<compile_context>
chip_gen: v5e
topology: v5e:2x2
jax: 0.10.0
libtpu: 0.0.40
codegen_flags: <defaults>
</compile_context>

<pallas_src>
import functools

import jax
import jax.numpy as jnp
from jax import lax
from jax.experimental import pallas as pl
from jax.experimental.pallas import tpu as pltpu


def _round_up(v, m):
    return ((v + m - 1) // m) * m


def _fused_unetconv_kernel(xb_ref, xh0_ref, xh1_ref, xh2_ref, xh3_ref,
                           w1_ref, w2_ref, s1_ref, b1_ref, s2_ref, b2_ref,
                           o_ref,
                           xs_ref, h1_ref,
                           *, TH, W, Wp, Cin_p, Cout, Cout_p, negative_slope):
    """One (batch, row-strip) step of conv3x3->BN->LReLU->conv3x3->BN->LReLU.

    Spatial buffers are FLAT (rows*Wp, channels): a 3x3 tap (dy, dx) of either conv is the
    contiguous slice starting at sublane offset dy*Wp + dx, so no im2col copies are needed.

    xb_ref : (1, TH*Wp, Cin_p)       bf16  body rows of the padded input strip
    xh*_ref: (1, Wp, Cin_p)          bf16  the 4 rows below the body (zero rows at image edge)
    w1_ref : (3, 3, Cin_p, Cout_p)   bf16  conv1 taps
    w2_ref : (3, 3, Cout_p, Cout_p)  bf16  conv2 taps
    s*/b*  : (1, Cout_p)             f32   folded BN scale / shift (conv bias included)
    o_ref  : (1, TH, W, Cout)        bf16  output strip (real channels only)
    xs_ref : ((TH+4)*Wp + 8, Cin_p)  bf16  scratch: flat input strip (+ over-read pad rows)
    h1_ref : ((TH+2)*Wp + 8, Cout_p) bf16  scratch: flat conv1 activation strip
    """
    r = pl.program_id(1)
    ns = pl.num_programs(1)

    R1 = (TH + 2) * Wp          # conv1 output rows (incl. +-1 pad ring and junk columns)
    R2 = TH * Wp                # conv2 output rows (incl. junk columns)
    body = TH * Wp

    # ---- assemble the flat (TH+4)*Wp-row input strip: body rows + 4 halo rows ------------
    xs_ref[0:body, :] = xb_ref[0]
    xs_ref[body:body + Wp, :] = xh0_ref[0]
    xs_ref[body + Wp:body + 2 * Wp, :] = xh1_ref[0]
    xs_ref[body + 2 * Wp:body + 3 * Wp, :] = xh2_ref[0]
    xs_ref[body + 3 * Wp:body + 4 * Wp, :] = xh3_ref[0]
    xs_ref[body + 4 * Wp:body + 4 * Wp + 8, :] = jnp.zeros((8, Cin_p), xs_ref.dtype)

    # ---- conv1: 9 per-tap matmuls on contiguous slices of the flat strip (K = Cin_p) -----
    acc1 = jnp.zeros((R1, Cout_p), jnp.float32)
    for dy in range(3):
        for dx in range(3):
            off = dy * Wp + dx
            acc1 = acc1 + jnp.dot(xs_ref[off:off + R1, :], w1_ref[dy, dx],
                                  preferred_element_type=jnp.float32)

    y1 = acc1 * s1_ref[...] + b1_ref[...]              # folded BN + conv bias (f32)
    y1 = jnp.where(y1 >= 0, y1, negative_slope * y1)   # LeakyReLU(0.2)
    h1_ref[0:R1, :] = y1.astype(h1_ref.dtype)
    h1_ref[R1:R1 + 8, :] = jnp.zeros((8, Cout_p), h1_ref.dtype)   # over-read pad rows

    # conv2 zero-pads conv1's output (SAME padding): those ring positions must be exact
    # zeros, not "conv1 evaluated outside the image".  Zero them with a few tiny border
    # stores instead of a full-strip iota/select mask.
    zc = jnp.zeros((Cout_p,), h1_ref.dtype)
    for i in range(TH + 2):
        h1_ref[i * Wp, :] = zc               # left pad column  (x = -1)
        h1_ref[i * Wp + W + 1, :] = zc       # right pad column (x = W)

    zr = jnp.zeros((Wp, Cout_p), h1_ref.dtype)

    @pl.when(r == 0)
    def _():
        h1_ref[0:Wp, :] = zr                               # top pad row (y = -1)

    @pl.when(r == ns - 1)
    def _():
        h1_ref[(TH + 1) * Wp:(TH + 2) * Wp, :] = zr        # bottom pad row (y = H)

    # ---- conv2: 9 per-tap matmuls on the VMEM-resident flat conv1 strip (K = Cout_p) -----
    acc2 = jnp.zeros((R2, Cout_p), jnp.float32)
    for dy in range(3):
        for dx in range(3):
            off = dy * Wp + dx
            acc2 = acc2 + jnp.dot(h1_ref[off:off + R2, :], w2_ref[dy, dx],
                                  preferred_element_type=jnp.float32)

    y2 = acc2 * s2_ref[...] + b2_ref[...]
    y2 = jnp.where(y2 >= 0, y2, negative_slope * y2)
    # Single epilogue trim: drop junk columns / padded channels, cast to bf16 and store.
    o_ref[0] = y2.reshape(TH, Wp, Cout_p)[:, :W, :Cout].astype(o_ref.dtype)


def fold_bn(conv_bias, gamma, beta, running_mean, running_var, eps=1e-5):
    """Fold BatchNorm2d (inference) + conv bias into per-channel scale/shift."""
    scale = gamma / jnp.sqrt(running_var + eps)
    shift = beta + scale * (conv_bias - running_mean)
    return scale, shift


def _choose_strip_height(H, W, Cin_p, Cout_p, Cout, vmem_cap):
    """Largest divisor of H whose per-step VMEM footprint fits the generation's budget."""
    Wp = _round_up(W + 4, 8)
    target = 16 if vmem_cap <= 64 * 1024 * 1024 else 32     # v7x (64 MiB) vs v5e/v6e (128 MiB)
    budget = int(vmem_cap * 0.45)

    def step_bytes(th):
        r1 = (th + 2) * Wp
        xs = ((th + 4) * Wp + 8) * Cin_p * 2
        h1 = (r1 + 8) * Cout_p * 2
        in_blk = 2 * (th + 4) * Wp * Cin_p * 2        # double-buffered body + halo blocks
        w_blk = 9 * (Cin_p + Cout_p) * Cout_p * 2
        out_blk = 2 * th * W * Cout * 2               # double-buffered bf16 output block
        temps = 3 * r1 * Cout_p * 4                   # acc1 / lrelu temp / acc2 (f32)
        return xs + h1 + in_blk + w_blk + out_blk + temps

    divisors = [d for d in range(1, H + 1) if H % d == 0]
    fitting = [d for d in divisors if d <= 2 * target and step_bytes(d) <= budget]
    # TODO(synk): support non-divisor strip heights (padded last strip + per-row ring masking)
    # so a prime H cannot degrade to TH=1.
    th = max(fitting) if fitting else 1
    return th, Wp


def unet_conv_forward(x_nhwc, params, drop=0.0, negative_slope=0.2,
                      out_dtype=jnp.bfloat16):
    """Fused unetConv forward.  x_nhwc: (N, H, W, Cin) f32 -> (N, H, W, Cout) out_dtype."""
    p1, p2 = params["conv1"], params["conv2"]
    N, H, W, Cin = x_nhwc.shape
    Cout = p1["w"].shape[-1]

    Cin_p = _round_up(max(Cin, 8), 8)      # conv1 contraction depth (lane dim of the LHS)
    Cout_p = _round_up(Cout, 128)          # lane-dense intermediate channels (MXU N dim)

    try:
        vmem_cap = pltpu.get_tpu_info().vmem_capacity_bytes
    except Exception:
        vmem_cap = 64 * 1024 * 1024        # conservative (v7x-sized) fallback
    TH, Wp = _choose_strip_height(H, W, Cin_p, Cout_p, Cout, vmem_cap)
    S = H // TH

    # Fold BN (inference stats) + conv bias into per-channel scale/shift, zero-pad to Cout_p.
    s1, sh1 = fold_bn(p1["b"], p1["gamma"], p1["beta"], p1["rmean"], p1["rvar"])
    s2, sh2 = fold_bn(p2["b"], p2["gamma"], p2["beta"], p2["rmean"], p2["rvar"])

    def pad_vec(v):
        return jnp.pad(v, (0, Cout_p - Cout)).reshape(1, Cout_p).astype(jnp.float32)

    s1, sh1, s2, sh2 = map(pad_vec, (s1, sh1, s2, sh2))

    def pack_w(w, cin_p):
        cin, cout = w.shape[2], w.shape[3]
        wp = jnp.pad(w, ((0, 0), (0, 0), (0, cin_p - cin), (0, Cout_p - cout)))
        return wp.astype(jnp.bfloat16)

    w1p = pack_w(p1["w"], Cin_p)           # (3, 3, Cin_p, Cout_p)
    w2p = pack_w(p2["w"], Cout_p)          # (3, 3, Cout_p, Cout_p)

    # Single padded input copy (2-row conv halo top/bottom, width padded to Wp = round_up(W+4, 8),
    # channels to Cin_p), flattened to (N, (H+4)*Wp, Cin_p) so every strip and every halo row is
    # a contiguous Blocked window of the SAME array (no halo side-band tensor in HBM).
    xq = jnp.pad(x_nhwc, ((0, 0), (2, 2), (2, Wp - W - 2), (0, Cin_p - Cin)))
    xq = xq.astype(jnp.bfloat16).reshape(N, (H + 4) * Wp, Cin_p)

    kern = functools.partial(_fused_unetconv_kernel, TH=TH, W=W, Wp=Wp,
                             Cin_p=Cin_p, Cout=Cout, Cout_p=Cout_p,
                             negative_slope=negative_slope)

    body_spec = pl.BlockSpec((1, TH * Wp, Cin_p), lambda n, r: (n, r, 0))
    halo_specs = [pl.BlockSpec((1, Wp, Cin_p),
                               lambda n, r, k=k: (n, (r + 1) * TH + k, 0))
                  for k in range(4)]
    vec_spec = pl.BlockSpec((1, Cout_p), lambda n, r: (0, 0))

    out = pl.pallas_call(
        kern,
        out_shape=jax.ShapeDtypeStruct((N, H, W, Cout), out_dtype),
        grid=(N, S),
        in_specs=[
            body_spec, *halo_specs,
            pl.BlockSpec((3, 3, Cin_p, Cout_p), lambda n, r: (0, 0, 0, 0)),
            pl.BlockSpec((3, 3, Cout_p, Cout_p), lambda n, r: (0, 0, 0, 0)),
            vec_spec, vec_spec, vec_spec, vec_spec,
        ],
        out_specs=pl.BlockSpec((1, TH, W, Cout), lambda n, r: (n, r, 0, 0)),
        scratch_shapes=[
            pltpu.VMEM(((TH + 4) * Wp + 8, Cin_p), jnp.bfloat16),    # flat input strip
            pltpu.VMEM(((TH + 2) * Wp + 8, Cout_p), jnp.bfloat16),   # flat conv1 strip
        ],
        compiler_params=pltpu.CompilerParams(
            dimension_semantics=("parallel", "parallel"),
            vmem_limit_bytes=min(int(0.85 * vmem_cap), 100 * 1024 * 1024)),
    )(xq, xq, xq, xq, xq, w1p, w2p, s1, sh1, s2, sh2)

    # TODO(synk): Dropout2d with drop > 0 in training mode is not implemented
    # (drop=0.0 / eval mode is the identity, matching the reference module here).
    return out


def init_unet_conv_params(key, in_size, out_size, bias=True, dtype=jnp.float32):
    """Deterministic synthetic parameters for unetConv(in_size, out_size, bias, act)."""
    k1, k2, k3, k4 = jax.random.split(key, 4)

    def conv_block(kw, kb, cin, cout):
        fan_in = cin * 9
        w = jax.random.normal(kw, (3, 3, cin, cout), dtype) / jnp.sqrt(fan_in)
        b = (jax.random.normal(kb, (cout,), dtype) * 0.01) if bias else jnp.zeros((cout,), dtype)
        # BatchNorm2d defaults: gamma=1, beta=0, running_mean=0, running_var=1
        return dict(w=w, b=b,
                    gamma=jnp.ones((cout,), dtype), beta=jnp.zeros((cout,), dtype),
                    rmean=jnp.zeros((cout,), dtype), rvar=jnp.ones((cout,), dtype))

    return dict(conv1=conv_block(k1, k2, in_size, out_size),
                conv2=conv_block(k3, k4, out_size, out_size))


def _reference_forward(x_nhwc, params, negative_slope=0.2):
    """Pure-JAX f32 reference (conv -> folded BN -> LeakyReLU, twice)."""
    def block(x, p):
        y = lax.conv_general_dilated(
            x, p["w"], window_strides=(1, 1), padding="SAME",
            dimension_numbers=("NHWC", "HWIO", "NHWC"),
            precision=lax.Precision.HIGHEST)
        scale, shift = fold_bn(p["b"], p["gamma"], p["beta"], p["rmean"], p["rvar"])
        y = y * scale + shift
        return jnp.where(y >= 0, y, negative_slope * y)

    return block(block(x_nhwc, params["conv1"]), params["conv2"])


if __name__ == "__main__":
    key = jax.random.PRNGKey(0)
    kx, kp = jax.random.split(key)

    N, Cin, H, W = 2, 4, 16, 16
    Cout = 8

    # PyTorch-style NCHW input -> NHWC for the kernel.
    x_nchw = jax.random.normal(kx, (N, Cin, H, W), jnp.float32)
    x_nhwc = jnp.transpose(x_nchw, (0, 2, 3, 1))

    params = init_unet_conv_params(kp, Cin, Cout, bias=True)

    out_nhwc = unet_conv_forward(x_nhwc, params, drop=0.0)
    jax.block_until_ready(out_nhwc)

    out_nchw = jnp.transpose(out_nhwc, (0, 3, 1, 2))  # back to PyTorch NCHW convention
    assert out_nchw.shape == (N, Cout, H, W)

    # Correctness check against the f32 reference.  The kernel uses bf16 MXU operands, a bf16
    # conv1 intermediate and a bf16 output, so expect ~1e-2 absolute error at these magnitudes.
    ref = _reference_forward(x_nhwc, params)
    err = float(jnp.max(jnp.abs(out_nhwc.astype(jnp.float32) - ref)))
    assert err < 0.1, f"max |pallas - reference| = {err}"

    print("KERNEL_OK")
</pallas_src>

<mosaic_0001>
module attributes {stable_mosaic.version = 11 : i64} {
  func.func @_fused_unetconv_kernel(%arg0: i32, %arg1: i32, %arg2: memref<1x384x8xbf16, #tpu.memory_space<vmem>>, %arg3: memref<1x24x8xbf16, #tpu.memory_space<vmem>>, %arg4: memref<1x24x8xbf16, #tpu.memory_space<vmem>>, %arg5: memref<1x24x8xbf16, #tpu.memory_space<vmem>>, %arg6: memref<1x24x8xbf16, #tpu.memory_space<vmem>>, %arg7: memref<3x3x8x128xbf16, #tpu.memory_space<vmem>>, %arg8: memref<3x3x128x128xbf16, #tpu.memory_space<vmem>>, %arg9: memref<1x128xf32, #tpu.memory_space<vmem>>, %arg10: memref<1x128xf32, #tpu.memory_space<vmem>>, %arg11: memref<1x128xf32, #tpu.memory_space<vmem>>, %arg12: memref<1x128xf32, #tpu.memory_space<vmem>>, %arg13: memref<1x16x16x8xbf16, #tpu.memory_space<vmem>>, %arg14: memref<488x8xbf16, #tpu.memory_space<vmem>>, %arg15: memref<440x128xbf16, #tpu.memory_space<vmem>>) attributes {dimension_semantics = [#tpu.dimension_semantics<parallel>, #tpu.dimension_semantics<parallel>], iteration_bounds = array<i64: 2, 1>, scalar_prefetch = 0 : i64, scratch_operands = 2 : i64, tpu.core_type = #tpu.core_type<tc>, window_params = [{transform_indices = @transform_0, window_bounds = array<i64: 1, 384, 8>}, {transform_indices = @transform_1, window_bounds = array<i64: 1, 24, 8>}, {transform_indices = @transform_2, window_bounds = array<i64: 1, 24, 8>}, {transform_indices = @transform_3, window_bounds = array<i64: 1, 24, 8>}, {transform_indices = @transform_4, window_bounds = array<i64: 1, 24, 8>}, {pipeline_mode = #tpu.pipeline_mode<synchronous>, transform_indices = @transform_5, window_bounds = array<i64: 3, 3, 8, 128>}, {pipeline_mode = #tpu.pipeline_mode<synchronous>, transform_indices = @transform_6, window_bounds = array<i64: 3, 3, 128, 128>}, {pipeline_mode = #tpu.pipeline_mode<synchronous>, transform_indices = @transform_7, window_bounds = array<i64: 1, 128>}, {pipeline_mode = #tpu.pipeline_mode<synchronous>, transform_indices = @transform_8, window_bounds = array<i64: 1, 128>}, {pipeline_mode = #tpu.pipeline_mode<synchronous>, transform_indices = @transform_9, window_bounds = array<i64: 1, 128>}, {pipeline_mode = #tpu.pipeline_mode<synchronous>, transform_indices = @transform_10, window_bounds = array<i64: 1, 128>}, {transform_indices = @transform_11, window_bounds = array<i64: 1, 16, 16, 8>}]} {
    %c0 = arith.constant 0 : index
    %c0_0 = arith.constant 0 : index
    %c0_1 = arith.constant 0 : index
    %0 = vector.load %arg2[%c0, %c0_0, %c0_1] : memref<1x384x8xbf16, #tpu.memory_space<vmem>>, vector<1x384x8xbf16>
    %1 = vector.shape_cast %0 : vector<1x384x8xbf16> to vector<384x8xbf16>
    %c0_2 = arith.constant 0 : index
    %c0_3 = arith.constant 0 : index
    %2 = vector.load %arg14[%c0_2, %c0_3] : memref<488x8xbf16, #tpu.memory_space<vmem>>, vector<384x8xbf16>
    tpu.vector_store %arg14[%c0_2, %c0_3], %1 {strides = array<i32>} : memref<488x8xbf16, #tpu.memory_space<vmem>>, vector<384x8xbf16>,
    %c0_4 = arith.constant 0 : index
    %c0_5 = arith.constant 0 : index
    %c0_6 = arith.constant 0 : index
    %3 = vector.load %arg3[%c0_4, %c0_5, %c0_6] : memref<1x24x8xbf16, #tpu.memory_space<vmem>>, vector<1x24x8xbf16>
    %4 = vector.shape_cast %3 : vector<1x24x8xbf16> to vector<24x8xbf16>
    %c384 = arith.constant 384 : index
    %c0_7 = arith.constant 0 : index
    %5 = vector.load %arg14[%c384, %c0_7] : memref<488x8xbf16, #tpu.memory_space<vmem>>, vector<24x8xbf16>
    tpu.vector_store %arg14[%c384, %c0_7], %4 {strides = array<i32>} : memref<488x8xbf16, #tpu.memory_space<vmem>>, vector<24x8xbf16>,
    %c0_8 = arith.constant 0 : index
    %c0_9 = arith.constant 0 : index
    %c0_10 = arith.constant 0 : index
    %6 = vector.load %arg4[%c0_8, %c0_9, %c0_10] : memref<1x24x8xbf16, #tpu.memory_space<vmem>>, vector<1x24x8xbf16>
    %7 = vector.shape_cast %6 : vector<1x24x8xbf16> to vector<24x8xbf16>
    %c408 = arith.constant 408 : index
    %c0_11 = arith.constant 0 : index
    %8 = vector.load %arg14[%c408, %c0_11] : memref<488x8xbf16, #tpu.memory_space<vmem>>, vector<24x8xbf16>
    tpu.vector_store %arg14[%c408, %c0_11], %7 {strides = array<i32>} : memref<488x8xbf16, #tpu.memory_space<vmem>>, vector<24x8xbf16>,
    %c0_12 = arith.constant 0 : index
    %c0_13 = arith.constant 0 : index
    %c0_14 = arith.constant 0 : index
    %9 = vector.load %arg5[%c0_12, %c0_13, %c0_14] : memref<1x24x8xbf16, #tpu.memory_space<vmem>>, vector<1x24x8xbf16>
    %10 = vector.shape_cast %9 : vector<1x24x8xbf16> to vector<24x8xbf16>
    %c432 = arith.constant 432 : index
    %c0_15 = arith.constant 0 : index
    %11 = vector.load %arg14[%c432, %c0_15] : memref<488x8xbf16, #tpu.memory_space<vmem>>, vector<24x8xbf16>
    tpu.vector_store %arg14[%c432, %c0_15], %10 {strides = array<i32>} : memref<488x8xbf16, #tpu.memory_space<vmem>>, vector<24x8xbf16>,
    %c0_16 = arith.constant 0 : index
    %c0_17 = arith.constant 0 : index
    %c0_18 = arith.constant 0 : index
    %12 = vector.load %arg6[%c0_16, %c0_17, %c0_18] : memref<1x24x8xbf16, #tpu.memory_space<vmem>>, vector<1x24x8xbf16>
    %13 = vector.shape_cast %12 : vector<1x24x8xbf16> to vector<24x8xbf16>
    %c456 = arith.constant 456 : index
    %c0_19 = arith.constant 0 : index
    %14 = vector.load %arg14[%c456, %c0_19] : memref<488x8xbf16, #tpu.memory_space<vmem>>, vector<24x8xbf16>
    tpu.vector_store %arg14[%c456, %c0_19], %13 {strides = array<i32>} : memref<488x8xbf16, #tpu.memory_space<vmem>>, vector<24x8xbf16>,
    %cst = arith.constant 0.000000e+00 : bf16
    %15 = vector.broadcast %cst : bf16 to vector<8x8xbf16>
    %c480 = arith.constant 480 : index
    %c0_20 = arith.constant 0 : index
    %16 = vector.load %arg14[%c480, %c0_20] : memref<488x8xbf16, #tpu.memory_space<vmem>>, vector<8x8xbf16>
    tpu.vector_store %arg14[%c480, %c0_20], %15 {strides = array<i32>} : memref<488x8xbf16, #tpu.memory_space<vmem>>, vector<8x8xbf16>,
    %cst_21 = arith.constant 0.000000e+00 : f32
    %17 = vector.broadcast %cst_21 : f32 to vector<432x128xf32>
    %c0_22 = arith.constant 0 : index
    %c0_23 = arith.constant 0 : index
    %18 = vector.load %arg14[%c0_22, %c0_23] : memref<488x8xbf16, #tpu.memory_space<vmem>>, vector<432x8xbf16>
    %c0_24 = arith.constant 0 : index
    %c0_25 = arith.constant 0 : index
    %c0_26 = arith.constant 0 : index
    %c0_27 = arith.constant 0 : index
    %19 = vector.load %arg7[%c0_24, %c0_25, %c0_26, %c0_27] : memref<3x3x8x128xbf16, #tpu.memory_space<vmem>>, vector<1x1x8x128xbf16>
    %20 = vector.shape_cast %19 : vector<1x1x8x128xbf16> to vector<8x128xbf16>
    %cst_28 = arith.constant dense<0.000000e+00> : vector<432x128xf32>
    %21 = tpu.matmul %18, %20, %cst_28 {dimension_numbers = #tpu.dot_dimension_numbers<[1], [0], [0], [1], [0, 0, 1, 1], [], []>} : vector<432x8xbf16>, vector<8x128xbf16>, vector<432x128xf32> -> vector<432x128xf32>
    %22 = arith.addf %17, %21 : vector<432x128xf32>
    %c1 = arith.constant 1 : index
    %c0_29 = arith.constant 0 : index
    %23 = vector.load %arg14[%c1, %c0_29] : memref<488x8xbf16, #tpu.memory_space<vmem>>, vector<432x8xbf16>
    %c0_30 = arith.constant 0 : index
    %c1_31 = arith.constant 1 : index
    %c0_32 = arith.constant 0 : index
    %c0_33 = arith.constant 0 : index
    %24 = vector.load %arg7[%c0_30, %c1_31, %c0_32, %c0_33] : memref<3x3x8x128xbf16, #tpu.memory_space<vmem>>, vector<1x1x8x128xbf16>
    %25 = vector.shape_cast %24 : vector<1x1x8x128xbf16> to vector<8x128xbf16>
    %cst_34 = arith.constant dense<0.000000e+00> : vector<432x128xf32>
    %26 = tpu.matmul %23, %25, %cst_34 {dimension_numbers = #tpu.dot_dimension_numbers<[1], [0], [0], [1], [0, 0, 1, 1], [], []>} : vector<432x8xbf16>, vector<8x128xbf16>, vector<432x128xf32> -> vector<432x128xf32>
    %27 = arith.addf %22, %26 : vector<432x128xf32>
    %c2 = arith.constant 2 : index
    %c0_35 = arith.constant 0 : index
    %28 = vector.load %arg14[%c2, %c0_35] : memref<488x8xbf16, #tpu.memory_space<vmem>>, vector<432x8xbf16>
    %c0_36 = arith.constant 0 : index
    %c2_37 = arith.constant 2 : index
    %c0_38 = arith.constant 0 : index
    %c0_39 = arith.constant 0 : index
    %29 = vector.load %arg7[%c0_36, %c2_37, %c0_38, %c0_39] : memref<3x3x8x128xbf16, #tpu.memory_space<vmem>>, vector<1x1x8x128xbf16>
    %30 = vector.shape_cast %29 : vector<1x1x8x128xbf16> to vector<8x128xbf16>
    %cst_40 = arith.constant dense<0.000000e+00> : vector<432x128xf32>
    %31 = tpu.matmul %28, %30, %cst_40 {dimension_numbers = #tpu.dot_dimension_numbers<[1], [0], [0], [1], [0, 0, 1, 1], [], []>} : vector<432x8xbf16>, vector<8x128xbf16>, vector<432x128xf32> -> vector<432x128xf32>
    %32 = arith.addf %27, %31 : vector<432x128xf32>
    %c24 = arith.constant 24 : index
    %c0_41 = arith.constant 0 : index
    %33 = vector.load %arg14[%c24, %c0_41] : memref<488x8xbf16, #tpu.memory_space<vmem>>, vector<432x8xbf16>
    %c1_42 = arith.constant 1 : index
    %c0_43 = arith.constant 0 : index
    %c0_44 = arith.constant 0 : index
    %c0_45 = arith.constant 0 : index
    %34 = vector.load %arg7[%c1_42, %c0_43, %c0_44, %c0_45] : memref<3x3x8x128xbf16, #tpu.memory_space<vmem>>, vector<1x1x8x128xbf16>
    %35 = vector.shape_cast %34 : vector<1x1x8x128xbf16> to vector<8x128xbf16>
    %cst_46 = arith.constant dense<0.000000e+00> : vector<432x128xf32>
    %36 = tpu.matmul %33, %35, %cst_46 {dimension_numbers = #tpu.dot_dimension_numbers<[1], [0], [0], [1], [0, 0, 1, 1], [], []>} : vector<432x8xbf16>, vector<8x128xbf16>, vector<432x128xf32> -> vector<432x128xf32>
    %37 = arith.addf %32, %36 : vector<432x128xf32>
    %c25 = arith.constant 25 : index
    %c0_47 = arith.constant 0 : index
    %38 = vector.load %arg14[%c25, %c0_47] : memref<488x8xbf16, #tpu.memory_space<vmem>>, vector<432x8xbf16>
    %c1_48 = arith.constant 1 : index
    %c1_49 = arith.constant 1 : index
    %c0_50 = arith.constant 0 : index
    %c0_51 = arith.constant 0 : index
    %39 = vector.load %arg7[%c1_48, %c1_49, %c0_50, %c0_51] : memref<3x3x8x128xbf16, #tpu.memory_space<vmem>>, vector<1x1x8x128xbf16>
    %40 = vector.shape_cast %39 : vector<1x1x8x128xbf16> to vector<8x128xbf16>
    %cst_52 = arith.constant dense<0.000000e+00> : vector<432x128xf32>
    %41 = tpu.matmul %38, %40, %cst_52 {dimension_numbers = #tpu.dot_dimension_numbers<[1], [0], [0], [1], [0, 0, 1, 1], [], []>} : vector<432x8xbf16>, vector<8x128xbf16>, vector<432x128xf32> -> vector<432x128xf32>
    %42 = arith.addf %37, %41 : vector<432x128xf32>
    %c26 = arith.constant 26 : index
    %c0_53 = arith.constant 0 : index
    %43 = vector.load %arg14[%c26, %c0_53] : memref<488x8xbf16, #tpu.memory_space<vmem>>, vector<432x8xbf16>
    %c1_54 = arith.constant 1 : index
    %c2_55 = arith.constant 2 : index
    %c0_56 = arith.constant 0 : index
    %c0_57 = arith.constant 0 : index
    %44 = vector.load %arg7[%c1_54, %c2_55, %c0_56, %c0_57] : memref<3x3x8x128xbf16, #tpu.memory_space<vmem>>, vector<1x1x8x128xbf16>
    %45 = vector.shape_cast %44 : vector<1x1x8x128xbf16> to vector<8x128xbf16>
    %cst_58 = arith.constant dense<0.000000e+00> : vector<432x128xf32>
    %46 = tpu.matmul %43, %45, %cst_58 {dimension_numbers = #tpu.dot_dimension_numbers<[1], [0], [0], [1], [0, 0, 1, 1], [], []>} : vector<432x8xbf16>, vector<8x128xbf16>, vector<432x128xf32> -> vector<432x128xf32>
    %47 = arith.addf %42, %46 : vector<432x128xf32>
    %c48 = arith.constant 48 : index
    %c0_59 = arith.constant 0 : index
    %48 = vector.load %arg14[%c48, %c0_59] : memref<488x8xbf16, #tpu.memory_space<vmem>>, vector<432x8xbf16>
    %c2_60 = arith.constant 2 : index
    %c0_61 = arith.constant 0 : index
    %c0_62 = arith.constant 0 : index
    %c0_63 = arith.constant 0 : index
    %49 = vector.load %arg7[%c2_60, %c0_61, %c0_62, %c0_63] : memref<3x3x8x128xbf16, #tpu.memory_space<vmem>>, vector<1x1x8x128xbf16>
    %50 = vector.shape_cast %49 : vector<1x1x8x128xbf16> to vector<8x128xbf16>
    %cst_64 = arith.constant dense<0.000000e+00> : vector<432x128xf32>
    %51 = tpu.matmul %48, %50, %cst_64 {dimension_numbers = #tpu.dot_dimension_numbers<[1], [0], [0], [1], [0, 0, 1, 1], [], []>} : vector<432x8xbf16>, vector<8x128xbf16>, vector<432x128xf32> -> vector<432x128xf32>
    %52 = arith.addf %47, %51 : vector<432x128xf32>
    %c49 = arith.constant 49 : index
    %c0_65 = arith.constant 0 : index
    %53 = vector.load %arg14[%c49, %c0_65] : memref<488x8xbf16, #tpu.memory_space<vmem>>, vector<432x8xbf16>
    %c2_66 = arith.constant 2 : index
    %c1_67 = arith.constant 1 : index
    %c0_68 = arith.constant 0 : index
    %c0_69 = arith.constant 0 : index
    %54 = vector.load %arg7[%c2_66, %c1_67, %c0_68, %c0_69] : memref<3x3x8x128xbf16, #tpu.memory_space<vmem>>, vector<1x1x8x128xbf16>
    %55 = vector.shape_cast %54 : vector<1x1x8x128xbf16> to vector<8x128xbf16>
    %cst_70 = arith.constant dense<0.000000e+00> : vector<432x128xf32>
    %56 = tpu.matmul %53, %55, %cst_70 {dimension_numbers = #tpu.dot_dimension_numbers<[1], [0], [0], [1], [0, 0, 1, 1], [], []>} : vector<432x8xbf16>, vector<8x128xbf16>, vector<432x128xf32> -> vector<432x128xf32>
    %57 = arith.addf %52, %56 : vector<432x128xf32>
    %c50 = arith.constant 50 : index
    %c0_71 = arith.constant 0 : index
    %58 = vector.load %arg14[%c50, %c0_71] : memref<488x8xbf16, #tpu.memory_space<vmem>>, vector<432x8xbf16>
    %c2_72 = arith.constant 2 : index
    %c2_73 = arith.constant 2 : index
    %c0_74 = arith.constant 0 : index
    %c0_75 = arith.constant 0 : index
    %59 = vector.load %arg7[%c2_72, %c2_73, %c0_74, %c0_75] : memref<3x3x8x128xbf16, #tpu.memory_space<vmem>>, vector<1x1x8x128xbf16>
    %60 = vector.shape_cast %59 : vector<1x1x8x128xbf16> to vector<8x128xbf16>
    %cst_76 = arith.constant dense<0.000000e+00> : vector<432x128xf32>
    %61 = tpu.matmul %58, %60, %cst_76 {dimension_numbers = #tpu.dot_dimension_numbers<[1], [0], [0], [1], [0, 0, 1, 1], [], []>} : vector<432x8xbf16>, vector<8x128xbf16>, vector<432x128xf32> -> vector<432x128xf32>
    %62 = arith.addf %57, %61 : vector<432x128xf32>
    %c0_77 = arith.constant 0 : index
    %c0_78 = arith.constant 0 : index
    %63 = vector.load %arg9[%c0_77, %c0_78] : memref<1x128xf32, #tpu.memory_space<vmem>>, vector<1x128xf32>
    %64 = vector.broadcast %63 : vector<1x128xf32> to vector<432x128xf32>
    %65 = arith.mulf %62, %64 : vector<432x128xf32>
    %c0_79 = arith.constant 0 : index
    %c0_80 = arith.constant 0 : index
    %66 = vector.load %arg10[%c0_79, %c0_80] : memref<1x128xf32, #tpu.memory_space<vmem>>, vector<1x128xf32>
    %67 = vector.broadcast %66 : vector<1x128xf32> to vector<432x128xf32>
    %68 = arith.addf %65, %67 : vector<432x128xf32>
    %cst_81 = arith.constant 0.000000e+00 : f32
    %69 = vector.broadcast %cst_81 : f32 to vector<432x128xf32>
    %70 = arith.cmpf oge, %68, %69 : vector<432x128xf32>
    %cst_82 = arith.constant 2.000000e-01 : f32
    %71 = vector.broadcast %cst_82 : f32 to vector<432x128xf32>
    %72 = arith.mulf %71, %68 : vector<432x128xf32>
    %73 = arith.select %70, %68, %72 : vector<432x128xi1>, vector<432x128xf32>
    %74 = arith.truncf %73 : vector<432x128xf32> to vector<432x128xbf16>
    %c0_83 = arith.constant 0 : index
    %c0_84 = arith.constant 0 : index
    %75 = vector.load %arg15[%c0_83, %c0_84] : memref<440x128xbf16, #tpu.memory_space<vmem>>, vector<432x128xbf16>
    tpu.vector_store %arg15[%c0_83, %c0_84], %74 {strides = array<i32>} : memref<440x128xbf16, #tpu.memory_space<vmem>>, vector<432x128xbf16>,
    %cst_85 = arith.constant 0.000000e+00 : bf16
    %76 = vector.broadcast %cst_85 : bf16 to vector<8x128xbf16>
    %c432_86 = arith.constant 432 : index
    %c0_87 = arith.constant 0 : index
    %77 = vector.load %arg15[%c432_86, %c0_87] : memref<440x128xbf16, #tpu.memory_space<vmem>>, vector<8x128xbf16>
    tpu.vector_store %arg15[%c432_86, %c0_87], %76 {strides = array<i32>} : memref<440x128xbf16, #tpu.memory_space<vmem>>, vector<8x128xbf16>,
    %cst_88 = arith.constant 0.000000e+00 : bf16
    %78 = vector.broadcast %cst_88 : bf16 to vector<128xbf16>
    %c0_89 = arith.constant 0 : index
    %c0_90 = arith.constant 0 : index
    %79 = vector.load %arg15[%c0_89, %c0_90] : memref<440x128xbf16, #tpu.memory_space<vmem>>, vector<1x128xbf16>
    %80 = vector.shape_cast %79 : vector<1x128xbf16> to vector<128xbf16>
    %81 = vector.shape_cast %78 : vector<128xbf16> to vector<1x128xbf16>
    tpu.vector_store %arg15[%c0_89, %c0_90], %81 {strides = array<i32>} : memref<440x128xbf16, #tpu.memory_space<vmem>>, vector<1x128xbf16>,
    %c17 = arith.constant 17 : index
    %c0_91 = arith.constant 0 : index
    %82 = vector.load %arg15[%c17, %c0_91] : memref<440x128xbf16, #tpu.memory_space<vmem>>, vector<1x128xbf16>
    %83 = vector.shape_cast %82 : vector<1x128xbf16> to vector<128xbf16>
    %84 = vector.shape_cast %78 : vector<128xbf16> to vector<1x128xbf16>
    tpu.vector_store %arg15[%c17, %c0_91], %84 {strides = array<i32>} : memref<440x128xbf16, #tpu.memory_space<vmem>>, vector<1x128xbf16>,
    %c24_92 = arith.constant 24 : index
    %c0_93 = arith.constant 0 : index
    %85 = vector.load %arg15[%c24_92, %c0_93] : memref<440x128xbf16, #tpu.memory_space<vmem>>, vector<1x128xbf16>
    %86 = vector.shape_cast %85 : vector<1x128xbf16> to vector<128xbf16>
    %87 = vector.shape_cast %78 : vector<128xbf16> to vector<1x128xbf16>
    tpu.vector_store %arg15[%c24_92, %c0_93], %87 {strides = array<i32>} : memref<440x128xbf16, #tpu.memory_space<vmem>>, vector<1x128xbf16>,
    %c41 = arith.constant 41 : index
    %c0_94 = arith.constant 0 : index
    %88 = vector.load %arg15[%c41, %c0_94] : memref<440x128xbf16, #tpu.memory_space<vmem>>, vector<1x128xbf16>
    %89 = vector.shape_cast %88 : vector<1x128xbf16> to vector<128xbf16>
    %90 = vector.shape_cast %78 : vector<128xbf16> to vector<1x128xbf16>
    tpu.vector_store %arg15[%c41, %c0_94], %90 {strides = array<i32>} : memref<440x128xbf16, #tpu.memory_space<vmem>>, vector<1x128xbf16>,
    %c48_95 = arith.constant 48 : index
    %c0_96 = arith.constant 0 : index
    %91 = vector.load %arg15[%c48_95, %c0_96] : memref<440x128xbf16, #tpu.memory_space<vmem>>, vector<1x128xbf16>
    %92 = vector.shape_cast %91 : vector<1x128xbf16> to vector<128xbf16>
    %93 = vector.shape_cast %78 : vector<128xbf16> to vector<1x128xbf16>
    tpu.vector_store %arg15[%c48_95, %c0_96], %93 {strides = array<i32>} : memref<440x128xbf16, #tpu.memory_space<vmem>>, vector<1x128xbf16>,
    %c65 = arith.constant 65 : index
    %c0_97 = arith.constant 0 : index
    %94 = vector.load %arg15[%c65, %c0_97] : memref<440x128xbf16, #tpu.memory_space<vmem>>, vector<1x128xbf16>
    %95 = vector.shape_cast %94 : vector<1x128xbf16> to vector<128xbf16>
    %96 = vector.shape_cast %78 : vector<128xbf16> to vector<1x128xbf16>
    tpu.vector_store %arg15[%c65, %c0_97], %96 {strides = array<i32>} : memref<440x128xbf16, #tpu.memory_space<vmem>>, vector<1x128xbf16>,
    %c72 = arith.constant 72 : index
    %c0_98 = arith.constant 0 : index
    %97 = vector.load %arg15[%c72, %c0_98] : memref<440x128xbf16, #tpu.memory_space<vmem>>, vector<1x128xbf16>
    %98 = vector.shape_cast %97 : vector<1x128xbf16> to vector<128xbf16>
    %99 = vector.shape_cast %78 : vector<128xbf16> to vector<1x128xbf16>
    tpu.vector_store %arg15[%c72, %c0_98], %99 {strides = array<i32>} : memref<440x128xbf16, #tpu.memory_space<vmem>>, vector<1x128xbf16>,
    %c89 = arith.constant 89 : index
    %c0_99 = arith.constant 0 : index
    %100 = vector.load %arg15[%c89, %c0_99] : memref<440x128xbf16, #tpu.memory_space<vmem>>, vector<1x128xbf16>
    %101 = vector.shape_cast %100 : vector<1x128xbf16> to vector<128xbf16>
    %102 = vector.shape_cast %78 : vector<128xbf16> to vector<1x128xbf16>
    tpu.vector_store %arg15[%c89, %c0_99], %102 {strides = array<i32>} : memref<440x128xbf16, #tpu.memory_space<vmem>>, vector<1x128xbf16>,
    %c96 = arith.constant 96 : index
    %c0_100 = arith.constant 0 : index
    %103 = vector.load %arg15[%c96, %c0_100] : memref<440x128xbf16, #tpu.memory_space<vmem>>, vector<1x128xbf16>
    %104 = vector.shape_cast %103 : vector<1x128xbf16> to vector<128xbf16>
    %105 = vector.shape_cast %78 : vector<128xbf16> to vector<1x128xbf16>
    tpu.vector_store %arg15[%c96, %c0_100], %105 {strides = array<i32>} : memref<440x128xbf16, #tpu.memory_space<vmem>>, vector<1x128xbf16>,
    %c113 = arith.constant 113 : index
    %c0_101 = arith.constant 0 : index
    %106 = vector.load %arg15[%c113, %c0_101] : memref<440x128xbf16, #tpu.memory_space<vmem>>, vector<1x128xbf16>
    %107 = vector.shape_cast %106 : vector<1x128xbf16> to vector<128xbf16>
    %108 = vector.shape_cast %78 : vector<128xbf16> to vector<1x128xbf16>
    tpu.vector_store %arg15[%c113, %c0_101], %108 {strides = array<i32>} : memref<440x128xbf16, #tpu.memory_space<vmem>>, vector<1x128xbf16>,
    %c120 = arith.constant 120 : index
    %c0_102 = arith.constant 0 : index
    %109 = vector.load %arg15[%c120, %c0_102] : memref<440x128xbf16, #tpu.memory_space<vmem>>, vector<1x128xbf16>
    %110 = vector.shape_cast %109 : vector<1x128xbf16> to vector<128xbf16>
    %111 = vector.shape_cast %78 : vector<128xbf16> to vector<1x128xbf16>
    tpu.vector_store %arg15[%c120, %c0_102], %111 {strides = array<i32>} : memref<440x128xbf16, #tpu.memory_space<vmem>>, vector<1x128xbf16>,
    %c137 = arith.constant 137 : index
    %c0_103 = arith.constant 0 : index
    %112 = vector.load %arg15[%c137, %c0_103] : memref<440x128xbf16, #tpu.memory_space<vmem>>, vector<1x128xbf16>
    %113 = vector.shape_cast %112 : vector<1x128xbf16> to vector<128xbf16>
    %114 = vector.shape_cast %78 : vector<128xbf16> to vector<1x128xbf16>
    tpu.vector_store %arg15[%c137, %c0_103], %114 {strides = array<i32>} : memref<440x128xbf16, #tpu.memory_space<vmem>>, vector<1x128xbf16>,
    %c144 = arith.constant 144 : index
    %c0_104 = arith.constant 0 : index
    %115 = vector.load %arg15[%c144, %c0_104] : memref<440x128xbf16, #tpu.memory_space<vmem>>, vector<1x128xbf16>
    %116 = vector.shape_cast %115 : vector<1x128xbf16> to vector<128xbf16>
    %117 = vector.shape_cast %78 : vector<128xbf16> to vector<1x128xbf16>
    tpu.vector_store %arg15[%c144, %c0_104], %117 {strides = array<i32>} : memref<440x128xbf16, #tpu.memory_space<vmem>>, vector<1x128xbf16>,
    %c161 = arith.constant 161 : index
    %c0_105 = arith.constant 0 : index
    %118 = vector.load %arg15[%c161, %c0_105] : memref<440x128xbf16, #tpu.memory_space<vmem>>, vector<1x128xbf16>
    %119 = vector.shape_cast %118 : vector<1x128xbf16> to vector<128xbf16>
    %120 = vector.shape_cast %78 : vector<128xbf16> to vector<1x128xbf16>
    tpu.vector_store %arg15[%c161, %c0_105], %120 {strides = array<i32>} : memref<440x128xbf16, #tpu.memory_space<vmem>>, vector<1x128xbf16>,
    %c168 = arith.constant 168 : index
    %c0_106 = arith.constant 0 : index
    %121 = vector.load %arg15[%c168, %c0_106] : memref<440x128xbf16, #tpu.memory_space<vmem>>, vector<1x128xbf16>
    %122 = vector.shape_cast %121 : vector<1x128xbf16> to vector<128xbf16>
    %123 = vector.shape_cast %78 : vector<128xbf16> to vector<1x128xbf16>
    tpu.vector_store %arg15[%c168, %c0_106], %123 {strides = array<i32>} : memref<440x128xbf16, #tpu.memory_space<vmem>>, vector<1x128xbf16>,
    %c185 = arith.constant 185 : index
    %c0_107 = arith.constant 0 : index
    %124 = vector.load %arg15[%c185, %c0_107] : memref<440x128xbf16, #tpu.memory_space<vmem>>, vector<1x128xbf16>
    %125 = vector.shape_cast %124 : vector<1x128xbf16> to vector<128xbf16>
    %126 = vector.shape_cast %78 : vector<128xbf16> to vector<1x128xbf16>
    tpu.vector_store %arg15[%c185, %c0_107], %126 {strides = array<i32>} : memref<440x128xbf16, #tpu.memory_space<vmem>>, vector<1x128xbf16>,
    %c192 = arith.constant 192 : index
    %c0_108 = arith.constant 0 : index
    %127 = vector.load %arg15[%c192, %c0_108] : memref<440x128xbf16, #tpu.memory_space<vmem>>, vector<1x128xbf16>
    %128 = vector.shape_cast %127 : vector<1x128xbf16> to vector<128xbf16>
    %129 = vector.shape_cast %78 : vector<128xbf16> to vector<1x128xbf16>
    tpu.vector_store %arg15[%c192, %c0_108], %129 {strides = array<i32>} : memref<440x128xbf16, #tpu.memory_space<vmem>>, vector<1x128xbf16>,
    %c209 = arith.constant 209 : index
    %c0_109 = arith.constant 0 : index
    %130 = vector.load %arg15[%c209, %c0_109] : memref<440x128xbf16, #tpu.memory_space<vmem>>, vector<1x128xbf16>
    %131 = vector.shape_cast %130 : vector<1x128xbf16> to vector<128xbf16>
    %132 = vector.shape_cast %78 : vector<128xbf16> to vector<1x128xbf16>
    tpu.vector_store %arg15[%c209, %c0_109], %132 {strides = array<i32>} : memref<440x128xbf16, #tpu.memory_space<vmem>>, vector<1x128xbf16>,
    %c216 = arith.constant 216 : index
    %c0_110 = arith.constant 0 : index
    %133 = vector.load %arg15[%c216, %c0_110] : memref<440x128xbf16, #tpu.memory_space<vmem>>, vector<1x128xbf16>
    %134 = vector.shape_cast %133 : vector<1x128xbf16> to vector<128xbf16>
    %135 = vector.shape_cast %78 : vector<128xbf16> to vector<1x128xbf16>
    tpu.vector_store %arg15[%c216, %c0_110], %135 {strides = array<i32>} : memref<440x128xbf16, #tpu.memory_space<vmem>>, vector<1x128xbf16>,
    %c233 = arith.constant 233 : index
    %c0_111 = arith.constant 0 : index
    %136 = vector.load %arg15[%c233, %c0_111] : memref<440x128xbf16, #tpu.memory_space<vmem>>, vector<1x128xbf16>
    %137 = vector.shape_cast %136 : vector<1x128xbf16> to vector<128xbf16>
    %138 = vector.shape_cast %78 : vector<128xbf16> to vector<1x128xbf16>
    tpu.vector_store %arg15[%c233, %c0_111], %138 {strides = array<i32>} : memref<440x128xbf16, #tpu.memory_space<vmem>>, vector<1x128xbf16>,
    %c240 = arith.constant 240 : index
    %c0_112 = arith.constant 0 : index
    %139 = vector.load %arg15[%c240, %c0_112] : memref<440x128xbf16, #tpu.memory_space<vmem>>, vector<1x128xbf16>
    %140 = vector.shape_cast %139 : vector<1x128xbf16> to vector<128xbf16>
    %141 = vector.shape_cast %78 : vector<128xbf16> to vector<1x128xbf16>
    tpu.vector_store %arg15[%c240, %c0_112], %141 {strides = array<i32>} : memref<440x128xbf16, #tpu.memory_space<vmem>>, vector<1x128xbf16>,
    %c257 = arith.constant 257 : index
    %c0_113 = arith.constant 0 : index
    %142 = vector.load %arg15[%c257, %c0_113] : memref<440x128xbf16, #tpu.memory_space<vmem>>, vector<1x128xbf16>
    %143 = vector.shape_cast %142 : vector<1x128xbf16> to vector<128xbf16>
    %144 = vector.shape_cast %78 : vector<128xbf16> to vector<1x128xbf16>
    tpu.vector_store %arg15[%c257, %c0_113], %144 {strides = array<i32>} : memref<440x128xbf16, #tpu.memory_space<vmem>>, vector<1x128xbf16>,
    %c264 = arith.constant 264 : index
    %c0_114 = arith.constant 0 : index
    %145 = vector.load %arg15[%c264, %c0_114] : memref<440x128xbf16, #tpu.memory_space<vmem>>, vector<1x128xbf16>
    %146 = vector.shape_cast %145 : vector<1x128xbf16> to vector<128xbf16>
    %147 = vector.shape_cast %78 : vector<128xbf16> to vector<1x128xbf16>
    tpu.vector_store %arg15[%c264, %c0_114], %147 {strides = array<i32>} : memref<440x128xbf16, #tpu.memory_space<vmem>>, vector<1x128xbf16>,
    %c281 = arith.constant 281 : index
    %c0_115 = arith.constant 0 : index
    %148 = vector.load %arg15[%c281, %c0_115] : memref<440x128xbf16, #tpu.memory_space<vmem>>, vector<1x128xbf16>
    %149 = vector.shape_cast %148 : vector<1x128xbf16> to vector<128xbf16>
    %150 = vector.shape_cast %78 : vector<128xbf16> to vector<1x128xbf16>
    tpu.vector_store %arg15[%c281, %c0_115], %150 {strides = array<i32>} : memref<440x128xbf16, #tpu.memory_space<vmem>>, vector<1x128xbf16>,
    %c288 = arith.constant 288 : index
    %c0_116 = arith.constant 0 : index
    %151 = vector.load %arg15[%c288, %c0_116] : memref<440x128xbf16, #tpu.memory_space<vmem>>, vector<1x128xbf16>
    %152 = vector.shape_cast %151 : vector<1x128xbf16> to vector<128xbf16>
    %153 = vector.shape_cast %78 : vector<128xbf16> to vector<1x128xbf16>
    tpu.vector_store %arg15[%c288, %c0_116], %153 {strides = array<i32>} : memref<440x128xbf16, #tpu.memory_space<vmem>>, vector<1x128xbf16>,
    %c305 = arith.constant 305 : index
    %c0_117 = arith.constant 0 : index
    %154 = vector.load %arg15[%c305, %c0_117] : memref<440x128xbf16, #tpu.memory_space<vmem>>, vector<1x128xbf16>
    %155 = vector.shape_cast %154 : vector<1x128xbf16> to vector<128xbf16>
    %156 = vector.shape_cast %78 : vector<128xbf16> to vector<1x128xbf16>
    tpu.vector_store %arg15[%c305, %c0_117], %156 {strides = array<i32>} : memref<440x128xbf16, #tpu.memory_space<vmem>>, vector<1x128xbf16>,
    %c312 = arith.constant 312 : index
    %c0_118 = arith.constant 0 : index
    %157 = vector.load %arg15[%c312, %c0_118] : memref<440x128xbf16, #tpu.memory_space<vmem>>, vector<1x128xbf16>
    %158 = vector.shape_cast %157 : vector<1x128xbf16> to vector<128xbf16>
    %159 = vector.shape_cast %78 : vector<128xbf16> to vector<1x128xbf16>
    tpu.vector_store %arg15[%c312, %c0_118], %159 {strides = array<i32>} : memref<440x128xbf16, #tpu.memory_space<vmem>>, vector<1x128xbf16>,
    %c329 = arith.constant 329 : index
    %c0_119 = arith.constant 0 : index
    %160 = vector.load %arg15[%c329, %c0_119] : memref<440x128xbf16, #tpu.memory_space<vmem>>, vector<1x128xbf16>
    %161 = vector.shape_cast %160 : vector<1x128xbf16> to vector<128xbf16>
    %162 = vector.shape_cast %78 : vector<128xbf16> to vector<1x128xbf16>
    tpu.vector_store %arg15[%c329, %c0_119], %162 {strides = array<i32>} : memref<440x128xbf16, #tpu.memory_space<vmem>>, vector<1x128xbf16>,
    %c336 = arith.constant 336 : index
    %c0_120 = arith.constant 0 : index
    %163 = vector.load %arg15[%c336, %c0_120] : memref<440x128xbf16, #tpu.memory_space<vmem>>, vector<1x128xbf16>
    %164 = vector.shape_cast %163 : vector<1x128xbf16> to vector<128xbf16>
    %165 = vector.shape_cast %78 : vector<128xbf16> to vector<1x128xbf16>
    tpu.vector_store %arg15[%c336, %c0_120], %165 {strides = array<i32>} : memref<440x128xbf16, #tpu.memory_space<vmem>>, vector<1x128xbf16>,
    %c353 = arith.constant 353 : index
    %c0_121 = arith.constant 0 : index
    %166 = vector.load %arg15[%c353, %c0_121] : memref<440x128xbf16, #tpu.memory_space<vmem>>, vector<1x128xbf16>
    %167 = vector.shape_cast %166 : vector<1x128xbf16> to vector<128xbf16>
    %168 = vector.shape_cast %78 : vector<128xbf16> to vector<1x128xbf16>
    tpu.vector_store %arg15[%c353, %c0_121], %168 {strides = array<i32>} : memref<440x128xbf16, #tpu.memory_space<vmem>>, vector<1x128xbf16>,
    %c360 = arith.constant 360 : index
    %c0_122 = arith.constant 0 : index
    %169 = vector.load %arg15[%c360, %c0_122] : memref<440x128xbf16, #tpu.memory_space<vmem>>, vector<1x128xbf16>
    %170 = vector.shape_cast %169 : vector<1x128xbf16> to vector<128xbf16>
    %171 = vector.shape_cast %78 : vector<128xbf16> to vector<1x128xbf16>
    tpu.vector_store %arg15[%c360, %c0_122], %171 {strides = array<i32>} : memref<440x128xbf16, #tpu.memory_space<vmem>>, vector<1x128xbf16>,
    %c377 = arith.constant 377 : index
    %c0_123 = arith.constant 0 : index
    %172 = vector.load %arg15[%c377, %c0_123] : memref<440x128xbf16, #tpu.memory_space<vmem>>, vector<1x128xbf16>
    %173 = vector.shape_cast %172 : vector<1x128xbf16> to vector<128xbf16>
    %174 = vector.shape_cast %78 : vector<128xbf16> to vector<1x128xbf16>
    tpu.vector_store %arg15[%c377, %c0_123], %174 {strides = array<i32>} : memref<440x128xbf16, #tpu.memory_space<vmem>>, vector<1x128xbf16>,
    %c384_124 = arith.constant 384 : index
    %c0_125 = arith.constant 0 : index
    %175 = vector.load %arg15[%c384_124, %c0_125] : memref<440x128xbf16, #tpu.memory_space<vmem>>, vector<1x128xbf16>
    %176 = vector.shape_cast %175 : vector<1x128xbf16> to vector<128xbf16>
    %177 = vector.shape_cast %78 : vector<128xbf16> to vector<1x128xbf16>
    tpu.vector_store %arg15[%c384_124, %c0_125], %177 {strides = array<i32>} : memref<440x128xbf16, #tpu.memory_space<vmem>>, vector<1x128xbf16>,
    %c401 = arith.constant 401 : index
    %c0_126 = arith.constant 0 : index
    %178 = vector.load %arg15[%c401, %c0_126] : memref<440x128xbf16, #tpu.memory_space<vmem>>, vector<1x128xbf16>
    %179 = vector.shape_cast %178 : vector<1x128xbf16> to vector<128xbf16>
    %180 = vector.shape_cast %78 : vector<128xbf16> to vector<1x128xbf16>
    tpu.vector_store %arg15[%c401, %c0_126], %180 {strides = array<i32>} : memref<440x128xbf16, #tpu.memory_space<vmem>>, vector<1x128xbf16>,
    %c408_127 = arith.constant 408 : index
    %c0_128 = arith.constant 0 : index
    %181 = vector.load %arg15[%c408_127, %c0_128] : memref<440x128xbf16, #tpu.memory_space<vmem>>, vector<1x128xbf16>
    %182 = vector.shape_cast %181 : vector<1x128xbf16> to vector<128xbf16>
    %183 = vector.shape_cast %78 : vector<128xbf16> to vector<1x128xbf16>
    tpu.vector_store %arg15[%c408_127, %c0_128], %183 {strides = array<i32>} : memref<440x128xbf16, #tpu.memory_space<vmem>>, vector<1x128xbf16>,
    %c425 = arith.constant 425 : index
    %c0_129 = arith.constant 0 : index
    %184 = vector.load %arg15[%c425, %c0_129] : memref<440x128xbf16, #tpu.memory_space<vmem>>, vector<1x128xbf16>
    %185 = vector.shape_cast %184 : vector<1x128xbf16> to vector<128xbf16>
    %186 = vector.shape_cast %78 : vector<128xbf16> to vector<1x128xbf16>
    tpu.vector_store %arg15[%c425, %c0_129], %186 {strides = array<i32>} : memref<440x128xbf16, #tpu.memory_space<vmem>>, vector<1x128xbf16>,
    %cst_130 = arith.constant 0.000000e+00 : bf16
    %187 = vector.broadcast %cst_130 : bf16 to vector<24x128xbf16>
    %c0_i32 = arith.constant 0 : i32
    %188 = arith.cmpi eq, %arg1, %c0_i32 : i32
    %189 = arith.extui %188 : i1 to i32
    %c0_i32_131 = arith.constant 0 : i32
    %190 = arith.cmpi ne, %189, %c0_i32_131 : i32
    scf.if %190 {
      %c0_208 = arith.constant 0 : index
      %c0_209 = arith.constant 0 : index
      %257 = vector.load %arg15[%c0_208, %c0_209] : memref<440x128xbf16, #tpu.memory_space<vmem>>, vector<24x128xbf16>
      tpu.vector_store %arg15[%c0_208, %c0_209], %187 {strides = array<i32>} : memref<440x128xbf16, #tpu.memory_space<vmem>>, vector<24x128xbf16>,
    } else {
    }
    %c0_i32_132 = arith.constant 0 : i32
    %191 = arith.cmpi eq, %arg1, %c0_i32_132 : i32
    %192 = arith.extui %191 : i1 to i32
    %c0_i32_133 = arith.constant 0 : i32
    %193 = arith.cmpi ne, %192, %c0_i32_133 : i32
    scf.if %193 {
      %c408_208 = arith.constant 408 : index
      %c0_209 = arith.constant 0 : index
      %257 = vector.load %arg15[%c408_208, %c0_209] : memref<440x128xbf16, #tpu.memory_space<vmem>>, vector<24x128xbf16>
      tpu.vector_store %arg15[%c408_208, %c0_209], %187 {strides = array<i32>} : memref<440x128xbf16, #tpu.memory_space<vmem>>, vector<24x128xbf16>,
    } else {
    }
    %cst_134 = arith.constant 0.000000e+00 : f32
    %194 = vector.broadcast %cst_134 : f32 to vector<384x128xf32>
    %c0_135 = arith.constant 0 : index
    %c0_136 = arith.constant 0 : index
    %195 = vector.load %arg15[%c0_135, %c0_136] : memref<440x128xbf16, #tpu.memory_space<vmem>>, vector<384x128xbf16>
    %c0_137 = arith.constant 0 : index
    %c0_138 = arith.constant 0 : index
    %c0_139 = arith.constant 0 : index
    %c0_140 = arith.constant 0 : index
    %196 = vector.load %arg8[%c0_137, %c0_138, %c0_139, %c0_140] : memref<3x3x128x128xbf16, #tpu.memory_space<vmem>>, vector<1x1x128x128xbf16>
    %197 = vector.shape_cast %196 : vector<1x1x128x128xbf16> to vector<128x128xbf16>
    %cst_141 = arith.constant dense<0.000000e+00> : vector<384x128xf32>
    %198 = tpu.matmul %195, %197, %cst_141 {dimension_numbers = #tpu.dot_dimension_numbers<[1], [0], [0], [1], [0, 0, 1, 1], [], []>} : vector<384x128xbf16>, vector<128x128xbf16>, vector<384x128xf32> -> vector<384x128xf32>
    %199 = arith.addf %194, %198 : vector<384x128xf32>
    %c1_142 = arith.constant 1 : index
    %c0_143 = arith.constant 0 : index
    %200 = vector.load %arg15[%c1_142, %c0_143] : memref<440x128xbf16, #tpu.memory_space<vmem>>, vector<384x128xbf16>
    %c0_144 = arith.constant 0 : index
    %c1_145 = arith.constant 1 : index
    %c0_146 = arith.constant 0 : index
    %c0_147 = arith.constant 0 : index
    %201 = vector.load %arg8[%c0_144, %c1_145, %c0_146, %c0_147] : memref<3x3x128x128xbf16, #tpu.memory_space<vmem>>, vector<1x1x128x128xbf16>
    %202 = vector.shape_cast %201 : vector<1x1x128x128xbf16> to vector<128x128xbf16>
    %cst_148 = arith.constant dense<0.000000e+00> : vector<384x128xf32>
    %203 = tpu.matmul %200, %202, %cst_148 {dimension_numbers = #tpu.dot_dimension_numbers<[1], [0], [0], [1], [0, 0, 1, 1], [], []>} : vector<384x128xbf16>, vector<128x128xbf16>, vector<384x128xf32> -> vector<384x128xf32>
    %204 = arith.addf %199, %203 : vector<384x128xf32>
    %c2_149 = arith.constant 2 : index
    %c0_150 = arith.constant 0 : index
    %205 = vector.load %arg15[%c2_149, %c0_150] : memref<440x128xbf16, #tpu.memory_space<vmem>>, vector<384x128xbf16>
    %c0_151 = arith.constant 0 : index
    %c2_152 = arith.constant 2 : index
    %c0_153 = arith.constant 0 : index
    %c0_154 = arith.constant 0 : index
    %206 = vector.load %arg8[%c0_151, %c2_152, %c0_153, %c0_154] : memref<3x3x128x128xbf16, #tpu.memory_space<vmem>>, vector<1x1x128x128xbf16>
    %207 = vector.shape_cast %206 : vector<1x1x128x128xbf16> to vector<128x128xbf16>
    %cst_155 = arith.constant dense<0.000000e+00> : vector<384x128xf32>
    %208 = tpu.matmul %205, %207, %cst_155 {dimension_numbers = #tpu.dot_dimension_numbers<[1], [0], [0], [1], [0, 0, 1, 1], [], []>} : vector<384x128xbf16>, vector<128x128xbf16>, vector<384x128xf32> -> vector<384x128xf32>
    %209 = arith.addf %204, %208 : vector<384x128xf32>
    %c24_156 = arith.constant 24 : index
    %c0_157 = arith.constant 0 : index
    %210 = vector.load %arg15[%c24_156, %c0_157] : memref<440x128xbf16, #tpu.memory_space<vmem>>, vector<384x128xbf16>
    %c1_158 = arith.constant 1 : index
    %c0_159 = arith.constant 0 : index
    %c0_160 = arith.constant 0 : index
    %c0_161 = arith.constant 0 : index
    %211 = vector.load %arg8[%c1_158, %c0_159, %c0_160, %c0_161] : memref<3x3x128x128xbf16, #tpu.memory_space<vmem>>, vector<1x1x128x128xbf16>
    %212 = vector.shape_cast %211 : vector<1x1x128x128xbf16> to vector<128x128xbf16>
    %cst_162 = arith.constant dense<0.000000e+00> : vector<384x128xf32>
    %213 = tpu.matmul %210, %212, %cst_162 {dimension_numbers = #tpu.dot_dimension_numbers<[1], [0], [0], [1], [0, 0, 1, 1], [], []>} : vector<384x128xbf16>, vector<128x128xbf16>, vector<384x128xf32> -> vector<384x128xf32>
    %214 = arith.addf %209, %213 : vector<384x128xf32>
    %c25_163 = arith.constant 25 : index
    %c0_164 = arith.constant 0 : index
    %215 = vector.load %arg15[%c25_163, %c0_164] : memref<440x128xbf16, #tpu.memory_space<vmem>>, vector<384x128xbf16>
    %c1_165 = arith.constant 1 : index
    %c1_166 = arith.constant 1 : index
    %c0_167 = arith.constant 0 : index
    %c0_168 = arith.constant 0 : index
    %216 = vector.load %arg8[%c1_165, %c1_166, %c0_167, %c0_168] : memref<3x3x128x128xbf16, #tpu.memory_space<vmem>>, vector<1x1x128x128xbf16>
    %217 = vector.shape_cast %216 : vector<1x1x128x128xbf16> to vector<128x128xbf16>
    %cst_169 = arith.constant dense<0.000000e+00> : vector<384x128xf32>
    %218 = tpu.matmul %215, %217, %cst_169 {dimension_numbers = #tpu.dot_dimension_numbers<[1], [0], [0], [1], [0, 0, 1, 1], [], []>} : vector<384x128xbf16>, vector<128x128xbf16>, vector<384x128xf32> -> vector<384x128xf32>
    %219 = arith.addf %214, %218 : vector<384x128xf32>
    %c26_170 = arith.constant 26 : index
    %c0_171 = arith.constant 0 : index
    %220 = vector.load %arg15[%c26_170, %c0_171] : memref<440x128xbf16, #tpu.memory_space<vmem>>, vector<384x128xbf16>
    %c1_172 = arith.constant 1 : index
    %c2_173 = arith.constant 2 : index
    %c0_174 = arith.constant 0 : index
    %c0_175 = arith.constant 0 : index
    %221 = vector.load %arg8[%c1_172, %c2_173, %c0_174, %c0_175] : memref<3x3x128x128xbf16, #tpu.memory_space<vmem>>, vector<1x1x128x128xbf16>
    %222 = vector.shape_cast %221 : vector<1x1x128x128xbf16> to vector<128x128xbf16>
    %cst_176 = arith.constant dense<0.000000e+00> : vector<384x128xf32>
    %223 = tpu.matmul %220, %222, %cst_176 {dimension_numbers = #tpu.dot_dimension_numbers<[1], [0], [0], [1], [0, 0, 1, 1], [], []>} : vector<384x128xbf16>, vector<128x128xbf16>, vector<384x128xf32> -> vector<384x128xf32>
    %224 = arith.addf %219, %223 : vector<384x128xf32>
    %c48_177 = arith.constant 48 : index
    %c0_178 = arith.constant 0 : index
    %225 = vector.load %arg15[%c48_177, %c0_178] : memref<440x128xbf16, #tpu.memory_space<vmem>>, vector<384x128xbf16>
    %c2_179 = arith.constant 2 : index
    %c0_180 = arith.constant 0 : index
    %c0_181 = arith.constant 0 : index
    %c0_182 = arith.constant 0 : index
    %226 = vector.load %arg8[%c2_179, %c0_180, %c0_181, %c0_182] : memref<3x3x128x128xbf16, #tpu.memory_space<vmem>>, vector<1x1x128x128xbf16>
    %227 = vector.shape_cast %226 : vector<1x1x128x128xbf16> to vector<128x128xbf16>
    %cst_183 = arith.constant dense<0.000000e+00> : vector<384x128xf32>
    %228 = tpu.matmul %225, %227, %cst_183 {dimension_numbers = #tpu.dot_dimension_numbers<[1], [0], [0], [1], [0, 0, 1, 1], [], []>} : vector<384x128xbf16>, vector<128x128xbf16>, vector<384x128xf32> -> vector<384x128xf32>
    %229 = arith.addf %224, %228 : vector<384x128xf32>
    %c49_184 = arith.constant 49 : index
    %c0_185 = arith.constant 0 : index
    %230 = vector.load %arg15[%c49_184, %c0_185] : memref<440x128xbf16, #tpu.memory_space<vmem>>, vector<384x128xbf16>
    %c2_186 = arith.constant 2 : index
    %c1_187 = arith.constant 1 : index
    %c0_188 = arith.constant 0 : index
    %c0_189 = arith.constant 0 : index
    %231 = vector.load %arg8[%c2_186, %c1_187, %c0_188, %c0_189] : memref<3x3x128x128xbf16, #tpu.memory_space<vmem>>, vector<1x1x128x128xbf16>
    %232 = vector.shape_cast %231 : vector<1x1x128x128xbf16> to vector<128x128xbf16>
    %cst_190 = arith.constant dense<0.000000e+00> : vector<384x128xf32>
    %233 = tpu.matmul %230, %232, %cst_190 {dimension_numbers = #tpu.dot_dimension_numbers<[1], [0], [0], [1], [0, 0, 1, 1], [], []>} : vector<384x128xbf16>, vector<128x128xbf16>, vector<384x128xf32> -> vector<384x128xf32>
    %234 = arith.addf %229, %233 : vector<384x128xf32>
    %c50_191 = arith.constant 50 : index
    %c0_192 = arith.constant 0 : index
    %235 = vector.load %arg15[%c50_191, %c0_192] : memref<440x128xbf16, #tpu.memory_space<vmem>>, vector<384x128xbf16>
    %c2_193 = arith.constant 2 : index
    %c2_194 = arith.constant 2 : index
    %c0_195 = arith.constant 0 : index
    %c0_196 = arith.constant 0 : index
    %236 = vector.load %arg8[%c2_193, %c2_194, %c0_195, %c0_196] : memref<3x3x128x128xbf16, #tpu.memory_space<vmem>>, vector<1x1x128x128xbf16>
    %237 = vector.shape_cast %236 : vector<1x1x128x128xbf16> to vector<128x128xbf16>
    %cst_197 = arith.constant dense<0.000000e+00> : vector<384x128xf32>
    %238 = tpu.matmul %235, %237, %cst_197 {dimension_numbers = #tpu.dot_dimension_numbers<[1], [0], [0], [1], [0, 0, 1, 1], [], []>} : vector<384x128xbf16>, vector<128x128xbf16>, vector<384x128xf32> -> vector<384x128xf32>
    %239 = arith.addf %234, %238 : vector<384x128xf32>
    %c0_198 = arith.constant 0 : index
    %c0_199 = arith.constant 0 : index
    %240 = vector.load %arg11[%c0_198, %c0_199] : memref<1x128xf32, #tpu.memory_space<vmem>>, vector<1x128xf32>
    %241 = vector.broadcast %240 : vector<1x128xf32> to vector<384x128xf32>
    %242 = arith.mulf %239, %241 : vector<384x128xf32>
    %c0_200 = arith.constant 0 : index
    %c0_201 = arith.constant 0 : index
    %243 = vector.load %arg12[%c0_200, %c0_201] : memref<1x128xf32, #tpu.memory_space<vmem>>, vector<1x128xf32>
    %244 = vector.broadcast %243 : vector<1x128xf32> to vector<384x128xf32>
    %245 = arith.addf %242, %244 : vector<384x128xf32>
    %cst_202 = arith.constant 0.000000e+00 : f32
    %246 = vector.broadcast %cst_202 : f32 to vector<384x128xf32>
    %247 = arith.cmpf oge, %245, %246 : vector<384x128xf32>
    %cst_203 = arith.constant 2.000000e-01 : f32
    %248 = vector.broadcast %cst_203 : f32 to vector<384x128xf32>
    %249 = arith.mulf %248, %245 : vector<384x128xf32>
    %250 = arith.select %247, %245, %249 : vector<384x128xi1>, vector<384x128xf32>
    %251 = vector.shape_cast %250 : vector<384x128xf32> to vector<16x24x128xf32>
    %252 = vector.extract_strided_slice %251 {offsets = [0, 0, 0], sizes = [16, 16, 8], strides = [1, 1, 1]} : vector<16x24x128xf32> to vector<16x16x8xf32>
    %253 = arith.truncf %252 : vector<16x16x8xf32> to vector<16x16x8xbf16>
    %c0_204 = arith.constant 0 : index
    %c0_205 = arith.constant 0 : index
    %c0_206 = arith.constant 0 : index
    %c0_207 = arith.constant 0 : index
    %254 = vector.load %arg13[%c0_204, %c0_205, %c0_206, %c0_207] : memref<1x16x16x8xbf16, #tpu.memory_space<vmem>>, vector<1x16x16x8xbf16>
    %255 = vector.shape_cast %254 : vector<1x16x16x8xbf16> to vector<16x16x8xbf16>
    %256 = vector.shape_cast %253 : vector<16x16x8xbf16> to vector<1x16x16x8xbf16>
    tpu.vector_store %arg13[%c0_204, %c0_205, %c0_206, %c0_207], %256 {strides = array<i32>} : memref<1x16x16x8xbf16, #tpu.memory_space<vmem>>, vector<1x16x16x8xbf16>,
    return
  }
  func.func @transform_0(%arg0: i32, %arg1: i32) -> (i32, i32, i32) {
    %c0_i32 = arith.constant 0 : i32
    %c0_i32_0 = arith.constant 0 : i32
    return %arg0, %arg1, %c0_i32 : i32, i32, i32
  }
  func.func @transform_1(%arg0: i32, %arg1: i32) -> (i32, i32, i32) {
    %c1_i32 = arith.constant 1 : i32
    %0 = arith.addi %arg1, %c1_i32 : i32
    %c16_i32 = arith.constant 16 : i32
    %1 = arith.muli %0, %c16_i32 : i32
    %c0_i32 = arith.constant 0 : i32
    %2 = arith.addi %1, %c0_i32 : i32
    %c0_i32_0 = arith.constant 0 : i32
    %c0_i32_1 = arith.constant 0 : i32
    return %arg0, %2, %c0_i32_0 : i32, i32, i32
  }
  func.func @transform_2(%arg0: i32, %arg1: i32) -> (i32, i32, i32) {
    %c1_i32 = arith.constant 1 : i32
    %0 = arith.addi %arg1, %c1_i32 : i32
    %c16_i32 = arith.constant 16 : i32
    %1 = arith.muli %0, %c16_i32 : i32
    %c1_i32_0 = arith.constant 1 : i32
    %2 = arith.addi %1, %c1_i32_0 : i32
    %c0_i32 = arith.constant 0 : i32
    %c0_i32_1 = arith.constant 0 : i32
    return %arg0, %2, %c0_i32 : i32, i32, i32
  }
  func.func @transform_3(%arg0: i32, %arg1: i32) -> (i32, i32, i32) {
    %c1_i32 = arith.constant 1 : i32
    %0 = arith.addi %arg1, %c1_i32 : i32
    %c16_i32 = arith.constant 16 : i32
    %1 = arith.muli %0, %c16_i32 : i32
    %c2_i32 = arith.constant 2 : i32
    %2 = arith.addi %1, %c2_i32 : i32
    %c0_i32 = arith.constant 0 : i32
    %c0_i32_0 = arith.constant 0 : i32
    return %arg0, %2, %c0_i32 : i32, i32, i32
  }
  func.func @transform_4(%arg0: i32, %arg1: i32) -> (i32, i32, i32) {
    %c1_i32 = arith.constant 1 : i32
    %0 = arith.addi %arg1, %c1_i32 : i32
    %c16_i32 = arith.constant 16 : i32
    %1 = arith.muli %0, %c16_i32 : i32
    %c3_i32 = arith.constant 3 : i32
    %2 = arith.addi %1, %c3_i32 : i32
    %c0_i32 = arith.constant 0 : i32
    %c0_i32_0 = arith.constant 0 : i32
    return %arg0, %2, %c0_i32 : i32, i32, i32
  }
  func.func @transform_5(%arg0: i32, %arg1: i32) -> (i32, i32, i32, i32) {
    %c0_i32 = arith.constant 0 : i32
    %c0_i32_0 = arith.constant 0 : i32
    %c0_i32_1 = arith.constant 0 : i32
    %c0_i32_2 = arith.constant 0 : i32
    %c0_i32_3 = arith.constant 0 : i32
    return %c0_i32, %c0_i32_0, %c0_i32_1, %c0_i32_2 : i32, i32, i32, i32
  }
  func.func @transform_6(%arg0: i32, %arg1: i32) -> (i32, i32, i32, i32) {
    %c0_i32 = arith.constant 0 : i32
    %c0_i32_0 = arith.constant 0 : i32
    %c0_i32_1 = arith.constant 0 : i32
    %c0_i32_2 = arith.constant 0 : i32
    %c0_i32_3 = arith.constant 0 : i32
    return %c0_i32, %c0_i32_0, %c0_i32_1, %c0_i32_2 : i32, i32, i32, i32
  }
  func.func @transform_7(%arg0: i32, %arg1: i32) -> (i32, i32) {
    %c0_i32 = arith.constant 0 : i32
    %c0_i32_0 = arith.constant 0 : i32
    %c0_i32_1 = arith.constant 0 : i32
    return %c0_i32, %c0_i32_0 : i32, i32
  }
  func.func @transform_8(%arg0: i32, %arg1: i32) -> (i32, i32) {
    %c0_i32 = arith.constant 0 : i32
    %c0_i32_0 = arith.constant 0 : i32
    %c0_i32_1 = arith.constant 0 : i32
    return %c0_i32, %c0_i32_0 : i32, i32
  }
  func.func @transform_9(%arg0: i32, %arg1: i32) -> (i32, i32) {
    %c0_i32 = arith.constant 0 : i32
    %c0_i32_0 = arith.constant 0 : i32
    %c0_i32_1 = arith.constant 0 : i32
    return %c0_i32, %c0_i32_0 : i32, i32
  }
  func.func @transform_10(%arg0: i32, %arg1: i32) -> (i32, i32) {
    %c0_i32 = arith.constant 0 : i32
    %c0_i32_0 = arith.constant 0 : i32
    %c0_i32_1 = arith.constant 0 : i32
    return %c0_i32, %c0_i32_0 : i32, i32
  }
  func.func @transform_11(%arg0: i32, %arg1: i32) -> (i32, i32, i32, i32) {
    %c0_i32 = arith.constant 0 : i32
    %c0_i32_0 = arith.constant 0 : i32
    %c0_i32_1 = arith.constant 0 : i32
    return %arg0, %arg1, %c0_i32, %c0_i32_0 : i32, i32, i32, i32
  }
}

</mosaic_0001>

<llo_original>
// kernel: tpu_custom_call.1
$region0: #{tpu_custom_call.1}
  #allocation0 [shape = 'u32[]', space=smem, size = 0x4, offset = 0x4, fixed_abs, tag = 'smem constant byte address 0x4 - core index']
  #allocation1 [shape = 'u32[72,128]{1,0:T(1,128)}', space=vmem, size = 0x9000, scoped, tag = 'internal scratch']
  #allocation2 [shape = 'bf16[488,8]{1,0:T(8,128)(2,1)}', space=vmem, size = 0x1e800, scoped, tag = 'scratch operand']
  #allocation3 [shape = 'bf16[440,128]{1,0:T(8,128)(2,1)}', space=vmem, size = 0x1b800, scoped, tag = 'scratch operand']
  %s0 = inlined_call_operand.vmem [shape: bf16[2,480,8], index: 0, kind: input, shape index: {}]
  %s1 = inlined_call_operand.vmem [shape: bf16[2,480,8], index: 1, kind: input, shape index: {}]
  %s2 = inlined_call_operand.vmem [shape: bf16[2,480,8], index: 2, kind: input, shape index: {}]
  %s3 = inlined_call_operand.vmem [shape: bf16[2,480,8], index: 3, kind: input, shape index: {}]
  %s4 = inlined_call_operand.vmem [shape: bf16[2,480,8], index: 4, kind: input, shape index: {}]
  %s5 = inlined_call_operand.vmem [shape: bf16[3,3,8,128], index: 5, kind: input, shape index: {}]
  %s6 = inlined_call_operand.vmem [shape: bf16[3,3,128,128], index: 6, kind: input, shape index: {}]
  %s7 = inlined_call_operand.vmem [shape: f32[1,128], index: 7, kind: input, shape index: {}]
  %s8 = inlined_call_operand.vmem [shape: f32[1,128], index: 8, kind: input, shape index: {}]
  %s9 = inlined_call_operand.vmem [shape: f32[1,128], index: 9, kind: input, shape index: {}]
  %s10 = inlined_call_operand.vmem [shape: f32[1,128], index: 10, kind: input, shape index: {}]
  %s11 = inlined_call_operand.vmem [shape: bf16[2,16,16,8], index: 11, kind: output, shape index: {}]
  %s12 = sld [smem:[#allocation0]]
  $region81: #{tpu_custom_call.1} parent=0
    _
  %s14 = ssub.s32 1, %s12
  %s15 = scalar_select 0, %s14, %s12
  loop: start=0, step=1, limit=4
  $region2: #{tpu_custom_call.1} parent=0 // loop_pre_header
    _
  $region3: #{tpu_custom_call.1} parent=0 // loop_header
    %s17 = sphi 0, %s21
    %p18 = scmp.ge.s32.totalorder %s17, 4
    %s24 = sphi 0, %s36
    %s25 = sphi 0, %s32
    %s26 = sphi 0, %s24
    %s27 = sphi 0, %s25
    %s28 = sphi 0, %s26
    %s29 = sphi 0, %s27
    %s41 = sphi 0, %s43
    %s44 = sphi 0, %s41
    %s45 = sphi 0, %s44
    %s61 = sphi 0, %s45
    %s73 = sphi 0, %s75
    %s76 = sphi 0, %s73
    %s77 = sphi 0, %s76
    %s93 = sphi 0, %s77
    %s107 = sphi 0, %s109
    %s110 = sphi 0, %s107
    %s111 = sphi 0, %s110
    %s127 = sphi 0, %s111
    %s141 = sphi 0, %s143
    %s144 = sphi 0, %s141
    %s145 = sphi 0, %s144
    %s161 = sphi 0, %s145
    %s175 = sphi 0, %s177
    %s178 = sphi 0, %s175
    %s179 = sphi 0, %s178
    %s195 = sphi 0, %s179
    %s199 = sphi 0, %s199
    %s201 = sphi 0, %s199
    %s202 = sphi 0, %s201
    %s216 = sphi 0, %s202
    %s220 = sphi 0, %s220
    %s222 = sphi 0, %s220
    %s223 = sphi 0, %s222
    %s237 = sphi 0, %s223
    %s241 = sphi 0, %s241
    %s243 = sphi 0, %s241
    %s244 = sphi 0, %s243
    %s258 = sphi 0, %s244
    %s262 = sphi 0, %s262
    %s264 = sphi 0, %s262
    %s265 = sphi 0, %s264
    %s279 = sphi 0, %s265
    %s283 = sphi 0, %s283
    %s285 = sphi 0, %s283
    %s286 = sphi 0, %s285
    %s300 = sphi 0, %s286
    %s304 = sphi 0, %s304
    %s306 = sphi 0, %s304
    %s307 = sphi 0, %s306
    %s321 = sphi 0, %s307
    %s329 = sphi 0, %s331
    %s332 = sphi 0, %s329
    %s333 = sphi 0, %s332
    %s349 = sphi 0, %s333
  $region4: #{tpu_custom_call.1} parent=0 // loop_header_branch
    %20 = sbr.rel (%p18) target = $region8
  $region5: #{tpu_custom_call.1} parent=0 // loop_body
    %s22 = ssub.s32 %s17, 1
    %s23 = ssub.s32 %s17, 2
    %s30 = sadd.s32 1, %s25
    %p31 = scmp.ge.s32.totalorder %s30, 1
    %s32 = scalar_select %p31, 0, %s30
    %s33 = sadd.s32 1, %s24
    %s34 = scalar_select %p31, %s33, %s24
    %p35 = scmp.ge.s32.totalorder %s34, 2
    %s36 = scalar_select %p35, 0, %s34
    %s37 = ssub.s32 %s24, %s36
    %s38 = ssub.s32 %s25, %s32
    %s39 = sor.u32 %s37, %s38
    %p40 = scmp.eq.s32.totalorder %s39, 0
    %s42 = sadd.s32 %s41, 1
    %s43 = scalar_select %p40, %s41, %s42
    %p46 = pneg %p40
    %p47 = scmp.eq.s32.totalorder %s17, 1
    %p48 = por %p46, %p47
    %p49 = scmp.ne.s32.totalorder %s41, %s44
    %p50 = scmp.eq.s32.totalorder %s17, 0
    %p51 = por %p49, %p50
    %p52 = scmp.ne.s32.totalorder %s41, %s44
    %p53 = scmp.eq.s32.totalorder %s22, 1
    %p54 = por %p52, %p53
    %p55 = scmp.ne.s32.totalorder %s44, %s45
    %p56 = scmp.eq.s32.totalorder %s22, 0
    %p57 = por %p55, %p56
    %p58 = scmp.ne.s32.totalorder %s44, %s45
    %p59 = scmp.eq.s32.totalorder %s23, 1
    %p60 = por %p58, %p59
    %p62 = scmp.ne.s32.totalorder %s45, %s61
    %p63 = scmp.eq.s32.totalorder %s23, 0
    %p64 = por %p62, %p63
    %s65 = sadd.s32 %s25, 1
    %s66 = smul.u32 %s65, 16
    %s67 = sadd.s32 %s32, 1
    %s68 = smul.u32 %s67, 16
    %s69 = ssub.s32 %s24, %s36
    %s70 = ssub.s32 %s66, %s68
    %s71 = sor.u32 %s69, %s70
    %p72 = scmp.eq.s32.totalorder %s71, 0
    %s74 = sadd.s32 %s73, 1
    %s75 = scalar_select %p72, %s73, %s74
    %p78 = pneg %p72
    %p79 = scmp.eq.s32.totalorder %s17, 1
    %p80 = por %p78, %p79
    %p81 = scmp.ne.s32.totalorder %s73, %s76
    %p82 = scmp.eq.s32.totalorder %s17, 0
    %p83 = por %p81, %p82
    %p84 = scmp.ne.s32.totalorder %s73, %s76
    %p85 = scmp.eq.s32.totalorder %s22, 1
    %p86 = por %p84, %p85
    %p87 = scmp.ne.s32.totalorder %s76, %s77
    %p88 = scmp.eq.s32.totalorder %s22, 0
    %p89 = por %p87, %p88
    %p90 = scmp.ne.s32.totalorder %s76, %s77
    %p91 = scmp.eq.s32.totalorder %s23, 1
    %p92 = por %p90, %p91
    %p94 = scmp.ne.s32.totalorder %s77, %s93
    %p95 = scmp.eq.s32.totalorder %s23, 0
    %p96 = por %p94, %p95
    %s97 = sadd.s32 %s25, 1
    %s98 = smul.u32 %s97, 16
    %s99 = sadd.s32 %s98, 1
    %s100 = sadd.s32 %s32, 1
    %s101 = smul.u32 %s100, 16
    %s102 = sadd.s32 %s101, 1
    %s103 = ssub.s32 %s24, %s36
    %s104 = ssub.s32 %s99, %s102
    %s105 = sor.u32 %s103, %s104
    %p106 = scmp.eq.s32.totalorder %s105, 0
    %s108 = sadd.s32 %s107, 1
    %s109 = scalar_select %p106, %s107, %s108
    %p112 = pneg %p106
    %p113 = scmp.eq.s32.totalorder %s17, 1
    %p114 = por %p112, %p113
    %p115 = scmp.ne.s32.totalorder %s107, %s110
    %p116 = scmp.eq.s32.totalorder %s17, 0
    %p117 = por %p115, %p116
    %p118 = scmp.ne.s32.totalorder %s107, %s110
    %p119 = scmp.eq.s32.totalorder %s22, 1
    %p120 = por %p118, %p119
    %p121 = scmp.ne.s32.totalorder %s110, %s111
    %p122 = scmp.eq.s32.totalorder %s22, 0
    %p123 = por %p121, %p122
    %p124 = scmp.ne.s32.totalorder %s110, %s111
    %p125 = scmp.eq.s32.totalorder %s23, 1
    %p126 = por %p124, %p125
    %p128 = scmp.ne.s32.totalorder %s111, %s127
    %p129 = scmp.eq.s32.totalorder %s23, 0
    %p130 = por %p128, %p129
    %s131 = sadd.s32 %s25, 1
    %s132 = smul.u32 %s131, 16
    %s133 = sadd.s32 %s132, 2
    %s134 = sadd.s32 %s32, 1
    %s135 = smul.u32 %s134, 16
    %s136 = sadd.s32 %s135, 2
    %s137 = ssub.s32 %s24, %s36
    %s138 = ssub.s32 %s133, %s136
    %s139 = sor.u32 %s137, %s138
    %p140 = scmp.eq.s32.totalorder %s139, 0
    %s142 = sadd.s32 %s141, 1
    %s143 = scalar_select %p140, %s141, %s142
    %p146 = pneg %p140
    %p147 = scmp.eq.s32.totalorder %s17, 1
    %p148 = por %p146, %p147
    %p149 = scmp.ne.s32.totalorder %s141, %s144
    %p150 = scmp.eq.s32.totalorder %s17, 0
    %p151 = por %p149, %p150
    %p152 = scmp.ne.s32.totalorder %s141, %s144
    %p153 = scmp.eq.s32.totalorder %s22, 1
    %p154 = por %p152, %p153
    %p155 = scmp.ne.s32.totalorder %s144, %s145
    %p156 = scmp.eq.s32.totalorder %s22, 0
    %p157 = por %p155, %p156
    %p158 = scmp.ne.s32.totalorder %s144, %s145
    %p159 = scmp.eq.s32.totalorder %s23, 1
    %p160 = por %p158, %p159
    %p162 = scmp.ne.s32.totalorder %s145, %s161
    %p163 = scmp.eq.s32.totalorder %s23, 0
    %p164 = por %p162, %p163
    %s165 = sadd.s32 %s25, 1
    %s166 = smul.u32 %s165, 16
    %s167 = sadd.s32 %s166, 3
    %s168 = sadd.s32 %s32, 1
    %s169 = smul.u32 %s168, 16
    %s170 = sadd.s32 %s169, 3
    %s171 = ssub.s32 %s24, %s36
    %s172 = ssub.s32 %s167, %s170
    %s173 = sor.u32 %s171, %s172
    %p174 = scmp.eq.s32.totalorder %s173, 0
    %s176 = sadd.s32 %s175, 1
    %s177 = scalar_select %p174, %s175, %s176
    %p180 = pneg %p174
    %p181 = scmp.eq.s32.totalorder %s17, 1
    %p182 = por %p180, %p181
    %p183 = scmp.ne.s32.totalorder %s175, %s178
    %p184 = scmp.eq.s32.totalorder %s17, 0
    %p185 = por %p183, %p184
    %p186 = scmp.ne.s32.totalorder %s175, %s178
    %p187 = scmp.eq.s32.totalorder %s22, 1
    %p188 = por %p186, %p187
    %p189 = scmp.ne.s32.totalorder %s178, %s179
    %p190 = scmp.eq.s32.totalorder %s22, 0
    %p191 = por %p189, %p190
    %p192 = scmp.ne.s32.totalorder %s178, %s179
    %p193 = scmp.eq.s32.totalorder %s23, 1
    %p194 = por %p192, %p193
    %p196 = scmp.ne.s32.totalorder %s179, %s195
    %p197 = scmp.eq.s32.totalorder %s23, 0
    %p198 = por %p196, %p197
    %s200 = sadd.s32 %s199, 1
    %p203 = scmp.eq.s32.totalorder %s17, 1
    %p204 = scmp.ne.s32.totalorder %s199, %s201
    %p205 = scmp.eq.s32.totalorder %s17, 0
    %p206 = por %p204, %p205
    %p207 = scmp.ne.s32.totalorder %s199, %s201
    %p208 = scmp.eq.s32.totalorder %s22, 1
    %p209 = por %p207, %p208
    %p210 = scmp.ne.s32.totalorder %s201, %s202
    %p211 = scmp.eq.s32.totalorder %s22, 0
    %p212 = por %p210, %p211
    %p213 = scmp.ne.s32.totalorder %s201, %s202
    %p214 = scmp.eq.s32.totalorder %s23, 1
    %p215 = por %p213, %p214
    %p217 = scmp.ne.s32.totalorder %s202, %s216
    %p218 = scmp.eq.s32.totalorder %s23, 0
    %p219 = por %p217, %p218
    %s221 = sadd.s32 %s220, 1
    %p224 = scmp.eq.s32.totalorder %s17, 1
    %p225 = scmp.ne.s32.totalorder %s220, %s222
    %p226 = scmp.eq.s32.totalorder %s17, 0
    %p227 = por %p225, %p226
    %p228 = scmp.ne.s32.totalorder %s220, %s222
    %p229 = scmp.eq.s32.totalorder %s22, 1
    %p230 = por %p228, %p229
    %p231 = scmp.ne.s32.totalorder %s222, %s223
    %p232 = scmp.eq.s32.totalorder %s22, 0
    %p233 = por %p231, %p232
    %p234 = scmp.ne.s32.totalorder %s222, %s223
    %p235 = scmp.eq.s32.totalorder %s23, 1
    %p236 = por %p234, %p235
    %p238 = scmp.ne.s32.totalorder %s223, %s237
    %p239 = scmp.eq.s32.totalorder %s23, 0
    %p240 = por %p238, %p239
    %s242 = sadd.s32 %s241, 1
    %p245 = scmp.eq.s32.totalorder %s17, 1
    %p246 = scmp.ne.s32.totalorder %s241, %s243
    %p247 = scmp.eq.s32.totalorder %s17, 0
    %p248 = por %p246, %p247
    %p249 = scmp.ne.s32.totalorder %s241, %s243
    %p250 = scmp.eq.s32.totalorder %s22, 1
    %p251 = por %p249, %p250
    %p252 = scmp.ne.s32.totalorder %s243, %s244
    %p253 = scmp.eq.s32.totalorder %s22, 0
    %p254 = por %p252, %p253
    %p255 = scmp.ne.s32.totalorder %s243, %s244
    %p256 = scmp.eq.s32.totalorder %s23, 1
    %p257 = por %p255, %p256
    %p259 = scmp.ne.s32.totalorder %s244, %s258
    %p260 = scmp.eq.s32.totalorder %s23, 0
    %p261 = por %p259, %p260
    %s263 = sadd.s32 %s262, 1
    %p266 = scmp.eq.s32.totalorder %s17, 1
    %p267 = scmp.ne.s32.totalorder %s262, %s264
    %p268 = scmp.eq.s32.totalorder %s17, 0
    %p269 = por %p267, %p268
    %p270 = scmp.ne.s32.totalorder %s262, %s264
    %p271 = scmp.eq.s32.totalorder %s22, 1
    %p272 = por %p270, %p271
    %p273 = scmp.ne.s32.totalorder %s264, %s265
    %p274 = scmp.eq.s32.totalorder %s22, 0
    %p275 = por %p273, %p274
    %p276 = scmp.ne.s32.totalorder %s264, %s265
    %p277 = scmp.eq.s32.totalorder %s23, 1
    %p278 = por %p276, %p277
    %p280 = scmp.ne.s32.totalorder %s265, %s279
    %p281 = scmp.eq.s32.totalorder %s23, 0
    %p282 = por %p280, %p281
    %s284 = sadd.s32 %s283, 1
    %p287 = scmp.eq.s32.totalorder %s17, 1
    %p288 = scmp.ne.s32.totalorder %s283, %s285
    %p289 = scmp.eq.s32.totalorder %s17, 0
    %p290 = por %p288, %p289
    %p291 = scmp.ne.s32.totalorder %s283, %s285
    %p292 = scmp.eq.s32.totalorder %s22, 1
    %p293 = por %p291, %p292
    %p294 = scmp.ne.s32.totalorder %s285, %s286
    %p295 = scmp.eq.s32.totalorder %s22, 0
    %p296 = por %p294, %p295
    %p297 = scmp.ne.s32.totalorder %s285, %s286
    %p298 = scmp.eq.s32.totalorder %s23, 1
    %p299 = por %p297, %p298
    %p301 = scmp.ne.s32.totalorder %s286, %s300
    %p302 = scmp.eq.s32.totalorder %s23, 0
    %p303 = por %p301, %p302
    %s305 = sadd.s32 %s304, 1
    %p308 = scmp.eq.s32.totalorder %s17, 1
    %p309 = scmp.ne.s32.totalorder %s304, %s306
    %p310 = scmp.eq.s32.totalorder %s17, 0
    %p311 = por %p309, %p310
    %p312 = scmp.ne.s32.totalorder %s304, %s306
    %p313 = scmp.eq.s32.totalorder %s22, 1
    %p314 = por %p312, %p313
    %p315 = scmp.ne.s32.totalorder %s306, %s307
    %p316 = scmp.eq.s32.totalorder %s22, 0
    %p317 = por %p315, %p316
    %p318 = scmp.ne.s32.totalorder %s306, %s307
    %p319 = scmp.eq.s32.totalorder %s23, 1
    %p320 = por %p318, %p319
    %p322 = scmp.ne.s32.totalorder %s307, %s321
    %p323 = scmp.eq.s32.totalorder %s23, 0
    %p324 = por %p322, %p323
    %s325 = ssub.s32 %s24, %s36
    %s326 = ssub.s32 %s25, %s32
    %s327 = sor.u32 %s325, %s326
    %p328 = scmp.eq.s32.totalorder %s327, 0
    %s330 = sadd.s32 %s329, 1
    %s331 = scalar_select %p328, %s329, %s330
    %p334 = pneg %p328
    %p335 = scmp.eq.s32.totalorder %s17, 1
    %p336 = por %p334, %p335
    %p337 = scmp.ne.s32.totalorder %s329, %s332
    %p338 = scmp.eq.s32.totalorder %s17, 0
    %p339 = por %p337, %p338
    %p340 = scmp.ne.s32.totalorder %s329, %s332
    %p341 = scmp.eq.s32.totalorder %s22, 1
    %p342 = por %p340, %p341
    %p343 = scmp.ne.s32.totalorder %s332, %s333
    %p344 = scmp.eq.s32.totalorder %s22, 0
    %p345 = por %p343, %p344
    %p346 = scmp.ne.s32.totalorder %s332, %s333
    %p347 = scmp.eq.s32.totalorder %s23, 1
    %p348 = por %p346, %p347
    %p350 = scmp.ne.s32.totalorder %s333, %s349
    %p351 = scmp.eq.s32.totalorder %s23, 0
    %p352 = por %p350, %p351
    %p353 = scmp.le.s32.totalorder 1, %s17
    %p354 = scmp.lt.s32.totalorder %s17, 3
    %p355 = pnand %p353, %p354
    %p356 = pneg %p355
    // Predicated region
    $region9: #{tpu_custom_call.1} parent=5 // pred_check
      _
    $region10: #{tpu_custom_call.1} parent=5 // pred_check_branch
      %358 = sbr.rel (%p355) target = $region12
    $region11: #{tpu_custom_call.1} parent=5 // pred_region
      %s359 = ssub.s32 %s17, 1
      // Predicated region
      $region13: #{tpu_custom_call.1} parent=11 // pred_check
        %p360 = pneg %p212
      $region14: #{tpu_custom_call.1} parent=11 // pred_check_branch
        %362 = sbr.rel (%p360) target = $region16
      $region15: #{tpu_custom_call.1} parent=11 // pred_region
        _
      $region16: #{tpu_custom_call.1} parent=11 // pred_fallthru
        _
      // Predicated region
      $region17: #{tpu_custom_call.1} parent=11 // pred_check
        %p363 = pneg %p233
      $region18: #{tpu_custom_call.1} parent=11 // pred_check_branch
        %365 = sbr.rel (%p363) target = $region20
      $region19: #{tpu_custom_call.1} parent=11 // pred_region
        _
      $region20: #{tpu_custom_call.1} parent=11 // pred_fallthru
        _
      // Predicated region
      $region21: #{tpu_custom_call.1} parent=11 // pred_check
        %p366 = pneg %p254
      $region22: #{tpu_custom_call.1} parent=11 // pred_check_branch
        %368 = sbr.rel (%p366) target = $region24
      $region23: #{tpu_custom_call.1} parent=11 // pred_region
        _
      $region24: #{tpu_custom_call.1} parent=11 // pred_fallthru
        _
      // Predicated region
      $region25: #{tpu_custom_call.1} parent=11 // pred_check
        %p369 = pneg %p275
      $region26: #{tpu_custom_call.1} parent=11 // pred_check_branch
        %371 = sbr.rel (%p369) target = $region28
      $region27: #{tpu_custom_call.1} parent=11 // pred_region
        _
      $region28: #{tpu_custom_call.1} parent=11 // pred_fallthru
        _
      // Predicated region
      $region29: #{tpu_custom_call.1} parent=11 // pred_check
        %p372 = pneg %p296
      $region30: #{tpu_custom_call.1} parent=11 // pred_check_branch
        %374 = sbr.rel (%p372) target = $region32
      $region31: #{tpu_custom_call.1} parent=11 // pred_region
        _
      $region32: #{tpu_custom_call.1} parent=11 // pred_fallthru
        _
      // Predicated region
      $region33: #{tpu_custom_call.1} parent=11 // pred_check
        %p375 = pneg %p317
      $region34: #{tpu_custom_call.1} parent=11 // pred_check_branch
        %377 = sbr.rel (%p375) target = $region36
      $region35: #{tpu_custom_call.1} parent=11 // pred_region
        _
      $region36: #{tpu_custom_call.1} parent=11 // pred_fallthru
        _
    $region12: #{tpu_custom_call.1} parent=5 // pred_fallthru
      _
    %p378 = scmp.lt.s32.totalorder %s17, 2
    // Predicated region
    $region37: #{tpu_custom_call.1} parent=5 // pred_check
      %p379 = pneg %p378
    $region38: #{tpu_custom_call.1} parent=5 // pred_check_branch
      %381 = sbr.rel (%p379) target = $region40
    $region39: #{tpu_custom_call.1} parent=5 // pred_region
      // Predicated region
      $region41: #{tpu_custom_call.1} parent=39 // pred_check
        %p382 = pneg %p51
      $region42: #{tpu_custom_call.1} parent=39 // pred_check_branch
        %384 = sbr.rel (%p382) target = $region44
      $region43: #{tpu_custom_call.1} parent=39 // pred_region
        %s385 = smul.u32 48, %s25
        %s386 = ssub.s32 60, %s385
        %p387 = scmp.lt.s32.totalorder %s386, 48
        %s388 = scalar_select %p387, %s386, 48
        %s389 = smul.u32 4, %s388
        %p390 = scmp.lt.s32.totalorder %s24, 1
        %s391 = scalar_select %p390, %s24, 1
        %p392 = scmp.lt.s32.totalorder %s385, 59
        %s393 = scalar_select %p392, %s385, 59
        %s394 = smul.addr %s391, 60
        %s395 = sadd.s32 %s393, %s394
        %s396 = smul.addr %s395, 4
        %s397 = scalar_lea.vmem %s0, %s396
        %s398 = smul.u32 48, %s25
        %s399 = ssub.s32 60, %s398
        %p400 = scmp.lt.s32.totalorder %s399, 48
        %s401 = scalar_select %p400, %s399, 48
        %s402 = smul.u32 4, %s401
      $region44: #{tpu_custom_call.1} parent=39 // pred_fallthru
        _
      // Predicated region
      $region45: #{tpu_custom_call.1} parent=39 // pred_check
        %p403 = pneg %p83
      $region46: #{tpu_custom_call.1} parent=39 // pred_check_branch
        %405 = sbr.rel (%p403) target = $region48
      $region47: #{tpu_custom_call.1} parent=39 // pred_region
        %s406 = sadd.s32 %s25, 1
        %s407 = smul.u32 %s406, 16
        %s408 = smul.u32 3, %s407
        %p409 = scmp.lt.s32.totalorder %s24, 1
        %s410 = scalar_select %p409, %s24, 1
        %p411 = scmp.lt.s32.totalorder %s408, 59
        %s412 = scalar_select %p411, %s408, 59
        %s413 = smul.addr %s410, 60
        %s414 = sadd.s32 %s412, %s413
        %s415 = smul.addr %s414, 4
        %s416 = scalar_lea.vmem %s1, %s415
        %s417 = sadd.s32 %s25, 1
        %s418 = smul.u32 %s417, 16
        %s419 = smul.u32 3, %s418
      $region48: #{tpu_custom_call.1} parent=39 // pred_fallthru
        _
      // Predicated region
      $region49: #{tpu_custom_call.1} parent=39 // pred_check
        %p420 = pneg %p117
      $region50: #{tpu_custom_call.1} parent=39 // pred_check_branch
        %422 = sbr.rel (%p420) target = $region52
      $region51: #{tpu_custom_call.1} parent=39 // pred_region
        %s423 = sadd.s32 %s25, 1
        %s424 = smul.u32 %s423, 16
        %s425 = sadd.s32 %s424, 1
        %s426 = smul.u32 3, %s425
        %p427 = scmp.lt.s32.totalorder %s24, 1
        %s428 = scalar_select %p427, %s24, 1
        %p429 = scmp.lt.s32.totalorder %s426, 59
        %s430 = scalar_select %p429, %s426, 59
        %s431 = smul.addr %s428, 60
        %s432 = sadd.s32 %s430, %s431
        %s433 = smul.addr %s432, 4
        %s434 = scalar_lea.vmem %s2, %s433
        %s435 = sadd.s32 %s25, 1
        %s436 = smul.u32 %s435, 16
        %s437 = sadd.s32 %s436, 1
        %s438 = smul.u32 3, %s437
      $region52: #{tpu_custom_call.1} parent=39 // pred_fallthru
        _
      // Predicated region
      $region53: #{tpu_custom_call.1} parent=39 // pred_check
        %p439 = pneg %p151
      $region54: #{tpu_custom_call.1} parent=39 // pred_check_branch
        %441 = sbr.rel (%p439) target = $region56
      $region55: #{tpu_custom_call.1} parent=39 // pred_region
        %s442 = sadd.s32 %s25, 1
        %s443 = smul.u32 %s442, 16
        %s444 = sadd.s32 %s443, 2
        %s445 = smul.u32 3, %s444
        %p446 = scmp.lt.s32.totalorder %s24, 1
        %s447 = scalar_select %p446, %s24, 1
        %p448 = scmp.lt.s32.totalorder %s445, 59
        %s449 = scalar_select %p448, %s445, 59
        %s450 = smul.addr %s447, 60
        %s451 = sadd.s32 %s449, %s450
        %s452 = smul.addr %s451, 4
        %s453 = scalar_lea.vmem %s3, %s452
        %s454 = sadd.s32 %s25, 1
        %s455 = smul.u32 %s454, 16
        %s456 = sadd.s32 %s455, 2
        %s457 = smul.u32 3, %s456
      $region56: #{tpu_custom_call.1} parent=39 // pred_fallthru
        _
      // Predicated region
      $region57: #{tpu_custom_call.1} parent=39 // pred_check
        %p458 = pneg %p185
      $region58: #{tpu_custom_call.1} parent=39 // pred_check_branch
        %460 = sbr.rel (%p458) target = $region60
      $region59: #{tpu_custom_call.1} parent=39 // pred_region
        %s461 = sadd.s32 %s25, 1
        %s462 = smul.u32 %s461, 16
        %s463 = sadd.s32 %s462, 3
        %s464 = smul.u32 3, %s463
        %p465 = scmp.lt.s32.totalorder %s24, 1
        %s466 = scalar_select %p465, %s24, 1
        %p467 = scmp.lt.s32.totalorder %s464, 59
        %s468 = scalar_select %p467, %s464, 59
        %s469 = smul.addr %s466, 60
        %s470 = sadd.s32 %s468, %s469
        %s471 = smul.addr %s470, 4
        %s472 = scalar_lea.vmem %s4, %s471
        %s473 = sadd.s32 %s25, 1
        %s474 = smul.u32 %s473, 16
        %s475 = sadd.s32 %s474, 3
        %s476 = smul.u32 3, %s475
      $region60: #{tpu_custom_call.1} parent=39 // pred_fallthru
        _
    $region40: #{tpu_custom_call.1} parent=5 // pred_fallthru
      _
    %p477 = scmp.le.s32.totalorder 1, %s17
    %p478 = scmp.lt.s32.totalorder %s17, 3
    %p479 = pnand %p477, %p478
    %p480 = pneg %p479
    // Predicated region
    $region61: #{tpu_custom_call.1} parent=5 // pred_check
      _
    $region62: #{tpu_custom_call.1} parent=5 // pred_check_branch
      %482 = sbr.rel (%p479) target = $region64
    $region63: #{tpu_custom_call.1} parent=5 // pred_region
      %s483 = ssub.s32 %s17, 1
      %s484 = smul.u32 48, %s27
      %s485 = ssub.s32 60, %s484
      %p486 = scmp.lt.s32.totalorder %s485, 48
      %s487 = scalar_select %p486, %s485, 48
      %s488 = smul.u32 4, %s487
      %p489 = scmp.lt.s32.totalorder %s26, 1
      %s490 = scalar_select %p489, %s26, 1
      %p491 = scmp.lt.s32.totalorder %s484, 59
      %s492 = scalar_select %p491, %s484, 59
      %s493 = smul.addr %s490, 60
      %s494 = sadd.s32 %s492, %s493
      %s495 = smul.addr %s494, 4
      %s496 = scalar_lea.vmem %s0, %s495
      %p497 = pneg %p57
      %p498 = pneg %p54
      %s499 = sadd.s32 %s27, 1
      %s500 = smul.u32 %s499, 16
      %s501 = smul.u32 3, %s500
      %p502 = scmp.lt.s32.totalorder %s26, 1
      %s503 = scalar_select %p502, %s26, 1
      %p504 = scmp.lt.s32.totalorder %s501, 59
      %s505 = scalar_select %p504, %s501, 59
      %s506 = smul.addr %s503, 60
      %s507 = sadd.s32 %s505, %s506
      %s508 = smul.addr %s507, 4
      %s509 = scalar_lea.vmem %s1, %s508
      %p510 = pneg %p89
      %p511 = pneg %p86
      %s512 = sadd.s32 %s27, 1
      %s513 = smul.u32 %s512, 16
      %s514 = sadd.s32 %s513, 1
      %s515 = smul.u32 3, %s514
      %p516 = scmp.lt.s32.totalorder %s26, 1
      %s517 = scalar_select %p516, %s26, 1
      %p518 = scmp.lt.s32.totalorder %s515, 59
      %s519 = scalar_select %p518, %s515, 59
      %s520 = smul.addr %s517, 60
      %s521 = sadd.s32 %s519, %s520
      %s522 = smul.addr %s521, 4
      %s523 = scalar_lea.vmem %s2, %s522
      %p524 = pneg %p123
      %p525 = pneg %p120
      %s526 = sadd.s32 %s27, 1
      %s527 = smul.u32 %s526, 16
      %s528 = sadd.s32 %s527, 2
      %s529 = smul.u32 3, %s528
      %p530 = scmp.lt.s32.totalorder %s26, 1
      %s531 = scalar_select %p530, %s26, 1
      %p532 = scmp.lt.s32.totalorder %s529, 59
      %s533 = scalar_select %p532, %s529, 59
      %s534 = smul.addr %s531, 60
      %s535 = sadd.s32 %s533, %s534
      %s536 = smul.addr %s535, 4
      %s537 = scalar_lea.vmem %s3, %s536
      %p538 = pneg %p157
      %p539 = pneg %p154
      %s540 = sadd.s32 %s27, 1
      %s541 = smul.u32 %s540, 16
      %s542 = sadd.s32 %s541, 3
      %s543 = smul.u32 3, %s542
      %p544 = scmp.lt.s32.totalorder %s26, 1
      %s545 = scalar_select %p544, %s26, 1
      %p546 = scmp.lt.s32.totalorder %s543, 59
      %s547 = scalar_select %p546, %s543, 59
      %s548 = smul.addr %s545, 60
      %s549 = sadd.s32 %s547, %s548
      %s550 = smul.addr %s549, 4
      %s551 = scalar_lea.vmem %s4, %s550
      %p552 = pneg %p191
      %p553 = pneg %p188
      %p554 = pneg %p212
      %p555 = pneg %p209
      %p556 = pneg %p233
      %p557 = pneg %p230
      %p558 = pneg %p254
      %p559 = pneg %p251
      %p560 = pneg %p275
      %p561 = pneg %p272
      %p562 = pneg %p296
      %p563 = pneg %p293
      %p564 = pneg %p317
      %p565 = pneg %p314
      %p566 = pneg %p345
      %p567 = pneg %p342
      %s568 = smul.u32 16, %s27
      %p569 = scmp.lt.s32.totalorder %s26, 1
      %s570 = scalar_select %p569, %s26, 1
      %p571 = scmp.lt.s32.totalorder %s568, 15
      %s572 = scalar_select %p571, %s568, 15
      %s573 = smul.addr %s572, 2
      %s574 = smul.addr %s570, 32
      %s575 = sadd.s32 %s573, %s574
      %s576 = smul.addr %s575, 4
      %s577 = scalar_lea.vmem %s11, %s576
      %s578 = smul.u32 48, %s27
      %s579 = ssub.s32 60, %s578
      %p580 = scmp.lt.s32.totalorder %s579, 48
      %s581 = scalar_select %p580, %s579, 48
      %s582 = smul.u32 4, %s581
      %p583 = scmp.lt.s32.totalorder %s26, 1
      %s584 = scalar_select %p583, %s26, 1
      %p585 = scmp.lt.s32.totalorder %s578, 59
      %s586 = scalar_select %p585, %s578, 59
      %s587 = smul.addr %s584, 60
      %s588 = sadd.s32 %s586, %s587
      %s589 = smul.addr %s588, 4
      %s590 = scalar_lea.vmem %s0, %s589
      %s591 = smul.u32 48, %s27
      %s592 = ssub.s32 60, %s591
      %p593 = scmp.lt.s32.totalorder %s592, 48
      %s594 = scalar_select %p593, %s592, 48
      %s595 = smul.u32 4, %s594
      %s596 = sadd.s32 %s27, 1
      %s597 = smul.u32 %s596, 16
      %s598 = smul.u32 3, %s597
      %p599 = scmp.lt.s32.totalorder %s26, 1
      %s600 = scalar_select %p599, %s26, 1
      %p601 = scmp.lt.s32.totalorder %s598, 59
      %s602 = scalar_select %p601, %s598, 59
      %s603 = smul.addr %s600, 60
      %s604 = sadd.s32 %s602, %s603
      %s605 = smul.addr %s604, 4
      %s606 = scalar_lea.vmem %s1, %s605
      %s607 = sadd.s32 %s27, 1
      %s608 = smul.u32 %s607, 16
      %s609 = smul.u32 3, %s608
      %s610 = sadd.s32 %s27, 1
      %s611 = smul.u32 %s610, 16
      %s612 = sadd.s32 %s611, 1
      %s613 = smul.u32 3, %s612
      %p614 = scmp.lt.s32.totalorder %s26, 1
      %s615 = scalar_select %p614, %s26, 1
      %p616 = scmp.lt.s32.totalorder %s613, 59
      %s617 = scalar_select %p616, %s613, 59
      %s618 = smul.addr %s615, 60
      %s619 = sadd.s32 %s617, %s618
      %s620 = smul.addr %s619, 4
      %s621 = scalar_lea.vmem %s2, %s620
      %s622 = sadd.s32 %s27, 1
      %s623 = smul.u32 %s622, 16
      %s624 = sadd.s32 %s623, 1
      %s625 = smul.u32 3, %s624
      %s626 = sadd.s32 %s27, 1
      %s627 = smul.u32 %s626, 16
      %s628 = sadd.s32 %s627, 2
      %s629 = smul.u32 3, %s628
      %p630 = scmp.lt.s32.totalorder %s26, 1
      %s631 = scalar_select %p630, %s26, 1
      %p632 = scmp.lt.s32.totalorder %s629, 59
      %s633 = scalar_select %p632, %s629, 59
      %s634 = smul.addr %s631, 60
      %s635 = sadd.s32 %s633, %s634
      %s636 = smul.addr %s635, 4
      %s637 = scalar_lea.vmem %s3, %s636
      %s638 = sadd.s32 %s27, 1
      %s639 = smul.u32 %s638, 16
      %s640 = sadd.s32 %s639, 2
      %s641 = smul.u32 3, %s640
      %s642 = sadd.s32 %s27, 1
      %s643 = smul.u32 %s642, 16
      %s644 = sadd.s32 %s643, 3
      %s645 = smul.u32 3, %s644
      %p646 = scmp.lt.s32.totalorder %s26, 1
      %s647 = scalar_select %p646, %s26, 1
      %p648 = scmp.lt.s32.totalorder %s645, 59
      %s649 = scalar_select %p648, %s645, 59
      %s650 = smul.addr %s647, 60
      %s651 = sadd.s32 %s649, %s650
      %s652 = smul.addr %s651, 4
      %s653 = scalar_lea.vmem %s4, %s652
      %s654 = sadd.s32 %s27, 1
      %s655 = smul.u32 %s654, 16
      %s656 = sadd.s32 %s655, 3
      %s657 = smul.u32 3, %s656
      %s658 = smul.u32 16, %s27
      %p659 = scmp.lt.s32.totalorder %s26, 1
      %s660 = scalar_select %p659, %s26, 1
      %p661 = scmp.lt.s32.totalorder %s658, 15
      %s662 = scalar_select %p661, %s658, 15
      %s663 = smul.addr %s662, 2
      %s664 = smul.addr %s660, 32
      %s665 = sadd.s32 %s663, %s664
      %s666 = smul.addr %s665, 4
      %s667 = scalar_lea.vmem %s11, %s666
      %s668 = smul.u32 16, %s27
      %v670 = vld [vmem:[%s590] sm:$0xf]
      %v671 = vld [vmem:[%s590 + $0x4] sm:$0xf]
      %v672 = vld [vmem:[%s590 + $0x8] sm:$0xf]
      %v673 = vld [vmem:[%s590 + $0xc] sm:$0xf]
      %v674 = vld [vmem:[%s590 + $0x10] sm:$0xf]
      %v675 = vld [vmem:[%s590 + $0x14] sm:$0xf]
      %v676 = vld [vmem:[%s590 + $0x18] sm:$0xf]
      %v677 = vld [vmem:[%s590 + $0x1c] sm:$0xf]
      %v678 = vld [vmem:[%s590 + $0x20] sm:$0xf]
      %v679 = vld [vmem:[%s590 + $0x24] sm:$0xf]
      %v680 = vld [vmem:[%s590 + $0x28] sm:$0xf]
      %v681 = vld [vmem:[%s590 + $0x2c] sm:$0xf]
      %v682 = vld [vmem:[%s590 + $0x30] sm:$0xf]
      %v683 = vld [vmem:[%s590 + $0x34] sm:$0xf]
      %v684 = vld [vmem:[%s590 + $0x38] sm:$0xf]
      %v685 = vld [vmem:[%s590 + $0x3c] sm:$0xf]
      %v686 = vld [vmem:[%s590 + $0x40] sm:$0xf]
      %v687 = vld [vmem:[%s590 + $0x44] sm:$0xf]
      %v688 = vld [vmem:[%s590 + $0x48] sm:$0xf]
      %v689 = vld [vmem:[%s590 + $0x4c] sm:$0xf]
      %v690 = vld [vmem:[%s590 + $0x50] sm:$0xf]
      %v691 = vld [vmem:[%s590 + $0x54] sm:$0xf]
      %v692 = vld [vmem:[%s590 + $0x58] sm:$0xf]
      %v693 = vld [vmem:[%s590 + $0x5c] sm:$0xf]
      %v694 = vld [vmem:[%s590 + $0x60] sm:$0xf]
      %v695 = vld [vmem:[%s590 + $0x64] sm:$0xf]
      %v696 = vld [vmem:[%s590 + $0x68] sm:$0xf]
      %v697 = vld [vmem:[%s590 + $0x6c] sm:$0xf]
      %v698 = vld [vmem:[%s590 + $0x70] sm:$0xf]
      %v699 = vld [vmem:[%s590 + $0x74] sm:$0xf]
      %v700 = vld [vmem:[%s590 + $0x78] sm:$0xf]
      %v701 = vld [vmem:[%s590 + $0x7c] sm:$0xf]
      %v702 = vld [vmem:[%s590 + $0x80] sm:$0xf]
      %v703 = vld [vmem:[%s590 + $0x84] sm:$0xf]
      %v704 = vld [vmem:[%s590 + $0x88] sm:$0xf]
      %v705 = vld [vmem:[%s590 + $0x8c] sm:$0xf]
      %v706 = vld [vmem:[%s590 + $0x90] sm:$0xf]
      %v707 = vld [vmem:[%s590 + $0x94] sm:$0xf]
      %v708 = vld [vmem:[%s590 + $0x98] sm:$0xf]
      %v709 = vld [vmem:[%s590 + $0x9c] sm:$0xf]
      %v710 = vld [vmem:[%s590 + $0xa0] sm:$0xf]
      %v711 = vld [vmem:[%s590 + $0xa4] sm:$0xf]
      %v712 = vld [vmem:[%s590 + $0xa8] sm:$0xf]
      %v713 = vld [vmem:[%s590 + $0xac] sm:$0xf]
      %v714 = vld [vmem:[%s590 + $0xb0] sm:$0xf]
      %v715 = vld [vmem:[%s590 + $0xb4] sm:$0xf]
      %v716 = vld [vmem:[%s590 + $0xb8] sm:$0xf]
      %v717 = vld [vmem:[%s590 + $0xbc] sm:$0xf]
      %vm718 = vcmask 60416
      %719 = vst.msk [vmem:[#allocation2] sm:$0xf] %vm718, %v670
      %720 = vst.msk [vmem:[#allocation2 + $0x4] sm:$0xf] %vm718, %v671
      %721 = vst.msk [vmem:[#allocation2 + $0x8] sm:$0xf] %vm718, %v672
      %722 = vst.msk [vmem:[#allocation2 + $0xc] sm:$0xf] %vm718, %v673
      %723 = vst.msk [vmem:[#allocation2 + $0x10] sm:$0xf] %vm718, %v674
      %724 = vst.msk [vmem:[#allocation2 + $0x14] sm:$0xf] %vm718, %v675
      %725 = vst.msk [vmem:[#allocation2 + $0x18] sm:$0xf] %vm718, %v676
      %726 = vst.msk [vmem:[#allocation2 + $0x1c] sm:$0xf] %vm718, %v677
      %727 = vst.msk [vmem:[#allocation2 + $0x20] sm:$0xf] %vm718, %v678
      %728 = vst.msk [vmem:[#allocation2 + $0x24] sm:$0xf] %vm718, %v679
      %729 = vst.msk [vmem:[#allocation2 + $0x28] sm:$0xf] %vm718, %v680
      %730 = vst.msk [vmem:[#allocation2 + $0x2c] sm:$0xf] %vm718, %v681
      %731 = vst.msk [vmem:[#allocation2 + $0x30] sm:$0xf] %vm718, %v682
      %732 = vst.msk [vmem:[#allocation2 + $0x34] sm:$0xf] %vm718, %v683
      %733 = vst.msk [vmem:[#allocation2 + $0x38] sm:$0xf] %vm718, %v684
      %734 = vst.msk [vmem:[#allocation2 + $0x3c] sm:$0xf] %vm718, %v685
      %735 = vst.msk [vmem:[#allocation2 + $0x40] sm:$0xf] %vm718, %v686
      %736 = vst.msk [vmem:[#allocation2 + $0x44] sm:$0xf] %vm718, %v687
      %737 = vst.msk [vmem:[#allocation2 + $0x48] sm:$0xf] %vm718, %v688
      %738 = vst.msk [vmem:[#allocation2 + $0x4c] sm:$0xf] %vm718, %v689
      %739 = vst.msk [vmem:[#allocation2 + $0x50] sm:$0xf] %vm718, %v690
      %740 = vst.msk [vmem:[#allocation2 + $0x54] sm:$0xf] %vm718, %v691
      %741 = vst.msk [vmem:[#allocation2 + $0x58] sm:$0xf] %vm718, %v692
      %742 = vst.msk [vmem:[#allocation2 + $0x5c] sm:$0xf] %vm718, %v693
      %743 = vst.msk [vmem:[#allocation2 + $0x60] sm:$0xf] %vm718, %v694
      %744 = vst.msk [vmem:[#allocation2 + $0x64] sm:$0xf] %vm718, %v695
      %745 = vst.msk [vmem:[#allocation2 + $0x68] sm:$0xf] %vm718, %v696
      %746 = vst.msk [vmem:[#allocation2 + $0x6c] sm:$0xf] %vm718, %v697
      %747 = vst.msk [vmem:[#allocation2 + $0x70] sm:$0xf] %vm718, %v698
      %748 = vst.msk [vmem:[#allocation2 + $0x74] sm:$0xf] %vm718, %v699
      %749 = vst.msk [vmem:[#allocation2 + $0x78] sm:$0xf] %vm718, %v700
      %750 = vst.msk [vmem:[#allocation2 + $0x7c] sm:$0xf] %vm718, %v701
      %751 = vst.msk [vmem:[#allocation2 + $0x80] sm:$0xf] %vm718, %v702
      %752 = vst.msk [vmem:[#allocation2 + $0x84] sm:$0xf] %vm718, %v703
      %753 = vst.msk [vmem:[#allocation2 + $0x88] sm:$0xf] %vm718, %v704
      %754 = vst.msk [vmem:[#allocation2 + $0x8c] sm:$0xf] %vm718, %v705
      %755 = vst.msk [vmem:[#allocation2 + $0x90] sm:$0xf] %vm718, %v706
      %756 = vst.msk [vmem:[#allocation2 + $0x94] sm:$0xf] %vm718, %v707
      %757 = vst.msk [vmem:[#allocation2 + $0x98] sm:$0xf] %vm718, %v708
      %758 = vst.msk [vmem:[#allocation2 + $0x9c] sm:$0xf] %vm718, %v709
      %759 = vst.msk [vmem:[#allocation2 + $0xa0] sm:$0xf] %vm718, %v710
      %760 = vst.msk [vmem:[#allocation2 + $0xa4] sm:$0xf] %vm718, %v711
      %761 = vst.msk [vmem:[#allocation2 + $0xa8] sm:$0xf] %vm718, %v712
      %762 = vst.msk [vmem:[#allocation2 + $0xac] sm:$0xf] %vm718, %v713
      %763 = vst.msk [vmem:[#allocation2 + $0xb0] sm:$0xf] %vm718, %v714
      %764 = vst.msk [vmem:[#allocation2 + $0xb4] sm:$0xf] %vm718, %v715
      %765 = vst.msk [vmem:[#allocation2 + $0xb8] sm:$0xf] %vm718, %v716
      %766 = vst.msk [vmem:[#allocation2 + $0xbc] sm:$0xf] %vm718, %v717
      %v767 = vld [vmem:[%s606] sm:$0xf]
      %v768 = vld [vmem:[%s606 + $0x4] sm:$0xf]
      %v769 = vld [vmem:[%s606 + $0x8] sm:$0xf]
      %770 = vst.msk [vmem:[#allocation2 + $0xc0] sm:$0xf] %vm718, %v767
      %771 = vst.msk [vmem:[#allocation2 + $0xc4] sm:$0xf] %vm718, %v768
      %772 = vst.msk [vmem:[#allocation2 + $0xc8] sm:$0xf] %vm718, %v769
      %v773 = vld [vmem:[%s621] sm:$0xf]
      %v774 = vld [vmem:[%s621 + $0x4] sm:$0xf]
      %v775 = vld [vmem:[%s621 + $0x8] sm:$0xf]
      %776 = vst.msk [vmem:[#allocation2 + $0xcc] sm:$0xf] %vm718, %v773
      %777 = vst.msk [vmem:[#allocation2 + $0xd0] sm:$0xf] %vm718, %v774
      %778 = vst.msk [vmem:[#allocation2 + $0xd4] sm:$0xf] %vm718, %v775
      %v779 = vld [vmem:[%s637] sm:$0xf]
      %v780 = vld [vmem:[%s637 + $0x4] sm:$0xf]
      %v781 = vld [vmem:[%s637 + $0x8] sm:$0xf]
      %782 = vst.msk [vmem:[#allocation2 + $0xd8] sm:$0xf] %vm718, %v779
      %783 = vst.msk [vmem:[#allocation2 + $0xdc] sm:$0xf] %vm718, %v780
      %784 = vst.msk [vmem:[#allocation2 + $0xe0] sm:$0xf] %vm718, %v781
      %v785 = vld [vmem:[%s653] sm:$0xf]
      %v786 = vld [vmem:[%s653 + $0x4] sm:$0xf]
      %v787 = vld [vmem:[%s653 + $0x8] sm:$0xf]
      %788 = vst.msk [vmem:[#allocation2 + $0xe4] sm:$0xf] %vm718, %v785
      %789 = vst.msk [vmem:[#allocation2 + $0xe8] sm:$0xf] %vm718, %v786
      %790 = vst.msk [vmem:[#allocation2 + $0xec] sm:$0xf] %vm718, %v787
      %791 = vst.msk [vmem:[#allocation2 + $0xf0] sm:$0xf] %vm718, 0
      %v792 = vld [vmem:[#allocation2] sm:$0xf]
      %v793 = vld [vmem:[#allocation2 + $0x4] sm:$0xf]
      %v794 = vld [vmem:[#allocation2 + $0x8] sm:$0xf]
      %v795 = vld [vmem:[#allocation2 + $0xc] sm:$0xf]
      %v796 = vld [vmem:[#allocation2 + $0x10] sm:$0xf]
      %v797 = vld [vmem:[#allocation2 + $0x14] sm:$0xf]
      %v798 = vld [vmem:[#allocation2 + $0x18] sm:$0xf]
      %v799 = vld [vmem:[#allocation2 + $0x1c] sm:$0xf]
      %v800 = vld [vmem:[#allocation2 + $0x20] sm:$0xf]
      %v801 = vld [vmem:[#allocation2 + $0x24] sm:$0xf]
      %v802 = vld [vmem:[#allocation2 + $0x28] sm:$0xf]
      %v803 = vld [vmem:[#allocation2 + $0x2c] sm:$0xf]
      %v804 = vld [vmem:[#allocation2 + $0x30] sm:$0xf]
      %v805 = vld [vmem:[#allocation2 + $0x34] sm:$0xf]
      %v806 = vld [vmem:[#allocation2 + $0x38] sm:$0xf]
      %v807 = vld [vmem:[#allocation2 + $0x3c] sm:$0xf]
      %v808 = vld [vmem:[#allocation2 + $0x40] sm:$0xf]
      %v809 = vld [vmem:[#allocation2 + $0x44] sm:$0xf]
      %v810 = vld [vmem:[#allocation2 + $0x48] sm:$0xf]
      %v811 = vld [vmem:[#allocation2 + $0x4c] sm:$0xf]
      %v812 = vld [vmem:[#allocation2 + $0x50] sm:$0xf]
      %v813 = vld [vmem:[#allocation2 + $0x54] sm:$0xf]
      %v814 = vld [vmem:[#allocation2 + $0x58] sm:$0xf]
      %v815 = vld [vmem:[#allocation2 + $0x5c] sm:$0xf]
      %v816 = vld [vmem:[#allocation2 + $0x60] sm:$0xf]
      %v817 = vld [vmem:[#allocation2 + $0x64] sm:$0xf]
      %v818 = vld [vmem:[#allocation2 + $0x68] sm:$0xf]
      %v819 = vld [vmem:[#allocation2 + $0x6c] sm:$0xf]
      %v820 = vld [vmem:[#allocation2 + $0x70] sm:$0xf]
      %v821 = vld [vmem:[#allocation2 + $0x74] sm:$0xf]
      %v822 = vld [vmem:[#allocation2 + $0x78] sm:$0xf]
      %v823 = vld [vmem:[#allocation2 + $0x7c] sm:$0xf]
      %v824 = vld [vmem:[#allocation2 + $0x80] sm:$0xf]
      %v825 = vld [vmem:[#allocation2 + $0x84] sm:$0xf]
      %v826 = vld [vmem:[#allocation2 + $0x88] sm:$0xf]
      %v827 = vld [vmem:[#allocation2 + $0x8c] sm:$0xf]
      %v828 = vld [vmem:[#allocation2 + $0x90] sm:$0xf]
      %v829 = vld [vmem:[#allocation2 + $0x94] sm:$0xf]
      %v830 = vld [vmem:[#allocation2 + $0x98] sm:$0xf]
      %v831 = vld [vmem:[#allocation2 + $0x9c] sm:$0xf]
      %v832 = vld [vmem:[#allocation2 + $0xa0] sm:$0xf]
      %v833 = vld [vmem:[#allocation2 + $0xa4] sm:$0xf]
      %v834 = vld [vmem:[#allocation2 + $0xa8] sm:$0xf]
      %v835 = vld [vmem:[#allocation2 + $0xac] sm:$0xf]
      %v836 = vld [vmem:[#allocation2 + $0xb0] sm:$0xf]
      %v837 = vld [vmem:[#allocation2 + $0xb4] sm:$0xf]
      %v838 = vld [vmem:[#allocation2 + $0xb8] sm:$0xf]
      %v839 = vld [vmem:[#allocation2 + $0xbc] sm:$0xf]
      %v840 = vld [vmem:[#allocation2 + $0xc0] sm:$0xf]
      %v841 = vld [vmem:[#allocation2 + $0xc4] sm:$0xf]
      %v842 = vld [vmem:[#allocation2 + $0xc8] sm:$0xf]
      %v843 = vld [vmem:[#allocation2 + $0xcc] sm:$0xf]
      %v844 = vld [vmem:[#allocation2 + $0xd0] sm:$0xf]
      %v845 = vld [vmem:[#allocation2 + $0xd4] sm:$0xf]
      %v846 = vld [vmem:[%s5] sm:$0xf]
      %v847 = vld [vmem:[#allocation2 + $0xd8] sm:$0x1]
      %s848 = scalar_lea.vmem %s5, 4
      %v849 = vld [vmem:[%s848] sm:$0xf]
      %v905 = vunpack.c.l.b16 %v792
      %v906 = vunpack.c.l.b16 %v793
      %v907 = vunpack.c.l.b16 %v794
      %v908 = vunpack.c.l.b16 %v795
      %v909 = vunpack.c.l.b16 %v796
      %v910 = vunpack.c.l.b16 %v797
      %v911 = vunpack.c.l.b16 %v798
      %v912 = vunpack.c.l.b16 %v799
      %v913 = vunpack.c.l.b16 %v800
      %v914 = vunpack.c.l.b16 %v801
      %v915 = vunpack.c.l.b16 %v802
      %v916 = vunpack.c.l.b16 %v803
      %v917 = vunpack.c.l.b16 %v804
      %v918 = vunpack.c.l.b16 %v805
      %v919 = vunpack.c.l.b16 %v806
      %v920 = vunpack.c.l.b16 %v807
      %v921 = vunpack.c.l.b16 %v808
      %v922 = vunpack.c.l.b16 %v809
      %v923 = vunpack.c.l.b16 %v810
      %v924 = vunpack.c.l.b16 %v811
      %v925 = vunpack.c.l.b16 %v812
      %v926 = vunpack.c.l.b16 %v813
      %v927 = vunpack.c.l.b16 %v814
      %v928 = vunpack.c.l.b16 %v815
      %v929 = vunpack.c.l.b16 %v816
      %v930 = vunpack.c.l.b16 %v817
      %v931 = vunpack.c.l.b16 %v818
      %v932 = vunpack.c.l.b16 %v819
      %v933 = vunpack.c.l.b16 %v820
      %v934 = vunpack.c.l.b16 %v821
      %v935 = vunpack.c.l.b16 %v822
      %v936 = vunpack.c.l.b16 %v823
      %v937 = vunpack.c.l.b16 %v824
      %v938 = vunpack.c.l.b16 %v825
      %v939 = vunpack.c.l.b16 %v826
      %v940 = vunpack.c.l.b16 %v827
      %v941 = vunpack.c.l.b16 %v828
      %v942 = vunpack.c.l.b16 %v829
      %v943 = vunpack.c.l.b16 %v830
      %v944 = vunpack.c.l.b16 %v831
      %v945 = vunpack.c.l.b16 %v832
      %v946 = vunpack.c.l.b16 %v833
      %v947 = vunpack.c.l.b16 %v834
      %v948 = vunpack.c.l.b16 %v835
      %v949 = vunpack.c.l.b16 %v836
      %v950 = vunpack.c.l.b16 %v837
      %v951 = vunpack.c.l.b16 %v838
      %v952 = vunpack.c.l.b16 %v839
      %v953 = vunpack.c.l.b16 %v840
      %v954 = vunpack.c.l.b16 %v841
      %v955 = vunpack.c.l.b16 %v842
      %v956 = vunpack.c.l.b16 %v843
      %v957 = vunpack.c.l.b16 %v844
      %v958 = vunpack.c.l.b16 %v845
      %v959 = vunpack.c.l.b16 %v847
      %v960 = vpack.c.b16 %v906, %v905
      %v961 = vpack.c.b16 %v908, %v907
      %v962 = vpack.c.b16 %v910, %v909
      %v963 = vpack.c.b16 %v912, %v911
      %v964 = vpack.c.b16 %v914, %v913
      %v965 = vpack.c.b16 %v916, %v915
      %v966 = vpack.c.b16 %v918, %v917
      %v967 = vpack.c.b16 %v920, %v919
      %v968 = vpack.c.b16 %v922, %v921
      %v969 = vpack.c.b16 %v924, %v923
      %v970 = vpack.c.b16 %v926, %v925
      %v971 = vpack.c.b16 %v928, %v927
      %v972 = vpack.c.b16 %v930, %v929
      %v973 = vpack.c.b16 %v932, %v931
      %v974 = vpack.c.b16 %v934, %v933
      %v975 = vpack.c.b16 %v936, %v935
      %v976 = vpack.c.b16 %v938, %v937
      %v977 = vpack.c.b16 %v940, %v939
      %v978 = vpack.c.b16 %v942, %v941
      %v979 = vpack.c.b16 %v944, %v943
      %v980 = vpack.c.b16 %v946, %v945
      %v981 = vpack.c.b16 %v948, %v947
      %v982 = vpack.c.b16 %v950, %v949
      %v983 = vpack.c.b16 %v952, %v951
      %v984 = vpack.c.b16 %v954, %v953
      %v985 = vpack.c.b16 %v956, %v955
      %v986 = vpack.c.b16 %v958, %v957
      %v987 = vpack.c.b16 %v959, %v959
      %vm988 = vsmask.f32 7424
      %v990 = vshrl.u32 %v960, 16
      %v992 = vshll.u32 %v960, 16
      %v994 = vrot.slane %v992, 1
      %v995 = vor.u32 %v990, %v994
      %v997 = vshll.u32 %v961, 16
      %v999 = vrot.slane %v997, 1
      %v1000 = vsel %vm988, %v995, %v999
      %v1001 = vshrl.u32 %v961, 16
      %v1003 = vor.u32 %v1001, %v999
      %v1005 = vshll.u32 %v962, 16
      %v1007 = vrot.slane %v1005, 1
      %v1008 = vsel %vm988, %v1003, %v1007
      %v1009 = vshrl.u32 %v962, 16
      %v1011 = vor.u32 %v1009, %v1007
      %v1013 = vshll.u32 %v963, 16
      %v1015 = vrot.slane %v1013, 1
      %v1016 = vsel %vm988, %v1011, %v1015
      %v1017 = vshrl.u32 %v963, 16
      %v1019 = vor.u32 %v1017, %v1015
      %v1021 = vshll.u32 %v964, 16
      %v1023 = vrot.slane %v1021, 1
      %v1024 = vsel %vm988, %v1019, %v1023
      %v1025 = vshrl.u32 %v964, 16
      %v1027 = vor.u32 %v1025, %v1023
      %v1029 = vshll.u32 %v965, 16
      %v1031 = vrot.slane %v1029, 1
      %v1032 = vsel %vm988, %v1027, %v1031
      %v1033 = vshrl.u32 %v965, 16
      %v1035 = vor.u32 %v1033, %v1031
      %v1037 = vshll.u32 %v966, 16
      %v1039 = vrot.slane %v1037, 1
      %v1040 = vsel %vm988, %v1035, %v1039
      %v1041 = vshrl.u32 %v966, 16
      %v1043 = vor.u32 %v1041, %v1039
      %v1045 = vshll.u32 %v967, 16
      %v1047 = vrot.slane %v1045, 1
      %v1048 = vsel %vm988, %v1043, %v1047
      %v1049 = vshrl.u32 %v967, 16
      %v1051 = vor.u32 %v1049, %v1047
      %v1053 = vshll.u32 %v968, 16
      %v1055 = vrot.slane %v1053, 1
      %v1056 = vsel %vm988, %v1051, %v1055
      %v1057 = vshrl.u32 %v968, 16
      %v1059 = vor.u32 %v1057, %v1055
      %v1061 = vshll.u32 %v969, 16
      %v1063 = vrot.slane %v1061, 1
      %v1064 = vsel %vm988, %v1059, %v1063
      %v1065 = vshrl.u32 %v969, 16
      %v1067 = vor.u32 %v1065, %v1063
      %v1069 = vshll.u32 %v970, 16
      %v1071 = vrot.slane %v1069, 1
      %v1072 = vsel %vm988, %v1067, %v1071
      %v1073 = vshrl.u32 %v970, 16
      %v1075 = vor.u32 %v1073, %v1071
      %v1077 = vshll.u32 %v971, 16
      %v1079 = vrot.slane %v1077, 1
      %v1080 = vsel %vm988, %v1075, %v1079
      %v1081 = vshrl.u32 %v971, 16
      %v1083 = vor.u32 %v1081, %v1079
      %v1085 = vshll.u32 %v972, 16
      %v1087 = vrot.slane %v1085, 1
      %v1088 = vsel %vm988, %v1083, %v1087
      %v1089 = vshrl.u32 %v972, 16
      %v1091 = vor.u32 %v1089, %v1087
      %v1093 = vshll.u32 %v973, 16
      %v1095 = vrot.slane %v1093, 1
      %v1096 = vsel %vm988, %v1091, %v1095
      %v1097 = vshrl.u32 %v973, 16
      %v1099 = vor.u32 %v1097, %v1095
      %v1101 = vshll.u32 %v974, 16
      %v1103 = vrot.slane %v1101, 1
      %v1104 = vsel %vm988, %v1099, %v1103
      %v1105 = vshrl.u32 %v974, 16
      %v1107 = vor.u32 %v1105, %v1103
      %v1109 = vshll.u32 %v975, 16
      %v1111 = vrot.slane %v1109, 1
      %v1112 = vsel %vm988, %v1107, %v1111
      %v1113 = vshrl.u32 %v975, 16
      %v1115 = vor.u32 %v1113, %v1111
      %v1117 = vshll.u32 %v976, 16
      %v1119 = vrot.slane %v1117, 1
      %v1120 = vsel %vm988, %v1115, %v1119
      %v1121 = vshrl.u32 %v976, 16
      %v1123 = vor.u32 %v1121, %v1119
      %v1125 = vshll.u32 %v977, 16
      %v1127 = vrot.slane %v1125, 1
      %v1128 = vsel %vm988, %v1123, %v1127
      %v1129 = vshrl.u32 %v977, 16
      %v1131 = vor.u32 %v1129, %v1127
      %v1133 = vshll.u32 %v978, 16
      %v1135 = vrot.slane %v1133, 1
      %v1136 = vsel %vm988, %v1131, %v1135
      %v1137 = vshrl.u32 %v978, 16
      %v1139 = vor.u32 %v1137, %v1135
      %v1141 = vshll.u32 %v979, 16
      %v1143 = vrot.slane %v1141, 1
      %v1144 = vsel %vm988, %v1139, %v1143
      %v1145 = vshrl.u32 %v979, 16
      %v1147 = vor.u32 %v1145, %v1143
      %v1149 = vshll.u32 %v980, 16
      %v1151 = vrot.slane %v1149, 1
      %v1152 = vsel %vm988, %v1147, %v1151
      %v1153 = vshrl.u32 %v980, 16
      %v1155 = vor.u32 %v1153, %v1151
      %v1157 = vshll.u32 %v981, 16
      %v1159 = vrot.slane %v1157, 1
      %v1160 = vsel %vm988, %v1155, %v1159
      %v1161 = vshrl.u32 %v981, 16
      %v1163 = vor.u32 %v1161, %v1159
      %v1165 = vshll.u32 %v982, 16
      %v1167 = vrot.slane %v1165, 1
      %v1168 = vsel %vm988, %v1163, %v1167
      %v1169 = vshrl.u32 %v982, 16
      %v1171 = vor.u32 %v1169, %v1167
      %v1173 = vshll.u32 %v983, 16
      %v1175 = vrot.slane %v1173, 1
      %v1176 = vsel %vm988, %v1171, %v1175
      %v1177 = vshrl.u32 %v983, 16
      %v1179 = vor.u32 %v1177, %v1175
      %v1181 = vshll.u32 %v984, 16
      %v1183 = vrot.slane %v1181, 1
      %v1184 = vsel %vm988, %v1179, %v1183
      %v1185 = vshrl.u32 %v984, 16
      %v1187 = vor.u32 %v1185, %v1183
      %v1189 = vshll.u32 %v985, 16
      %v1191 = vrot.slane %v1189, 1
      %v1192 = vsel %vm988, %v1187, %v1191
      %v1193 = vshrl.u32 %v985, 16
      %v1195 = vor.u32 %v1193, %v1191
      %v1197 = vshll.u32 %v986, 16
      %v1199 = vrot.slane %v1197, 1
      %v1200 = vsel %vm988, %v1195, %v1199
      %v1201 = vshrl.u32 %v986, 16
      %v1203 = vor.u32 %v1201, %v1199
      %v1205 = vshll.u32 %v987, 16
      %v1207 = vrot.slane %v1205, 1
      %v1208 = vsel %vm988, %v1203, %v1207
      %vm1209 = vcmask 64512
      %v1211 = vsel %vm1209, %v1000, 0
      %v1214 = vsel %vm1209, %v1008, 0
      %v1217 = vsel %vm1209, %v1016, 0
      %v1220 = vsel %vm1209, %v1024, 0
      %v1223 = vsel %vm1209, %v1032, 0
      %v1226 = vsel %vm1209, %v1040, 0
      %v1229 = vsel %vm1209, %v1048, 0
      %v1232 = vsel %vm1209, %v1056, 0
      %v1235 = vsel %vm1209, %v1064, 0
      %v1238 = vsel %vm1209, %v1072, 0
      %v1241 = vsel %vm1209, %v1080, 0
      %v1244 = vsel %vm1209, %v1088, 0
      %v1247 = vsel %vm1209, %v1096, 0
      %v1250 = vsel %vm1209, %v1104, 0
      %v1253 = vsel %vm1209, %v1112, 0
      %v1256 = vsel %vm1209, %v1120, 0
      %v1259 = vsel %vm1209, %v1128, 0
      %v1262 = vsel %vm1209, %v1136, 0
      %v1265 = vsel %vm1209, %v1144, 0
      %v1268 = vsel %vm1209, %v1152, 0
      %v1271 = vsel %vm1209, %v1160, 0
      %v1274 = vsel %vm1209, %v1168, 0
      %v1277 = vsel %vm1209, %v1176, 0
      %v1280 = vsel %vm1209, %v1184, 0
      %v1283 = vsel %vm1209, %v1192, 0
      %v1286 = vsel %vm1209, %v1200, 0
      %v1289 = vsel %vm1209, %v1208, 0
      %vm1291 = vcmask 1043456
      %v1293 = vsel %vm1291, %v849, 0
      %1295 = vmatpush.bf16.msra.mxu0 0
      %1296 = vmatpush.bf16.msra.mxu0 0
      %1297 = vmatpush.bf16.msra.mxu0 0
      %1298 = vmatpush.bf16.msra.mxu0 0
      %1299 = vmatpush.bf16.msra.mxu0 0
      %1300 = vmatpush.bf16.msra.mxu0 0
      %1301 = vmatpush.bf16.msra.mxu0 0
      %1302 = vmatpush.bf16.msra.mxu0 %v1293
      %1303 = vmatmul.bf16.gmra.mxu0 %v1211
      %v1304 = vpop.f32.mrf.mxu0
      %v1305 = vadd.f32 0.0, %v1304
      %v1306 = vpop.f32.mrf.mxu0
      %v1307 = vadd.f32 0.0, %v1306
      %1308 = vmatmul.bf16.gmra.mxu0 %v1214
      %v1309 = vpop.f32.mrf.mxu0
      %v1310 = vadd.f32 0.0, %v1309
      %v1311 = vpop.f32.mrf.mxu0
      %v1312 = vadd.f32 0.0, %v1311
      %1313 = vmatmul.bf16.gmra.mxu0 %v1217
      %v1314 = vpop.f32.mrf.mxu0
      %v1315 = vadd.f32 0.0, %v1314
      %v1316 = vpop.f32.mrf.mxu0
      %v1317 = vadd.f32 0.0, %v1316
      %1318 = vmatmul.bf16.gmra.mxu0 %v1220
      %v1319 = vpop.f32.mrf.mxu0
      %v1320 = vadd.f32 0.0, %v1319
      %v1321 = vpop.f32.mrf.mxu0
      %v1322 = vadd.f32 0.0, %v1321
      %1323 = vmatmul.bf16.gmra.mxu0 %v1223
      %v1324 = vpop.f32.mrf.mxu0
      %v1325 = vadd.f32 0.0, %v1324
      %v1326 = vpop.f32.mrf.mxu0
      %v1327 = vadd.f32 0.0, %v1326
      %1328 = vmatmul.bf16.gmra.mxu0 %v1226
      %v1329 = vpop.f32.mrf.mxu0
      %v1330 = vadd.f32 0.0, %v1329
      %v1331 = vpop.f32.mrf.mxu0
      %v1332 = vadd.f32 0.0, %v1331
      %1333 = vmatmul.bf16.gmra.mxu0 %v1229
      %v1334 = vpop.f32.mrf.mxu0
      %v1335 = vadd.f32 0.0, %v1334
      %v1336 = vpop.f32.mrf.mxu0
      %v1337 = vadd.f32 0.0, %v1336
      %1338 = vmatmul.bf16.gmra.mxu0 %v1232
      %v1339 = vpop.f32.mrf.mxu0
      %v1340 = vadd.f32 0.0, %v1339
      %v1341 = vpop.f32.mrf.mxu0
      %v1342 = vadd.f32 0.0, %v1341
      %1343 = vmatmul.bf16.gmra.mxu0 %v1235
      %v1344 = vpop.f32.mrf.mxu0
      %v1345 = vadd.f32 0.0, %v1344
      %v1346 = vpop.f32.mrf.mxu0
      %v1347 = vadd.f32 0.0, %v1346
      %1348 = vmatmul.bf16.gmra.mxu0 %v1238
      %v1349 = vpop.f32.mrf.mxu0
      %v1350 = vadd.f32 0.0, %v1349
      %v1351 = vpop.f32.mrf.mxu0
      %v1352 = vadd.f32 0.0, %v1351
      %1353 = vmatmul.bf16.gmra.mxu0 %v1241
      %v1354 = vpop.f32.mrf.mxu0
      %v1355 = vadd.f32 0.0, %v1354
      %v1356 = vpop.f32.mrf.mxu0
      %v1357 = vadd.f32 0.0, %v1356
      %1358 = vmatmul.bf16.gmra.mxu0 %v1244
      %v1359 = vpop.f32.mrf.mxu0
      %v1360 = vadd.f32 0.0, %v1359
      %v1361 = vpop.f32.mrf.mxu0
      %v1362 = vadd.f32 0.0, %v1361
      %1363 = vmatmul.bf16.gmra.mxu0 %v1247
      %v1364 = vpop.f32.mrf.mxu0
      %v1365 = vadd.f32 0.0, %v1364
      %v1366 = vpop.f32.mrf.mxu0
      %v1367 = vadd.f32 0.0, %v1366
      %1368 = vmatmul.bf16.gmra.mxu0 %v1250
      %v1369 = vpop.f32.mrf.mxu0
      %v1370 = vadd.f32 0.0, %v1369
      %v1371 = vpop.f32.mrf.mxu0
      %v1372 = vadd.f32 0.0, %v1371
      %1373 = vmatmul.bf16.gmra.mxu0 %v1253
      %v1374 = vpop.f32.mrf.mxu0
      %v1375 = vadd.f32 0.0, %v1374
      %v1376 = vpop.f32.mrf.mxu0
      %v1377 = vadd.f32 0.0, %v1376
      %1378 = vmatmul.bf16.gmra.mxu0 %v1256
      %v1379 = vpop.f32.mrf.mxu0
      %v1380 = vadd.f32 0.0, %v1379
      %v1381 = vpop.f32.mrf.mxu0
      %v1382 = vadd.f32 0.0, %v1381
      %1383 = vmatmul.bf16.gmra.mxu0 %v1259
      %v1384 = vpop.f32.mrf.mxu0
      %v1385 = vadd.f32 0.0, %v1384
      %v1386 = vpop.f32.mrf.mxu0
      %v1387 = vadd.f32 0.0, %v1386
      %1388 = vmatmul.bf16.gmra.mxu0 %v1262
      %v1389 = vpop.f32.mrf.mxu0
      %v1390 = vadd.f32 0.0, %v1389
      %v1391 = vpop.f32.mrf.mxu0
      %v1392 = vadd.f32 0.0, %v1391
      %1393 = vmatmul.bf16.gmra.mxu0 %v1265
      %v1394 = vpop.f32.mrf.mxu0
      %v1395 = vadd.f32 0.0, %v1394
      %v1396 = vpop.f32.mrf.mxu0
      %v1397 = vadd.f32 0.0, %v1396
      %1398 = vmatmul.bf16.gmra.mxu0 %v1268
      %v1399 = vpop.f32.mrf.mxu0
      %v1400 = vadd.f32 0.0, %v1399
      %v1401 = vpop.f32.mrf.mxu0
      %v1402 = vadd.f32 0.0, %v1401
      %1403 = vmatmul.bf16.gmra.mxu0 %v1271
      %v1404 = vpop.f32.mrf.mxu0
      %v1405 = vadd.f32 0.0, %v1404
      %v1406 = vpop.f32.mrf.mxu0
      %v1407 = vadd.f32 0.0, %v1406
      %1408 = vmatmul.bf16.gmra.mxu0 %v1274
      %v1409 = vpop.f32.mrf.mxu0
      %v1410 = vadd.f32 0.0, %v1409
      %v1411 = vpop.f32.mrf.mxu0
      %v1412 = vadd.f32 0.0, %v1411
      %1413 = vmatmul.bf16.gmra.mxu0 %v1277
      %v1414 = vpop.f32.mrf.mxu0
      %v1415 = vadd.f32 0.0, %v1414
      %v1416 = vpop.f32.mrf.mxu0
      %v1417 = vadd.f32 0.0, %v1416
      %1418 = vmatmul.bf16.gmra.mxu0 %v1280
      %v1419 = vpop.f32.mrf.mxu0
      %v1420 = vadd.f32 0.0, %v1419
      %v1421 = vpop.f32.mrf.mxu0
      %v1422 = vadd.f32 0.0, %v1421
      %1423 = vmatmul.bf16.gmra.mxu0 %v1283
      %v1424 = vpop.f32.mrf.mxu0
      %v1425 = vadd.f32 0.0, %v1424
      %v1426 = vpop.f32.mrf.mxu0
      %v1427 = vadd.f32 0.0, %v1426
      %1428 = vmatmul.bf16.gmra.mxu0 %v1286
      %v1429 = vpop.f32.mrf.mxu0
      %v1430 = vadd.f32 0.0, %v1429
      %v1431 = vpop.f32.mrf.mxu0
      %v1432 = vadd.f32 0.0, %v1431
      %1433 = vmatmul.bf16.gmra.mxu0 %v1289
      %v1434 = vpop.f32.mrf.mxu0
      %v1435 = vadd.f32 0.0, %v1434
      %v1436 = vpop.f32.mrf.mxu0
      %v1437 = vadd.f32 0.0, %v1436
      %1438 = vdwg.mxu0
      %v1439 = vsel %vm1209, %v960, 0
      %v1441 = vsel %vm1209, %v961, 0
      %v1443 = vsel %vm1209, %v962, 0
      %v1445 = vsel %vm1209, %v963, 0
      %v1447 = vsel %vm1209, %v964, 0
      %v1449 = vsel %vm1209, %v965, 0
      %v1451 = vsel %vm1209, %v966, 0
      %v1453 = vsel %vm1209, %v967, 0
      %v1455 = vsel %vm1209, %v968, 0
      %v1457 = vsel %vm1209, %v969, 0
      %v1459 = vsel %vm1209, %v970, 0
      %v1461 = vsel %vm1209, %v971, 0
      %v1463 = vsel %vm1209, %v972, 0
      %v1465 = vsel %vm1209, %v973, 0
      %v1467 = vsel %vm1209, %v974, 0
      %v1469 = vsel %vm1209, %v975, 0
      %v1471 = vsel %vm1209, %v976, 0
      %v1473 = vsel %vm1209, %v977, 0
      %v1475 = vsel %vm1209, %v978, 0
      %v1477 = vsel %vm1209, %v979, 0
      %v1479 = vsel %vm1209, %v980, 0
      %v1481 = vsel %vm1209, %v981, 0
      %v1483 = vsel %vm1209, %v982, 0
      %v1485 = vsel %vm1209, %v983, 0
      %v1487 = vsel %vm1209, %v984, 0
      %v1489 = vsel %vm1209, %v985, 0
      %v1491 = vsel %vm1209, %v986, 0
      %v1494 = vsel %vm1291, %v846, 0
      %1496 = vmatpush.bf16.msra.mxu0 0
      %1497 = vmatpush.bf16.msra.mxu0 0
      %1498 = vmatpush.bf16.msra.mxu0 0
      %1499 = vmatpush.bf16.msra.mxu0 0
      %1500 = vmatpush.bf16.msra.mxu0 0
      %1501 = vmatpush.bf16.msra.mxu0 0
      %1502 = vmatpush.bf16.msra.mxu0 0
      %1503 = vmatpush.bf16.msra.mxu0 %v1494
      %1504 = vmatmul.bf16.gmra.mxu0 %v1439
      %v1505 = vpop.f32.mrf.mxu0
      %v1506 = vadd.f32 %v1305, %v1505
      %v1507 = vpop.f32.mrf.mxu0
      %v1508 = vadd.f32 %v1307, %v1507
      %1509 = vmatmul.bf16.gmra.mxu0 %v1441
      %v1510 = vpop.f32.mrf.mxu0
      %v1511 = vadd.f32 %v1310, %v1510
      %v1512 = vpop.f32.mrf.mxu0
      %v1513 = vadd.f32 %v1312, %v1512
      %1514 = vmatmul.bf16.gmra.mxu0 %v1443
      %v1515 = vpop.f32.mrf.mxu0
      %v1516 = vadd.f32 %v1315, %v1515
      %v1517 = vpop.f32.mrf.mxu0
      %v1518 = vadd.f32 %v1317, %v1517
      %1519 = vmatmul.bf16.gmra.mxu0 %v1445
      %v1520 = vpop.f32.mrf.mxu0
      %v1521 = vadd.f32 %v1320, %v1520
      %v1522 = vpop.f32.mrf.mxu0
      %v1523 = vadd.f32 %v1322, %v1522
      %1524 = vmatmul.bf16.gmra.mxu0 %v1447
      %v1525 = vpop.f32.mrf.mxu0
      %v1526 = vadd.f32 %v1325, %v1525
      %v1527 = vpop.f32.mrf.mxu0
      %v1528 = vadd.f32 %v1327, %v1527
      %1529 = vmatmul.bf16.gmra.mxu0 %v1449
      %v1530 = vpop.f32.mrf.mxu0
      %v1531 = vadd.f32 %v1330, %v1530
      %v1532 = vpop.f32.mrf.mxu0
      %v1533 = vadd.f32 %v1332, %v1532
      %1534 = vmatmul.bf16.gmra.mxu0 %v1451
      %v1535 = vpop.f32.mrf.mxu0
      %v1536 = vadd.f32 %v1335, %v1535
      %v1537 = vpop.f32.mrf.mxu0
      %v1538 = vadd.f32 %v1337, %v1537
      %1539 = vmatmul.bf16.gmra.mxu0 %v1453
      %v1540 = vpop.f32.mrf.mxu0
      %v1541 = vadd.f32 %v1340, %v1540
      %v1542 = vpop.f32.mrf.mxu0
      %v1543 = vadd.f32 %v1342, %v1542
      %1544 = vmatmul.bf16.gmra.mxu0 %v1455
      %v1545 = vpop.f32.mrf.mxu0
      %v1546 = vadd.f32 %v1345, %v1545
      %v1547 = vpop.f32.mrf.mxu0
      %v1548 = vadd.f32 %v1347, %v1547
      %1549 = vmatmul.bf16.gmra.mxu0 %v1457
      %v1550 = vpop.f32.mrf.mxu0
      %v1551 = vadd.f32 %v1350, %v1550
      %v1552 = vpop.f32.mrf.mxu0
      %v1553 = vadd.f32 %v1352, %v1552
      %1554 = vmatmul.bf16.gmra.mxu0 %v1459
      %v1555 = vpop.f32.mrf.mxu0
      %v1556 = vadd.f32 %v1355, %v1555
      %v1557 = vpop.f32.mrf.mxu0
      %v1558 = vadd.f32 %v1357, %v1557
      %1559 = vmatmul.bf16.gmra.mxu0 %v1461
      %v1560 = vpop.f32.mrf.mxu0
      %v1561 = vadd.f32 %v1360, %v1560
      %v1562 = vpop.f32.mrf.mxu0
      %v1563 = vadd.f32 %v1362, %v1562
      %1564 = vmatmul.bf16.gmra.mxu0 %v1463
      %v1565 = vpop.f32.mrf.mxu0
      %v1566 = vadd.f32 %v1365, %v1565
      %v1567 = vpop.f32.mrf.mxu0
      %v1568 = vadd.f32 %v1367, %v1567
      %1569 = vmatmul.bf16.gmra.mxu0 %v1465
      %v1570 = vpop.f32.mrf.mxu0
      %v1571 = vadd.f32 %v1370, %v1570
      %v1572 = vpop.f32.mrf.mxu0
      %v1573 = vadd.f32 %v1372, %v1572
      %1574 = vmatmul.bf16.gmra.mxu0 %v1467
      %v1575 = vpop.f32.mrf.mxu0
      %v1576 = vadd.f32 %v1375, %v1575
      %v1577 = vpop.f32.mrf.mxu0
      %v1578 = vadd.f32 %v1377, %v1577
      %1579 = vmatmul.bf16.gmra.mxu0 %v1469
      %v1580 = vpop.f32.mrf.mxu0
      %v1581 = vadd.f32 %v1380, %v1580
      %v1582 = vpop.f32.mrf.mxu0
      %v1583 = vadd.f32 %v1382, %v1582
      %1584 = vmatmul.bf16.gmra.mxu0 %v1471
      %v1585 = vpop.f32.mrf.mxu0
      %v1586 = vadd.f32 %v1385, %v1585
      %v1587 = vpop.f32.mrf.mxu0
      %v1588 = vadd.f32 %v1387, %v1587
      %1589 = vmatmul.bf16.gmra.mxu0 %v1473
      %v1590 = vpop.f32.mrf.mxu0
      %v1591 = vadd.f32 %v1390, %v1590
      %v1592 = vpop.f32.mrf.mxu0
      %v1593 = vadd.f32 %v1392, %v1592
      %1594 = vmatmul.bf16.gmra.mxu0 %v1475
      %v1595 = vpop.f32.mrf.mxu0
      %v1596 = vadd.f32 %v1395, %v1595
      %v1597 = vpop.f32.mrf.mxu0
      %v1598 = vadd.f32 %v1397, %v1597
      %1599 = vmatmul.bf16.gmra.mxu0 %v1477
      %v1600 = vpop.f32.mrf.mxu0
      %v1601 = vadd.f32 %v1400, %v1600
      %v1602 = vpop.f32.mrf.mxu0
      %v1603 = vadd.f32 %v1402, %v1602
      %1604 = vmatmul.bf16.gmra.mxu0 %v1479
      %v1605 = vpop.f32.mrf.mxu0
      %v1606 = vadd.f32 %v1405, %v1605
      %v1607 = vpop.f32.mrf.mxu0
      %v1608 = vadd.f32 %v1407, %v1607
      %1609 = vmatmul.bf16.gmra.mxu0 %v1481
      %v1610 = vpop.f32.mrf.mxu0
      %v1611 = vadd.f32 %v1410, %v1610
      %v1612 = vpop.f32.mrf.mxu0
      %v1613 = vadd.f32 %v1412, %v1612
      %1614 = vmatmul.bf16.gmra.mxu0 %v1483
      %v1615 = vpop.f32.mrf.mxu0
      %v1616 = vadd.f32 %v1415, %v1615
      %v1617 = vpop.f32.mrf.mxu0
      %v1618 = vadd.f32 %v1417, %v1617
      %1619 = vmatmul.bf16.gmra.mxu0 %v1485
      %v1620 = vpop.f32.mrf.mxu0
      %v1621 = vadd.f32 %v1420, %v1620
      %v1622 = vpop.f32.mrf.mxu0
      %v1623 = vadd.f32 %v1422, %v1622
      %1624 = vmatmul.bf16.gmra.mxu0 %v1487
      %v1625 = vpop.f32.mrf.mxu0
      %v1626 = vadd.f32 %v1425, %v1625
      %v1627 = vpop.f32.mrf.mxu0
      %v1628 = vadd.f32 %v1427, %v1627
      %1629 = vmatmul.bf16.gmra.mxu0 %v1489
      %v1630 = vpop.f32.mrf.mxu0
      %v1631 = vadd.f32 %v1430, %v1630
      %v1632 = vpop.f32.mrf.mxu0
      %v1633 = vadd.f32 %v1432, %v1632
      %1634 = vmatmul.bf16.gmra.mxu0 %v1491
      %v1635 = vpop.f32.mrf.mxu0
      %v1636 = vadd.f32 %v1435, %v1635
      %v1637 = vpop.f32.mrf.mxu0
      %v1638 = vadd.f32 %v1437, %v1637
      %1639 = vdwg.mxu0
      %v1640 = vld [vmem:[#allocation2] sm:$0xe]
      %s1641 = scalar_lea.vmem %s5, 8
      %v1642 = vld [vmem:[%s1641] sm:$0xf]
      %v1644 = vunpack.c.l.b16 %v1640
      %v1645 = vpack.c.b16 %v906, %v1644
      %vm1646 = vcmask 1046528
      %v1647 = vrot.slane %v1645, 1
      %v1648 = vrot.slane %v961, 1
      %v1649 = vsel %vm1646, %v1647, %v1648
      %v1650 = vrot.slane %v962, 1
      %v1651 = vsel %vm1646, %v1648, %v1650
      %v1652 = vrot.slane %v963, 1
      %v1653 = vsel %vm1646, %v1650, %v1652
      %v1654 = vrot.slane %v964, 1
      %v1655 = vsel %vm1646, %v1652, %v1654
      %v1656 = vrot.slane %v965, 1
      %v1657 = vsel %vm1646, %v1654, %v1656
      %v1658 = vrot.slane %v966, 1
      %v1659 = vsel %vm1646, %v1656, %v1658
      %v1660 = vrot.slane %v967, 1
      %v1661 = vsel %vm1646, %v1658, %v1660
      %v1662 = vrot.slane %v968, 1
      %v1663 = vsel %vm1646, %v1660, %v1662
      %v1664 = vrot.slane %v969, 1
      %v1665 = vsel %vm1646, %v1662, %v1664
      %v1666 = vrot.slane %v970, 1
      %v1667 = vsel %vm1646, %v1664, %v1666
      %v1668 = vrot.slane %v971, 1
      %v1669 = vsel %vm1646, %v1666, %v1668
      %v1670 = vrot.slane %v972, 1
      %v1671 = vsel %vm1646, %v1668, %v1670
      %v1672 = vrot.slane %v973, 1
      %v1673 = vsel %vm1646, %v1670, %v1672
      %v1674 = vrot.slane %v974, 1
      %v1675 = vsel %vm1646, %v1672, %v1674
      %v1676 = vrot.slane %v975, 1
      %v1677 = vsel %vm1646, %v1674, %v1676
      %v1678 = vrot.slane %v976, 1
      %v1679 = vsel %vm1646, %v1676, %v1678
      %v1680 = vrot.slane %v977, 1
      %v1681 = vsel %vm1646, %v1678, %v1680
      %v1682 = vrot.slane %v978, 1
      %v1683 = vsel %vm1646, %v1680, %v1682
      %v1684 = vrot.slane %v979, 1
      %v1685 = vsel %vm1646, %v1682, %v1684
      %v1686 = vrot.slane %v980, 1
      %v1687 = vsel %vm1646, %v1684, %v1686
      %v1688 = vrot.slane %v981, 1
      %v1689 = vsel %vm1646, %v1686, %v1688
      %v1690 = vrot.slane %v982, 1
      %v1691 = vsel %vm1646, %v1688, %v1690
      %v1692 = vrot.slane %v983, 1
      %v1693 = vsel %vm1646, %v1690, %v1692
      %v1694 = vrot.slane %v984, 1
      %v1695 = vsel %vm1646, %v1692, %v1694
      %v1696 = vrot.slane %v985, 1
      %v1697 = vsel %vm1646, %v1694, %v1696
      %v1698 = vrot.slane %v986, 1
      %v1699 = vsel %vm1646, %v1696, %v1698
      %v1700 = vrot.slane %v987, 1
      %v1701 = vsel %vm1646, %v1698, %v1700
      %v1703 = vsel %vm1209, %v1649, 0
      %v1706 = vsel %vm1209, %v1651, 0
      %v1709 = vsel %vm1209, %v1653, 0
      %v1712 = vsel %vm1209, %v1655, 0
      %v1715 = vsel %vm1209, %v1657, 0
      %v1718 = vsel %vm1209, %v1659, 0
      %v1721 = vsel %vm1209, %v1661, 0
      %v1724 = vsel %vm1209, %v1663, 0
      %v1727 = vsel %vm1209, %v1665, 0
      %v1730 = vsel %vm1209, %v1667, 0
      %v1733 = vsel %vm1209, %v1669, 0
      %v1736 = vsel %vm1209, %v1671, 0
      %v1739 = vsel %vm1209, %v1673, 0
      %v1742 = vsel %vm1209, %v1675, 0
      %v1745 = vsel %vm1209, %v1677, 0
      %v1748 = vsel %vm1209, %v1679, 0
      %v1751 = vsel %vm1209, %v1681, 0
      %v1754 = vsel %vm1209, %v1683, 0
      %v1757 = vsel %vm1209, %v1685, 0
      %v1760 = vsel %vm1209, %v1687, 0
      %v1763 = vsel %vm1209, %v1689, 0
      %v1766 = vsel %vm1209, %v1691, 0
      %v1769 = vsel %vm1209, %v1693, 0
      %v1772 = vsel %vm1209, %v1695, 0
      %v1775 = vsel %vm1209, %v1697, 0
      %v1778 = vsel %vm1209, %v1699, 0
      %v1781 = vsel %vm1209, %v1701, 0
      %v1784 = vsel %vm1291, %v1642, 0
      %1786 = vmatpush.bf16.msra.mxu0 0
      %1787 = vmatpush.bf16.msra.mxu0 0
      %1788 = vmatpush.bf16.msra.mxu0 0
      %1789 = vmatpush.bf16.msra.mxu0 0
      %1790 = vmatpush.bf16.msra.mxu0 0
      %1791 = vmatpush.bf16.msra.mxu0 0
      %1792 = vmatpush.bf16.msra.mxu0 0
      %1793 = vmatpush.bf16.msra.mxu0 %v1784
      %1794 = vmatmul.bf16.gmra.mxu0 %v1703
      %v1795 = vpop.f32.mrf.mxu0
      %v1796 = vadd.f32 0.0, %v1795
      %v1797 = vpop.f32.mrf.mxu0
      %v1798 = vadd.f32 0.0, %v1797
      %1799 = vmatmul.bf16.gmra.mxu0 %v1706
      %v1800 = vpop.f32.mrf.mxu0
      %v1801 = vadd.f32 0.0, %v1800
      %v1802 = vpop.f32.mrf.mxu0
      %v1803 = vadd.f32 0.0, %v1802
      %1804 = vmatmul.bf16.gmra.mxu0 %v1709
      %v1805 = vpop.f32.mrf.mxu0
      %v1806 = vadd.f32 0.0, %v1805
      %v1807 = vpop.f32.mrf.mxu0
      %v1808 = vadd.f32 0.0, %v1807
      %1809 = vmatmul.bf16.gmra.mxu0 %v1712
      %v1810 = vpop.f32.mrf.mxu0
      %v1811 = vadd.f32 0.0, %v1810
      %v1812 = vpop.f32.mrf.mxu0
      %v1813 = vadd.f32 0.0, %v1812
      %1814 = vmatmul.bf16.gmra.mxu0 %v1715
      %v1815 = vpop.f32.mrf.mxu0
      %v1816 = vadd.f32 0.0, %v1815
      %v1817 = vpop.f32.mrf.mxu0
      %v1818 = vadd.f32 0.0, %v1817
      %1819 = vmatmul.bf16.gmra.mxu0 %v1718
      %v1820 = vpop.f32.mrf.mxu0
      %v1821 = vadd.f32 0.0, %v1820
      %v1822 = vpop.f32.mrf.mxu0
      %v1823 = vadd.f32 0.0, %v1822
      %1824 = vmatmul.bf16.gmra.mxu0 %v1721
      %v1825 = vpop.f32.mrf.mxu0
      %v1826 = vadd.f32 0.0, %v1825
      %v1827 = vpop.f32.mrf.mxu0
      %v1828 = vadd.f32 0.0, %v1827
      %1829 = vmatmul.bf16.gmra.mxu0 %v1724
      %v1830 = vpop.f32.mrf.mxu0
      %v1831 = vadd.f32 0.0, %v1830
      %v1832 = vpop.f32.mrf.mxu0
      %v1833 = vadd.f32 0.0, %v1832
      %1834 = vmatmul.bf16.gmra.mxu0 %v1727
      %v1835 = vpop.f32.mrf.mxu0
      %v1836 = vadd.f32 0.0, %v1835
      %v1837 = vpop.f32.mrf.mxu0
      %v1838 = vadd.f32 0.0, %v1837
      %1839 = vmatmul.bf16.gmra.mxu0 %v1730
      %v1840 = vpop.f32.mrf.mxu0
      %v1841 = vadd.f32 0.0, %v1840
      %v1842 = vpop.f32.mrf.mxu0
      %v1843 = vadd.f32 0.0, %v1842
      %1844 = vmatmul.bf16.gmra.mxu0 %v1733
      %v1845 = vpop.f32.mrf.mxu0
      %v1846 = vadd.f32 0.0, %v1845
      %v1847 = vpop.f32.mrf.mxu0
      %v1848 = vadd.f32 0.0, %v1847
      %1849 = vmatmul.bf16.gmra.mxu0 %v1736
      %v1850 = vpop.f32.mrf.mxu0
      %v1851 = vadd.f32 0.0, %v1850
      %v1852 = vpop.f32.mrf.mxu0
      %v1853 = vadd.f32 0.0, %v1852
      %1854 = vmatmul.bf16.gmra.mxu0 %v1739
      %v1855 = vpop.f32.mrf.mxu0
      %v1856 = vadd.f32 0.0, %v1855
      %v1857 = vpop.f32.mrf.mxu0
      %v1858 = vadd.f32 0.0, %v1857
      %1859 = vmatmul.bf16.gmra.mxu0 %v1742
      %v1860 = vpop.f32.mrf.mxu0
      %v1861 = vadd.f32 0.0, %v1860
      %v1862 = vpop.f32.mrf.mxu0
      %v1863 = vadd.f32 0.0, %v1862
      %1864 = vmatmul.bf16.gmra.mxu0 %v1745
      %v1865 = vpop.f32.mrf.mxu0
      %v1866 = vadd.f32 0.0, %v1865
      %v1867 = vpop.f32.mrf.mxu0
      %v1868 = vadd.f32 0.0, %v1867
      %1869 = vmatmul.bf16.gmra.mxu0 %v1748
      %v1870 = vpop.f32.mrf.mxu0
      %v1871 = vadd.f32 0.0, %v1870
      %v1872 = vpop.f32.mrf.mxu0
      %v1873 = vadd.f32 0.0, %v1872
      %1874 = vmatmul.bf16.gmra.mxu0 %v1751
      %v1875 = vpop.f32.mrf.mxu0
      %v1876 = vadd.f32 0.0, %v1875
      %v1877 = vpop.f32.mrf.mxu0
      %v1878 = vadd.f32 0.0, %v1877
      %1879 = vmatmul.bf16.gmra.mxu0 %v1754
      %v1880 = vpop.f32.mrf.mxu0
      %v1881 = vadd.f32 0.0, %v1880
      %v1882 = vpop.f32.mrf.mxu0
      %v1883 = vadd.f32 0.0, %v1882
      %1884 = vmatmul.bf16.gmra.mxu0 %v1757
      %v1885 = vpop.f32.mrf.mxu0
      %v1886 = vadd.f32 0.0, %v1885
      %v1887 = vpop.f32.mrf.mxu0
      %v1888 = vadd.f32 0.0, %v1887
      %1889 = vmatmul.bf16.gmra.mxu0 %v1760
      %v1890 = vpop.f32.mrf.mxu0
      %v1891 = vadd.f32 0.0, %v1890
      %v1892 = vpop.f32.mrf.mxu0
      %v1893 = vadd.f32 0.0, %v1892
      %1894 = vmatmul.bf16.gmra.mxu0 %v1763
      %v1895 = vpop.f32.mrf.mxu0
      %v1896 = vadd.f32 0.0, %v1895
      %v1897 = vpop.f32.mrf.mxu0
      %v1898 = vadd.f32 0.0, %v1897
      %1899 = vmatmul.bf16.gmra.mxu0 %v1766
      %v1900 = vpop.f32.mrf.mxu0
      %v1901 = vadd.f32 0.0, %v1900
      %v1902 = vpop.f32.mrf.mxu0
      %v1903 = vadd.f32 0.0, %v1902
      %1904 = vmatmul.bf16.gmra.mxu0 %v1769
      %v1905 = vpop.f32.mrf.mxu0
      %v1906 = vadd.f32 0.0, %v1905
      %v1907 = vpop.f32.mrf.mxu0
      %v1908 = vadd.f32 0.0, %v1907
      %1909 = vmatmul.bf16.gmra.mxu0 %v1772
      %v1910 = vpop.f32.mrf.mxu0
      %v1911 = vadd.f32 0.0, %v1910
      %v1912 = vpop.f32.mrf.mxu0
      %v1913 = vadd.f32 0.0, %v1912
      %1914 = vmatmul.bf16.gmra.mxu0 %v1775
      %v1915 = vpop.f32.mrf.mxu0
      %v1916 = vadd.f32 0.0, %v1915
      %v1917 = vpop.f32.mrf.mxu0
      %v1918 = vadd.f32 0.0, %v1917
      %1919 = vmatmul.bf16.gmra.mxu0 %v1778
      %v1920 = vpop.f32.mrf.mxu0
      %v1921 = vadd.f32 0.0, %v1920
      %v1922 = vpop.f32.mrf.mxu0
      %v1923 = vadd.f32 0.0, %v1922
      %1924 = vmatmul.bf16.gmra.mxu0 %v1781
      %v1925 = vpop.f32.mrf.mxu0
      %v1926 = vadd.f32 0.0, %v1925
      %v1927 = vpop.f32.mrf.mxu0
      %v1928 = vadd.f32 0.0, %v1927
      %1929 = vdwg.mxu0
      %v1930 = vadd.f32 %v1506, %v1796
      %v1931 = vadd.f32 %v1508, %v1798
      %v1932 = vadd.f32 %v1511, %v1801
      %v1933 = vadd.f32 %v1513, %v1803
      %v1934 = vadd.f32 %v1516, %v1806
      %v1935 = vadd.f32 %v1518, %v1808
      %v1936 = vadd.f32 %v1521, %v1811
      %v1937 = vadd.f32 %v1523, %v1813
      %v1938 = vadd.f32 %v1526, %v1816
      %v1939 = vadd.f32 %v1528, %v1818
      %v1940 = vadd.f32 %v1531, %v1821
      %v1941 = vadd.f32 %v1533, %v1823
      %v1942 = vadd.f32 %v1536, %v1826
      %v1943 = vadd.f32 %v1538, %v1828
      %v1944 = vadd.f32 %v1541, %v1831
      %v1945 = vadd.f32 %v1543, %v1833
      %v1946 = vadd.f32 %v1546, %v1836
      %v1947 = vadd.f32 %v1548, %v1838
      %v1948 = vadd.f32 %v1551, %v1841
      %v1949 = vadd.f32 %v1553, %v1843
      %v1950 = vadd.f32 %v1556, %v1846
      %v1951 = vadd.f32 %v1558, %v1848
      %v1952 = vadd.f32 %v1561, %v1851
      %v1953 = vadd.f32 %v1563, %v1853
      %v1954 = vadd.f32 %v1566, %v1856
      %v1955 = vadd.f32 %v1568, %v1858
      %v1956 = vadd.f32 %v1571, %v1861
      %v1957 = vadd.f32 %v1573, %v1863
      %v1958 = vadd.f32 %v1576, %v1866
      %v1959 = vadd.f32 %v1578, %v1868
      %v1960 = vadd.f32 %v1581, %v1871
      %v1961 = vadd.f32 %v1583, %v1873
      %v1962 = vadd.f32 %v1586, %v1876
      %v1963 = vadd.f32 %v1588, %v1878
      %v1964 = vadd.f32 %v1591, %v1881
      %v1965 = vadd.f32 %v1593, %v1883
      %v1966 = vadd.f32 %v1596, %v1886
      %v1967 = vadd.f32 %v1598, %v1888
      %v1968 = vadd.f32 %v1601, %v1891
      %v1969 = vadd.f32 %v1603, %v1893
      %v1970 = vadd.f32 %v1606, %v1896
      %v1971 = vadd.f32 %v1608, %v1898
      %v1972 = vadd.f32 %v1611, %v1901
      %v1973 = vadd.f32 %v1613, %v1903
      %v1974 = vadd.f32 %v1616, %v1906
      %v1975 = vadd.f32 %v1618, %v1908
      %v1976 = vadd.f32 %v1621, %v1911
      %v1977 = vadd.f32 %v1623, %v1913
      %v1978 = vadd.f32 %v1626, %v1916
      %v1979 = vadd.f32 %v1628, %v1918
      %v1980 = vadd.f32 %v1631, %v1921
      %v1981 = vadd.f32 %v1633, %v1923
      %v1982 = vadd.f32 %v1636, %v1926
      %v1983 = vadd.f32 %v1638, %v1928
      %v1984 = vld [vmem:[#allocation2 + $0xc] sm:$0xf]
      %v1985 = vld [vmem:[#allocation2 + $0x10] sm:$0xf]
      %v1986 = vld [vmem:[#allocation2 + $0x14] sm:$0xf]
      %v1987 = vld [vmem:[#allocation2 + $0x18] sm:$0xf]
      %v1988 = vld [vmem:[#allocation2 + $0x1c] sm:$0xf]
      %v1989 = vld [vmem:[#allocation2 + $0x20] sm:$0xf]
      %v1990 = vld [vmem:[#allocation2 + $0x24] sm:$0xf]
      %v1991 = vld [vmem:[#allocation2 + $0x28] sm:$0xf]
      %v1992 = vld [vmem:[#allocation2 + $0x2c] sm:$0xf]
      %v1993 = vld [vmem:[#allocation2 + $0x30] sm:$0xf]
      %v1994 = vld [vmem:[#allocation2 + $0x34] sm:$0xf]
      %v1995 = vld [vmem:[#allocation2 + $0x38] sm:$0xf]
      %v1996 = vld [vmem:[#allocation2 + $0x3c] sm:$0xf]
      %v1997 = vld [vmem:[#allocation2 + $0x40] sm:$0xf]
      %v1998 = vld [vmem:[#allocation2 + $0x44] sm:$0xf]
      %v1999 = vld [vmem:[#allocation2 + $0x48] sm:$0xf]
      %v2000 = vld [vmem:[#allocation2 + $0x4c] sm:$0xf]
      %v2001 = vld [vmem:[#allocation2 + $0x50] sm:$0xf]
      %v2002 = vld [vmem:[#allocation2 + $0x54] sm:$0xf]
      %v2003 = vld [vmem:[#allocation2 + $0x58] sm:$0xf]
      %v2004 = vld [vmem:[#allocation2 + $0x5c] sm:$0xf]
      %v2005 = vld [vmem:[#allocation2 + $0x60] sm:$0xf]
      %v2006 = vld [vmem:[#allocation2 + $0x64] sm:$0xf]
      %v2007 = vld [vmem:[#allocation2 + $0x68] sm:$0xf]
      %v2008 = vld [vmem:[#allocation2 + $0x6c] sm:$0xf]
      %v2009 = vld [vmem:[#allocation2 + $0x70] sm:$0xf]
      %v2010 = vld [vmem:[#allocation2 + $0x74] sm:$0xf]
      %v2011 = vld [vmem:[#allocation2 + $0x78] sm:$0xf]
      %v2012 = vld [vmem:[#allocation2 + $0x7c] sm:$0xf]
      %v2013 = vld [vmem:[#allocation2 + $0x80] sm:$0xf]
      %v2014 = vld [vmem:[#allocation2 + $0x84] sm:$0xf]
      %v2015 = vld [vmem:[#allocation2 + $0x88] sm:$0xf]
      %v2016 = vld [vmem:[#allocation2 + $0x8c] sm:$0xf]
      %v2017 = vld [vmem:[#allocation2 + $0x90] sm:$0xf]
      %v2018 = vld [vmem:[#allocation2 + $0x94] sm:$0xf]
      %v2019 = vld [vmem:[#allocation2 + $0x98] sm:$0xf]
      %v2020 = vld [vmem:[#allocation2 + $0x9c] sm:$0xf]
      %v2021 = vld [vmem:[#allocation2 + $0xa0] sm:$0xf]
      %v2022 = vld [vmem:[#allocation2 + $0xa4] sm:$0xf]
      %v2023 = vld [vmem:[#allocation2 + $0xa8] sm:$0xf]
      %v2024 = vld [vmem:[#allocation2 + $0xac] sm:$0xf]
      %v2025 = vld [vmem:[#allocation2 + $0xb0] sm:$0xf]
      %v2026 = vld [vmem:[#allocation2 + $0xb4] sm:$0xf]
      %v2027 = vld [vmem:[#allocation2 + $0xb8] sm:$0xf]
      %v2028 = vld [vmem:[#allocation2 + $0xbc] sm:$0xf]
      %v2029 = vld [vmem:[#allocation2 + $0xc0] sm:$0xf]
      %v2030 = vld [vmem:[#allocation2 + $0xc4] sm:$0xf]
      %v2031 = vld [vmem:[#allocation2 + $0xc8] sm:$0xf]
      %v2032 = vld [vmem:[#allocation2 + $0xcc] sm:$0xf]
      %v2033 = vld [vmem:[#allocation2 + $0xd0] sm:$0xf]
      %v2034 = vld [vmem:[#allocation2 + $0xd4] sm:$0xf]
      %v2035 = vld [vmem:[#allocation2 + $0xd8] sm:$0xf]
      %v2036 = vld [vmem:[#allocation2 + $0xdc] sm:$0xf]
      %v2037 = vld [vmem:[#allocation2 + $0xe0] sm:$0xf]
      %s2038 = scalar_lea.vmem %s5, 12
      %v2039 = vld [vmem:[%s2038] sm:$0xf]
      %v2094 = vunpack.c.l.b16 %v1984
      %v2095 = vunpack.c.l.b16 %v1985
      %v2096 = vunpack.c.l.b16 %v1986
      %v2097 = vunpack.c.l.b16 %v1987
      %v2098 = vunpack.c.l.b16 %v1988
      %v2099 = vunpack.c.l.b16 %v1989
      %v2100 = vunpack.c.l.b16 %v1990
      %v2101 = vunpack.c.l.b16 %v1991
      %v2102 = vunpack.c.l.b16 %v1992
      %v2103 = vunpack.c.l.b16 %v1993
      %v2104 = vunpack.c.l.b16 %v1994
      %v2105 = vunpack.c.l.b16 %v1995
      %v2106 = vunpack.c.l.b16 %v1996
      %v2107 = vunpack.c.l.b16 %v1997
      %v2108 = vunpack.c.l.b16 %v1998
      %v2109 = vunpack.c.l.b16 %v1999
      %v2110 = vunpack.c.l.b16 %v2000
      %v2111 = vunpack.c.l.b16 %v2001
      %v2112 = vunpack.c.l.b16 %v2002
      %v2113 = vunpack.c.l.b16 %v2003
      %v2114 = vunpack.c.l.b16 %v2004
      %v2115 = vunpack.c.l.b16 %v2005
      %v2116 = vunpack.c.l.b16 %v2006
      %v2117 = vunpack.c.l.b16 %v2007
      %v2118 = vunpack.c.l.b16 %v2008
      %v2119 = vunpack.c.l.b16 %v2009
      %v2120 = vunpack.c.l.b16 %v2010
      %v2121 = vunpack.c.l.b16 %v2011
      %v2122 = vunpack.c.l.b16 %v2012
      %v2123 = vunpack.c.l.b16 %v2013
      %v2124 = vunpack.c.l.b16 %v2014
      %v2125 = vunpack.c.l.b16 %v2015
      %v2126 = vunpack.c.l.b16 %v2016
      %v2127 = vunpack.c.l.b16 %v2017
      %v2128 = vunpack.c.l.b16 %v2018
      %v2129 = vunpack.c.l.b16 %v2019
      %v2130 = vunpack.c.l.b16 %v2020
      %v2131 = vunpack.c.l.b16 %v2021
      %v2132 = vunpack.c.l.b16 %v2022
      %v2133 = vunpack.c.l.b16 %v2023
      %v2134 = vunpack.c.l.b16 %v2024
      %v2135 = vunpack.c.l.b16 %v2025
      %v2136 = vunpack.c.l.b16 %v2026
      %v2137 = vunpack.c.l.b16 %v2027
      %v2138 = vunpack.c.l.b16 %v2028
      %v2139 = vunpack.c.l.b16 %v2029
      %v2140 = vunpack.c.l.b16 %v2030
      %v2141 = vunpack.c.l.b16 %v2031
      %v2142 = vunpack.c.l.b16 %v2032
      %v2143 = vunpack.c.l.b16 %v2033
      %v2144 = vunpack.c.l.b16 %v2034
      %v2145 = vunpack.c.l.b16 %v2035
      %v2146 = vunpack.c.l.b16 %v2036
      %v2147 = vunpack.c.l.b16 %v2037
      %v2148 = vpack.c.b16 %v2095, %v2094
      %v2149 = vpack.c.b16 %v2097, %v2096
      %v2150 = vpack.c.b16 %v2099, %v2098
      %v2151 = vpack.c.b16 %v2101, %v2100
      %v2152 = vpack.c.b16 %v2103, %v2102
      %v2153 = vpack.c.b16 %v2105, %v2104
      %v2154 = vpack.c.b16 %v2107, %v2106
      %v2155 = vpack.c.b16 %v2109, %v2108
      %v2156 = vpack.c.b16 %v2111, %v2110
      %v2157 = vpack.c.b16 %v2113, %v2112
      %v2158 = vpack.c.b16 %v2115, %v2114
      %v2159 = vpack.c.b16 %v2117, %v2116
      %v2160 = vpack.c.b16 %v2119, %v2118
      %v2161 = vpack.c.b16 %v2121, %v2120
      %v2162 = vpack.c.b16 %v2123, %v2122
      %v2163 = vpack.c.b16 %v2125, %v2124
      %v2164 = vpack.c.b16 %v2127, %v2126
      %v2165 = vpack.c.b16 %v2129, %v2128
      %v2166 = vpack.c.b16 %v2131, %v2130
      %v2167 = vpack.c.b16 %v2133, %v2132
      %v2168 = vpack.c.b16 %v2135, %v2134
      %v2169 = vpack.c.b16 %v2137, %v2136
      %v2170 = vpack.c.b16 %v2139, %v2138
      %v2171 = vpack.c.b16 %v2141, %v2140
      %v2172 = vpack.c.b16 %v2143, %v2142
      %v2173 = vpack.c.b16 %v2145, %v2144
      %v2174 = vpack.c.b16 %v2147, %v2146
      %v2176 = vsel %vm1209, %v2148, 0
      %v2179 = vsel %vm1209, %v2149, 0
      %v2182 = vsel %vm1209, %v2150, 0
      %v2185 = vsel %vm1209, %v2151, 0
      %v2188 = vsel %vm1209, %v2152, 0
      %v2191 = vsel %vm1209, %v2153, 0
      %v2194 = vsel %vm1209, %v2154, 0
      %v2197 = vsel %vm1209, %v2155, 0
      %v2200 = vsel %vm1209, %v2156, 0
      %v2203 = vsel %vm1209, %v2157, 0
      %v2206 = vsel %vm1209, %v2158, 0
      %v2209 = vsel %vm1209, %v2159, 0
      %v2212 = vsel %vm1209, %v2160, 0
      %v2215 = vsel %vm1209, %v2161, 0
      %v2218 = vsel %vm1209, %v2162, 0
      %v2221 = vsel %vm1209, %v2163, 0
      %v2224 = vsel %vm1209, %v2164, 0
      %v2227 = vsel %vm1209, %v2165, 0
      %v2230 = vsel %vm1209, %v2166, 0
      %v2233 = vsel %vm1209, %v2167, 0
      %v2236 = vsel %vm1209, %v2168, 0
      %v2239 = vsel %vm1209, %v2169, 0
      %v2242 = vsel %vm1209, %v2170, 0
      %v2245 = vsel %vm1209, %v2171, 0
      %v2248 = vsel %vm1209, %v2172, 0
      %v2251 = vsel %vm1209, %v2173, 0
      %v2254 = vsel %vm1209, %v2174, 0
      %v2257 = vsel %vm1291, %v2039, 0
      %2259 = vmatpush.bf16.msra.mxu0 0
      %2260 = vmatpush.bf16.msra.mxu0 0
      %2261 = vmatpush.bf16.msra.mxu0 0
      %2262 = vmatpush.bf16.msra.mxu0 0
      %2263 = vmatpush.bf16.msra.mxu0 0
      %2264 = vmatpush.bf16.msra.mxu0 0
      %2265 = vmatpush.bf16.msra.mxu0 0
      %2266 = vmatpush.bf16.msra.mxu0 %v2257
      %2267 = vmatmul.bf16.gmra.mxu0 %v2176
      %v2268 = vpop.f32.mrf.mxu0
      %v2269 = vadd.f32 0.0, %v2268
      %v2270 = vpop.f32.mrf.mxu0
      %v2271 = vadd.f32 0.0, %v2270
      %2272 = vmatmul.bf16.gmra.mxu0 %v2179
      %v2273 = vpop.f32.mrf.mxu0
      %v2274 = vadd.f32 0.0, %v2273
      %v2275 = vpop.f32.mrf.mxu0
      %v2276 = vadd.f32 0.0, %v2275
      %2277 = vmatmul.bf16.gmra.mxu0 %v2182
      %v2278 = vpop.f32.mrf.mxu0
      %v2279 = vadd.f32 0.0, %v2278
      %v2280 = vpop.f32.mrf.mxu0
      %v2281 = vadd.f32 0.0, %v2280
      %2282 = vmatmul.bf16.gmra.mxu0 %v2185
      %v2283 = vpop.f32.mrf.mxu0
      %v2284 = vadd.f32 0.0, %v2283
      %v2285 = vpop.f32.mrf.mxu0
      %v2286 = vadd.f32 0.0, %v2285
      %2287 = vmatmul.bf16.gmra.mxu0 %v2188
      %v2288 = vpop.f32.mrf.mxu0
      %v2289 = vadd.f32 0.0, %v2288
      %v2290 = vpop.f32.mrf.mxu0
      %v2291 = vadd.f32 0.0, %v2290
      %2292 = vmatmul.bf16.gmra.mxu0 %v2191
      %v2293 = vpop.f32.mrf.mxu0
      %v2294 = vadd.f32 0.0, %v2293
      %v2295 = vpop.f32.mrf.mxu0
      %v2296 = vadd.f32 0.0, %v2295
      %2297 = vmatmul.bf16.gmra.mxu0 %v2194
      %v2298 = vpop.f32.mrf.mxu0
      %v2299 = vadd.f32 0.0, %v2298
      %v2300 = vpop.f32.mrf.mxu0
      %v2301 = vadd.f32 0.0, %v2300
      %2302 = vmatmul.bf16.gmra.mxu0 %v2197
      %v2303 = vpop.f32.mrf.mxu0
      %v2304 = vadd.f32 0.0, %v2303
      %v2305 = vpop.f32.mrf.mxu0
      %v2306 = vadd.f32 0.0, %v2305
      %2307 = vmatmul.bf16.gmra.mxu0 %v2200
      %v2308 = vpop.f32.mrf.mxu0
      %v2309 = vadd.f32 0.0, %v2308
      %v2310 = vpop.f32.mrf.mxu0
      %v2311 = vadd.f32 0.0, %v2310
      %2312 = vmatmul.bf16.gmra.mxu0 %v2203
      %v2313 = vpop.f32.mrf.mxu0
      %v2314 = vadd.f32 0.0, %v2313
      %v2315 = vpop.f32.mrf.mxu0
      %v2316 = vadd.f32 0.0, %v2315
      %2317 = vmatmul.bf16.gmra.mxu0 %v2206
      %v2318 = vpop.f32.mrf.mxu0
      %v2319 = vadd.f32 0.0, %v2318
      %v2320 = vpop.f32.mrf.mxu0
      %v2321 = vadd.f32 0.0, %v2320
      %2322 = vmatmul.bf16.gmra.mxu0 %v2209
      %v2323 = vpop.f32.mrf.mxu0
      %v2324 = vadd.f32 0.0, %v2323
      %v2325 = vpop.f32.mrf.mxu0
      %v2326 = vadd.f32 0.0, %v2325
      %2327 = vmatmul.bf16.gmra.mxu0 %v2212
      %v2328 = vpop.f32.mrf.mxu0
      %v2329 = vadd.f32 0.0, %v2328
      %v2330 = vpop.f32.mrf.mxu0
      %v2331 = vadd.f32 0.0, %v2330
      %2332 = vmatmul.bf16.gmra.mxu0 %v2215
      %v2333 = vpop.f32.mrf.mxu0
      %v2334 = vadd.f32 0.0, %v2333
      %v2335 = vpop.f32.mrf.mxu0
      %v2336 = vadd.f32 0.0, %v2335
      %2337 = vmatmul.bf16.gmra.mxu0 %v2218
      %v2338 = vpop.f32.mrf.mxu0
      %v2339 = vadd.f32 0.0, %v2338
      %v2340 = vpop.f32.mrf.mxu0
      %v2341 = vadd.f32 0.0, %v2340
      %2342 = vmatmul.bf16.gmra.mxu0 %v2221
      %v2343 = vpop.f32.mrf.mxu0
      %v2344 = vadd.f32 0.0, %v2343
      %v2345 = vpop.f32.mrf.mxu0
      %v2346 = vadd.f32 0.0, %v2345
      %2347 = vmatmul.bf16.gmra.mxu0 %v2224
      %v2348 = vpop.f32.mrf.mxu0
      %v2349 = vadd.f32 0.0, %v2348
      %v2350 = vpop.f32.mrf.mxu0
      %v2351 = vadd.f32 0.0, %v2350
      %2352 = vmatmul.bf16.gmra.mxu0 %v2227
      %v2353 = vpop.f32.mrf.mxu0
      %v2354 = vadd.f32 0.0, %v2353
      %v2355 = vpop.f32.mrf.mxu0
      %v2356 = vadd.f32 0.0, %v2355
      %2357 = vmatmul.bf16.gmra.mxu0 %v2230
      %v2358 = vpop.f32.mrf.mxu0
      %v2359 = vadd.f32 0.0, %v2358
      %v2360 = vpop.f32.mrf.mxu0
      %v2361 = vadd.f32 0.0, %v2360
      %2362 = vmatmul.bf16.gmra.mxu0 %v2233
      %v2363 = vpop.f32.mrf.mxu0
      %v2364 = vadd.f32 0.0, %v2363
      %v2365 = vpop.f32.mrf.mxu0
      %v2366 = vadd.f32 0.0, %v2365
      %2367 = vmatmul.bf16.gmra.mxu0 %v2236
      %v2368 = vpop.f32.mrf.mxu0
      %v2369 = vadd.f32 0.0, %v2368
      %v2370 = vpop.f32.mrf.mxu0
      %v2371 = vadd.f32 0.0, %v2370
      %2372 = vmatmul.bf16.gmra.mxu0 %v2239
      %v2373 = vpop.f32.mrf.mxu0
      %v2374 = vadd.f32 0.0, %v2373
      %v2375 = vpop.f32.mrf.mxu0
      %v2376 = vadd.f32 0.0, %v2375
      %2377 = vmatmul.bf16.gmra.mxu0 %v2242
      %v2378 = vpop.f32.mrf.mxu0
      %v2379 = vadd.f32 0.0, %v2378
      %v2380 = vpop.f32.mrf.mxu0
      %v2381 = vadd.f32 0.0, %v2380
      %2382 = vmatmul.bf16.gmra.mxu0 %v2245
      %v2383 = vpop.f32.mrf.mxu0
      %v2384 = vadd.f32 0.0, %v2383
      %v2385 = vpop.f32.mrf.mxu0
      %v2386 = vadd.f32 0.0, %v2385
      %2387 = vmatmul.bf16.gmra.mxu0 %v2248
      %v2388 = vpop.f32.mrf.mxu0
      %v2389 = vadd.f32 0.0, %v2388
      %v2390 = vpop.f32.mrf.mxu0
      %v2391 = vadd.f32 0.0, %v2390
      %2392 = vmatmul.bf16.gmra.mxu0 %v2251
      %v2393 = vpop.f32.mrf.mxu0
      %v2394 = vadd.f32 0.0, %v2393
      %v2395 = vpop.f32.mrf.mxu0
      %v2396 = vadd.f32 0.0, %v2395
      %2397 = vmatmul.bf16.gmra.mxu0 %v2254
      %v2398 = vpop.f32.mrf.mxu0
      %v2399 = vadd.f32 0.0, %v2398
      %v2400 = vpop.f32.mrf.mxu0
      %v2401 = vadd.f32 0.0, %v2400
      %2402 = vdwg.mxu0
      %v2403 = vadd.f32 %v1930, %v2269
      %v2404 = vadd.f32 %v1931, %v2271
      %v2405 = vadd.f32 %v1932, %v2274
      %v2406 = vadd.f32 %v1933, %v2276
      %v2407 = vadd.f32 %v1934, %v2279
      %v2408 = vadd.f32 %v1935, %v2281
      %v2409 = vadd.f32 %v1936, %v2284
      %v2410 = vadd.f32 %v1937, %v2286
      %v2411 = vadd.f32 %v1938, %v2289
      %v2412 = vadd.f32 %v1939, %v2291
      %v2413 = vadd.f32 %v1940, %v2294
      %v2414 = vadd.f32 %v1941, %v2296
      %v2415 = vadd.f32 %v1942, %v2299
      %v2416 = vadd.f32 %v1943, %v2301
      %v2417 = vadd.f32 %v1944, %v2304
      %v2418 = vadd.f32 %v1945, %v2306
      %v2419 = vadd.f32 %v1946, %v2309
      %v2420 = vadd.f32 %v1947, %v2311
      %v2421 = vadd.f32 %v1948, %v2314
      %v2422 = vadd.f32 %v1949, %v2316
      %v2423 = vadd.f32 %v1950, %v2319
      %v2424 = vadd.f32 %v1951, %v2321
      %v2425 = vadd.f32 %v1952, %v2324
      %v2426 = vadd.f32 %v1953, %v2326
      %v2427 = vadd.f32 %v1954, %v2329
      %v2428 = vadd.f32 %v1955, %v2331
      %v2429 = vadd.f32 %v1956, %v2334
      %v2430 = vadd.f32 %v1957, %v2336
      %v2431 = vadd.f32 %v1958, %v2339
      %v2432 = vadd.f32 %v1959, %v2341
      %v2433 = vadd.f32 %v1960, %v2344
      %v2434 = vadd.f32 %v1961, %v2346
      %v2435 = vadd.f32 %v1962, %v2349
      %v2436 = vadd.f32 %v1963, %v2351
      %v2437 = vadd.f32 %v1964, %v2354
      %v2438 = vadd.f32 %v1965, %v2356
      %v2439 = vadd.f32 %v1966, %v2359
      %v2440 = vadd.f32 %v1967, %v2361
      %v2441 = vadd.f32 %v1968, %v2364
      %v2442 = vadd.f32 %v1969, %v2366
      %v2443 = vadd.f32 %v1970, %v2369
      %v2444 = vadd.f32 %v1971, %v2371
      %v2445 = vadd.f32 %v1972, %v2374
      %v2446 = vadd.f32 %v1973, %v2376
      %v2447 = vadd.f32 %v1974, %v2379
      %v2448 = vadd.f32 %v1975, %v2381
      %v2449 = vadd.f32 %v1976, %v2384
      %v2450 = vadd.f32 %v1977, %v2386
      %v2451 = vadd.f32 %v1978, %v2389
      %v2452 = vadd.f32 %v1979, %v2391
      %v2453 = vadd.f32 %v1980, %v2394
      %v2454 = vadd.f32 %v1981, %v2396
      %v2455 = vadd.f32 %v1982, %v2399
      %v2456 = vadd.f32 %v1983, %v2401
      %v2457 = vld [vmem:[#allocation2 + $0xc] sm:$0xf]
      %v2458 = vld [vmem:[#allocation2 + $0x10] sm:$0xf]
      %v2459 = vld [vmem:[#allocation2 + $0x14] sm:$0xf]
      %v2460 = vld [vmem:[#allocation2 + $0x18] sm:$0xf]
      %v2461 = vld [vmem:[#allocation2 + $0x1c] sm:$0xf]
      %v2462 = vld [vmem:[#allocation2 + $0x20] sm:$0xf]
      %v2463 = vld [vmem:[#allocation2 + $0x24] sm:$0xf]
      %v2464 = vld [vmem:[#allocation2 + $0x28] sm:$0xf]
      %v2465 = vld [vmem:[#allocation2 + $0x2c] sm:$0xf]
      %v2466 = vld [vmem:[#allocation2 + $0x30] sm:$0xf]
      %v2467 = vld [vmem:[#allocation2 + $0x34] sm:$0xf]
      %v2468 = vld [vmem:[#allocation2 + $0x38] sm:$0xf]
      %v2469 = vld [vmem:[#allocation2 + $0x3c] sm:$0xf]
      %v2470 = vld [vmem:[#allocation2 + $0x40] sm:$0xf]
      %v2471 = vld [vmem:[#allocation2 + $0x44] sm:$0xf]
      %v2472 = vld [vmem:[#allocation2 + $0x48] sm:$0xf]
      %v2473 = vld [vmem:[#allocation2 + $0x4c] sm:$0xf]
      %v2474 = vld [vmem:[#allocation2 + $0x50] sm:$0xf]
      %v2475 = vld [vmem:[#allocation2 + $0x54] sm:$0xf]
      %v2476 = vld [vmem:[#allocation2 + $0x58] sm:$0xf]
      %v2477 = vld [vmem:[#allocation2 + $0x5c] sm:$0xf]
      %v2478 = vld [vmem:[#allocation2 + $0x60] sm:$0xf]
      %v2479 = vld [vmem:[#allocation2 + $0x64] sm:$0xf]
      %v2480 = vld [vmem:[#allocation2 + $0x68] sm:$0xf]
      %v2481 = vld [vmem:[#allocation2 + $0x6c] sm:$0xf]
      %v2482 = vld [vmem:[#allocation2 + $0x70] sm:$0xf]
      %v2483 = vld [vmem:[#allocation2 + $0x74] sm:$0xf]
      %v2484 = vld [vmem:[#allocation2 + $0x78] sm:$0xf]
      %v2485 = vld [vmem:[#allocation2 + $0x7c] sm:$0xf]
      %v2486 = vld [vmem:[#allocation2 + $0x80] sm:$0xf]
      %v2487 = vld [vmem:[#allocation2 + $0x84] sm:$0xf]
      %v2488 = vld [vmem:[#allocation2 + $0x88] sm:$0xf]
      %v2489 = vld [vmem:[#allocation2 + $0x8c] sm:$0xf]
      %v2490 = vld [vmem:[#allocation2 + $0x90] sm:$0xf]
      %v2491 = vld [vmem:[#allocation2 + $0x94] sm:$0xf]
      %v2492 = vld [vmem:[#allocation2 + $0x98] sm:$0xf]
      %v2493 = vld [vmem:[#allocation2 + $0x9c] sm:$0xf]
      %v2494 = vld [vmem:[#allocation2 + $0xa0] sm:$0xf]
      %v2495 = vld [vmem:[#allocation2 + $0xa4] sm:$0xf]
      %v2496 = vld [vmem:[#allocation2 + $0xa8] sm:$0xf]
      %v2497 = vld [vmem:[#allocation2 + $0xac] sm:$0xf]
      %v2498 = vld [vmem:[#allocation2 + $0xb0] sm:$0xf]
      %v2499 = vld [vmem:[#allocation2 + $0xb4] sm:$0xf]
      %v2500 = vld [vmem:[#allocation2 + $0xb8] sm:$0xf]
      %v2501 = vld [vmem:[#allocation2 + $0xbc] sm:$0xf]
      %v2502 = vld [vmem:[#allocation2 + $0xc0] sm:$0xf]
      %v2503 = vld [vmem:[#allocation2 + $0xc4] sm:$0xf]
      %v2504 = vld [vmem:[#allocation2 + $0xc8] sm:$0xf]
      %v2505 = vld [vmem:[#allocation2 + $0xcc] sm:$0xf]
      %v2506 = vld [vmem:[#allocation2 + $0xd0] sm:$0xf]
      %v2507 = vld [vmem:[#allocation2 + $0xd4] sm:$0xf]
      %v2508 = vld [vmem:[#allocation2 + $0xd8] sm:$0xf]
      %v2509 = vld [vmem:[#allocation2 + $0xdc] sm:$0xf]
      %v2510 = vld [vmem:[#allocation2 + $0xe0] sm:$0xf]
      %v2511 = vld [vmem:[#allocation2 + $0xe4] sm:$0x1]
      %s2512 = scalar_lea.vmem %s5, 16
      %v2513 = vld [vmem:[%s2512] sm:$0xf]
      %v2569 = vunpack.c.l.b16 %v2457
      %v2570 = vunpack.c.l.b16 %v2458
      %v2571 = vunpack.c.l.b16 %v2459
      %v2572 = vunpack.c.l.b16 %v2460
      %v2573 = vunpack.c.l.b16 %v2461
      %v2574 = vunpack.c.l.b16 %v2462
      %v2575 = vunpack.c.l.b16 %v2463
      %v2576 = vunpack.c.l.b16 %v2464
      %v2577 = vunpack.c.l.b16 %v2465
      %v2578 = vunpack.c.l.b16 %v2466
      %v2579 = vunpack.c.l.b16 %v2467
      %v2580 = vunpack.c.l.b16 %v2468
      %v2581 = vunpack.c.l.b16 %v2469
      %v2582 = vunpack.c.l.b16 %v2470
      %v2583 = vunpack.c.l.b16 %v2471
      %v2584 = vunpack.c.l.b16 %v2472
      %v2585 = vunpack.c.l.b16 %v2473
      %v2586 = vunpack.c.l.b16 %v2474
      %v2587 = vunpack.c.l.b16 %v2475
      %v2588 = vunpack.c.l.b16 %v2476
      %v2589 = vunpack.c.l.b16 %v2477
      %v2590 = vunpack.c.l.b16 %v2478
      %v2591 = vunpack.c.l.b16 %v2479
      %v2592 = vunpack.c.l.b16 %v2480
      %v2593 = vunpack.c.l.b16 %v2481
      %v2594 = vunpack.c.l.b16 %v2482
      %v2595 = vunpack.c.l.b16 %v2483
      %v2596 = vunpack.c.l.b16 %v2484
      %v2597 = vunpack.c.l.b16 %v2485
      %v2598 = vunpack.c.l.b16 %v2486
      %v2599 = vunpack.c.l.b16 %v2487
      %v2600 = vunpack.c.l.b16 %v2488
      %v2601 = vunpack.c.l.b16 %v2489
      %v2602 = vunpack.c.l.b16 %v2490
      %v2603 = vunpack.c.l.b16 %v2491
      %v2604 = vunpack.c.l.b16 %v2492
      %v2605 = vunpack.c.l.b16 %v2493
      %v2606 = vunpack.c.l.b16 %v2494
      %v2607 = vunpack.c.l.b16 %v2495
      %v2608 = vunpack.c.l.b16 %v2496
      %v2609 = vunpack.c.l.b16 %v2497
      %v2610 = vunpack.c.l.b16 %v2498
      %v2611 = vunpack.c.l.b16 %v2499
      %v2612 = vunpack.c.l.b16 %v2500
      %v2613 = vunpack.c.l.b16 %v2501
      %v2614 = vunpack.c.l.b16 %v2502
      %v2615 = vunpack.c.l.b16 %v2503
      %v2616 = vunpack.c.l.b16 %v2504
      %v2617 = vunpack.c.l.b16 %v2505
      %v2618 = vunpack.c.l.b16 %v2506
      %v2619 = vunpack.c.l.b16 %v2507
      %v2620 = vunpack.c.l.b16 %v2508
      %v2621 = vunpack.c.l.b16 %v2509
      %v2622 = vunpack.c.l.b16 %v2510
      %v2623 = vunpack.c.l.b16 %v2511
      %v2624 = vpack.c.b16 %v2570, %v2569
      %v2625 = vpack.c.b16 %v2572, %v2571
      %v2626 = vpack.c.b16 %v2574, %v2573
      %v2627 = vpack.c.b16 %v2576, %v2575
      %v2628 = vpack.c.b16 %v2578, %v2577
      %v2629 = vpack.c.b16 %v2580, %v2579
      %v2630 = vpack.c.b16 %v2582, %v2581
      %v2631 = vpack.c.b16 %v2584, %v2583
      %v2632 = vpack.c.b16 %v2586, %v2585
      %v2633 = vpack.c.b16 %v2588, %v2587
      %v2634 = vpack.c.b16 %v2590, %v2589
      %v2635 = vpack.c.b16 %v2592, %v2591
      %v2636 = vpack.c.b16 %v2594, %v2593
      %v2637 = vpack.c.b16 %v2596, %v2595
      %v2638 = vpack.c.b16 %v2598, %v2597
      %v2639 = vpack.c.b16 %v2600, %v2599
      %v2640 = vpack.c.b16 %v2602, %v2601
      %v2641 = vpack.c.b16 %v2604, %v2603
      %v2642 = vpack.c.b16 %v2606, %v2605
      %v2643 = vpack.c.b16 %v2608, %v2607
      %v2644 = vpack.c.b16 %v2610, %v2609
      %v2645 = vpack.c.b16 %v2612, %v2611
      %v2646 = vpack.c.b16 %v2614, %v2613
      %v2647 = vpack.c.b16 %v2616, %v2615
      %v2648 = vpack.c.b16 %v2618, %v2617
      %v2649 = vpack.c.b16 %v2620, %v2619
      %v2650 = vpack.c.b16 %v2622, %v2621
      %v2651 = vpack.c.b16 %v2623, %v2623
      %v2653 = vshrl.u32 %v2624, 16
      %v2655 = vshll.u32 %v2624, 16
      %v2657 = vrot.slane %v2655, 1
      %v2658 = vor.u32 %v2653, %v2657
      %v2660 = vshll.u32 %v2625, 16
      %v2662 = vrot.slane %v2660, 1
      %v2663 = vsel %vm988, %v2658, %v2662
      %v2664 = vshrl.u32 %v2625, 16
      %v2666 = vor.u32 %v2664, %v2662
      %v2668 = vshll.u32 %v2626, 16
      %v2670 = vrot.slane %v2668, 1
      %v2671 = vsel %vm988, %v2666, %v2670
      %v2672 = vshrl.u32 %v2626, 16
      %v2674 = vor.u32 %v2672, %v2670
      %v2676 = vshll.u32 %v2627, 16
      %v2678 = vrot.slane %v2676, 1
      %v2679 = vsel %vm988, %v2674, %v2678
      %v2680 = vshrl.u32 %v2627, 16
      %v2682 = vor.u32 %v2680, %v2678
      %v2684 = vshll.u32 %v2628, 16
      %v2686 = vrot.slane %v2684, 1
      %v2687 = vsel %vm988, %v2682, %v2686
      %v2688 = vshrl.u32 %v2628, 16
      %v2690 = vor.u32 %v2688, %v2686
      %v2692 = vshll.u32 %v2629, 16
      %v2694 = vrot.slane %v2692, 1
      %v2695 = vsel %vm988, %v2690, %v2694
      %v2696 = vshrl.u32 %v2629, 16
      %v2698 = vor.u32 %v2696, %v2694
      %v2700 = vshll.u32 %v2630, 16
      %v2702 = vrot.slane %v2700, 1
      %v2703 = vsel %vm988, %v2698, %v2702
      %v2704 = vshrl.u32 %v2630, 16
      %v2706 = vor.u32 %v2704, %v2702
      %v2708 = vshll.u32 %v2631, 16
      %v2710 = vrot.slane %v2708, 1
      %v2711 = vsel %vm988, %v2706, %v2710
      %v2712 = vshrl.u32 %v2631, 16
      %v2714 = vor.u32 %v2712, %v2710
      %v2716 = vshll.u32 %v2632, 16
      %v2718 = vrot.slane %v2716, 1
      %v2719 = vsel %vm988, %v2714, %v2718
      %v2720 = vshrl.u32 %v2632, 16
      %v2722 = vor.u32 %v2720, %v2718
      %v2724 = vshll.u32 %v2633, 16
      %v2726 = vrot.slane %v2724, 1
      %v2727 = vsel %vm988, %v2722, %v2726
      %v2728 = vshrl.u32 %v2633, 16
      %v2730 = vor.u32 %v2728, %v2726
      %v2732 = vshll.u32 %v2634, 16
      %v2734 = vrot.slane %v2732, 1
      %v2735 = vsel %vm988, %v2730, %v2734
      %v2736 = vshrl.u32 %v2634, 16
      %v2738 = vor.u32 %v2736, %v2734
      %v2740 = vshll.u32 %v2635, 16
      %v2742 = vrot.slane %v2740, 1
      %v2743 = vsel %vm988, %v2738, %v2742
      %v2744 = vshrl.u32 %v2635, 16
      %v2746 = vor.u32 %v2744, %v2742
      %v2748 = vshll.u32 %v2636, 16
      %v2750 = vrot.slane %v2748, 1
      %v2751 = vsel %vm988, %v2746, %v2750
      %v2752 = vshrl.u32 %v2636, 16
      %v2754 = vor.u32 %v2752, %v2750
      %v2756 = vshll.u32 %v2637, 16
      %v2758 = vrot.slane %v2756, 1
      %v2759 = vsel %vm988, %v2754, %v2758
      %v2760 = vshrl.u32 %v2637, 16
      %v2762 = vor.u32 %v2760, %v2758
      %v2764 = vshll.u32 %v2638, 16
      %v2766 = vrot.slane %v2764, 1
      %v2767 = vsel %vm988, %v2762, %v2766
      %v2768 = vshrl.u32 %v2638, 16
      %v2770 = vor.u32 %v2768, %v2766
      %v2772 = vshll.u32 %v2639, 16
      %v2774 = vrot.slane %v2772, 1
      %v2775 = vsel %vm988, %v2770, %v2774
      %v2776 = vshrl.u32 %v2639, 16
      %v2778 = vor.u32 %v2776, %v2774
      %v2780 = vshll.u32 %v2640, 16
      %v2782 = vrot.slane %v2780, 1
      %v2783 = vsel %vm988, %v2778, %v2782
      %v2784 = vshrl.u32 %v2640, 16
      %v2786 = vor.u32 %v2784, %v2782
      %v2788 = vshll.u32 %v2641, 16
      %v2790 = vrot.slane %v2788, 1
      %v2791 = vsel %vm988, %v2786, %v2790
      %v2792 = vshrl.u32 %v2641, 16
      %v2794 = vor.u32 %v2792, %v2790
      %v2796 = vshll.u32 %v2642, 16
      %v2798 = vrot.slane %v2796, 1
      %v2799 = vsel %vm988, %v2794, %v2798
      %v2800 = vshrl.u32 %v2642, 16
      %v2802 = vor.u32 %v2800, %v2798
      %v2804 = vshll.u32 %v2643, 16
      %v2806 = vrot.slane %v2804, 1
      %v2807 = vsel %vm988, %v2802, %v2806
      %v2808 = vshrl.u32 %v2643, 16
      %v2810 = vor.u32 %v2808, %v2806
      %v2812 = vshll.u32 %v2644, 16
      %v2814 = vrot.slane %v2812, 1
      %v2815 = vsel %vm988, %v2810, %v2814
      %v2816 = vshrl.u32 %v2644, 16
      %v2818 = vor.u32 %v2816, %v2814
      %v2820 = vshll.u32 %v2645, 16
      %v2822 = vrot.slane %v2820, 1
      %v2823 = vsel %vm988, %v2818, %v2822
      %v2824 = vshrl.u32 %v2645, 16
      %v2826 = vor.u32 %v2824, %v2822
      %v2828 = vshll.u32 %v2646, 16
      %v2830 = vrot.slane %v2828, 1
      %v2831 = vsel %vm988, %v2826, %v2830
      %v2832 = vshrl.u32 %v2646, 16
      %v2834 = vor.u32 %v2832, %v2830
      %v2836 = vshll.u32 %v2647, 16
      %v2838 = vrot.slane %v2836, 1
      %v2839 = vsel %vm988, %v2834, %v2838
      %v2840 = vshrl.u32 %v2647, 16
      %v2842 = vor.u32 %v2840, %v2838
      %v2844 = vshll.u32 %v2648, 16
      %v2846 = vrot.slane %v2844, 1
      %v2847 = vsel %vm988, %v2842, %v2846
      %v2848 = vshrl.u32 %v2648, 16
      %v2850 = vor.u32 %v2848, %v2846
      %v2852 = vshll.u32 %v2649, 16
      %v2854 = vrot.slane %v2852, 1
      %v2855 = vsel %vm988, %v2850, %v2854
      %v2856 = vshrl.u32 %v2649, 16
      %v2858 = vor.u32 %v2856, %v2854
      %v2860 = vshll.u32 %v2650, 16
      %v2862 = vrot.slane %v2860, 1
      %v2863 = vsel %vm988, %v2858, %v2862
      %v2864 = vshrl.u32 %v2650, 16
      %v2866 = vor.u32 %v2864, %v2862
      %v2868 = vshll.u32 %v2651, 16
      %v2870 = vrot.slane %v2868, 1
      %v2871 = vsel %vm988, %v2866, %v2870
      %v2873 = vsel %vm1209, %v2663, 0
      %v2876 = vsel %vm1209, %v2671, 0
      %v2879 = vsel %vm1209, %v2679, 0
      %v2882 = vsel %vm1209, %v2687, 0
      %v2885 = vsel %vm1209, %v2695, 0
      %v2888 = vsel %vm1209, %v2703, 0
      %v2891 = vsel %vm1209, %v2711, 0
      %v2894 = vsel %vm1209, %v2719, 0
      %v2897 = vsel %vm1209, %v2727, 0
      %v2900 = vsel %vm1209, %v2735, 0
      %v2903 = vsel %vm1209, %v2743, 0
      %v2906 = vsel %vm1209, %v2751, 0
      %v2909 = vsel %vm1209, %v2759, 0
      %v2912 = vsel %vm1209, %v2767, 0
      %v2915 = vsel %vm1209, %v2775, 0
      %v2918 = vsel %vm1209, %v2783, 0
      %v2921 = vsel %vm1209, %v2791, 0
      %v2924 = vsel %vm1209, %v2799, 0
      %v2927 = vsel %vm1209, %v2807, 0
      %v2930 = vsel %vm1209, %v2815, 0
      %v2933 = vsel %vm1209, %v2823, 0
      %v2936 = vsel %vm1209, %v2831, 0
      %v2939 = vsel %vm1209, %v2839, 0
      %v2942 = vsel %vm1209, %v2847, 0
      %v2945 = vsel %vm1209, %v2855, 0
      %v2948 = vsel %vm1209, %v2863, 0
      %v2951 = vsel %vm1209, %v2871, 0
      %v2954 = vsel %vm1291, %v2513, 0
      %2956 = vmatpush.bf16.msra.mxu0 0
      %2957 = vmatpush.bf16.msra.mxu0 0
      %2958 = vmatpush.bf16.msra.mxu0 0
      %2959 = vmatpush.bf16.msra.mxu0 0
      %2960 = vmatpush.bf16.msra.mxu0 0
      %2961 = vmatpush.bf16.msra.mxu0 0
      %2962 = vmatpush.bf16.msra.mxu0 0
      %2963 = vmatpush.bf16.msra.mxu0 %v2954
      %2964 = vmatmul.bf16.gmra.mxu0 %v2873
      %v2965 = vpop.f32.mrf.mxu0
      %v2966 = vadd.f32 0.0, %v2965
      %v2967 = vpop.f32.mrf.mxu0
      %v2968 = vadd.f32 0.0, %v2967
      %2969 = vmatmul.bf16.gmra.mxu0 %v2876
      %v2970 = vpop.f32.mrf.mxu0
      %v2971 = vadd.f32 0.0, %v2970
      %v2972 = vpop.f32.mrf.mxu0
      %v2973 = vadd.f32 0.0, %v2972
      %2974 = vmatmul.bf16.gmra.mxu0 %v2879
      %v2975 = vpop.f32.mrf.mxu0
      %v2976 = vadd.f32 0.0, %v2975
      %v2977 = vpop.f32.mrf.mxu0
      %v2978 = vadd.f32 0.0, %v2977
      %2979 = vmatmul.bf16.gmra.mxu0 %v2882
      %v2980 = vpop.f32.mrf.mxu0
      %v2981 = vadd.f32 0.0, %v2980
      %v2982 = vpop.f32.mrf.mxu0
      %v2983 = vadd.f32 0.0, %v2982
      %2984 = vmatmul.bf16.gmra.mxu0 %v2885
      %v2985 = vpop.f32.mrf.mxu0
      %v2986 = vadd.f32 0.0, %v2985
      %v2987 = vpop.f32.mrf.mxu0
      %v2988 = vadd.f32 0.0, %v2987
      %2989 = vmatmul.bf16.gmra.mxu0 %v2888
      %v2990 = vpop.f32.mrf.mxu0
      %v2991 = vadd.f32 0.0, %v2990
      %v2992 = vpop.f32.mrf.mxu0
      %v2993 = vadd.f32 0.0, %v2992
      %2994 = vmatmul.bf16.gmra.mxu0 %v2891
      %v2995 = vpop.f32.mrf.mxu0
      %v2996 = vadd.f32 0.0, %v2995
      %v2997 = vpop.f32.mrf.mxu0
      %v2998 = vadd.f32 0.0, %v2997
      %2999 = vmatmul.bf16.gmra.mxu0 %v2894
      %v3000 = vpop.f32.mrf.mxu0
      %v3001 = vadd.f32 0.0, %v3000
      %v3002 = vpop.f32.mrf.mxu0
      %v3003 = vadd.f32 0.0, %v3002
      %3004 = vmatmul.bf16.gmra.mxu0 %v2897
      %v3005 = vpop.f32.mrf.mxu0
      %v3006 = vadd.f32 0.0, %v3005
      %v3007 = vpop.f32.mrf.mxu0
      %v3008 = vadd.f32 0.0, %v3007
      %3009 = vmatmul.bf16.gmra.mxu0 %v2900
      %v3010 = vpop.f32.mrf.mxu0
      %v3011 = vadd.f32 0.0, %v3010
      %v3012 = vpop.f32.mrf.mxu0
      %v3013 = vadd.f32 0.0, %v3012
      %3014 = vmatmul.bf16.gmra.mxu0 %v2903
      %v3015 = vpop.f32.mrf.mxu0
      %v3016 = vadd.f32 0.0, %v3015
      %v3017 = vpop.f32.mrf.mxu0
      %v3018 = vadd.f32 0.0, %v3017
      %3019 = vmatmul.bf16.gmra.mxu0 %v2906
      %v3020 = vpop.f32.mrf.mxu0
      %v3021 = vadd.f32 0.0, %v3020
      %v3022 = vpop.f32.mrf.mxu0
      %v3023 = vadd.f32 0.0, %v3022
      %3024 = vmatmul.bf16.gmra.mxu0 %v2909
      %v3025 = vpop.f32.mrf.mxu0
      %v3026 = vadd.f32 0.0, %v3025
      %v3027 = vpop.f32.mrf.mxu0
      %v3028 = vadd.f32 0.0, %v3027
      %3029 = vmatmul.bf16.gmra.mxu0 %v2912
      %v3030 = vpop.f32.mrf.mxu0
      %v3031 = vadd.f32 0.0, %v3030
      %v3032 = vpop.f32.mrf.mxu0
      %v3033 = vadd.f32 0.0, %v3032
      %3034 = vmatmul.bf16.gmra.mxu0 %v2915
      %v3035 = vpop.f32.mrf.mxu0
      %v3036 = vadd.f32 0.0, %v3035
      %v3037 = vpop.f32.mrf.mxu0
      %v3038 = vadd.f32 0.0, %v3037
      %3039 = vmatmul.bf16.gmra.mxu0 %v2918
      %v3040 = vpop.f32.mrf.mxu0
      %v3041 = vadd.f32 0.0, %v3040
      %v3042 = vpop.f32.mrf.mxu0
      %v3043 = vadd.f32 0.0, %v3042
      %3044 = vmatmul.bf16.gmra.mxu0 %v2921
      %v3045 = vpop.f32.mrf.mxu0
      %v3046 = vadd.f32 0.0, %v3045
      %v3047 = vpop.f32.mrf.mxu0
      %v3048 = vadd.f32 0.0, %v3047
      %3049 = vmatmul.bf16.gmra.mxu0 %v2924
      %v3050 = vpop.f32.mrf.mxu0
      %v3051 = vadd.f32 0.0, %v3050
      %v3052 = vpop.f32.mrf.mxu0
      %v3053 = vadd.f32 0.0, %v3052
      %3054 = vmatmul.bf16.gmra.mxu0 %v2927
      %v3055 = vpop.f32.mrf.mxu0
      %v3056 = vadd.f32 0.0, %v3055
      %v3057 = vpop.f32.mrf.mxu0
      %v3058 = vadd.f32 0.0, %v3057
      %3059 = vmatmul.bf16.gmra.mxu0 %v2930
      %v3060 = vpop.f32.mrf.mxu0
      %v3061 = vadd.f32 0.0, %v3060
      %v3062 = vpop.f32.mrf.mxu0
      %v3063 = vadd.f32 0.0, %v3062
      %3064 = vmatmul.bf16.gmra.mxu0 %v2933
      %v3065 = vpop.f32.mrf.mxu0
      %v3066 = vadd.f32 0.0, %v3065
      %v3067 = vpop.f32.mrf.mxu0
      %v3068 = vadd.f32 0.0, %v3067
      %3069 = vmatmul.bf16.gmra.mxu0 %v2936
      %v3070 = vpop.f32.mrf.mxu0
      %v3071 = vadd.f32 0.0, %v3070
      %v3072 = vpop.f32.mrf.mxu0
      %v3073 = vadd.f32 0.0, %v3072
      %3074 = vmatmul.bf16.gmra.mxu0 %v2939
      %v3075 = vpop.f32.mrf.mxu0
      %v3076 = vadd.f32 0.0, %v3075
      %v3077 = vpop.f32.mrf.mxu0
      %v3078 = vadd.f32 0.0, %v3077
      %3079 = vmatmul.bf16.gmra.mxu0 %v2942
      %v3080 = vpop.f32.mrf.mxu0
      %v3081 = vadd.f32 0.0, %v3080
      %v3082 = vpop.f32.mrf.mxu0
      %v3083 = vadd.f32 0.0, %v3082
      %3084 = vmatmul.bf16.gmra.mxu0 %v2945
      %v3085 = vpop.f32.mrf.mxu0
      %v3086 = vadd.f32 0.0, %v3085
      %v3087 = vpop.f32.mrf.mxu0
      %v3088 = vadd.f32 0.0, %v3087
      %3089 = vmatmul.bf16.gmra.mxu0 %v2948
      %v3090 = vpop.f32.mrf.mxu0
      %v3091 = vadd.f32 0.0, %v3090
      %v3092 = vpop.f32.mrf.mxu0
      %v3093 = vadd.f32 0.0, %v3092
      %3094 = vmatmul.bf16.gmra.mxu0 %v2951
      %v3095 = vpop.f32.mrf.mxu0
      %v3096 = vadd.f32 0.0, %v3095
      %v3097 = vpop.f32.mrf.mxu0
      %v3098 = vadd.f32 0.0, %v3097
      %3099 = vdwg.mxu0
      %v3100 = vadd.f32 %v2403, %v2966
      %v3101 = vadd.f32 %v2404, %v2968
      %v3102 = vadd.f32 %v2405, %v2971
      %v3103 = vadd.f32 %v2406, %v2973
      %v3104 = vadd.f32 %v2407, %v2976
      %v3105 = vadd.f32 %v2408, %v2978
      %v3106 = vadd.f32 %v2409, %v2981
      %v3107 = vadd.f32 %v2410, %v2983
      %v3108 = vadd.f32 %v2411, %v2986
      %v3109 = vadd.f32 %v2412, %v2988
      %v3110 = vadd.f32 %v2413, %v2991
      %v3111 = vadd.f32 %v2414, %v2993
      %v3112 = vadd.f32 %v2415, %v2996
      %v3113 = vadd.f32 %v2416, %v2998
      %v3114 = vadd.f32 %v2417, %v3001
      %v3115 = vadd.f32 %v2418, %v3003
      %v3116 = vadd.f32 %v2419, %v3006
      %v3117 = vadd.f32 %v2420, %v3008
      %v3118 = vadd.f32 %v2421, %v3011
      %v3119 = vadd.f32 %v2422, %v3013
      %v3120 = vadd.f32 %v2423, %v3016
      %v3121 = vadd.f32 %v2424, %v3018
      %v3122 = vadd.f32 %v2425, %v3021
      %v3123 = vadd.f32 %v2426, %v3023
      %v3124 = vadd.f32 %v2427, %v3026
      %v3125 = vadd.f32 %v2428, %v3028
      %v3126 = vadd.f32 %v2429, %v3031
      %v3127 = vadd.f32 %v2430, %v3033
      %v3128 = vadd.f32 %v2431, %v3036
      %v3129 = vadd.f32 %v2432, %v3038
      %v3130 = vadd.f32 %v2433, %v3041
      %v3131 = vadd.f32 %v2434, %v3043
      %v3132 = vadd.f32 %v2435, %v3046
      %v3133 = vadd.f32 %v2436, %v3048
      %v3134 = vadd.f32 %v2437, %v3051
      %v3135 = vadd.f32 %v2438, %v3053
      %v3136 = vadd.f32 %v2439, %v3056
      %v3137 = vadd.f32 %v2440, %v3058
      %v3138 = vadd.f32 %v2441, %v3061
      %v3139 = vadd.f32 %v2442, %v3063
      %v3140 = vadd.f32 %v2443, %v3066
      %v3141 = vadd.f32 %v2444, %v3068
      %v3142 = vadd.f32 %v2445, %v3071
      %v3143 = vadd.f32 %v2446, %v3073
      %v3144 = vadd.f32 %v2447, %v3076
      %v3145 = vadd.f32 %v2448, %v3078
      %v3146 = vadd.f32 %v2449, %v3081
      %v3147 = vadd.f32 %v2450, %v3083
      %v3148 = vadd.f32 %v2451, %v3086
      %v3149 = vadd.f32 %v2452, %v3088
      %v3150 = vadd.f32 %v2453, %v3091
      %v3151 = vadd.f32 %v2454, %v3093
      %v3152 = vadd.f32 %v2455, %v3096
      %v3153 = vadd.f32 %v2456, %v3098
      %v3154 = vld [vmem:[#allocation2 + $0xc] sm:$0xe]
      %s3155 = scalar_lea.vmem %s5, 20
      %v3156 = vld [vmem:[%s3155] sm:$0xf]
      %v3158 = vunpack.c.l.b16 %v3154
      %v3159 = vpack.c.b16 %v2570, %v3158
      %v3160 = vrot.slane %v3159, 1
      %v3161 = vrot.slane %v2625, 1
      %v3162 = vsel %vm1646, %v3160, %v3161
      %v3163 = vrot.slane %v2626, 1
      %v3164 = vsel %vm1646, %v3161, %v3163
      %v3165 = vrot.slane %v2627, 1
      %v3166 = vsel %vm1646, %v3163, %v3165
      %v3167 = vrot.slane %v2628, 1
      %v3168 = vsel %vm1646, %v3165, %v3167
      %v3169 = vrot.slane %v2629, 1
      %v3170 = vsel %vm1646, %v3167, %v3169
      %v3171 = vrot.slane %v2630, 1
      %v3172 = vsel %vm1646, %v3169, %v3171
      %v3173 = vrot.slane %v2631, 1
      %v3174 = vsel %vm1646, %v3171, %v3173
      %v3175 = vrot.slane %v2632, 1
      %v3176 = vsel %vm1646, %v3173, %v3175
      %v3177 = vrot.slane %v2633, 1
      %v3178 = vsel %vm1646, %v3175, %v3177
      %v3179 = vrot.slane %v2634, 1
      %v3180 = vsel %vm1646, %v3177, %v3179
      %v3181 = vrot.slane %v2635, 1
      %v3182 = vsel %vm1646, %v3179, %v3181
      %v3183 = vrot.slane %v2636, 1
      %v3184 = vsel %vm1646, %v3181, %v3183
      %v3185 = vrot.slane %v2637, 1
      %v3186 = vsel %vm1646, %v3183, %v3185
      %v3187 = vrot.slane %v2638, 1
      %v3188 = vsel %vm1646, %v3185, %v3187
      %v3189 = vrot.slane %v2639, 1
      %v3190 = vsel %vm1646, %v3187, %v3189
      %v3191 = vrot.slane %v2640, 1
      %v3192 = vsel %vm1646, %v3189, %v3191
      %v3193 = vrot.slane %v2641, 1
      %v3194 = vsel %vm1646, %v3191, %v3193
      %v3195 = vrot.slane %v2642, 1
      %v3196 = vsel %vm1646, %v3193, %v3195
      %v3197 = vrot.slane %v2643, 1
      %v3198 = vsel %vm1646, %v3195, %v3197
      %v3199 = vrot.slane %v2644, 1
      %v3200 = vsel %vm1646, %v3197, %v3199
      %v3201 = vrot.slane %v2645, 1
      %v3202 = vsel %vm1646, %v3199, %v3201
      %v3203 = vrot.slane %v2646, 1
      %v3204 = vsel %vm1646, %v3201, %v3203
      %v3205 = vrot.slane %v2647, 1
      %v3206 = vsel %vm1646, %v3203, %v3205
      %v3207 = vrot.slane %v2648, 1
      %v3208 = vsel %vm1646, %v3205, %v3207
      %v3209 = vrot.slane %v2649, 1
      %v3210 = vsel %vm1646, %v3207, %v3209
      %v3211 = vrot.slane %v2650, 1
      %v3212 = vsel %vm1646, %v3209, %v3211
      %v3213 = vrot.slane %v2651, 1
      %v3214 = vsel %vm1646, %v3211, %v3213
      %v3216 = vsel %vm1209, %v3162, 0
      %v3219 = vsel %vm1209, %v3164, 0
      %v3222 = vsel %vm1209, %v3166, 0
      %v3225 = vsel %vm1209, %v3168, 0
      %v3228 = vsel %vm1209, %v3170, 0
      %v3231 = vsel %vm1209, %v3172, 0
      %v3234 = vsel %vm1209, %v3174, 0
      %v3237 = vsel %vm1209, %v3176, 0
      %v3240 = vsel %vm1209, %v3178, 0
      %v3243 = vsel %vm1209, %v3180, 0
      %v3246 = vsel %vm1209, %v3182, 0
      %v3249 = vsel %vm1209, %v3184, 0
      %v3252 = vsel %vm1209, %v3186, 0
      %v3255 = vsel %vm1209, %v3188, 0
      %v3258 = vsel %vm1209, %v3190, 0
      %v3261 = vsel %vm1209, %v3192, 0
      %v3264 = vsel %vm1209, %v3194, 0
      %v3267 = vsel %vm1209, %v3196, 0
      %v3270 = vsel %vm1209, %v3198, 0
      %v3273 = vsel %vm1209, %v3200, 0
      %v3276 = vsel %vm1209, %v3202, 0
      %v3279 = vsel %vm1209, %v3204, 0
      %v3282 = vsel %vm1209, %v3206, 0
      %v3285 = vsel %vm1209, %v3208, 0
      %v3288 = vsel %vm1209, %v3210, 0
      %v3291 = vsel %vm1209, %v3212, 0
      %v3294 = vsel %vm1209, %v3214, 0
      %v3297 = vsel %vm1291, %v3156, 0
      %3299 = vmatpush.bf16.msra.mxu0 0
      %3300 = vmatpush.bf16.msra.mxu0 0
      %3301 = vmatpush.bf16.msra.mxu0 0
      %3302 = vmatpush.bf16.msra.mxu0 0
      %3303 = vmatpush.bf16.msra.mxu0 0
      %3304 = vmatpush.bf16.msra.mxu0 0
      %3305 = vmatpush.bf16.msra.mxu0 0
      %3306 = vmatpush.bf16.msra.mxu0 %v3297
      %3307 = vmatmul.bf16.gmra.mxu0 %v3216
      %v3308 = vpop.f32.mrf.mxu0
      %v3309 = vadd.f32 0.0, %v3308
      %v3310 = vpop.f32.mrf.mxu0
      %v3311 = vadd.f32 0.0, %v3310
      %3312 = vmatmul.bf16.gmra.mxu0 %v3219
      %v3313 = vpop.f32.mrf.mxu0
      %v3314 = vadd.f32 0.0, %v3313
      %v3315 = vpop.f32.mrf.mxu0
      %v3316 = vadd.f32 0.0, %v3315
      %3317 = vmatmul.bf16.gmra.mxu0 %v3222
      %v3318 = vpop.f32.mrf.mxu0
      %v3319 = vadd.f32 0.0, %v3318
      %v3320 = vpop.f32.mrf.mxu0
      %v3321 = vadd.f32 0.0, %v3320
      %3322 = vmatmul.bf16.gmra.mxu0 %v3225
      %v3323 = vpop.f32.mrf.mxu0
      %v3324 = vadd.f32 0.0, %v3323
      %v3325 = vpop.f32.mrf.mxu0
      %v3326 = vadd.f32 0.0, %v3325
      %3327 = vmatmul.bf16.gmra.mxu0 %v3228
      %v3328 = vpop.f32.mrf.mxu0
      %v3329 = vadd.f32 0.0, %v3328
      %v3330 = vpop.f32.mrf.mxu0
      %v3331 = vadd.f32 0.0, %v3330
      %3332 = vmatmul.bf16.gmra.mxu0 %v3231
      %v3333 = vpop.f32.mrf.mxu0
      %v3334 = vadd.f32 0.0, %v3333
      %v3335 = vpop.f32.mrf.mxu0
      %v3336 = vadd.f32 0.0, %v3335
      %3337 = vmatmul.bf16.gmra.mxu0 %v3234
      %v3338 = vpop.f32.mrf.mxu0
      %v3339 = vadd.f32 0.0, %v3338
      %v3340 = vpop.f32.mrf.mxu0
      %v3341 = vadd.f32 0.0, %v3340
      %3342 = vmatmul.bf16.gmra.mxu0 %v3237
      %v3343 = vpop.f32.mrf.mxu0
      %v3344 = vadd.f32 0.0, %v3343
      %v3345 = vpop.f32.mrf.mxu0
      %v3346 = vadd.f32 0.0, %v3345
      %3347 = vmatmul.bf16.gmra.mxu0 %v3240
      %v3348 = vpop.f32.mrf.mxu0
      %v3349 = vadd.f32 0.0, %v3348
      %v3350 = vpop.f32.mrf.mxu0
      %v3351 = vadd.f32 0.0, %v3350
      %3352 = vmatmul.bf16.gmra.mxu0 %v3243
      %v3353 = vpop.f32.mrf.mxu0
      %v3354 = vadd.f32 0.0, %v3353
      %v3355 = vpop.f32.mrf.mxu0
      %v3356 = vadd.f32 0.0, %v3355
      %3357 = vmatmul.bf16.gmra.mxu0 %v3246
      %v3358 = vpop.f32.mrf.mxu0
      %v3359 = vadd.f32 0.0, %v3358
      %v3360 = vpop.f32.mrf.mxu0
      %v3361 = vadd.f32 0.0, %v3360
      %3362 = vmatmul.bf16.gmra.mxu0 %v3249
      %v3363 = vpop.f32.mrf.mxu0
      %v3364 = vadd.f32 0.0, %v3363
      %v3365 = vpop.f32.mrf.mxu0
      %v3366 = vadd.f32 0.0, %v3365
      %3367 = vmatmul.bf16.gmra.mxu0 %v3252
      %v3368 = vpop.f32.mrf.mxu0
      %v3369 = vadd.f32 0.0, %v3368
      %v3370 = vpop.f32.mrf.mxu0
      %v3371 = vadd.f32 0.0, %v3370
      %3372 = vmatmul.bf16.gmra.mxu0 %v3255
      %v3373 = vpop.f32.mrf.mxu0
      %v3374 = vadd.f32 0.0, %v3373
      %v3375 = vpop.f32.mrf.mxu0
      %v3376 = vadd.f32 0.0, %v3375
      %3377 = vmatmul.bf16.gmra.mxu0 %v3258
      %v3378 = vpop.f32.mrf.mxu0
      %v3379 = vadd.f32 0.0, %v3378
      %v3380 = vpop.f32.mrf.mxu0
      %v3381 = vadd.f32 0.0, %v3380
      %3382 = vmatmul.bf16.gmra.mxu0 %v3261
      %v3383 = vpop.f32.mrf.mxu0
      %v3384 = vadd.f32 0.0, %v3383
      %v3385 = vpop.f32.mrf.mxu0
      %v3386 = vadd.f32 0.0, %v3385
      %3387 = vmatmul.bf16.gmra.mxu0 %v3264
      %v3388 = vpop.f32.mrf.mxu0
      %v3389 = vadd.f32 0.0, %v3388
      %v3390 = vpop.f32.mrf.mxu0
      %v3391 = vadd.f32 0.0, %v3390
      %3392 = vmatmul.bf16.gmra.mxu0 %v3267
      %v3393 = vpop.f32.mrf.mxu0
      %v3394 = vadd.f32 0.0, %v3393
      %v3395 = vpop.f32.mrf.mxu0
      %v3396 = vadd.f32 0.0, %v3395
      %3397 = vmatmul.bf16.gmra.mxu0 %v3270
      %v3398 = vpop.f32.mrf.mxu0
      %v3399 = vadd.f32 0.0, %v3398
      %v3400 = vpop.f32.mrf.mxu0
      %v3401 = vadd.f32 0.0, %v3400
      %3402 = vmatmul.bf16.gmra.mxu0 %v3273
      %v3403 = vpop.f32.mrf.mxu0
      %v3404 = vadd.f32 0.0, %v3403
      %v3405 = vpop.f32.mrf.mxu0
      %v3406 = vadd.f32 0.0, %v3405
      %3407 = vmatmul.bf16.gmra.mxu0 %v3276
      %v3408 = vpop.f32.mrf.mxu0
      %v3409 = vadd.f32 0.0, %v3408
      %v3410 = vpop.f32.mrf.mxu0
      %v3411 = vadd.f32 0.0, %v3410
      %3412 = vmatmul.bf16.gmra.mxu0 %v3279
      %v3413 = vpop.f32.mrf.mxu0
      %v3414 = vadd.f32 0.0, %v3413
      %v3415 = vpop.f32.mrf.mxu0
      %v3416 = vadd.f32 0.0, %v3415
      %3417 = vmatmul.bf16.gmra.mxu0 %v3282
      %v3418 = vpop.f32.mrf.mxu0
      %v3419 = vadd.f32 0.0, %v3418
      %v3420 = vpop.f32.mrf.mxu0
      %v3421 = vadd.f32 0.0, %v3420
      %3422 = vmatmul.bf16.gmra.mxu0 %v3285
      %v3423 = vpop.f32.mrf.mxu0
      %v3424 = vadd.f32 0.0, %v3423
      %v3425 = vpop.f32.mrf.mxu0
      %v3426 = vadd.f32 0.0, %v3425
      %3427 = vmatmul.bf16.gmra.mxu0 %v3288
      %v3428 = vpop.f32.mrf.mxu0
      %v3429 = vadd.f32 0.0, %v3428
      %v3430 = vpop.f32.mrf.mxu0
      %v3431 = vadd.f32 0.0, %v3430
      %3432 = vmatmul.bf16.gmra.mxu0 %v3291
      %v3433 = vpop.f32.mrf.mxu0
      %v3434 = vadd.f32 0.0, %v3433
      %v3435 = vpop.f32.mrf.mxu0
      %v3436 = vadd.f32 0.0, %v3435
      %3437 = vmatmul.bf16.gmra.mxu0 %v3294
      %v3438 = vpop.f32.mrf.mxu0
      %v3439 = vadd.f32 0.0, %v3438
      %v3440 = vpop.f32.mrf.mxu0
      %v3441 = vadd.f32 0.0, %v3440
      %3442 = vdwg.mxu0
      %v3443 = vadd.f32 %v3100, %v3309
      %v3444 = vadd.f32 %v3101, %v3311
      %v3445 = vadd.f32 %v3102, %v3314
      %v3446 = vadd.f32 %v3103, %v3316
      %v3447 = vadd.f32 %v3104, %v3319
      %v3448 = vadd.f32 %v3105, %v3321
      %v3449 = vadd.f32 %v3106, %v3324
      %v3450 = vadd.f32 %v3107, %v3326
      %v3451 = vadd.f32 %v3108, %v3329
      %v3452 = vadd.f32 %v3109, %v3331
      %v3453 = vadd.f32 %v3110, %v3334
      %v3454 = vadd.f32 %v3111, %v3336
      %v3455 = vadd.f32 %v3112, %v3339
      %v3456 = vadd.f32 %v3113, %v3341
      %v3457 = vadd.f32 %v3114, %v3344
      %v3458 = vadd.f32 %v3115, %v3346
      %v3459 = vadd.f32 %v3116, %v3349
      %v3460 = vadd.f32 %v3117, %v3351
      %v3461 = vadd.f32 %v3118, %v3354
      %v3462 = vadd.f32 %v3119, %v3356
      %v3463 = vadd.f32 %v3120, %v3359
      %v3464 = vadd.f32 %v3121, %v3361
      %v3465 = vadd.f32 %v3122, %v3364
      %v3466 = vadd.f32 %v3123, %v3366
      %v3467 = vadd.f32 %v3124, %v3369
      %v3468 = vadd.f32 %v3125, %v3371
      %v3469 = vadd.f32 %v3126, %v3374
      %v3470 = vadd.f32 %v3127, %v3376
      %v3471 = vadd.f32 %v3128, %v3379
      %v3472 = vadd.f32 %v3129, %v3381
      %v3473 = vadd.f32 %v3130, %v3384
      %v3474 = vadd.f32 %v3131, %v3386
      %v3475 = vadd.f32 %v3132, %v3389
      %v3476 = vadd.f32 %v3133, %v3391
      %v3477 = vadd.f32 %v3134, %v3394
      %v3478 = vadd.f32 %v3135, %v3396
      %v3479 = vadd.f32 %v3136, %v3399
      %v3480 = vadd.f32 %v3137, %v3401
      %v3481 = vadd.f32 %v3138, %v3404
      %v3482 = vadd.f32 %v3139, %v3406
      %v3483 = vadd.f32 %v3140, %v3409
      %v3484 = vadd.f32 %v3141, %v3411
      %v3485 = vadd.f32 %v3142, %v3414
      %v3486 = vadd.f32 %v3143, %v3416
      %v3487 = vadd.f32 %v3144, %v3419
      %v3488 = vadd.f32 %v3145, %v3421
      %v3489 = vadd.f32 %v3146, %v3424
      %v3490 = vadd.f32 %v3147, %v3426
      %v3491 = vadd.f32 %v3148, %v3429
      %v3492 = vadd.f32 %v3149, %v3431
      %v3493 = vadd.f32 %v3150, %v3434
      %v3494 = vadd.f32 %v3151, %v3436
      %v3495 = vadd.f32 %v3152, %v3439
      %v3496 = vadd.f32 %v3153, %v3441
      %v3497 = vld [vmem:[#allocation2 + $0x18] sm:$0xf]
      %v3498 = vld [vmem:[#allocation2 + $0x1c] sm:$0xf]
      %v3499 = vld [vmem:[#allocation2 + $0x20] sm:$0xf]
      %v3500 = vld [vmem:[#allocation2 + $0x24] sm:$0xf]
      %v3501 = vld [vmem:[#allocation2 + $0x28] sm:$0xf]
      %v3502 = vld [vmem:[#allocation2 + $0x2c] sm:$0xf]
      %v3503 = vld [vmem:[#allocation2 + $0x30] sm:$0xf]
      %v3504 = vld [vmem:[#allocation2 + $0x34] sm:$0xf]
      %v3505 = vld [vmem:[#allocation2 + $0x38] sm:$0xf]
      %v3506 = vld [vmem:[#allocation2 + $0x3c] sm:$0xf]
      %v3507 = vld [vmem:[#allocation2 + $0x40] sm:$0xf]
      %v3508 = vld [vmem:[#allocation2 + $0x44] sm:$0xf]
      %v3509 = vld [vmem:[#allocation2 + $0x48] sm:$0xf]
      %v3510 = vld [vmem:[#allocation2 + $0x4c] sm:$0xf]
      %v3511 = vld [vmem:[#allocation2 + $0x50] sm:$0xf]
      %v3512 = vld [vmem:[#allocation2 + $0x54] sm:$0xf]
      %v3513 = vld [vmem:[#allocation2 + $0x58] sm:$0xf]
      %v3514 = vld [vmem:[#allocation2 + $0x5c] sm:$0xf]
      %v3515 = vld [vmem:[#allocation2 + $0x60] sm:$0xf]
      %v3516 = vld [vmem:[#allocation2 + $0x64] sm:$0xf]
      %v3517 = vld [vmem:[#allocation2 + $0x68] sm:$0xf]
      %v3518 = vld [vmem:[#allocation2 + $0x6c] sm:$0xf]
      %v3519 = vld [vmem:[#allocation2 + $0x70] sm:$0xf]
      %v3520 = vld [vmem:[#allocation2 + $0x74] sm:$0xf]
      %v3521 = vld [vmem:[#allocation2 + $0x78] sm:$0xf]
      %v3522 = vld [vmem:[#allocation2 + $0x7c] sm:$0xf]
      %v3523 = vld [vmem:[#allocation2 + $0x80] sm:$0xf]
      %v3524 = vld [vmem:[#allocation2 + $0x84] sm:$0xf]
      %v3525 = vld [vmem:[#allocation2 + $0x88] sm:$0xf]
      %v3526 = vld [vmem:[#allocation2 + $0x8c] sm:$0xf]
      %v3527 = vld [vmem:[#allocation2 + $0x90] sm:$0xf]
      %v3528 = vld [vmem:[#allocation2 + $0x94] sm:$0xf]
      %v3529 = vld [vmem:[#allocation2 + $0x98] sm:$0xf]
      %v3530 = vld [vmem:[#allocation2 + $0x9c] sm:$0xf]
      %v3531 = vld [vmem:[#allocation2 + $0xa0] sm:$0xf]
      %v3532 = vld [vmem:[#allocation2 + $0xa4] sm:$0xf]
      %v3533 = vld [vmem:[#allocation2 + $0xa8] sm:$0xf]
      %v3534 = vld [vmem:[#allocation2 + $0xac] sm:$0xf]
      %v3535 = vld [vmem:[#allocation2 + $0xb0] sm:$0xf]
      %v3536 = vld [vmem:[#allocation2 + $0xb4] sm:$0xf]
      %v3537 = vld [vmem:[#allocation2 + $0xb8] sm:$0xf]
      %v3538 = vld [vmem:[#allocation2 + $0xbc] sm:$0xf]
      %v3539 = vld [vmem:[#allocation2 + $0xc0] sm:$0xf]
      %v3540 = vld [vmem:[#allocation2 + $0xc4] sm:$0xf]
      %v3541 = vld [vmem:[#allocation2 + $0xc8] sm:$0xf]
      %v3542 = vld [vmem:[#allocation2 + $0xcc] sm:$0xf]
      %v3543 = vld [vmem:[#allocation2 + $0xd0] sm:$0xf]
      %v3544 = vld [vmem:[#allocation2 + $0xd4] sm:$0xf]
      %v3545 = vld [vmem:[#allocation2 + $0xd8] sm:$0xf]
      %v3546 = vld [vmem:[#allocation2 + $0xdc] sm:$0xf]
      %v3547 = vld [vmem:[#allocation2 + $0xe0] sm:$0xf]
      %v3548 = vld [vmem:[#allocation2 + $0xe4] sm:$0xf]
      %v3549 = vld [vmem:[#allocation2 + $0xe8] sm:$0xf]
      %v3550 = vld [vmem:[#allocation2 + $0xec] sm:$0xf]
      %s3551 = scalar_lea.vmem %s5, 24
      %v3552 = vld [vmem:[%s3551] sm:$0xf]
      %v3607 = vunpack.c.l.b16 %v3497
      %v3608 = vunpack.c.l.b16 %v3498
      %v3609 = vunpack.c.l.b16 %v3499
      %v3610 = vunpack.c.l.b16 %v3500
      %v3611 = vunpack.c.l.b16 %v3501
      %v3612 = vunpack.c.l.b16 %v3502
      %v3613 = vunpack.c.l.b16 %v3503
      %v3614 = vunpack.c.l.b16 %v3504
      %v3615 = vunpack.c.l.b16 %v3505
      %v3616 = vunpack.c.l.b16 %v3506
      %v3617 = vunpack.c.l.b16 %v3507
      %v3618 = vunpack.c.l.b16 %v3508
      %v3619 = vunpack.c.l.b16 %v3509
      %v3620 = vunpack.c.l.b16 %v3510
      %v3621 = vunpack.c.l.b16 %v3511
      %v3622 = vunpack.c.l.b16 %v3512
      %v3623 = vunpack.c.l.b16 %v3513
      %v3624 = vunpack.c.l.b16 %v3514
      %v3625 = vunpack.c.l.b16 %v3515
      %v3626 = vunpack.c.l.b16 %v3516
      %v3627 = vunpack.c.l.b16 %v3517
      %v3628 = vunpack.c.l.b16 %v3518
      %v3629 = vunpack.c.l.b16 %v3519
      %v3630 = vunpack.c.l.b16 %v3520
      %v3631 = vunpack.c.l.b16 %v3521
      %v3632 = vunpack.c.l.b16 %v3522
      %v3633 = vunpack.c.l.b16 %v3523
      %v3634 = vunpack.c.l.b16 %v3524
      %v3635 = vunpack.c.l.b16 %v3525
      %v3636 = vunpack.c.l.b16 %v3526
      %v3637 = vunpack.c.l.b16 %v3527
      %v3638 = vunpack.c.l.b16 %v3528
      %v3639 = vunpack.c.l.b16 %v3529
      %v3640 = vunpack.c.l.b16 %v3530
      %v3641 = vunpack.c.l.b16 %v3531
      %v3642 = vunpack.c.l.b16 %v3532
      %v3643 = vunpack.c.l.b16 %v3533
      %v3644 = vunpack.c.l.b16 %v3534
      %v3645 = vunpack.c.l.b16 %v3535
      %v3646 = vunpack.c.l.b16 %v3536
      %v3647 = vunpack.c.l.b16 %v3537
      %v3648 = vunpack.c.l.b16 %v3538
      %v3649 = vunpack.c.l.b16 %v3539
      %v3650 = vunpack.c.l.b16 %v3540
      %v3651 = vunpack.c.l.b16 %v3541
      %v3652 = vunpack.c.l.b16 %v3542
      %v3653 = vunpack.c.l.b16 %v3543
      %v3654 = vunpack.c.l.b16 %v3544
      %v3655 = vunpack.c.l.b16 %v3545
      %v3656 = vunpack.c.l.b16 %v3546
      %v3657 = vunpack.c.l.b16 %v3547
      %v3658 = vunpack.c.l.b16 %v3548
      %v3659 = vunpack.c.l.b16 %v3549
      %v3660 = vunpack.c.l.b16 %v3550
      %v3661 = vpack.c.b16 %v3608, %v3607
      %v3662 = vpack.c.b16 %v3610, %v3609
      %v3663 = vpack.c.b16 %v3612, %v3611
      %v3664 = vpack.c.b16 %v3614, %v3613
      %v3665 = vpack.c.b16 %v3616, %v3615
      %v3666 = vpack.c.b16 %v3618, %v3617
      %v3667 = vpack.c.b16 %v3620, %v3619
      %v3668 = vpack.c.b16 %v3622, %v3621
      %v3669 = vpack.c.b16 %v3624, %v3623
      %v3670 = vpack.c.b16 %v3626, %v3625
      %v3671 = vpack.c.b16 %v3628, %v3627
      %v3672 = vpack.c.b16 %v3630, %v3629
      %v3673 = vpack.c.b16 %v3632, %v3631
      %v3674 = vpack.c.b16 %v3634, %v3633
      %v3675 = vpack.c.b16 %v3636, %v3635
      %v3676 = vpack.c.b16 %v3638, %v3637
      %v3677 = vpack.c.b16 %v3640, %v3639
      %v3678 = vpack.c.b16 %v3642, %v3641
      %v3679 = vpack.c.b16 %v3644, %v3643
      %v3680 = vpack.c.b16 %v3646, %v3645
      %v3681 = vpack.c.b16 %v3648, %v3647
      %v3682 = vpack.c.b16 %v3650, %v3649
      %v3683 = vpack.c.b16 %v3652, %v3651
      %v3684 = vpack.c.b16 %v3654, %v3653
      %v3685 = vpack.c.b16 %v3656, %v3655
      %v3686 = vpack.c.b16 %v3658, %v3657
      %v3687 = vpack.c.b16 %v3660, %v3659
      %v3689 = vsel %vm1209, %v3661, 0
      %v3692 = vsel %vm1209, %v3662, 0
      %v3695 = vsel %vm1209, %v3663, 0
      %v3698 = vsel %vm1209, %v3664, 0
      %v3701 = vsel %vm1209, %v3665, 0
      %v3704 = vsel %vm1209, %v3666, 0
      %v3707 = vsel %vm1209, %v3667, 0
      %v3710 = vsel %vm1209, %v3668, 0
      %v3713 = vsel %vm1209, %v3669, 0
      %v3716 = vsel %vm1209, %v3670, 0
      %v3719 = vsel %vm1209, %v3671, 0
      %v3722 = vsel %vm1209, %v3672, 0
      %v3725 = vsel %vm1209, %v3673, 0
      %v3728 = vsel %vm1209, %v3674, 0
      %v3731 = vsel %vm1209, %v3675, 0
      %v3734 = vsel %vm1209, %v3676, 0
      %v3737 = vsel %vm1209, %v3677, 0
      %v3740 = vsel %vm1209, %v3678, 0
      %v3743 = vsel %vm1209, %v3679, 0
      %v3746 = vsel %vm1209, %v3680, 0
      %v3749 = vsel %vm1209, %v3681, 0
      %v3752 = vsel %vm1209, %v3682, 0
      %v3755 = vsel %vm1209, %v3683, 0
      %v3758 = vsel %vm1209, %v3684, 0
      %v3761 = vsel %vm1209, %v3685, 0
      %v3764 = vsel %vm1209, %v3686, 0
      %v3767 = vsel %vm1209, %v3687, 0
      %v3770 = vsel %vm1291, %v3552, 0
      %3772 = vmatpush.bf16.msra.mxu0 0
      %3773 = vmatpush.bf16.msra.mxu0 0
      %3774 = vmatpush.bf16.msra.mxu0 0
      %3775 = vmatpush.bf16.msra.mxu0 0
      %3776 = vmatpush.bf16.msra.mxu0 0
      %3777 = vmatpush.bf16.msra.mxu0 0
      %3778 = vmatpush.bf16.msra.mxu0 0
      %3779 = vmatpush.bf16.msra.mxu0 %v3770
      %3780 = vmatmul.bf16.gmra.mxu0 %v3689
      %v3781 = vpop.f32.mrf.mxu0
      %v3782 = vadd.f32 0.0, %v3781
      %v3783 = vpop.f32.mrf.mxu0
      %v3784 = vadd.f32 0.0, %v3783
      %3785 = vmatmul.bf16.gmra.mxu0 %v3692
      %v3786 = vpop.f32.mrf.mxu0
      %v3787 = vadd.f32 0.0, %v3786
      %v3788 = vpop.f32.mrf.mxu0
      %v3789 = vadd.f32 0.0, %v3788
      %3790 = vmatmul.bf16.gmra.mxu0 %v3695
      %v3791 = vpop.f32.mrf.mxu0
      %v3792 = vadd.f32 0.0, %v3791
      %v3793 = vpop.f32.mrf.mxu0
      %v3794 = vadd.f32 0.0, %v3793
      %3795 = vmatmul.bf16.gmra.mxu0 %v3698
      %v3796 = vpop.f32.mrf.mxu0
      %v3797 = vadd.f32 0.0, %v3796
      %v3798 = vpop.f32.mrf.mxu0
      %v3799 = vadd.f32 0.0, %v3798
      %3800 = vmatmul.bf16.gmra.mxu0 %v3701
      %v3801 = vpop.f32.mrf.mxu0
      %v3802 = vadd.f32 0.0, %v3801
      %v3803 = vpop.f32.mrf.mxu0
      %v3804 = vadd.f32 0.0, %v3803
      %3805 = vmatmul.bf16.gmra.mxu0 %v3704
      %v3806 = vpop.f32.mrf.mxu0
      %v3807 = vadd.f32 0.0, %v3806
      %v3808 = vpop.f32.mrf.mxu0
      %v3809 = vadd.f32 0.0, %v3808
      %3810 = vmatmul.bf16.gmra.mxu0 %v3707
      %v3811 = vpop.f32.mrf.mxu0
      %v3812 = vadd.f32 0.0, %v3811
      %v3813 = vpop.f32.mrf.mxu0
      %v3814 = vadd.f32 0.0, %v3813
      %3815 = vmatmul.bf16.gmra.mxu0 %v3710
      %v3816 = vpop.f32.mrf.mxu0
      %v3817 = vadd.f32 0.0, %v3816
      %v3818 = vpop.f32.mrf.mxu0
      %v3819 = vadd.f32 0.0, %v3818
      %3820 = vmatmul.bf16.gmra.mxu0 %v3713
      %v3821 = vpop.f32.mrf.mxu0
      %v3822 = vadd.f32 0.0, %v3821
      %v3823 = vpop.f32.mrf.mxu0
      %v3824 = vadd.f32 0.0, %v3823
      %3825 = vmatmul.bf16.gmra.mxu0 %v3716
      %v3826 = vpop.f32.mrf.mxu0
      %v3827 = vadd.f32 0.0, %v3826
      %v3828 = vpop.f32.mrf.mxu0
      %v3829 = vadd.f32 0.0, %v3828
      %3830 = vmatmul.bf16.gmra.mxu0 %v3719
      %v3831 = vpop.f32.mrf.mxu0
      %v3832 = vadd.f32 0.0, %v3831
      %v3833 = vpop.f32.mrf.mxu0
      %v3834 = vadd.f32 0.0, %v3833
      %3835 = vmatmul.bf16.gmra.mxu0 %v3722
      %v3836 = vpop.f32.mrf.mxu0
      %v3837 = vadd.f32 0.0, %v3836
      %v3838 = vpop.f32.mrf.mxu0
      %v3839 = vadd.f32 0.0, %v3838
      %3840 = vmatmul.bf16.gmra.mxu0 %v3725
      %v3841 = vpop.f32.mrf.mxu0
      %v3842 = vadd.f32 0.0, %v3841
      %v3843 = vpop.f32.mrf.mxu0
      %v3844 = vadd.f32 0.0, %v3843
      %3845 = vmatmul.bf16.gmra.mxu0 %v3728
      %v3846 = vpop.f32.mrf.mxu0
      %v3847 = vadd.f32 0.0, %v3846
      %v3848 = vpop.f32.mrf.mxu0
      %v3849 = vadd.f32 0.0, %v3848
      %3850 = vmatmul.bf16.gmra.mxu0 %v3731
      %v3851 = vpop.f32.mrf.mxu0
      %v3852 = vadd.f32 0.0, %v3851
      %v3853 = vpop.f32.mrf.mxu0
      %v3854 = vadd.f32 0.0, %v3853
      %3855 = vmatmul.bf16.gmra.mxu0 %v3734
      %v3856 = vpop.f32.mrf.mxu0
      %v3857 = vadd.f32 0.0, %v3856
      %v3858 = vpop.f32.mrf.mxu0
      %v3859 = vadd.f32 0.0, %v3858
      %3860 = vmatmul.bf16.gmra.mxu0 %v3737
      %v3861 = vpop.f32.mrf.mxu0
      %v3862 = vadd.f32 0.0, %v3861
      %v3863 = vpop.f32.mrf.mxu0
      %v3864 = vadd.f32 0.0, %v3863
      %3865 = vmatmul.bf16.gmra.mxu0 %v3740
      %v3866 = vpop.f32.mrf.mxu0
      %v3867 = vadd.f32 0.0, %v3866
      %v3868 = vpop.f32.mrf.mxu0
      %v3869 = vadd.f32 0.0, %v3868
      %3870 = vmatmul.bf16.gmra.mxu0 %v3743
      %v3871 = vpop.f32.mrf.mxu0
      %v3872 = vadd.f32 0.0, %v3871
      %v3873 = vpop.f32.mrf.mxu0
      %v3874 = vadd.f32 0.0, %v3873
      %3875 = vmatmul.bf16.gmra.mxu0 %v3746
      %v3876 = vpop.f32.mrf.mxu0
      %v3877 = vadd.f32 0.0, %v3876
      %v3878 = vpop.f32.mrf.mxu0
      %v3879 = vadd.f32 0.0, %v3878
      %3880 = vmatmul.bf16.gmra.mxu0 %v3749
      %v3881 = vpop.f32.mrf.mxu0
      %v3882 = vadd.f32 0.0, %v3881
      %v3883 = vpop.f32.mrf.mxu0
      %v3884 = vadd.f32 0.0, %v3883
      %3885 = vmatmul.bf16.gmra.mxu0 %v3752
      %v3886 = vpop.f32.mrf.mxu0
      %v3887 = vadd.f32 0.0, %v3886
      %v3888 = vpop.f32.mrf.mxu0
      %v3889 = vadd.f32 0.0, %v3888
      %3890 = vmatmul.bf16.gmra.mxu0 %v3755
      %v3891 = vpop.f32.mrf.mxu0
      %v3892 = vadd.f32 0.0, %v3891
      %v3893 = vpop.f32.mrf.mxu0
      %v3894 = vadd.f32 0.0, %v3893
      %3895 = vmatmul.bf16.gmra.mxu0 %v3758
      %v3896 = vpop.f32.mrf.mxu0
      %v3897 = vadd.f32 0.0, %v3896
      %v3898 = vpop.f32.mrf.mxu0
      %v3899 = vadd.f32 0.0, %v3898
      %3900 = vmatmul.bf16.gmra.mxu0 %v3761
      %v3901 = vpop.f32.mrf.mxu0
      %v3902 = vadd.f32 0.0, %v3901
      %v3903 = vpop.f32.mrf.mxu0
      %v3904 = vadd.f32 0.0, %v3903
      %3905 = vmatmul.bf16.gmra.mxu0 %v3764
      %v3906 = vpop.f32.mrf.mxu0
      %v3907 = vadd.f32 0.0, %v3906
      %v3908 = vpop.f32.mrf.mxu0
      %v3909 = vadd.f32 0.0, %v3908
      %3910 = vmatmul.bf16.gmra.mxu0 %v3767
      %v3911 = vpop.f32.mrf.mxu0
      %v3912 = vadd.f32 0.0, %v3911
      %v3913 = vpop.f32.mrf.mxu0
      %v3914 = vadd.f32 0.0, %v3913
      %3915 = vdwg.mxu0
      %v3916 = vadd.f32 %v3443, %v3782
      %v3917 = vadd.f32 %v3444, %v3784
      %v3918 = vadd.f32 %v3445, %v3787
      %v3919 = vadd.f32 %v3446, %v3789
      %v3920 = vadd.f32 %v3447, %v3792
      %v3921 = vadd.f32 %v3448, %v3794
      %v3922 = vadd.f32 %v3449, %v3797
      %v3923 = vadd.f32 %v3450, %v3799
      %v3924 = vadd.f32 %v3451, %v3802
      %v3925 = vadd.f32 %v3452, %v3804
      %v3926 = vadd.f32 %v3453, %v3807
      %v3927 = vadd.f32 %v3454, %v3809
      %v3928 = vadd.f32 %v3455, %v3812
      %v3929 = vadd.f32 %v3456, %v3814
      %v3930 = vadd.f32 %v3457, %v3817
      %v3931 = vadd.f32 %v3458, %v3819
      %v3932 = vadd.f32 %v3459, %v3822
      %v3933 = vadd.f32 %v3460, %v3824
      %v3934 = vadd.f32 %v3461, %v3827
      %v3935 = vadd.f32 %v3462, %v3829
      %v3936 = vadd.f32 %v3463, %v3832
      %v3937 = vadd.f32 %v3464, %v3834
      %v3938 = vadd.f32 %v3465, %v3837
      %v3939 = vadd.f32 %v3466, %v3839
      %v3940 = vadd.f32 %v3467, %v3842
      %v3941 = vadd.f32 %v3468, %v3844
      %v3942 = vadd.f32 %v3469, %v3847
      %v3943 = vadd.f32 %v3470, %v3849
      %v3944 = vadd.f32 %v3471, %v3852
      %v3945 = vadd.f32 %v3472, %v3854
      %v3946 = vadd.f32 %v3473, %v3857
      %v3947 = vadd.f32 %v3474, %v3859
      %v3948 = vadd.f32 %v3475, %v3862
      %v3949 = vadd.f32 %v3476, %v3864
      %v3950 = vadd.f32 %v3477, %v3867
      %v3951 = vadd.f32 %v3478, %v3869
      %v3952 = vadd.f32 %v3479, %v3872
      %v3953 = vadd.f32 %v3480, %v3874
      %v3954 = vadd.f32 %v3481, %v3877
      %v3955 = vadd.f32 %v3482, %v3879
      %v3956 = vadd.f32 %v3483, %v3882
      %v3957 = vadd.f32 %v3484, %v3884
      %v3958 = vadd.f32 %v3485, %v3887
      %v3959 = vadd.f32 %v3486, %v3889
      %v3960 = vadd.f32 %v3487, %v3892
      %v3961 = vadd.f32 %v3488, %v3894
      %v3962 = vadd.f32 %v3489, %v3897
      %v3963 = vadd.f32 %v3490, %v3899
      %v3964 = vadd.f32 %v3491, %v3902
      %v3965 = vadd.f32 %v3492, %v3904
      %v3966 = vadd.f32 %v3493, %v3907
      %v3967 = vadd.f32 %v3494, %v3909
      %v3968 = vadd.f32 %v3495, %v3912
      %v3969 = vadd.f32 %v3496, %v3914
      %v3970 = vld [vmem:[#allocation2 + $0x18] sm:$0xf]
      %v3971 = vld [vmem:[#allocation2 + $0x1c] sm:$0xf]
      %v3972 = vld [vmem:[#allocation2 + $0x20] sm:$0xf]
      %v3973 = vld [vmem:[#allocation2 + $0x24] sm:$0xf]
      %v3974 = vld [vmem:[#allocation2 + $0x28] sm:$0xf]
      %v3975 = vld [vmem:[#allocation2 + $0x2c] sm:$0xf]
      %v3976 = vld [vmem:[#allocation2 + $0x30] sm:$0xf]
      %v3977 = vld [vmem:[#allocation2 + $0x34] sm:$0xf]
      %v3978 = vld [vmem:[#allocation2 + $0x38] sm:$0xf]
      %v3979 = vld [vmem:[#allocation2 + $0x3c] sm:$0xf]
      %v3980 = vld [vmem:[#allocation2 + $0x40] sm:$0xf]
      %v3981 = vld [vmem:[#allocation2 + $0x44] sm:$0xf]
      %v3982 = vld [vmem:[#allocation2 + $0x48] sm:$0xf]
      %v3983 = vld [vmem:[#allocation2 + $0x4c] sm:$0xf]
      %v3984 = vld [vmem:[#allocation2 + $0x50] sm:$0xf]
      %v3985 = vld [vmem:[#allocation2 + $0x54] sm:$0xf]
      %v3986 = vld [vmem:[#allocation2 + $0x58] sm:$0xf]
      %v3987 = vld [vmem:[#allocation2 + $0x5c] sm:$0xf]
      %v3988 = vld [vmem:[#allocation2 + $0x60] sm:$0xf]
      %v3989 = vld [vmem:[#allocation2 + $0x64] sm:$0xf]
      %v3990 = vld [vmem:[#allocation2 + $0x68] sm:$0xf]
      %v3991 = vld [vmem:[#allocation2 + $0x6c] sm:$0xf]
      %v3992 = vld [vmem:[#allocation2 + $0x70] sm:$0xf]
      %v3993 = vld [vmem:[#allocation2 + $0x74] sm:$0xf]
      %v3994 = vld [vmem:[#allocation2 + $0x78] sm:$0xf]
      %v3995 = vld [vmem:[#allocation2 + $0x7c] sm:$0xf]
      %v3996 = vld [vmem:[#allocation2 + $0x80] sm:$0xf]
      %v3997 = vld [vmem:[#allocation2 + $0x84] sm:$0xf]
      %v3998 = vld [vmem:[#allocation2 + $0x88] sm:$0xf]
      %v3999 = vld [vmem:[#allocation2 + $0x8c] sm:$0xf]
      %v4000 = vld [vmem:[#allocation2 + $0x90] sm:$0xf]
      %v4001 = vld [vmem:[#allocation2 + $0x94] sm:$0xf]
      %v4002 = vld [vmem:[#allocation2 + $0x98] sm:$0xf]
      %v4003 = vld [vmem:[#allocation2 + $0x9c] sm:$0xf]
      %v4004 = vld [vmem:[#allocation2 + $0xa0] sm:$0xf]
      %v4005 = vld [vmem:[#allocation2 + $0xa4] sm:$0xf]
      %v4006 = vld [vmem:[#allocation2 + $0xa8] sm:$0xf]
      %v4007 = vld [vmem:[#allocation2 + $0xac] sm:$0xf]
      %v4008 = vld [vmem:[#allocation2 + $0xb0] sm:$0xf]
      %v4009 = vld [vmem:[#allocation2 + $0xb4] sm:$0xf]
      %v4010 = vld [vmem:[#allocation2 + $0xb8] sm:$0xf]
      %v4011 = vld [vmem:[#allocation2 + $0xbc] sm:$0xf]
      %v4012 = vld [vmem:[#allocation2 + $0xc0] sm:$0xf]
      %v4013 = vld [vmem:[#allocation2 + $0xc4] sm:$0xf]
      %v4014 = vld [vmem:[#allocation2 + $0xc8] sm:$0xf]
      %v4015 = vld [vmem:[#allocation2 + $0xcc] sm:$0xf]
      %v4016 = vld [vmem:[#allocation2 + $0xd0] sm:$0xf]
      %v4017 = vld [vmem:[#allocation2 + $0xd4] sm:$0xf]
      %v4018 = vld [vmem:[#allocation2 + $0xd8] sm:$0xf]
      %v4019 = vld [vmem:[#allocation2 + $0xdc] sm:$0xf]
      %v4020 = vld [vmem:[#allocation2 + $0xe0] sm:$0xf]
      %v4021 = vld [vmem:[#allocation2 + $0xe4] sm:$0xf]
      %v4022 = vld [vmem:[#allocation2 + $0xe8] sm:$0xf]
      %v4023 = vld [vmem:[#allocation2 + $0xec] sm:$0xf]
      %v4024 = vld [vmem:[#allocation2 + $0xf0] sm:$0x1]
      %s4025 = scalar_lea.vmem %s5, 28
      %v4026 = vld [vmem:[%s4025] sm:$0xf]
      %v4082 = vunpack.c.l.b16 %v3970
      %v4083 = vunpack.c.l.b16 %v3971
      %v4084 = vunpack.c.l.b16 %v3972
      %v4085 = vunpack.c.l.b16 %v3973
      %v4086 = vunpack.c.l.b16 %v3974
      %v4087 = vunpack.c.l.b16 %v3975
      %v4088 = vunpack.c.l.b16 %v3976
      %v4089 = vunpack.c.l.b16 %v3977
      %v4090 = vunpack.c.l.b16 %v3978
      %v4091 = vunpack.c.l.b16 %v3979
      %v4092 = vunpack.c.l.b16 %v3980
      %v4093 = vunpack.c.l.b16 %v3981
      %v4094 = vunpack.c.l.b16 %v3982
      %v4095 = vunpack.c.l.b16 %v3983
      %v4096 = vunpack.c.l.b16 %v3984
      %v4097 = vunpack.c.l.b16 %v3985
      %v4098 = vunpack.c.l.b16 %v3986
      %v4099 = vunpack.c.l.b16 %v3987
      %v4100 = vunpack.c.l.b16 %v3988
      %v4101 = vunpack.c.l.b16 %v3989
      %v4102 = vunpack.c.l.b16 %v3990
      %v4103 = vunpack.c.l.b16 %v3991
      %v4104 = vunpack.c.l.b16 %v3992
      %v4105 = vunpack.c.l.b16 %v3993
      %v4106 = vunpack.c.l.b16 %v3994
      %v4107 = vunpack.c.l.b16 %v3995
      %v4108 = vunpack.c.l.b16 %v3996
      %v4109 = vunpack.c.l.b16 %v3997
      %v4110 = vunpack.c.l.b16 %v3998
      %v4111 = vunpack.c.l.b16 %v3999
      %v4112 = vunpack.c.l.b16 %v4000
      %v4113 = vunpack.c.l.b16 %v4001
      %v4114 = vunpack.c.l.b16 %v4002
      %v4115 = vunpack.c.l.b16 %v4003
      %v4116 = vunpack.c.l.b16 %v4004
      %v4117 = vunpack.c.l.b16 %v4005
      %v4118 = vunpack.c.l.b16 %v4006
      %v4119 = vunpack.c.l.b16 %v4007
      %v4120 = vunpack.c.l.b16 %v4008
      %v4121 = vunpack.c.l.b16 %v4009
      %v4122 = vunpack.c.l.b16 %v4010
      %v4123 = vunpack.c.l.b16 %v4011
      %v4124 = vunpack.c.l.b16 %v4012
      %v4125 = vunpack.c.l.b16 %v4013
      %v4126 = vunpack.c.l.b16 %v4014
      %v4127 = vunpack.c.l.b16 %v4015
      %v4128 = vunpack.c.l.b16 %v4016
      %v4129 = vunpack.c.l.b16 %v4017
      %v4130 = vunpack.c.l.b16 %v4018
      %v4131 = vunpack.c.l.b16 %v4019
      %v4132 = vunpack.c.l.b16 %v4020
      %v4133 = vunpack.c.l.b16 %v4021
      %v4134 = vunpack.c.l.b16 %v4022
      %v4135 = vunpack.c.l.b16 %v4023
      %v4136 = vunpack.c.l.b16 %v4024
      %v4137 = vpack.c.b16 %v4083, %v4082
      %v4138 = vpack.c.b16 %v4085, %v4084
      %v4139 = vpack.c.b16 %v4087, %v4086
      %v4140 = vpack.c.b16 %v4089, %v4088
      %v4141 = vpack.c.b16 %v4091, %v4090
      %v4142 = vpack.c.b16 %v4093, %v4092
      %v4143 = vpack.c.b16 %v4095, %v4094
      %v4144 = vpack.c.b16 %v4097, %v4096
      %v4145 = vpack.c.b16 %v4099, %v4098
      %v4146 = vpack.c.b16 %v4101, %v4100
      %v4147 = vpack.c.b16 %v4103, %v4102
      %v4148 = vpack.c.b16 %v4105, %v4104
      %v4149 = vpack.c.b16 %v4107, %v4106
      %v4150 = vpack.c.b16 %v4109, %v4108
      %v4151 = vpack.c.b16 %v4111, %v4110
      %v4152 = vpack.c.b16 %v4113, %v4112
      %v4153 = vpack.c.b16 %v4115, %v4114
      %v4154 = vpack.c.b16 %v4117, %v4116
      %v4155 = vpack.c.b16 %v4119, %v4118
      %v4156 = vpack.c.b16 %v4121, %v4120
      %v4157 = vpack.c.b16 %v4123, %v4122
      %v4158 = vpack.c.b16 %v4125, %v4124
      %v4159 = vpack.c.b16 %v4127, %v4126
      %v4160 = vpack.c.b16 %v4129, %v4128
      %v4161 = vpack.c.b16 %v4131, %v4130
      %v4162 = vpack.c.b16 %v4133, %v4132
      %v4163 = vpack.c.b16 %v4135, %v4134
      %v4164 = vpack.c.b16 %v4136, %v4136
      %v4166 = vshrl.u32 %v4137, 16
      %v4168 = vshll.u32 %v4137, 16
      %v4170 = vrot.slane %v4168, 1
      %v4171 = vor.u32 %v4166, %v4170
      %v4173 = vshll.u32 %v4138, 16
      %v4175 = vrot.slane %v4173, 1
      %v4176 = vsel %vm988, %v4171, %v4175
      %v4177 = vshrl.u32 %v4138, 16
      %v4179 = vor.u32 %v4177, %v4175
      %v4181 = vshll.u32 %v4139, 16
      %v4183 = vrot.slane %v4181, 1
      %v4184 = vsel %vm988, %v4179, %v4183
      %v4185 = vshrl.u32 %v4139, 16
      %v4187 = vor.u32 %v4185, %v4183
      %v4189 = vshll.u32 %v4140, 16
      %v4191 = vrot.slane %v4189, 1
      %v4192 = vsel %vm988, %v4187, %v4191
      %v4193 = vshrl.u32 %v4140, 16
      %v4195 = vor.u32 %v4193, %v4191
      %v4197 = vshll.u32 %v4141, 16
      %v4199 = vrot.slane %v4197, 1
      %v4200 = vsel %vm988, %v4195, %v4199
      %v4201 = vshrl.u32 %v4141, 16
      %v4203 = vor.u32 %v4201, %v4199
      %v4205 = vshll.u32 %v4142, 16
      %v4207 = vrot.slane %v4205, 1
      %v4208 = vsel %vm988, %v4203, %v4207
      %v4209 = vshrl.u32 %v4142, 16
      %v4211 = vor.u32 %v4209, %v4207
      %v4213 = vshll.u32 %v4143, 16
      %v4215 = vrot.slane %v4213, 1
      %v4216 = vsel %vm988, %v4211, %v4215
      %v4217 = vshrl.u32 %v4143, 16
      %v4219 = vor.u32 %v4217, %v4215
      %v4221 = vshll.u32 %v4144, 16
      %v4223 = vrot.slane %v4221, 1
      %v4224 = vsel %vm988, %v4219, %v4223
      %v4225 = vshrl.u32 %v4144, 16
      %v4227 = vor.u32 %v4225, %v4223
      %v4229 = vshll.u32 %v4145, 16
      %v4231 = vrot.slane %v4229, 1
      %v4232 = vsel %vm988, %v4227, %v4231
      %v4233 = vshrl.u32 %v4145, 16
      %v4235 = vor.u32 %v4233, %v4231
      %v4237 = vshll.u32 %v4146, 16
      %v4239 = vrot.slane %v4237, 1
      %v4240 = vsel %vm988, %v4235, %v4239
      %v4241 = vshrl.u32 %v4146, 16
      %v4243 = vor.u32 %v4241, %v4239
      %v4245 = vshll.u32 %v4147, 16
      %v4247 = vrot.slane %v4245, 1
      %v4248 = vsel %vm988, %v4243, %v4247
      %v4249 = vshrl.u32 %v4147, 16
      %v4251 = vor.u32 %v4249, %v4247
      %v4253 = vshll.u32 %v4148, 16
      %v4255 = vrot.slane %v4253, 1
      %v4256 = vsel %vm988, %v4251, %v4255
      %v4257 = vshrl.u32 %v4148, 16
      %v4259 = vor.u32 %v4257, %v4255
      %v4261 = vshll.u32 %v4149, 16
      %v4263 = vrot.slane %v4261, 1
      %v4264 = vsel %vm988, %v4259, %v4263
      %v4265 = vshrl.u32 %v4149, 16
      %v4267 = vor.u32 %v4265, %v4263
      %v4269 = vshll.u32 %v4150, 16
      %v4271 = vrot.slane %v4269, 1
      %v4272 = vsel %vm988, %v4267, %v4271
      %v4273 = vshrl.u32 %v4150, 16
      %v4275 = vor.u32 %v4273, %v4271
      %v4277 = vshll.u32 %v4151, 16
      %v4279 = vrot.slane %v4277, 1
      %v4280 = vsel %vm988, %v4275, %v4279
      %v4281 = vshrl.u32 %v4151, 16
      %v4283 = vor.u32 %v4281, %v4279
      %v4285 = vshll.u32 %v4152, 16
      %v4287 = vrot.slane %v4285, 1
      %v4288 = vsel %vm988, %v4283, %v4287
      %v4289 = vshrl.u32 %v4152, 16
      %v4291 = vor.u32 %v4289, %v4287
      %v4293 = vshll.u32 %v4153, 16
      %v4295 = vrot.slane %v4293, 1
      %v4296 = vsel %vm988, %v4291, %v4295
      %v4297 = vshrl.u32 %v4153, 16
      %v4299 = vor.u32 %v4297, %v4295
      %v4301 = vshll.u32 %v4154, 16
      %v4303 = vrot.slane %v4301, 1
      %v4304 = vsel %vm988, %v4299, %v4303
      %v4305 = vshrl.u32 %v4154, 16
      %v4307 = vor.u32 %v4305, %v4303
      %v4309 = vshll.u32 %v4155, 16
      %v4311 = vrot.slane %v4309, 1
      %v4312 = vsel %vm988, %v4307, %v4311
      %v4313 = vshrl.u32 %v4155, 16
      %v4315 = vor.u32 %v4313, %v4311
      %v4317 = vshll.u32 %v4156, 16
      %v4319 = vrot.slane %v4317, 1
      %v4320 = vsel %vm988, %v4315, %v4319
      %v4321 = vshrl.u32 %v4156, 16
      %v4323 = vor.u32 %v4321, %v4319
      %v4325 = vshll.u32 %v4157, 16
      %v4327 = vrot.slane %v4325, 1
      %v4328 = vsel %vm988, %v4323, %v4327
      %v4329 = vshrl.u32 %v4157, 16
      %v4331 = vor.u32 %v4329, %v4327
      %v4333 = vshll.u32 %v4158, 16
      %v4335 = vrot.slane %v4333, 1
      %v4336 = vsel %vm988, %v4331, %v4335
      %v4337 = vshrl.u32 %v4158, 16
      %v4339 = vor.u32 %v4337, %v4335
      %v4341 = vshll.u32 %v4159, 16
      %v4343 = vrot.slane %v4341, 1
      %v4344 = vsel %vm988, %v4339, %v4343
      %v4345 = vshrl.u32 %v4159, 16
      %v4347 = vor.u32 %v4345, %v4343
      %v4349 = vshll.u32 %v4160, 16
      %v4351 = vrot.slane %v4349, 1
      %v4352 = vsel %vm988, %v4347, %v4351
      %v4353 = vshrl.u32 %v4160, 16
      %v4355 = vor.u32 %v4353, %v4351
      %v4357 = vshll.u32 %v4161, 16
      %v4359 = vrot.slane %v4357, 1
      %v4360 = vsel %vm988, %v4355, %v4359
      %v4361 = vshrl.u32 %v4161, 16
      %v4363 = vor.u32 %v4361, %v4359
      %v4365 = vshll.u32 %v4162, 16
      %v4367 = vrot.slane %v4365, 1
      %v4368 = vsel %vm988, %v4363, %v4367
      %v4369 = vshrl.u32 %v4162, 16
      %v4371 = vor.u32 %v4369, %v4367
      %v4373 = vshll.u32 %v4163, 16
      %v4375 = vrot.slane %v4373, 1
      %v4376 = vsel %vm988, %v4371, %v4375
      %v4377 = vshrl.u32 %v4163, 16
      %v4379 = vor.u32 %v4377, %v4375
      %v4381 = vshll.u32 %v4164, 16
      %v4383 = vrot.slane %v4381, 1
      %v4384 = vsel %vm988, %v4379, %v4383
      %v4386 = vsel %vm1209, %v4176, 0
      %v4389 = vsel %vm1209, %v4184, 0
      %v4392 = vsel %vm1209, %v4192, 0
      %v4395 = vsel %vm1209, %v4200, 0
      %v4398 = vsel %vm1209, %v4208, 0
      %v4401 = vsel %vm1209, %v4216, 0
      %v4404 = vsel %vm1209, %v4224, 0
      %v4407 = vsel %vm1209, %v4232, 0
      %v4410 = vsel %vm1209, %v4240, 0
      %v4413 = vsel %vm1209, %v4248, 0
      %v4416 = vsel %vm1209, %v4256, 0
      %v4419 = vsel %vm1209, %v4264, 0
      %v4422 = vsel %vm1209, %v4272, 0
      %v4425 = vsel %vm1209, %v4280, 0
      %v4428 = vsel %vm1209, %v4288, 0
      %v4431 = vsel %vm1209, %v4296, 0
      %v4434 = vsel %vm1209, %v4304, 0
      %v4437 = vsel %vm1209, %v4312, 0
      %v4440 = vsel %vm1209, %v4320, 0
      %v4443 = vsel %vm1209, %v4328, 0
      %v4446 = vsel %vm1209, %v4336, 0
      %v4449 = vsel %vm1209, %v4344, 0
      %v4452 = vsel %vm1209, %v4352, 0
      %v4455 = vsel %vm1209, %v4360, 0
      %v4458 = vsel %vm1209, %v4368, 0
      %v4461 = vsel %vm1209, %v4376, 0
      %v4464 = vsel %vm1209, %v4384, 0
      %v4467 = vsel %vm1291, %v4026, 0
      %4469 = vmatpush.bf16.msra.mxu0 0
      %4470 = vmatpush.bf16.msra.mxu0 0
      %4471 = vmatpush.bf16.msra.mxu0 0
      %4472 = vmatpush.bf16.msra.mxu0 0
      %4473 = vmatpush.bf16.msra.mxu0 0
      %4474 = vmatpush.bf16.msra.mxu0 0
      %4475 = vmatpush.bf16.msra.mxu0 0
      %4476 = vmatpush.bf16.msra.mxu0 %v4467
      %4477 = vmatmul.bf16.gmra.mxu0 %v4386
      %v4478 = vpop.f32.mrf.mxu0
      %v4479 = vadd.f32 0.0, %v4478
      %v4480 = vpop.f32.mrf.mxu0
      %v4481 = vadd.f32 0.0, %v4480
      %4482 = vmatmul.bf16.gmra.mxu0 %v4389
      %v4483 = vpop.f32.mrf.mxu0
      %v4484 = vadd.f32 0.0, %v4483
      %v4485 = vpop.f32.mrf.mxu0
      %v4486 = vadd.f32 0.0, %v4485
      %4487 = vmatmul.bf16.gmra.mxu0 %v4392
      %v4488 = vpop.f32.mrf.mxu0
      %v4489 = vadd.f32 0.0, %v4488
      %v4490 = vpop.f32.mrf.mxu0
      %v4491 = vadd.f32 0.0, %v4490
      %4492 = vmatmul.bf16.gmra.mxu0 %v4395
      %v4493 = vpop.f32.mrf.mxu0
      %v4494 = vadd.f32 0.0, %v4493
      %v4495 = vpop.f32.mrf.mxu0
      %v4496 = vadd.f32 0.0, %v4495
      %4497 = vmatmul.bf16.gmra.mxu0 %v4398
      %v4498 = vpop.f32.mrf.mxu0
      %v4499 = vadd.f32 0.0, %v4498
      %v4500 = vpop.f32.mrf.mxu0
      %v4501 = vadd.f32 0.0, %v4500
      %4502 = vmatmul.bf16.gmra.mxu0 %v4401
      %v4503 = vpop.f32.mrf.mxu0
      %v4504 = vadd.f32 0.0, %v4503
      %v4505 = vpop.f32.mrf.mxu0
      %v4506 = vadd.f32 0.0, %v4505
      %4507 = vmatmul.bf16.gmra.mxu0 %v4404
      %v4508 = vpop.f32.mrf.mxu0
      %v4509 = vadd.f32 0.0, %v4508
      %v4510 = vpop.f32.mrf.mxu0
      %v4511 = vadd.f32 0.0, %v4510
      %4512 = vmatmul.bf16.gmra.mxu0 %v4407
      %v4513 = vpop.f32.mrf.mxu0
      %v4514 = vadd.f32 0.0, %v4513
      %v4515 = vpop.f32.mrf.mxu0
      %v4516 = vadd.f32 0.0, %v4515
      %4517 = vmatmul.bf16.gmra.mxu0 %v4410
      %v4518 = vpop.f32.mrf.mxu0
      %v4519 = vadd.f32 0.0, %v4518
      %v4520 = vpop.f32.mrf.mxu0
      %v4521 = vadd.f32 0.0, %v4520
      %4522 = vmatmul.bf16.gmra.mxu0 %v4413
      %v4523 = vpop.f32.mrf.mxu0
      %v4524 = vadd.f32 0.0, %v4523
      %v4525 = vpop.f32.mrf.mxu0
      %v4526 = vadd.f32 0.0, %v4525
      %4527 = vmatmul.bf16.gmra.mxu0 %v4416
      %v4528 = vpop.f32.mrf.mxu0
      %v4529 = vadd.f32 0.0, %v4528
      %v4530 = vpop.f32.mrf.mxu0
      %v4531 = vadd.f32 0.0, %v4530
      %4532 = vmatmul.bf16.gmra.mxu0 %v4419
      %v4533 = vpop.f32.mrf.mxu0
      %v4534 = vadd.f32 0.0, %v4533
      %v4535 = vpop.f32.mrf.mxu0
      %v4536 = vadd.f32 0.0, %v4535
      %4537 = vmatmul.bf16.gmra.mxu0 %v4422
      %v4538 = vpop.f32.mrf.mxu0
      %v4539 = vadd.f32 0.0, %v4538
      %v4540 = vpop.f32.mrf.mxu0
      %v4541 = vadd.f32 0.0, %v4540
      %4542 = vmatmul.bf16.gmra.mxu0 %v4425
      %v4543 = vpop.f32.mrf.mxu0
      %v4544 = vadd.f32 0.0, %v4543
      %v4545 = vpop.f32.mrf.mxu0
      %v4546 = vadd.f32 0.0, %v4545
      %4547 = vmatmul.bf16.gmra.mxu0 %v4428
      %v4548 = vpop.f32.mrf.mxu0
      %v4549 = vadd.f32 0.0, %v4548
      %v4550 = vpop.f32.mrf.mxu0
      %v4551 = vadd.f32 0.0, %v4550
      %4552 = vmatmul.bf16.gmra.mxu0 %v4431
      %v4553 = vpop.f32.mrf.mxu0
      %v4554 = vadd.f32 0.0, %v4553
      %v4555 = vpop.f32.mrf.mxu0
      %v4556 = vadd.f32 0.0, %v4555
      %4557 = vmatmul.bf16.gmra.mxu0 %v4434
      %v4558 = vpop.f32.mrf.mxu0
      %v4559 = vadd.f32 0.0, %v4558
      %v4560 = vpop.f32.mrf.mxu0
      %v4561 = vadd.f32 0.0, %v4560
      %4562 = vmatmul.bf16.gmra.mxu0 %v4437
      %v4563 = vpop.f32.mrf.mxu0
      %v4564 = vadd.f32 0.0, %v4563
      %v4565 = vpop.f32.mrf.mxu0
      %v4566 = vadd.f32 0.0, %v4565
      %4567 = vmatmul.bf16.gmra.mxu0 %v4440
      %v4568 = vpop.f32.mrf.mxu0
      %v4569 = vadd.f32 0.0, %v4568
      %v4570 = vpop.f32.mrf.mxu0
      %v4571 = vadd.f32 0.0, %v4570
      %4572 = vmatmul.bf16.gmra.mxu0 %v4443
      %v4573 = vpop.f32.mrf.mxu0
      %v4574 = vadd.f32 0.0, %v4573
      %v4575 = vpop.f32.mrf.mxu0
      %v4576 = vadd.f32 0.0, %v4575
      %4577 = vmatmul.bf16.gmra.mxu0 %v4446
      %v4578 = vpop.f32.mrf.mxu0
      %v4579 = vadd.f32 0.0, %v4578
      %v4580 = vpop.f32.mrf.mxu0
      %v4581 = vadd.f32 0.0, %v4580
      %4582 = vmatmul.bf16.gmra.mxu0 %v4449
      %v4583 = vpop.f32.mrf.mxu0
      %v4584 = vadd.f32 0.0, %v4583
      %v4585 = vpop.f32.mrf.mxu0
      %v4586 = vadd.f32 0.0, %v4585
      %4587 = vmatmul.bf16.gmra.mxu0 %v4452
      %v4588 = vpop.f32.mrf.mxu0
      %v4589 = vadd.f32 0.0, %v4588
      %v4590 = vpop.f32.mrf.mxu0
      %v4591 = vadd.f32 0.0, %v4590
      %4592 = vmatmul.bf16.gmra.mxu0 %v4455
      %v4593 = vpop.f32.mrf.mxu0
      %v4594 = vadd.f32 0.0, %v4593
      %v4595 = vpop.f32.mrf.mxu0
      %v4596 = vadd.f32 0.0, %v4595
      %4597 = vmatmul.bf16.gmra.mxu0 %v4458
      %v4598 = vpop.f32.mrf.mxu0
      %v4599 = vadd.f32 0.0, %v4598
      %v4600 = vpop.f32.mrf.mxu0
      %v4601 = vadd.f32 0.0, %v4600
      %4602 = vmatmul.bf16.gmra.mxu0 %v4461
      %v4603 = vpop.f32.mrf.mxu0
      %v4604 = vadd.f32 0.0, %v4603
      %v4605 = vpop.f32.mrf.mxu0
      %v4606 = vadd.f32 0.0, %v4605
      %4607 = vmatmul.bf16.gmra.mxu0 %v4464
      %v4608 = vpop.f32.mrf.mxu0
      %v4609 = vadd.f32 0.0, %v4608
      %v4610 = vpop.f32.mrf.mxu0
      %v4611 = vadd.f32 0.0, %v4610
      %4612 = vdwg.mxu0
      %v4613 = vadd.f32 %v3916, %v4479
      %v4614 = vadd.f32 %v3917, %v4481
      %v4615 = vadd.f32 %v3918, %v4484
      %v4616 = vadd.f32 %v3919, %v4486
      %v4617 = vadd.f32 %v3920, %v4489
      %v4618 = vadd.f32 %v3921, %v4491
      %v4619 = vadd.f32 %v3922, %v4494
      %v4620 = vadd.f32 %v3923, %v4496
      %v4621 = vadd.f32 %v3924, %v4499
      %v4622 = vadd.f32 %v3925, %v4501
      %v4623 = vadd.f32 %v3926, %v4504
      %v4624 = vadd.f32 %v3927, %v4506
      %v4625 = vadd.f32 %v3928, %v4509
      %v4626 = vadd.f32 %v3929, %v4511
      %v4627 = vadd.f32 %v3930, %v4514
      %v4628 = vadd.f32 %v3931, %v4516
      %v4629 = vadd.f32 %v3932, %v4519
      %v4630 = vadd.f32 %v3933, %v4521
      %v4631 = vadd.f32 %v3934, %v4524
      %v4632 = vadd.f32 %v3935, %v4526
      %v4633 = vadd.f32 %v3936, %v4529
      %v4634 = vadd.f32 %v3937, %v4531
      %v4635 = vadd.f32 %v3938, %v4534
      %v4636 = vadd.f32 %v3939, %v4536
      %v4637 = vadd.f32 %v3940, %v4539
      %v4638 = vadd.f32 %v3941, %v4541
      %v4639 = vadd.f32 %v3942, %v4544
      %v4640 = vadd.f32 %v3943, %v4546
      %v4641 = vadd.f32 %v3944, %v4549
      %v4642 = vadd.f32 %v3945, %v4551
      %v4643 = vadd.f32 %v3946, %v4554
      %v4644 = vadd.f32 %v3947, %v4556
      %v4645 = vadd.f32 %v3948, %v4559
      %v4646 = vadd.f32 %v3949, %v4561
      %v4647 = vadd.f32 %v3950, %v4564
      %v4648 = vadd.f32 %v3951, %v4566
      %v4649 = vadd.f32 %v3952, %v4569
      %v4650 = vadd.f32 %v3953, %v4571
      %v4651 = vadd.f32 %v3954, %v4574
      %v4652 = vadd.f32 %v3955, %v4576
      %v4653 = vadd.f32 %v3956, %v4579
      %v4654 = vadd.f32 %v3957, %v4581
      %v4655 = vadd.f32 %v3958, %v4584
      %v4656 = vadd.f32 %v3959, %v4586
      %v4657 = vadd.f32 %v3960, %v4589
      %v4658 = vadd.f32 %v3961, %v4591
      %v4659 = vadd.f32 %v3962, %v4594
      %v4660 = vadd.f32 %v3963, %v4596
      %v4661 = vadd.f32 %v3964, %v4599
      %v4662 = vadd.f32 %v3965, %v4601
      %v4663 = vadd.f32 %v3966, %v4604
      %v4664 = vadd.f32 %v3967, %v4606
      %v4665 = vadd.f32 %v3968, %v4609
      %v4666 = vadd.f32 %v3969, %v4611
      %v4667 = vld [vmem:[#allocation2 + $0x18] sm:$0xe]
      %s4668 = scalar_lea.vmem %s5, 32
      %v4669 = vld [vmem:[%s4668] sm:$0xf]
      %v4671 = vunpack.c.l.b16 %v4667
      %v4672 = vpack.c.b16 %v4083, %v4671
      %v4673 = vrot.slane %v4672, 1
      %v4674 = vrot.slane %v4138, 1
      %v4675 = vsel %vm1646, %v4673, %v4674
      %v4676 = vrot.slane %v4139, 1
      %v4677 = vsel %vm1646, %v4674, %v4676
      %v4678 = vrot.slane %v4140, 1
      %v4679 = vsel %vm1646, %v4676, %v4678
      %v4680 = vrot.slane %v4141, 1
      %v4681 = vsel %vm1646, %v4678, %v4680
      %v4682 = vrot.slane %v4142, 1
      %v4683 = vsel %vm1646, %v4680, %v4682
      %v4684 = vrot.slane %v4143, 1
      %v4685 = vsel %vm1646, %v4682, %v4684
      %v4686 = vrot.slane %v4144, 1
      %v4687 = vsel %vm1646, %v4684, %v4686
      %v4688 = vrot.slane %v4145, 1
      %v4689 = vsel %vm1646, %v4686, %v4688
      %v4690 = vrot.slane %v4146, 1
      %v4691 = vsel %vm1646, %v4688, %v4690
      %v4692 = vrot.slane %v4147, 1
      %v4693 = vsel %vm1646, %v4690, %v4692
      %v4694 = vrot.slane %v4148, 1
      %v4695 = vsel %vm1646, %v4692, %v4694
      %v4696 = vrot.slane %v4149, 1
      %v4697 = vsel %vm1646, %v4694, %v4696
      %v4698 = vrot.slane %v4150, 1
      %v4699 = vsel %vm1646, %v4696, %v4698
      %v4700 = vrot.slane %v4151, 1
      %v4701 = vsel %vm1646, %v4698, %v4700
      %v4702 = vrot.slane %v4152, 1
      %v4703 = vsel %vm1646, %v4700, %v4702
      %v4704 = vrot.slane %v4153, 1
      %v4705 = vsel %vm1646, %v4702, %v4704
      %v4706 = vrot.slane %v4154, 1
      %v4707 = vsel %vm1646, %v4704, %v4706
      %v4708 = vrot.slane %v4155, 1
      %v4709 = vsel %vm1646, %v4706, %v4708
      %v4710 = vrot.slane %v4156, 1
      %v4711 = vsel %vm1646, %v4708, %v4710
      %v4712 = vrot.slane %v4157, 1
      %v4713 = vsel %vm1646, %v4710, %v4712
      %v4714 = vrot.slane %v4158, 1
      %v4715 = vsel %vm1646, %v4712, %v4714
      %v4716 = vrot.slane %v4159, 1
      %v4717 = vsel %vm1646, %v4714, %v4716
      %v4718 = vrot.slane %v4160, 1
      %v4719 = vsel %vm1646, %v4716, %v4718
      %v4720 = vrot.slane %v4161, 1
      %v4721 = vsel %vm1646, %v4718, %v4720
      %v4722 = vrot.slane %v4162, 1
      %v4723 = vsel %vm1646, %v4720, %v4722
      %v4724 = vrot.slane %v4163, 1
      %v4725 = vsel %vm1646, %v4722, %v4724
      %v4726 = vrot.slane %v4164, 1
      %v4727 = vsel %vm1646, %v4724, %v4726
      %v4729 = vsel %vm1209, %v4675, 0
      %v4732 = vsel %vm1209, %v4677, 0
      %v4735 = vsel %vm1209, %v4679, 0
      %v4738 = vsel %vm1209, %v4681, 0
      %v4741 = vsel %vm1209, %v4683, 0
      %v4744 = vsel %vm1209, %v4685, 0
      %v4747 = vsel %vm1209, %v4687, 0
      %v4750 = vsel %vm1209, %v4689, 0
      %v4753 = vsel %vm1209, %v4691, 0
      %v4756 = vsel %vm1209, %v4693, 0
      %v4759 = vsel %vm1209, %v4695, 0
      %v4762 = vsel %vm1209, %v4697, 0
      %v4765 = vsel %vm1209, %v4699, 0
      %v4768 = vsel %vm1209, %v4701, 0
      %v4771 = vsel %vm1209, %v4703, 0
      %v4774 = vsel %vm1209, %v4705, 0
      %v4777 = vsel %vm1209, %v4707, 0
      %v4780 = vsel %vm1209, %v4709, 0
      %v4783 = vsel %vm1209, %v4711, 0
      %v4786 = vsel %vm1209, %v4713, 0
      %v4789 = vsel %vm1209, %v4715, 0
      %v4792 = vsel %vm1209, %v4717, 0
      %v4795 = vsel %vm1209, %v4719, 0
      %v4798 = vsel %vm1209, %v4721, 0
      %v4801 = vsel %vm1209, %v4723, 0
      %v4804 = vsel %vm1209, %v4725, 0
      %v4807 = vsel %vm1209, %v4727, 0
      %v4810 = vsel %vm1291, %v4669, 0
      %4812 = vmatpush.bf16.msra.mxu0 0
      %4813 = vmatpush.bf16.msra.mxu0 0
      %4814 = vmatpush.bf16.msra.mxu0 0
      %4815 = vmatpush.bf16.msra.mxu0 0
      %4816 = vmatpush.bf16.msra.mxu0 0
      %4817 = vmatpush.bf16.msra.mxu0 0
      %4818 = vmatpush.bf16.msra.mxu0 0
      %4819 = vmatpush.bf16.msra.mxu0 %v4810
      %4820 = vmatmul.bf16.gmra.mxu0 %v4729
      %v4821 = vpop.f32.mrf.mxu0
      %v4822 = vadd.f32 0.0, %v4821
      %v4823 = vpop.f32.mrf.mxu0
      %v4824 = vadd.f32 0.0, %v4823
      %4825 = vmatmul.bf16.gmra.mxu0 %v4732
      %v4826 = vpop.f32.mrf.mxu0
      %v4827 = vadd.f32 0.0, %v4826
      %v4828 = vpop.f32.mrf.mxu0
      %v4829 = vadd.f32 0.0, %v4828
      %4830 = vmatmul.bf16.gmra.mxu0 %v4735
      %v4831 = vpop.f32.mrf.mxu0
      %v4832 = vadd.f32 0.0, %v4831
      %v4833 = vpop.f32.mrf.mxu0
      %v4834 = vadd.f32 0.0, %v4833
      %4835 = vmatmul.bf16.gmra.mxu0 %v4738
      %v4836 = vpop.f32.mrf.mxu0
      %v4837 = vadd.f32 0.0, %v4836
      %v4838 = vpop.f32.mrf.mxu0
      %v4839 = vadd.f32 0.0, %v4838
      %4840 = vmatmul.bf16.gmra.mxu0 %v4741
      %v4841 = vpop.f32.mrf.mxu0
      %v4842 = vadd.f32 0.0, %v4841
      %v4843 = vpop.f32.mrf.mxu0
      %v4844 = vadd.f32 0.0, %v4843
      %4845 = vmatmul.bf16.gmra.mxu0 %v4744
      %v4846 = vpop.f32.mrf.mxu0
      %v4847 = vadd.f32 0.0, %v4846
      %v4848 = vpop.f32.mrf.mxu0
      %v4849 = vadd.f32 0.0, %v4848
      %4850 = vmatmul.bf16.gmra.mxu0 %v4747
      %v4851 = vpop.f32.mrf.mxu0
      %v4852 = vadd.f32 0.0, %v4851
      %v4853 = vpop.f32.mrf.mxu0
      %v4854 = vadd.f32 0.0, %v4853
      %4855 = vmatmul.bf16.gmra.mxu0 %v4750
      %v4856 = vpop.f32.mrf.mxu0
      %v4857 = vadd.f32 0.0, %v4856
      %v4858 = vpop.f32.mrf.mxu0
      %v4859 = vadd.f32 0.0, %v4858
      %4860 = vmatmul.bf16.gmra.mxu0 %v4753
      %v4861 = vpop.f32.mrf.mxu0
      %v4862 = vadd.f32 0.0, %v4861
      %v4863 = vpop.f32.mrf.mxu0
      %v4864 = vadd.f32 0.0, %v4863
      %4865 = vmatmul.bf16.gmra.mxu0 %v4756
      %v4866 = vpop.f32.mrf.mxu0
      %v4867 = vadd.f32 0.0, %v4866
      %v4868 = vpop.f32.mrf.mxu0
      %v4869 = vadd.f32 0.0, %v4868
      %4870 = vmatmul.bf16.gmra.mxu0 %v4759
      %v4871 = vpop.f32.mrf.mxu0
      %v4872 = vadd.f32 0.0, %v4871
      %v4873 = vpop.f32.mrf.mxu0
      %v4874 = vadd.f32 0.0, %v4873
      %4875 = vmatmul.bf16.gmra.mxu0 %v4762
      %v4876 = vpop.f32.mrf.mxu0
      %v4877 = vadd.f32 0.0, %v4876
      %v4878 = vpop.f32.mrf.mxu0
      %v4879 = vadd.f32 0.0, %v4878
      %4880 = vmatmul.bf16.gmra.mxu0 %v4765
      %v4881 = vpop.f32.mrf.mxu0
      %v4882 = vadd.f32 0.0, %v4881
      %v4883 = vpop.f32.mrf.mxu0
      %v4884 = vadd.f32 0.0, %v4883
      %4885 = vmatmul.bf16.gmra.mxu0 %v4768
      %v4886 = vpop.f32.mrf.mxu0
      %v4887 = vadd.f32 0.0, %v4886
      %v4888 = vpop.f32.mrf.mxu0
      %v4889 = vadd.f32 0.0, %v4888
      %4890 = vmatmul.bf16.gmra.mxu0 %v4771
      %v4891 = vpop.f32.mrf.mxu0
      %v4892 = vadd.f32 0.0, %v4891
      %v4893 = vpop.f32.mrf.mxu0
      %v4894 = vadd.f32 0.0, %v4893
      %4895 = vmatmul.bf16.gmra.mxu0 %v4774
      %v4896 = vpop.f32.mrf.mxu0
      %v4897 = vadd.f32 0.0, %v4896
      %v4898 = vpop.f32.mrf.mxu0
      %v4899 = vadd.f32 0.0, %v4898
      %4900 = vmatmul.bf16.gmra.mxu0 %v4777
      %v4901 = vpop.f32.mrf.mxu0
      %v4902 = vadd.f32 0.0, %v4901
      %v4903 = vpop.f32.mrf.mxu0
      %v4904 = vadd.f32 0.0, %v4903
      %4905 = vmatmul.bf16.gmra.mxu0 %v4780
      %v4906 = vpop.f32.mrf.mxu0
      %v4907 = vadd.f32 0.0, %v4906
      %v4908 = vpop.f32.mrf.mxu0
      %v4909 = vadd.f32 0.0, %v4908
      %4910 = vmatmul.bf16.gmra.mxu0 %v4783
      %v4911 = vpop.f32.mrf.mxu0
      %v4912 = vadd.f32 0.0, %v4911
      %v4913 = vpop.f32.mrf.mxu0
      %v4914 = vadd.f32 0.0, %v4913
      %4915 = vmatmul.bf16.gmra.mxu0 %v4786
      %v4916 = vpop.f32.mrf.mxu0
      %v4917 = vadd.f32 0.0, %v4916
      %v4918 = vpop.f32.mrf.mxu0
      %v4919 = vadd.f32 0.0, %v4918
      %4920 = vmatmul.bf16.gmra.mxu0 %v4789
      %v4921 = vpop.f32.mrf.mxu0
      %v4922 = vadd.f32 0.0, %v4921
      %v4923 = vpop.f32.mrf.mxu0
      %v4924 = vadd.f32 0.0, %v4923
      %4925 = vmatmul.bf16.gmra.mxu0 %v4792
      %v4926 = vpop.f32.mrf.mxu0
      %v4927 = vadd.f32 0.0, %v4926
      %v4928 = vpop.f32.mrf.mxu0
      %v4929 = vadd.f32 0.0, %v4928
      %4930 = vmatmul.bf16.gmra.mxu0 %v4795
      %v4931 = vpop.f32.mrf.mxu0
      %v4932 = vadd.f32 0.0, %v4931
      %v4933 = vpop.f32.mrf.mxu0
      %v4934 = vadd.f32 0.0, %v4933
      %4935 = vmatmul.bf16.gmra.mxu0 %v4798
      %v4936 = vpop.f32.mrf.mxu0
      %v4937 = vadd.f32 0.0, %v4936
      %v4938 = vpop.f32.mrf.mxu0
      %v4939 = vadd.f32 0.0, %v4938
      %4940 = vmatmul.bf16.gmra.mxu0 %v4801
      %v4941 = vpop.f32.mrf.mxu0
      %v4942 = vadd.f32 0.0, %v4941
      %v4943 = vpop.f32.mrf.mxu0
      %v4944 = vadd.f32 0.0, %v4943
      %4945 = vmatmul.bf16.gmra.mxu0 %v4804
      %v4946 = vpop.f32.mrf.mxu0
      %v4947 = vadd.f32 0.0, %v4946
      %v4948 = vpop.f32.mrf.mxu0
      %v4949 = vadd.f32 0.0, %v4948
      %4950 = vmatmul.bf16.gmra.mxu0 %v4807
      %v4951 = vpop.f32.mrf.mxu0
      %v4952 = vadd.f32 0.0, %v4951
      %v4953 = vpop.f32.mrf.mxu0
      %v4954 = vadd.f32 0.0, %v4953
      %4955 = vdwg.mxu0
      %v4956 = vadd.f32 %v4613, %v4822
      %v4957 = vadd.f32 %v4614, %v4824
      %v4958 = vadd.f32 %v4615, %v4827
      %v4959 = vadd.f32 %v4616, %v4829
      %v4960 = vadd.f32 %v4617, %v4832
      %v4961 = vadd.f32 %v4618, %v4834
      %v4962 = vadd.f32 %v4619, %v4837
      %v4963 = vadd.f32 %v4620, %v4839
      %v4964 = vadd.f32 %v4621, %v4842
      %v4965 = vadd.f32 %v4622, %v4844
      %v4966 = vadd.f32 %v4623, %v4847
      %v4967 = vadd.f32 %v4624, %v4849
      %v4968 = vadd.f32 %v4625, %v4852
      %v4969 = vadd.f32 %v4626, %v4854
      %v4970 = vadd.f32 %v4627, %v4857
      %v4971 = vadd.f32 %v4628, %v4859
      %v4972 = vadd.f32 %v4629, %v4862
      %v4973 = vadd.f32 %v4630, %v4864
      %v4974 = vadd.f32 %v4631, %v4867
      %v4975 = vadd.f32 %v4632, %v4869
      %v4976 = vadd.f32 %v4633, %v4872
      %v4977 = vadd.f32 %v4634, %v4874
      %v4978 = vadd.f32 %v4635, %v4877
      %v4979 = vadd.f32 %v4636, %v4879
      %v4980 = vadd.f32 %v4637, %v4882
      %v4981 = vadd.f32 %v4638, %v4884
      %v4982 = vadd.f32 %v4639, %v4887
      %v4983 = vadd.f32 %v4640, %v4889
      %v4984 = vadd.f32 %v4641, %v4892
      %v4985 = vadd.f32 %v4642, %v4894
      %v4986 = vadd.f32 %v4643, %v4897
      %v4987 = vadd.f32 %v4644, %v4899
      %v4988 = vadd.f32 %v4645, %v4902
      %v4989 = vadd.f32 %v4646, %v4904
      %v4990 = vadd.f32 %v4647, %v4907
      %v4991 = vadd.f32 %v4648, %v4909
      %v4992 = vadd.f32 %v4649, %v4912
      %v4993 = vadd.f32 %v4650, %v4914
      %v4994 = vadd.f32 %v4651, %v4917
      %v4995 = vadd.f32 %v4652, %v4919
      %v4996 = vadd.f32 %v4653, %v4922
      %v4997 = vadd.f32 %v4654, %v4924
      %v4998 = vadd.f32 %v4655, %v4927
      %v4999 = vadd.f32 %v4656, %v4929
      %v5000 = vadd.f32 %v4657, %v4932
      %v5001 = vadd.f32 %v4658, %v4934
      %v5002 = vadd.f32 %v4659, %v4937
      %v5003 = vadd.f32 %v4660, %v4939
      %v5004 = vadd.f32 %v4661, %v4942
      %v5005 = vadd.f32 %v4662, %v4944
      %v5006 = vadd.f32 %v4663, %v4947
      %v5007 = vadd.f32 %v4664, %v4949
      %v5008 = vadd.f32 %v4665, %v4952
      %v5009 = vadd.f32 %v4666, %v4954
      %v5010 = vld [vmem:[%s7] sm:$0x1]
      %v5012 = vperm.slane %v5010, 0
      %v5014 = vmul.f32 %v4956, %v5012
      %v5015 = vmul.f32 %v4957, %v5012
      %v5016 = vmul.f32 %v4958, %v5012
      %v5017 = vmul.f32 %v4959, %v5012
      %v5018 = vmul.f32 %v4960, %v5012
      %v5019 = vmul.f32 %v4961, %v5012
      %v5020 = vmul.f32 %v4962, %v5012
      %v5021 = vmul.f32 %v4963, %v5012
      %v5022 = vmul.f32 %v4964, %v5012
      %v5023 = vmul.f32 %v4965, %v5012
      %v5024 = vmul.f32 %v4966, %v5012
      %v5025 = vmul.f32 %v4967, %v5012
      %v5026 = vmul.f32 %v4968, %v5012
      %v5027 = vmul.f32 %v4969, %v5012
      %v5028 = vmul.f32 %v4970, %v5012
      %v5029 = vmul.f32 %v4971, %v5012
      %v5030 = vmul.f32 %v4972, %v5012
      %v5031 = vmul.f32 %v4973, %v5012
      %v5032 = vmul.f32 %v4974, %v5012
      %v5033 = vmul.f32 %v4975, %v5012
      %v5034 = vmul.f32 %v4976, %v5012
      %v5035 = vmul.f32 %v4977, %v5012
      %v5036 = vmul.f32 %v4978, %v5012
      %v5037 = vmul.f32 %v4979, %v5012
      %v5038 = vmul.f32 %v4980, %v5012
      %v5039 = vmul.f32 %v4981, %v5012
      %v5040 = vmul.f32 %v4982, %v5012
      %v5041 = vmul.f32 %v4983, %v5012
      %v5042 = vmul.f32 %v4984, %v5012
      %v5043 = vmul.f32 %v4985, %v5012
      %v5044 = vmul.f32 %v4986, %v5012
      %v5045 = vmul.f32 %v4987, %v5012
      %v5046 = vmul.f32 %v4988, %v5012
      %v5047 = vmul.f32 %v4989, %v5012
      %v5048 = vmul.f32 %v4990, %v5012
      %v5049 = vmul.f32 %v4991, %v5012
      %v5050 = vmul.f32 %v4992, %v5012
      %v5051 = vmul.f32 %v4993, %v5012
      %v5052 = vmul.f32 %v4994, %v5012
      %v5053 = vmul.f32 %v4995, %v5012
      %v5054 = vmul.f32 %v4996, %v5012
      %v5055 = vmul.f32 %v4997, %v5012
      %v5056 = vmul.f32 %v4998, %v5012
      %v5057 = vmul.f32 %v4999, %v5012
      %v5058 = vmul.f32 %v5000, %v5012
      %v5059 = vmul.f32 %v5001, %v5012
      %v5060 = vmul.f32 %v5002, %v5012
      %v5061 = vmul.f32 %v5003, %v5012
      %v5062 = vmul.f32 %v5004, %v5012
      %v5063 = vmul.f32 %v5005, %v5012
      %v5064 = vmul.f32 %v5006, %v5012
      %v5065 = vmul.f32 %v5007, %v5012
      %v5066 = vmul.f32 %v5008, %v5012
      %v5067 = vmul.f32 %v5009, %v5012
      %v5068 = vld [vmem:[%s8] sm:$0x1]
      %v5070 = vperm.slane %v5068, 0
      %v5072 = vadd.f32 %v5014, %v5070
      %v5073 = vadd.f32 %v5015, %v5070
      %v5074 = vadd.f32 %v5016, %v5070
      %v5075 = vadd.f32 %v5017, %v5070
      %v5076 = vadd.f32 %v5018, %v5070
      %v5077 = vadd.f32 %v5019, %v5070
      %v5078 = vadd.f32 %v5020, %v5070
      %v5079 = vadd.f32 %v5021, %v5070
      %v5080 = vadd.f32 %v5022, %v5070
      %v5081 = vadd.f32 %v5023, %v5070
      %v5082 = vadd.f32 %v5024, %v5070
      %v5083 = vadd.f32 %v5025, %v5070
      %v5084 = vadd.f32 %v5026, %v5070
      %v5085 = vadd.f32 %v5027, %v5070
      %v5086 = vadd.f32 %v5028, %v5070
      %v5087 = vadd.f32 %v5029, %v5070
      %v5088 = vadd.f32 %v5030, %v5070
      %v5089 = vadd.f32 %v5031, %v5070
      %v5090 = vadd.f32 %v5032, %v5070
      %v5091 = vadd.f32 %v5033, %v5070
      %v5092 = vadd.f32 %v5034, %v5070
      %v5093 = vadd.f32 %v5035, %v5070
      %v5094 = vadd.f32 %v5036, %v5070
      %v5095 = vadd.f32 %v5037, %v5070
      %v5096 = vadd.f32 %v5038, %v5070
      %v5097 = vadd.f32 %v5039, %v5070
      %v5098 = vadd.f32 %v5040, %v5070
      %v5099 = vadd.f32 %v5041, %v5070
      %v5100 = vadd.f32 %v5042, %v5070
      %v5101 = vadd.f32 %v5043, %v5070
      %v5102 = vadd.f32 %v5044, %v5070
      %v5103 = vadd.f32 %v5045, %v5070
      %v5104 = vadd.f32 %v5046, %v5070
      %v5105 = vadd.f32 %v5047, %v5070
      %v5106 = vadd.f32 %v5048, %v5070
      %v5107 = vadd.f32 %v5049, %v5070
      %v5108 = vadd.f32 %v5050, %v5070
      %v5109 = vadd.f32 %v5051, %v5070
      %v5110 = vadd.f32 %v5052, %v5070
      %v5111 = vadd.f32 %v5053, %v5070
      %v5112 = vadd.f32 %v5054, %v5070
      %v5113 = vadd.f32 %v5055, %v5070
      %v5114 = vadd.f32 %v5056, %v5070
      %v5115 = vadd.f32 %v5057, %v5070
      %v5116 = vadd.f32 %v5058, %v5070
      %v5117 = vadd.f32 %v5059, %v5070
      %v5118 = vadd.f32 %v5060, %v5070
      %v5119 = vadd.f32 %v5061, %v5070
      %v5120 = vadd.f32 %v5062, %v5070
      %v5121 = vadd.f32 %v5063, %v5070
      %v5122 = vadd.f32 %v5064, %v5070
      %v5123 = vadd.f32 %v5065, %v5070
      %v5124 = vadd.f32 %v5066, %v5070
      %v5125 = vadd.f32 %v5067, %v5070
      %vm5126 = vcmp.ge.f32.partialorder %v5072, 0.0
      %vm5127 = vcmp.ge.f32.partialorder %v5073, 0.0
      %vm5128 = vcmp.ge.f32.partialorder %v5074, 0.0
      %vm5129 = vcmp.ge.f32.partialorder %v5075, 0.0
      %vm5130 = vcmp.ge.f32.partialorder %v5076, 0.0
      %vm5131 = vcmp.ge.f32.partialorder %v5077, 0.0
      %vm5132 = vcmp.ge.f32.partialorder %v5078, 0.0
      %vm5133 = vcmp.ge.f32.partialorder %v5079, 0.0
      %vm5134 = vcmp.ge.f32.partialorder %v5080, 0.0
      %vm5135 = vcmp.ge.f32.partialorder %v5081, 0.0
      %vm5136 = vcmp.ge.f32.partialorder %v5082, 0.0
      %vm5137 = vcmp.ge.f32.partialorder %v5083, 0.0
      %vm5138 = vcmp.ge.f32.partialorder %v5084, 0.0
      %vm5139 = vcmp.ge.f32.partialorder %v5085, 0.0
      %vm5140 = vcmp.ge.f32.partialorder %v5086, 0.0
      %vm5141 = vcmp.ge.f32.partialorder %v5087, 0.0
      %vm5142 = vcmp.ge.f32.partialorder %v5088, 0.0
      %vm5143 = vcmp.ge.f32.partialorder %v5089, 0.0
      %vm5144 = vcmp.ge.f32.partialorder %v5090, 0.0
      %vm5145 = vcmp.ge.f32.partialorder %v5091, 0.0
      %vm5146 = vcmp.ge.f32.partialorder %v5092, 0.0
      %vm5147 = vcmp.ge.f32.partialorder %v5093, 0.0
      %vm5148 = vcmp.ge.f32.partialorder %v5094, 0.0
      %vm5149 = vcmp.ge.f32.partialorder %v5095, 0.0
      %vm5150 = vcmp.ge.f32.partialorder %v5096, 0.0
      %vm5151 = vcmp.ge.f32.partialorder %v5097, 0.0
      %vm5152 = vcmp.ge.f32.partialorder %v5098, 0.0
      %vm5153 = vcmp.ge.f32.partialorder %v5099, 0.0
      %vm5154 = vcmp.ge.f32.partialorder %v5100, 0.0
      %vm5155 = vcmp.ge.f32.partialorder %v5101, 0.0
      %vm5156 = vcmp.ge.f32.partialorder %v5102, 0.0
      %vm5157 = vcmp.ge.f32.partialorder %v5103, 0.0
      %vm5158 = vcmp.ge.f32.partialorder %v5104, 0.0
      %vm5159 = vcmp.ge.f32.partialorder %v5105, 0.0
      %vm5160 = vcmp.ge.f32.partialorder %v5106, 0.0
      %vm5161 = vcmp.ge.f32.partialorder %v5107, 0.0
      %vm5162 = vcmp.ge.f32.partialorder %v5108, 0.0
      %vm5163 = vcmp.ge.f32.partialorder %v5109, 0.0
      %vm5164 = vcmp.ge.f32.partialorder %v5110, 0.0
      %vm5165 = vcmp.ge.f32.partialorder %v5111, 0.0
      %vm5166 = vcmp.ge.f32.partialorder %v5112, 0.0
      %vm5167 = vcmp.ge.f32.partialorder %v5113, 0.0
      %vm5168 = vcmp.ge.f32.partialorder %v5114, 0.0
      %vm5169 = vcmp.ge.f32.partialorder %v5115, 0.0
      %vm5170 = vcmp.ge.f32.partialorder %v5116, 0.0
      %vm5171 = vcmp.ge.f32.partialorder %v5117, 0.0
      %vm5172 = vcmp.ge.f32.partialorder %v5118, 0.0
      %vm5173 = vcmp.ge.f32.partialorder %v5119, 0.0
      %vm5174 = vcmp.ge.f32.partialorder %v5120, 0.0
      %vm5175 = vcmp.ge.f32.partialorder %v5121, 0.0
      %vm5176 = vcmp.ge.f32.partialorder %v5122, 0.0
      %vm5177 = vcmp.ge.f32.partialorder %v5123, 0.0
      %vm5178 = vcmp.ge.f32.partialorder %v5124, 0.0
      %vm5179 = vcmp.ge.f32.partialorder %v5125, 0.0
      %v5180 = vmul.f32 %v5072, 0.2
      %v5181 = vmul.f32 %v5073, 0.2
      %v5182 = vmul.f32 %v5074, 0.2
      %v5183 = vmul.f32 %v5075, 0.2
      %v5184 = vmul.f32 %v5076, 0.2
      %v5185 = vmul.f32 %v5077, 0.2
      %v5186 = vmul.f32 %v5078, 0.2
      %v5187 = vmul.f32 %v5079, 0.2
      %v5188 = vmul.f32 %v5080, 0.2
      %v5189 = vmul.f32 %v5081, 0.2
      %v5190 = vmul.f32 %v5082, 0.2
      %v5191 = vmul.f32 %v5083, 0.2
      %v5192 = vmul.f32 %v5084, 0.2
      %v5193 = vmul.f32 %v5085, 0.2
      %v5194 = vmul.f32 %v5086, 0.2
      %v5195 = vmul.f32 %v5087, 0.2
      %v5196 = vmul.f32 %v5088, 0.2
      %v5197 = vmul.f32 %v5089, 0.2
      %v5198 = vmul.f32 %v5090, 0.2
      %v5199 = vmul.f32 %v5091, 0.2
      %v5200 = vmul.f32 %v5092, 0.2
      %v5201 = vmul.f32 %v5093, 0.2
      %v5202 = vmul.f32 %v5094, 0.2
      %v5203 = vmul.f32 %v5095, 0.2
      %v5204 = vmul.f32 %v5096, 0.2
      %v5205 = vmul.f32 %v5097, 0.2
      %v5206 = vmul.f32 %v5098, 0.2
      %v5207 = vmul.f32 %v5099, 0.2
      %v5208 = vmul.f32 %v5100, 0.2
      %v5209 = vmul.f32 %v5101, 0.2
      %v5210 = vmul.f32 %v5102, 0.2
      %v5211 = vmul.f32 %v5103, 0.2
      %v5212 = vmul.f32 %v5104, 0.2
      %v5213 = vmul.f32 %v5105, 0.2
      %v5214 = vmul.f32 %v5106, 0.2
      %v5215 = vmul.f32 %v5107, 0.2
      %v5216 = vmul.f32 %v5108, 0.2
      %v5217 = vmul.f32 %v5109, 0.2
      %v5218 = vmul.f32 %v5110, 0.2
      %v5219 = vmul.f32 %v5111, 0.2
      %v5220 = vmul.f32 %v5112, 0.2
      %v5221 = vmul.f32 %v5113, 0.2
      %v5222 = vmul.f32 %v5114, 0.2
      %v5223 = vmul.f32 %v5115, 0.2
      %v5224 = vmul.f32 %v5116, 0.2
      %v5225 = vmul.f32 %v5117, 0.2
      %v5226 = vmul.f32 %v5118, 0.2
      %v5227 = vmul.f32 %v5119, 0.2
      %v5228 = vmul.f32 %v5120, 0.2
      %v5229 = vmul.f32 %v5121, 0.2
      %v5230 = vmul.f32 %v5122, 0.2
      %v5231 = vmul.f32 %v5123, 0.2
      %v5232 = vmul.f32 %v5124, 0.2
      %v5233 = vmul.f32 %v5125, 0.2
      %v5234 = vsel %vm5126, %v5072, %v5180
      %v5235 = vsel %vm5127, %v5073, %v5181
      %v5236 = vsel %vm5128, %v5074, %v5182
      %v5237 = vsel %vm5129, %v5075, %v5183
      %v5238 = vsel %vm5130, %v5076, %v5184
      %v5239 = vsel %vm5131, %v5077, %v5185
      %v5240 = vsel %vm5132, %v5078, %v5186
      %v5241 = vsel %vm5133, %v5079, %v5187
      %v5242 = vsel %vm5134, %v5080, %v5188
      %v5243 = vsel %vm5135, %v5081, %v5189
      %v5244 = vsel %vm5136, %v5082, %v5190
      %v5245 = vsel %vm5137, %v5083, %v5191
      %v5246 = vsel %vm5138, %v5084, %v5192
      %v5247 = vsel %vm5139, %v5085, %v5193
      %v5248 = vsel %vm5140, %v5086, %v5194
      %v5249 = vsel %vm5141, %v5087, %v5195
      %v5250 = vsel %vm5142, %v5088, %v5196
      %v5251 = vsel %vm5143, %v5089, %v5197
      %v5252 = vsel %vm5144, %v5090, %v5198
      %v5253 = vsel %vm5145, %v5091, %v5199
      %v5254 = vsel %vm5146, %v5092, %v5200
      %v5255 = vsel %vm5147, %v5093, %v5201
      %v5256 = vsel %vm5148, %v5094, %v5202
      %v5257 = vsel %vm5149, %v5095, %v5203
      %v5258 = vsel %vm5150, %v5096, %v5204
      %v5259 = vsel %vm5151, %v5097, %v5205
      %v5260 = vsel %vm5152, %v5098, %v5206
      %v5261 = vsel %vm5153, %v5099, %v5207
      %v5262 = vsel %vm5154, %v5100, %v5208
      %v5263 = vsel %vm5155, %v5101, %v5209
      %v5264 = vsel %vm5156, %v5102, %v5210
      %v5265 = vsel %vm5157, %v5103, %v5211
      %v5266 = vsel %vm5158, %v5104, %v5212
      %v5267 = vsel %vm5159, %v5105, %v5213
      %v5268 = vsel %vm5160, %v5106, %v5214
      %v5269 = vsel %vm5161, %v5107, %v5215
      %v5270 = vsel %vm5162, %v5108, %v5216
      %v5271 = vsel %vm5163, %v5109, %v5217
      %v5272 = vsel %vm5164, %v5110, %v5218
      %v5273 = vsel %vm5165, %v5111, %v5219
      %v5274 = vsel %vm5166, %v5112, %v5220
      %v5275 = vsel %vm5167, %v5113, %v5221
      %v5276 = vsel %vm5168, %v5114, %v5222
      %v5277 = vsel %vm5169, %v5115, %v5223
      %v5278 = vsel %vm5170, %v5116, %v5224
      %v5279 = vsel %vm5171, %v5117, %v5225
      %v5280 = vsel %vm5172, %v5118, %v5226
      %v5281 = vsel %vm5173, %v5119, %v5227
      %v5282 = vsel %vm5174, %v5120, %v5228
      %v5283 = vsel %vm5175, %v5121, %v5229
      %v5284 = vsel %vm5176, %v5122, %v5230
      %v5285 = vsel %vm5177, %v5123, %v5231
      %v5286 = vsel %vm5178, %v5124, %v5232
      %v5287 = vsel %vm5179, %v5125, %v5233
      %v5288 = vpack.c.bf16 %v5234, %v5234
      %v5289 = vpack.c.bf16 %v5235, %v5235
      %v5290 = vpack.c.bf16 %v5236, %v5236
      %v5291 = vpack.c.bf16 %v5237, %v5237
      %v5292 = vpack.c.bf16 %v5238, %v5238
      %v5293 = vpack.c.bf16 %v5239, %v5239
      %v5294 = vpack.c.bf16 %v5240, %v5240
      %v5295 = vpack.c.bf16 %v5241, %v5241
      %v5296 = vpack.c.bf16 %v5242, %v5242
      %v5297 = vpack.c.bf16 %v5243, %v5243
      %v5298 = vpack.c.bf16 %v5244, %v5244
      %v5299 = vpack.c.bf16 %v5245, %v5245
      %v5300 = vpack.c.bf16 %v5246, %v5246
      %v5301 = vpack.c.bf16 %v5247, %v5247
      %v5302 = vpack.c.bf16 %v5248, %v5248
      %v5303 = vpack.c.bf16 %v5249, %v5249
      %v5304 = vpack.c.bf16 %v5250, %v5250
      %v5305 = vpack.c.bf16 %v5251, %v5251
      %v5306 = vpack.c.bf16 %v5252, %v5252
      %v5307 = vpack.c.bf16 %v5253, %v5253
      %v5308 = vpack.c.bf16 %v5254, %v5254
      %v5309 = vpack.c.bf16 %v5255, %v5255
      %v5310 = vpack.c.bf16 %v5256, %v5256
      %v5311 = vpack.c.bf16 %v5257, %v5257
      %v5312 = vpack.c.bf16 %v5258, %v5258
      %v5313 = vpack.c.bf16 %v5259, %v5259
      %v5314 = vpack.c.bf16 %v5260, %v5260
      %v5315 = vpack.c.bf16 %v5261, %v5261
      %v5316 = vpack.c.bf16 %v5262, %v5262
      %v5317 = vpack.c.bf16 %v5263, %v5263
      %v5318 = vpack.c.bf16 %v5264, %v5264
      %v5319 = vpack.c.bf16 %v5265, %v5265
      %v5320 = vpack.c.bf16 %v5266, %v5266
      %v5321 = vpack.c.bf16 %v5267, %v5267
      %v5322 = vpack.c.bf16 %v5268, %v5268
      %v5323 = vpack.c.bf16 %v5269, %v5269
      %v5324 = vpack.c.bf16 %v5270, %v5270
      %v5325 = vpack.c.bf16 %v5271, %v5271
      %v5326 = vpack.c.bf16 %v5272, %v5272
      %v5327 = vpack.c.bf16 %v5273, %v5273
      %v5328 = vpack.c.bf16 %v5274, %v5274
      %v5329 = vpack.c.bf16 %v5275, %v5275
      %v5330 = vpack.c.bf16 %v5276, %v5276
      %v5331 = vpack.c.bf16 %v5277, %v5277
      %v5332 = vpack.c.bf16 %v5278, %v5278
      %v5333 = vpack.c.bf16 %v5279, %v5279
      %v5334 = vpack.c.bf16 %v5280, %v5280
      %v5335 = vpack.c.bf16 %v5281, %v5281
      %v5336 = vpack.c.bf16 %v5282, %v5282
      %v5337 = vpack.c.bf16 %v5283, %v5283
      %v5338 = vpack.c.bf16 %v5284, %v5284
      %v5339 = vpack.c.bf16 %v5285, %v5285
      %v5340 = vpack.c.bf16 %v5286, %v5286
      %v5341 = vpack.c.bf16 %v5287, %v5287
      %5342 = vst [vmem:[#allocation3] sm:$0xf] %v5288
      %5343 = vst [vmem:[#allocation3 + $0x4] sm:$0xf] %v5289
      %5344 = vst [vmem:[#allocation3 + $0x8] sm:$0xf] %v5290
      %5345 = vst [vmem:[#allocation3 + $0xc] sm:$0xf] %v5291
      %5346 = vst [vmem:[#allocation3 + $0x10] sm:$0xf] %v5292
      %5347 = vst [vmem:[#allocation3 + $0x14] sm:$0xf] %v5293
      %5348 = vst [vmem:[#allocation3 + $0x18] sm:$0xf] %v5294
      %5349 = vst [vmem:[#allocation3 + $0x1c] sm:$0xf] %v5295
      %5350 = vst [vmem:[#allocation3 + $0x20] sm:$0xf] %v5296
      %5351 = vst [vmem:[#allocation3 + $0x24] sm:$0xf] %v5297
      %5352 = vst [vmem:[#allocation3 + $0x28] sm:$0xf] %v5298
      %5353 = vst [vmem:[#allocation3 + $0x2c] sm:$0xf] %v5299
      %5354 = vst [vmem:[#allocation3 + $0x30] sm:$0xf] %v5300
      %5355 = vst [vmem:[#allocation3 + $0x34] sm:$0xf] %v5301
      %5356 = vst [vmem:[#allocation3 + $0x38] sm:$0xf] %v5302
      %5357 = vst [vmem:[#allocation3 + $0x3c] sm:$0xf] %v5303
      %5358 = vst [vmem:[#allocation3 + $0x40] sm:$0xf] %v5304
      %5359 = vst [vmem:[#allocation3 + $0x44] sm:$0xf] %v5305
      %5360 = vst [vmem:[#allocation3 + $0x48] sm:$0xf] %v5306
      %5361 = vst [vmem:[#allocation3 + $0x4c] sm:$0xf] %v5307
      %5362 = vst [vmem:[#allocation3 + $0x50] sm:$0xf] %v5308
      %5363 = vst [vmem:[#allocation3 + $0x54] sm:$0xf] %v5309
      %5364 = vst [vmem:[#allocation3 + $0x58] sm:$0xf] %v5310
      %5365 = vst [vmem:[#allocation3 + $0x5c] sm:$0xf] %v5311
      %5366 = vst [vmem:[#allocation3 + $0x60] sm:$0xf] %v5312
      %5367 = vst [vmem:[#allocation3 + $0x64] sm:$0xf] %v5313
      %5368 = vst [vmem:[#allocation3 + $0x68] sm:$0xf] %v5314
      %5369 = vst [vmem:[#allocation3 + $0x6c] sm:$0xf] %v5315
      %5370 = vst [vmem:[#allocation3 + $0x70] sm:$0xf] %v5316
      %5371 = vst [vmem:[#allocation3 + $0x74] sm:$0xf] %v5317
      %5372 = vst [vmem:[#allocation3 + $0x78] sm:$0xf] %v5318
      %5373 = vst [vmem:[#allocation3 + $0x7c] sm:$0xf] %v5319
      %5374 = vst [vmem:[#allocation3 + $0x80] sm:$0xf] %v5320
      %5375 = vst [vmem:[#allocation3 + $0x84] sm:$0xf] %v5321
      %5376 = vst [vmem:[#allocation3 + $0x88] sm:$0xf] %v5322
      %5377 = vst [vmem:[#allocation3 + $0x8c] sm:$0xf] %v5323
      %5378 = vst [vmem:[#allocation3 + $0x90] sm:$0xf] %v5324
      %5379 = vst [vmem:[#allocation3 + $0x94] sm:$0xf] %v5325
      %5380 = vst [vmem:[#allocation3 + $0x98] sm:$0xf] %v5326
      %5381 = vst [vmem:[#allocation3 + $0x9c] sm:$0xf] %v5327
      %5382 = vst [vmem:[#allocation3 + $0xa0] sm:$0xf] %v5328
      %5383 = vst [vmem:[#allocation3 + $0xa4] sm:$0xf] %v5329
      %5384 = vst [vmem:[#allocation3 + $0xa8] sm:$0xf] %v5330
      %5385 = vst [vmem:[#allocation3 + $0xac] sm:$0xf] %v5331
      %5386 = vst [vmem:[#allocation3 + $0xb0] sm:$0xf] %v5332
      %5387 = vst [vmem:[#allocation3 + $0xb4] sm:$0xf] %v5333
      %5388 = vst [vmem:[#allocation3 + $0xb8] sm:$0xf] %v5334
      %5389 = vst [vmem:[#allocation3 + $0xbc] sm:$0xf] %v5335
      %5390 = vst [vmem:[#allocation3 + $0xc0] sm:$0xf] %v5336
      %5391 = vst [vmem:[#allocation3 + $0xc4] sm:$0xf] %v5337
      %5392 = vst [vmem:[#allocation3 + $0xc8] sm:$0xf] %v5338
      %5393 = vst [vmem:[#allocation3 + $0xcc] sm:$0xf] %v5339
      %5394 = vst [vmem:[#allocation3 + $0xd0] sm:$0xf] %v5340
      %5395 = vst [vmem:[#allocation3 + $0xd4] sm:$0xf] %v5341
      %5396 = vst [vmem:[#allocation3 + $0xd8] sm:$0xf] 0
      %vm5397 = vcmask 1040384
      %vm5398 = vsmask.f32 256
      %vm5399 = vmand %vm5397, %vm5398
      %v5400 = vld [vmem:[#allocation3] sm:$0x1]
      %v5401 = vsel %vm5399, 0, %v5400
      %5402 = vst [vmem:[#allocation3] sm:$0x1] %v5401
      %vm5403 = vsmask.f32 7938
      %vm5404 = vmand %vm5397, %vm5403
      %v5405 = vld [vmem:[#allocation3 + $0x8] sm:$0x1]
      %v5406 = vsel %vm5404, 0, %v5405
      %5407 = vst [vmem:[#allocation3 + $0x8] sm:$0x1] %v5406
      %v5408 = vld [vmem:[#allocation3 + $0xc] sm:$0x1]
      %v5409 = vsel %vm5399, 0, %v5408
      %5410 = vst [vmem:[#allocation3 + $0xc] sm:$0x1] %v5409
      %v5411 = vld [vmem:[#allocation3 + $0x14] sm:$0x1]
      %v5412 = vsel %vm5404, 0, %v5411
      %5413 = vst [vmem:[#allocation3 + $0x14] sm:$0x1] %v5412
      %v5414 = vld [vmem:[#allocation3 + $0x18] sm:$0x1]
      %v5415 = vsel %vm5399, 0, %v5414
      %5416 = vst [vmem:[#allocation3 + $0x18] sm:$0x1] %v5415
      %v5417 = vld [vmem:[#allocation3 + $0x20] sm:$0x1]
      %v5418 = vsel %vm5404, 0, %v5417
      %5419 = vst [vmem:[#allocation3 + $0x20] sm:$0x1] %v5418
      %v5420 = vld [vmem:[#allocation3 + $0x24] sm:$0x1]
      %v5421 = vsel %vm5399, 0, %v5420
      %5422 = vst [vmem:[#allocation3 + $0x24] sm:$0x1] %v5421
      %v5423 = vld [vmem:[#allocation3 + $0x2c] sm:$0x1]
      %v5424 = vsel %vm5404, 0, %v5423
      %5425 = vst [vmem:[#allocation3 + $0x2c] sm:$0x1] %v5424
      %v5426 = vld [vmem:[#allocation3 + $0x30] sm:$0x1]
      %v5427 = vsel %vm5399, 0, %v5426
      %5428 = vst [vmem:[#allocation3 + $0x30] sm:$0x1] %v5427
      %v5429 = vld [vmem:[#allocation3 + $0x38] sm:$0x1]
      %v5430 = vsel %vm5404, 0, %v5429
      %5431 = vst [vmem:[#allocation3 + $0x38] sm:$0x1] %v5430
      %v5432 = vld [vmem:[#allocation3 + $0x3c] sm:$0x1]
      %v5433 = vsel %vm5399, 0, %v5432
      %5434 = vst [vmem:[#allocation3 + $0x3c] sm:$0x1] %v5433
      %v5435 = vld [vmem:[#allocation3 + $0x44] sm:$0x1]
      %v5436 = vsel %vm5404, 0, %v5435
      %5437 = vst [vmem:[#allocation3 + $0x44] sm:$0x1] %v5436
      %v5438 = vld [vmem:[#allocation3 + $0x48] sm:$0x1]
      %v5439 = vsel %vm5399, 0, %v5438
      %5440 = vst [vmem:[#allocation3 + $0x48] sm:$0x1] %v5439
      %v5441 = vld [vmem:[#allocation3 + $0x50] sm:$0x1]
      %v5442 = vsel %vm5404, 0, %v5441
      %5443 = vst [vmem:[#allocation3 + $0x50] sm:$0x1] %v5442
      %v5444 = vld [vmem:[#allocation3 + $0x54] sm:$0x1]
      %v5445 = vsel %vm5399, 0, %v5444
      %5446 = vst [vmem:[#allocation3 + $0x54] sm:$0x1] %v5445
      %v5447 = vld [vmem:[#allocation3 + $0x5c] sm:$0x1]
      %v5448 = vsel %vm5404, 0, %v5447
      %5449 = vst [vmem:[#allocation3 + $0x5c] sm:$0x1] %v5448
      %v5450 = vld [vmem:[#allocation3 + $0x60] sm:$0x1]
      %v5451 = vsel %vm5399, 0, %v5450
      %5452 = vst [vmem:[#allocation3 + $0x60] sm:$0x1] %v5451
      %v5453 = vld [vmem:[#allocation3 + $0x68] sm:$0x1]
      %v5454 = vsel %vm5404, 0, %v5453
      %5455 = vst [vmem:[#allocation3 + $0x68] sm:$0x1] %v5454
      %v5456 = vld [vmem:[#allocation3 + $0x6c] sm:$0x1]
      %v5457 = vsel %vm5399, 0, %v5456
      %5458 = vst [vmem:[#allocation3 + $0x6c] sm:$0x1] %v5457
      %v5459 = vld [vmem:[#allocation3 + $0x74] sm:$0x1]
      %v5460 = vsel %vm5404, 0, %v5459
      %5461 = vst [vmem:[#allocation3 + $0x74] sm:$0x1] %v5460
      %v5462 = vld [vmem:[#allocation3 + $0x78] sm:$0x1]
      %v5463 = vsel %vm5399, 0, %v5462
      %5464 = vst [vmem:[#allocation3 + $0x78] sm:$0x1] %v5463
      %v5465 = vld [vmem:[#allocation3 + $0x80] sm:$0x1]
      %v5466 = vsel %vm5404, 0, %v5465
      %5467 = vst [vmem:[#allocation3 + $0x80] sm:$0x1] %v5466
      %v5468 = vld [vmem:[#allocation3 + $0x84] sm:$0x1]
      %v5469 = vsel %vm5399, 0, %v5468
      %5470 = vst [vmem:[#allocation3 + $0x84] sm:$0x1] %v5469
      %v5471 = vld [vmem:[#allocation3 + $0x8c] sm:$0x1]
      %v5472 = vsel %vm5404, 0, %v5471
      %5473 = vst [vmem:[#allocation3 + $0x8c] sm:$0x1] %v5472
      %v5474 = vld [vmem:[#allocation3 + $0x90] sm:$0x1]
      %v5475 = vsel %vm5399, 0, %v5474
      %5476 = vst [vmem:[#allocation3 + $0x90] sm:$0x1] %v5475
      %v5477 = vld [vmem:[#allocation3 + $0x98] sm:$0x1]
      %v5478 = vsel %vm5404, 0, %v5477
      %5479 = vst [vmem:[#allocation3 + $0x98] sm:$0x1] %v5478
      %v5480 = vld [vmem:[#allocation3 + $0x9c] sm:$0x1]
      %v5481 = vsel %vm5399, 0, %v5480
      %5482 = vst [vmem:[#allocation3 + $0x9c] sm:$0x1] %v5481
      %v5483 = vld [vmem:[#allocation3 + $0xa4] sm:$0x1]
      %v5484 = vsel %vm5404, 0, %v5483
      %5485 = vst [vmem:[#allocation3 + $0xa4] sm:$0x1] %v5484
      %v5486 = vld [vmem:[#allocation3 + $0xa8] sm:$0x1]
      %v5487 = vsel %vm5399, 0, %v5486
      %5488 = vst [vmem:[#allocation3 + $0xa8] sm:$0x1] %v5487
      %v5489 = vld [vmem:[#allocation3 + $0xb0] sm:$0x1]
      %v5490 = vsel %vm5404, 0, %v5489
      %5491 = vst [vmem:[#allocation3 + $0xb0] sm:$0x1] %v5490
      %v5492 = vld [vmem:[#allocation3 + $0xb4] sm:$0x1]
      %v5493 = vsel %vm5399, 0, %v5492
      %5494 = vst [vmem:[#allocation3 + $0xb4] sm:$0x1] %v5493
      %v5495 = vld [vmem:[#allocation3 + $0xbc] sm:$0x1]
      %v5496 = vsel %vm5404, 0, %v5495
      %5497 = vst [vmem:[#allocation3 + $0xbc] sm:$0x1] %v5496
      %v5498 = vld [vmem:[#allocation3 + $0xc0] sm:$0x1]
      %v5499 = vsel %vm5399, 0, %v5498
      %5500 = vst [vmem:[#allocation3 + $0xc0] sm:$0x1] %v5499
      %v5501 = vld [vmem:[#allocation3 + $0xc8] sm:$0x1]
      %v5502 = vsel %vm5404, 0, %v5501
      %5503 = vst [vmem:[#allocation3 + $0xc8] sm:$0x1] %v5502
      %v5504 = vld [vmem:[#allocation3 + $0xcc] sm:$0x1]
      %v5505 = vsel %vm5399, 0, %v5504
      %5506 = vst [vmem:[#allocation3 + $0xcc] sm:$0x1] %v5505
      %v5507 = vld [vmem:[#allocation3 + $0xd4] sm:$0x1]
      %v5508 = vsel %vm5404, 0, %v5507
      %5509 = vst [vmem:[#allocation3 + $0xd4] sm:$0x1] %v5508
      %p5510 = scmp.eq.s32.totalorder %s27, 0
      // Predicated region
      $region65: #{tpu_custom_call.1} parent=63 // pred_check
        %p5511 = pneg %p5510
      $region66: #{tpu_custom_call.1} parent=63 // pred_check_branch
        %5513 = sbr.rel (%p5511) target = $region68
      $region67: #{tpu_custom_call.1} parent=63 // pred_region
        %5514 = vst [vmem:[#allocation3] sm:$0xf] 0
        %5515 = vst [vmem:[#allocation3 + $0x4] sm:$0xf] 0
        %5516 = vst [vmem:[#allocation3 + $0x8] sm:$0xf] 0
        %5517 = vst [vmem:[#allocation3 + $0xcc] sm:$0xf] 0
        %5518 = vst [vmem:[#allocation3 + $0xd0] sm:$0xf] 0
        %5519 = vst [vmem:[#allocation3 + $0xd4] sm:$0xf] 0
      $region68: #{tpu_custom_call.1} parent=63 // pred_fallthru
        _
      %v5520 = vld [vmem:[#allocation3] sm:$0xf]
      %v5521 = vld [vmem:[#allocation3 + $0x4] sm:$0xf]
      %v5522 = vld [vmem:[#allocation3 + $0x8] sm:$0xf]
      %v5523 = vld [vmem:[#allocation3 + $0xc] sm:$0xf]
      %v5524 = vld [vmem:[#allocation3 + $0x10] sm:$0xf]
      %v5525 = vld [vmem:[#allocation3 + $0x14] sm:$0xf]
      %v5526 = vld [vmem:[#allocation3 + $0x18] sm:$0xf]
      %v5527 = vld [vmem:[#allocation3 + $0x1c] sm:$0xf]
      %v5528 = vld [vmem:[#allocation3 + $0x20] sm:$0xf]
      %v5529 = vld [vmem:[#allocation3 + $0x24] sm:$0xf]
      %v5530 = vld [vmem:[#allocation3 + $0x28] sm:$0xf]
      %v5531 = vld [vmem:[#allocation3 + $0x2c] sm:$0xf]
      %v5532 = vld [vmem:[#allocation3 + $0x30] sm:$0xf]
      %v5533 = vld [vmem:[#allocation3 + $0x34] sm:$0xf]
      %v5534 = vld [vmem:[#allocation3 + $0x38] sm:$0xf]
      %v5535 = vld [vmem:[#allocation3 + $0x3c] sm:$0xf]
      %v5536 = vld [vmem:[#allocation3 + $0x40] sm:$0xf]
      %v5537 = vld [vmem:[#allocation3 + $0x44] sm:$0xf]
      %v5538 = vld [vmem:[#allocation3 + $0x48] sm:$0xf]
      %v5539 = vld [vmem:[#allocation3 + $0x4c] sm:$0xf]
      %v5540 = vld [vmem:[#allocation3 + $0x50] sm:$0xf]
      %v5541 = vld [vmem:[#allocation3 + $0x54] sm:$0xf]
      %v5542 = vld [vmem:[#allocation3 + $0x58] sm:$0xf]
      %v5543 = vld [vmem:[#allocation3 + $0x5c] sm:$0xf]
      %v5544 = vld [vmem:[#allocation3 + $0x60] sm:$0xf]
      %v5545 = vld [vmem:[#allocation3 + $0x64] sm:$0xf]
      %v5546 = vld [vmem:[#allocation3 + $0x68] sm:$0xf]
      %v5547 = vld [vmem:[#allocation3 + $0x6c] sm:$0xf]
      %v5548 = vld [vmem:[#allocation3 + $0x70] sm:$0xf]
      %v5549 = vld [vmem:[#allocation3 + $0x74] sm:$0xf]
      %v5550 = vld [vmem:[#allocation3 + $0x78] sm:$0xf]
      %v5551 = vld [vmem:[#allocation3 + $0x7c] sm:$0xf]
      %v5552 = vld [vmem:[#allocation3 + $0x80] sm:$0xf]
      %v5553 = vld [vmem:[#allocation3 + $0x84] sm:$0xf]
      %v5554 = vld [vmem:[#allocation3 + $0x88] sm:$0xf]
      %v5555 = vld [vmem:[#allocation3 + $0x8c] sm:$0xf]
      %v5556 = vld [vmem:[#allocation3 + $0x90] sm:$0xf]
      %v5557 = vld [vmem:[#allocation3 + $0x94] sm:$0xf]
      %v5558 = vld [vmem:[#allocation3 + $0x98] sm:$0xf]
      %v5559 = vld [vmem:[#allocation3 + $0x9c] sm:$0xf]
      %v5560 = vld [vmem:[#allocation3 + $0xa0] sm:$0xf]
      %v5561 = vld [vmem:[#allocation3 + $0xa4] sm:$0xf]
      %v5562 = vld [vmem:[#allocation3 + $0xa8] sm:$0xf]
      %v5563 = vld [vmem:[#allocation3 + $0xac] sm:$0xf]
      %v5564 = vld [vmem:[#allocation3 + $0xb0] sm:$0xf]
      %v5565 = vld [vmem:[#allocation3 + $0xb4] sm:$0xf]
      %v5566 = vld [vmem:[#allocation3 + $0xb8] sm:$0xf]
      %v5567 = vld [vmem:[#allocation3 + $0xbc] sm:$0xf]
      %v5568 = vld [vmem:[%s6] sm:$0xf]
      %v5569 = vld [vmem:[%s6 + $0x4] sm:$0xf]
      %v5570 = vld [vmem:[%s6 + $0x8] sm:$0xf]
      %v5571 = vld [vmem:[%s6 + $0xc] sm:$0xf]
      %v5572 = vld [vmem:[%s6 + $0x10] sm:$0xf]
      %v5573 = vld [vmem:[%s6 + $0x14] sm:$0xf]
      %v5574 = vld [vmem:[%s6 + $0x18] sm:$0xf]
      %v5575 = vld [vmem:[%s6 + $0x1c] sm:$0xf]
      %v5576 = vld [vmem:[%s6 + $0x20] sm:$0xf]
      %v5577 = vld [vmem:[%s6 + $0x24] sm:$0xf]
      %v5578 = vld [vmem:[%s6 + $0x28] sm:$0xf]
      %v5579 = vld [vmem:[%s6 + $0x2c] sm:$0xf]
      %v5580 = vld [vmem:[%s6 + $0x30] sm:$0xf]
      %v5581 = vld [vmem:[%s6 + $0x34] sm:$0xf]
      %v5582 = vld [vmem:[%s6 + $0x38] sm:$0xf]
      %v5583 = vld [vmem:[%s6 + $0x3c] sm:$0xf]
      %v5584 = vld [vmem:[#allocation3 + $0xc0] sm:$0x1]
      %s5585 = scalar_lea.vmem %s6, 64
      %v5586 = vld [vmem:[%s5585] sm:$0xf]
      %v5587 = vld [vmem:[%s5585 + $0x4] sm:$0xf]
      %v5588 = vld [vmem:[%s5585 + $0x8] sm:$0xf]
      %v5589 = vld [vmem:[%s5585 + $0xc] sm:$0xf]
      %v5590 = vld [vmem:[%s5585 + $0x10] sm:$0xf]
      %v5591 = vld [vmem:[%s5585 + $0x14] sm:$0xf]
      %v5592 = vld [vmem:[%s5585 + $0x18] sm:$0xf]
      %v5593 = vld [vmem:[%s5585 + $0x1c] sm:$0xf]
      %v5594 = vld [vmem:[%s5585 + $0x20] sm:$0xf]
      %v5595 = vld [vmem:[%s5585 + $0x24] sm:$0xf]
      %v5596 = vld [vmem:[%s5585 + $0x28] sm:$0xf]
      %v5597 = vld [vmem:[%s5585 + $0x2c] sm:$0xf]
      %v5598 = vld [vmem:[%s5585 + $0x30] sm:$0xf]
      %v5599 = vld [vmem:[%s5585 + $0x34] sm:$0xf]
      %v5600 = vld [vmem:[%s5585 + $0x38] sm:$0xf]
      %v5601 = vld [vmem:[%s5585 + $0x3c] sm:$0xf]
      %v5651 = vunpack.c.l.b16 %v5520
      %v5652 = vunpack.c.l.b16 %v5521
      %v5653 = vunpack.c.l.b16 %v5522
      %v5654 = vunpack.c.l.b16 %v5523
      %v5655 = vunpack.c.l.b16 %v5524
      %v5656 = vunpack.c.l.b16 %v5525
      %v5657 = vunpack.c.l.b16 %v5526
      %v5658 = vunpack.c.l.b16 %v5527
      %v5659 = vunpack.c.l.b16 %v5528
      %v5660 = vunpack.c.l.b16 %v5529
      %v5661 = vunpack.c.l.b16 %v5530
      %v5662 = vunpack.c.l.b16 %v5531
      %v5663 = vunpack.c.l.b16 %v5532
      %v5664 = vunpack.c.l.b16 %v5533
      %v5665 = vunpack.c.l.b16 %v5534
      %v5666 = vunpack.c.l.b16 %v5535
      %v5667 = vunpack.c.l.b16 %v5536
      %v5668 = vunpack.c.l.b16 %v5537
      %v5669 = vunpack.c.l.b16 %v5538
      %v5670 = vunpack.c.l.b16 %v5539
      %v5671 = vunpack.c.l.b16 %v5540
      %v5672 = vunpack.c.l.b16 %v5541
      %v5673 = vunpack.c.l.b16 %v5542
      %v5674 = vunpack.c.l.b16 %v5543
      %v5675 = vunpack.c.l.b16 %v5544
      %v5676 = vunpack.c.l.b16 %v5545
      %v5677 = vunpack.c.l.b16 %v5546
      %v5678 = vunpack.c.l.b16 %v5547
      %v5679 = vunpack.c.l.b16 %v5548
      %v5680 = vunpack.c.l.b16 %v5549
      %v5681 = vunpack.c.l.b16 %v5550
      %v5682 = vunpack.c.l.b16 %v5551
      %v5683 = vunpack.c.l.b16 %v5552
      %v5684 = vunpack.c.l.b16 %v5553
      %v5685 = vunpack.c.l.b16 %v5554
      %v5686 = vunpack.c.l.b16 %v5555
      %v5687 = vunpack.c.l.b16 %v5556
      %v5688 = vunpack.c.l.b16 %v5557
      %v5689 = vunpack.c.l.b16 %v5558
      %v5690 = vunpack.c.l.b16 %v5559
      %v5691 = vunpack.c.l.b16 %v5560
      %v5692 = vunpack.c.l.b16 %v5561
      %v5693 = vunpack.c.l.b16 %v5562
      %v5694 = vunpack.c.l.b16 %v5563
      %v5695 = vunpack.c.l.b16 %v5564
      %v5696 = vunpack.c.l.b16 %v5565
      %v5697 = vunpack.c.l.b16 %v5566
      %v5698 = vunpack.c.l.b16 %v5567
      %v5699 = vunpack.c.l.b16 %v5584
      %v5700 = vpack.c.b16 %v5652, %v5651
      %v5701 = vpack.c.b16 %v5654, %v5653
      %v5702 = vpack.c.b16 %v5656, %v5655
      %v5703 = vpack.c.b16 %v5658, %v5657
      %v5704 = vpack.c.b16 %v5660, %v5659
      %v5705 = vpack.c.b16 %v5662, %v5661
      %v5706 = vpack.c.b16 %v5664, %v5663
      %v5707 = vpack.c.b16 %v5666, %v5665
      %v5708 = vpack.c.b16 %v5668, %v5667
      %v5709 = vpack.c.b16 %v5670, %v5669
      %v5710 = vpack.c.b16 %v5672, %v5671
      %v5711 = vpack.c.b16 %v5674, %v5673
      %v5712 = vpack.c.b16 %v5676, %v5675
      %v5713 = vpack.c.b16 %v5678, %v5677
      %v5714 = vpack.c.b16 %v5680, %v5679
      %v5715 = vpack.c.b16 %v5682, %v5681
      %v5716 = vpack.c.b16 %v5684, %v5683
      %v5717 = vpack.c.b16 %v5686, %v5685
      %v5718 = vpack.c.b16 %v5688, %v5687
      %v5719 = vpack.c.b16 %v5690, %v5689
      %v5720 = vpack.c.b16 %v5692, %v5691
      %v5721 = vpack.c.b16 %v5694, %v5693
      %v5722 = vpack.c.b16 %v5696, %v5695
      %v5723 = vpack.c.b16 %v5698, %v5697
      %v5724 = vpack.c.b16 %v5699, %v5699
      %v5726 = vshrl.u32 %v5700, 16
      %v5728 = vshll.u32 %v5700, 16
      %v5730 = vrot.slane %v5728, 1
      %v5731 = vor.u32 %v5726, %v5730
      %v5733 = vshll.u32 %v5701, 16
      %v5735 = vrot.slane %v5733, 1
      %v5736 = vsel %vm988, %v5731, %v5735
      %v5737 = vshrl.u32 %v5701, 16
      %v5739 = vor.u32 %v5737, %v5735
      %v5741 = vshll.u32 %v5702, 16
      %v5743 = vrot.slane %v5741, 1
      %v5744 = vsel %vm988, %v5739, %v5743
      %v5745 = vshrl.u32 %v5702, 16
      %v5747 = vor.u32 %v5745, %v5743
      %v5749 = vshll.u32 %v5703, 16
      %v5751 = vrot.slane %v5749, 1
      %v5752 = vsel %vm988, %v5747, %v5751
      %v5753 = vshrl.u32 %v5703, 16
      %v5755 = vor.u32 %v5753, %v5751
      %v5757 = vshll.u32 %v5704, 16
      %v5759 = vrot.slane %v5757, 1
      %v5760 = vsel %vm988, %v5755, %v5759
      %v5761 = vshrl.u32 %v5704, 16
      %v5763 = vor.u32 %v5761, %v5759
      %v5765 = vshll.u32 %v5705, 16
      %v5767 = vrot.slane %v5765, 1
      %v5768 = vsel %vm988, %v5763, %v5767
      %v5769 = vshrl.u32 %v5705, 16
      %v5771 = vor.u32 %v5769, %v5767
      %v5773 = vshll.u32 %v5706, 16
      %v5775 = vrot.slane %v5773, 1
      %v5776 = vsel %vm988, %v5771, %v5775
      %v5777 = vshrl.u32 %v5706, 16
      %v5779 = vor.u32 %v5777, %v5775
      %v5781 = vshll.u32 %v5707, 16
      %v5783 = vrot.slane %v5781, 1
      %v5784 = vsel %vm988, %v5779, %v5783
      %v5785 = vshrl.u32 %v5707, 16
      %v5787 = vor.u32 %v5785, %v5783
      %v5789 = vshll.u32 %v5708, 16
      %v5791 = vrot.slane %v5789, 1
      %v5792 = vsel %vm988, %v5787, %v5791
      %v5793 = vshrl.u32 %v5708, 16
      %v5795 = vor.u32 %v5793, %v5791
      %v5797 = vshll.u32 %v5709, 16
      %v5799 = vrot.slane %v5797, 1
      %v5800 = vsel %vm988, %v5795, %v5799
      %v5801 = vshrl.u32 %v5709, 16
      %v5803 = vor.u32 %v5801, %v5799
      %v5805 = vshll.u32 %v5710, 16
      %v5807 = vrot.slane %v5805, 1
      %v5808 = vsel %vm988, %v5803, %v5807
      %v5809 = vshrl.u32 %v5710, 16
      %v5811 = vor.u32 %v5809, %v5807
      %v5813 = vshll.u32 %v5711, 16
      %v5815 = vrot.slane %v5813, 1
      %v5816 = vsel %vm988, %v5811, %v5815
      %v5817 = vshrl.u32 %v5711, 16
      %v5819 = vor.u32 %v5817, %v5815
      %v5821 = vshll.u32 %v5712, 16
      %v5823 = vrot.slane %v5821, 1
      %v5824 = vsel %vm988, %v5819, %v5823
      %v5825 = vshrl.u32 %v5712, 16
      %v5827 = vor.u32 %v5825, %v5823
      %v5829 = vshll.u32 %v5713, 16
      %v5831 = vrot.slane %v5829, 1
      %v5832 = vsel %vm988, %v5827, %v5831
      %v5833 = vshrl.u32 %v5713, 16
      %v5835 = vor.u32 %v5833, %v5831
      %v5837 = vshll.u32 %v5714, 16
      %v5839 = vrot.slane %v5837, 1
      %v5840 = vsel %vm988, %v5835, %v5839
      %v5841 = vshrl.u32 %v5714, 16
      %v5843 = vor.u32 %v5841, %v5839
      %v5845 = vshll.u32 %v5715, 16
      %v5847 = vrot.slane %v5845, 1
      %v5848 = vsel %vm988, %v5843, %v5847
      %v5849 = vshrl.u32 %v5715, 16
      %v5851 = vor.u32 %v5849, %v5847
      %v5853 = vshll.u32 %v5716, 16
      %v5855 = vrot.slane %v5853, 1
      %v5856 = vsel %vm988, %v5851, %v5855
      %v5857 = vshrl.u32 %v5716, 16
      %v5859 = vor.u32 %v5857, %v5855
      %v5861 = vshll.u32 %v5717, 16
      %v5863 = vrot.slane %v5861, 1
      %v5864 = vsel %vm988, %v5859, %v5863
      %v5865 = vshrl.u32 %v5717, 16
      %v5867 = vor.u32 %v5865, %v5863
      %v5869 = vshll.u32 %v5718, 16
      %v5871 = vrot.slane %v5869, 1
      %v5872 = vsel %vm988, %v5867, %v5871
      %v5873 = vshrl.u32 %v5718, 16
      %v5875 = vor.u32 %v5873, %v5871
      %v5877 = vshll.u32 %v5719, 16
      %v5879 = vrot.slane %v5877, 1
      %v5880 = vsel %vm988, %v5875, %v5879
      %v5881 = vshrl.u32 %v5719, 16
      %v5883 = vor.u32 %v5881, %v5879
      %v5885 = vshll.u32 %v5720, 16
      %v5887 = vrot.slane %v5885, 1
      %v5888 = vsel %vm988, %v5883, %v5887
      %v5889 = vshrl.u32 %v5720, 16
      %v5891 = vor.u32 %v5889, %v5887
      %v5893 = vshll.u32 %v5721, 16
      %v5895 = vrot.slane %v5893, 1
      %v5896 = vsel %vm988, %v5891, %v5895
      %v5897 = vshrl.u32 %v5721, 16
      %v5899 = vor.u32 %v5897, %v5895
      %v5901 = vshll.u32 %v5722, 16
      %v5903 = vrot.slane %v5901, 1
      %v5904 = vsel %vm988, %v5899, %v5903
      %v5905 = vshrl.u32 %v5722, 16
      %v5907 = vor.u32 %v5905, %v5903
      %v5909 = vshll.u32 %v5723, 16
      %v5911 = vrot.slane %v5909, 1
      %v5912 = vsel %vm988, %v5907, %v5911
      %v5913 = vshrl.u32 %v5723, 16
      %v5915 = vor.u32 %v5913, %v5911
      %v5917 = vshll.u32 %v5724, 16
      %v5919 = vrot.slane %v5917, 1
      %v5920 = vsel %vm988, %v5915, %v5919
      %v5961 = vunpack.c.l.b16 %v5586
      %v5962 = vunpack.c.l.b16 %v5587
      %v5963 = vunpack.c.l.b16 %v5588
      %v5964 = vunpack.c.l.b16 %v5589
      %v5965 = vunpack.c.l.b16 %v5590
      %v5966 = vunpack.c.l.b16 %v5591
      %v5967 = vunpack.c.l.b16 %v5592
      %v5968 = vunpack.c.l.b16 %v5593
      %v5969 = vunpack.c.l.b16 %v5594
      %v5970 = vunpack.c.l.b16 %v5595
      %v5971 = vunpack.c.l.b16 %v5596
      %v5972 = vunpack.c.l.b16 %v5597
      %v5973 = vunpack.c.l.b16 %v5598
      %v5974 = vunpack.c.l.b16 %v5599
      %v5975 = vunpack.c.l.b16 %v5600
      %v5976 = vunpack.c.l.b16 %v5601
      %v5977 = vpack.c.b16 %v5962, %v5961
      %v5978 = vpack.c.b16 %v5964, %v5963
      %v5979 = vpack.c.b16 %v5966, %v5965
      %v5980 = vpack.c.b16 %v5968, %v5967
      %v5981 = vpack.c.b16 %v5970, %v5969
      %v5982 = vpack.c.b16 %v5972, %v5971
      %v5983 = vpack.c.b16 %v5974, %v5973
      %v5984 = vpack.c.b16 %v5976, %v5975
      %5993 = vmatpush.bf16.msra.mxu0 %v5984
      %5994 = vmatpush.bf16.msra.mxu0 %v5983
      %5995 = vmatpush.bf16.msra.mxu0 %v5982
      %5996 = vmatpush.bf16.msra.mxu0 %v5981
      %5997 = vmatpush.bf16.msra.mxu0 %v5980
      %5998 = vmatpush.bf16.msra.mxu0 %v5979
      %5999 = vmatpush.bf16.msra.mxu0 %v5978
      %6000 = vmatpush.bf16.msra.mxu0 %v5977
      %6001 = vmatmul.bf16.gmra.mxu0 %v5736
      %v6002 = vpop.f32.mrf.mxu0
      %v6003 = vadd.f32 0.0, %v6002
      %v6004 = vpop.f32.mrf.mxu0
      %v6005 = vadd.f32 0.0, %v6004
      %6006 = vmatmul.bf16.gmra.mxu0 %v5744
      %v6007 = vpop.f32.mrf.mxu0
      %v6008 = vpop.f32.mrf.mxu0
      %v6009 = vadd.f32 0.0, %v6008
      %6010 = vmatmul.bf16.gmra.mxu0 %v5752
      %v6011 = vpop.f32.mrf.mxu0
      %v6012 = vadd.f32 0.0, %v6011
      %v6013 = vpop.f32.mrf.mxu0
      %6014 = vmatmul.bf16.gmra.mxu0 %v5760
      %v6015 = vpop.f32.mrf.mxu0
      %v6016 = vadd.f32 0.0, %v6015
      %v6017 = vpop.f32.mrf.mxu0
      %v6018 = vadd.f32 0.0, %v6017
      %6019 = vmatmul.bf16.gmra.mxu0 %v5768
      %v6020 = vpop.f32.mrf.mxu0
      %v6021 = vpop.f32.mrf.mxu0
      %v6022 = vadd.f32 0.0, %v6021
      %6023 = vmatmul.bf16.gmra.mxu0 %v5776
      %v6024 = vpop.f32.mrf.mxu0
      %v6025 = vadd.f32 0.0, %v6024
      %v6026 = vpop.f32.mrf.mxu0
      %6027 = vmatmul.bf16.gmra.mxu0 %v5784
      %v6028 = vpop.f32.mrf.mxu0
      %v6029 = vadd.f32 0.0, %v6028
      %v6030 = vpop.f32.mrf.mxu0
      %v6031 = vadd.f32 0.0, %v6030
      %6032 = vmatmul.bf16.gmra.mxu0 %v5792
      %v6033 = vpop.f32.mrf.mxu0
      %v6034 = vpop.f32.mrf.mxu0
      %v6035 = vadd.f32 0.0, %v6034
      %6036 = vmatmul.bf16.gmra.mxu0 %v5800
      %v6037 = vpop.f32.mrf.mxu0
      %v6038 = vadd.f32 0.0, %v6037
      %v6039 = vpop.f32.mrf.mxu0
      %6040 = vmatmul.bf16.gmra.mxu0 %v5808
      %v6041 = vpop.f32.mrf.mxu0
      %v6042 = vadd.f32 0.0, %v6041
      %v6043 = vpop.f32.mrf.mxu0
      %v6044 = vadd.f32 0.0, %v6043
      %6045 = vmatmul.bf16.gmra.mxu0 %v5816
      %v6046 = vpop.f32.mrf.mxu0
      %v6047 = vpop.f32.mrf.mxu0
      %v6048 = vadd.f32 0.0, %v6047
      %6049 = vmatmul.bf16.gmra.mxu0 %v5824
      %v6050 = vpop.f32.mrf.mxu0
      %v6051 = vadd.f32 0.0, %v6050
      %v6052 = vpop.f32.mrf.mxu0
      %6053 = vmatmul.bf16.gmra.mxu0 %v5832
      %v6054 = vpop.f32.mrf.mxu0
      %v6055 = vadd.f32 0.0, %v6054
      %v6056 = vpop.f32.mrf.mxu0
      %v6057 = vadd.f32 0.0, %v6056
      %6058 = vmatmul.bf16.gmra.mxu0 %v5840
      %v6059 = vpop.f32.mrf.mxu0
      %v6060 = vpop.f32.mrf.mxu0
      %v6061 = vadd.f32 0.0, %v6060
      %6062 = vmatmul.bf16.gmra.mxu0 %v5848
      %v6063 = vpop.f32.mrf.mxu0
      %v6064 = vadd.f32 0.0, %v6063
      %v6065 = vpop.f32.mrf.mxu0
      %6066 = vmatmul.bf16.gmra.mxu0 %v5856
      %v6067 = vpop.f32.mrf.mxu0
      %v6068 = vadd.f32 0.0, %v6067
      %v6069 = vpop.f32.mrf.mxu0
      %v6070 = vadd.f32 0.0, %v6069
      %6071 = vmatmul.bf16.gmra.mxu0 %v5864
      %v6072 = vpop.f32.mrf.mxu0
      %v6073 = vpop.f32.mrf.mxu0
      %v6074 = vadd.f32 0.0, %v6073
      %6075 = vmatmul.bf16.gmra.mxu0 %v5872
      %v6076 = vpop.f32.mrf.mxu0
      %v6077 = vadd.f32 0.0, %v6076
      %v6078 = vpop.f32.mrf.mxu0
      %6079 = vmatmul.bf16.gmra.mxu0 %v5880
      %v6080 = vpop.f32.mrf.mxu0
      %v6081 = vadd.f32 0.0, %v6080
      %v6082 = vpop.f32.mrf.mxu0
      %v6083 = vadd.f32 0.0, %v6082
      %6084 = vmatmul.bf16.gmra.mxu0 %v5888
      %v6085 = vpop.f32.mrf.mxu0
      %v6086 = vpop.f32.mrf.mxu0
      %v6087 = vadd.f32 0.0, %v6086
      %6088 = vmatmul.bf16.gmra.mxu0 %v5896
      %v6089 = vpop.f32.mrf.mxu0
      %v6090 = vadd.f32 0.0, %v6089
      %v6091 = vpop.f32.mrf.mxu0
      %6092 = vmatmul.bf16.gmra.mxu0 %v5904
      %v6093 = vpop.f32.mrf.mxu0
      %v6094 = vadd.f32 0.0, %v6093
      %v6095 = vpop.f32.mrf.mxu0
      %v6096 = vadd.f32 0.0, %v6095
      %6097 = vmatmul.bf16.gmra.mxu0 %v5912
      %v6098 = vpop.f32.mrf.mxu0
      %v6099 = vpop.f32.mrf.mxu0
      %v6100 = vadd.f32 0.0, %v6099
      %6101 = vmatmul.bf16.gmra.mxu0 %v5920
      %v6102 = vpop.f32.mrf.mxu0
      %v6103 = vadd.f32 0.0, %v6102
      %v6104 = vpop.f32.mrf.mxu0
      %6105 = vdwg.mxu0
      %v6146 = vunpack.c.l.b16 %v5568
      %v6147 = vunpack.c.l.b16 %v5569
      %v6148 = vunpack.c.l.b16 %v5570
      %v6149 = vunpack.c.l.b16 %v5571
      %v6150 = vunpack.c.l.b16 %v5572
      %v6151 = vunpack.c.l.b16 %v5573
      %v6152 = vunpack.c.l.b16 %v5574
      %v6153 = vunpack.c.l.b16 %v5575
      %v6154 = vunpack.c.l.b16 %v5576
      %v6155 = vunpack.c.l.b16 %v5577
      %v6156 = vunpack.c.l.b16 %v5578
      %v6157 = vunpack.c.l.b16 %v5579
      %v6158 = vunpack.c.l.b16 %v5580
      %v6159 = vunpack.c.l.b16 %v5581
      %v6160 = vunpack.c.l.b16 %v5582
      %v6161 = vunpack.c.l.b16 %v5583
      %v6162 = vpack.c.b16 %v6147, %v6146
      %v6163 = vpack.c.b16 %v6149, %v6148
      %v6164 = vpack.c.b16 %v6151, %v6150
      %v6165 = vpack.c.b16 %v6153, %v6152
      %v6166 = vpack.c.b16 %v6155, %v6154
      %v6167 = vpack.c.b16 %v6157, %v6156
      %v6168 = vpack.c.b16 %v6159, %v6158
      %v6169 = vpack.c.b16 %v6161, %v6160
      %6178 = vmatpush.bf16.msra.mxu0 %v6169
      %6179 = vmatpush.bf16.msra.mxu0 %v6168
      %6180 = vmatpush.bf16.msra.mxu0 %v6167
      %6181 = vmatpush.bf16.msra.mxu0 %v6166
      %6182 = vmatpush.bf16.msra.mxu0 %v6165
      %6183 = vmatpush.bf16.msra.mxu0 %v6164
      %6184 = vmatpush.bf16.msra.mxu0 %v6163
      %6185 = vmatpush.bf16.msra.mxu0 %v6162
      %6186 = vmatmul.bf16.gmra.mxu0 %v5700
      %v6187 = vpop.f32.mrf.mxu0
      %v6188 = vadd.f32 %v6003, %v6187
      %v6189 = vpop.f32.mrf.mxu0
      %v6190 = vadd.f32 %v6005, %v6189
      %6191 = vmatmul.bf16.gmra.mxu0 %v5701
      %v6192 = vpop.f32.mrf.mxu0
      %v6193 = vpop.f32.mrf.mxu0
      %v6194 = vadd.f32 %v6009, %v6193
      %6195 = vmatmul.bf16.gmra.mxu0 %v5702
      %v6196 = vpop.f32.mrf.mxu0
      %v6197 = vadd.f32 %v6012, %v6196
      %v6198 = vpop.f32.mrf.mxu0
      %6199 = vmatmul.bf16.gmra.mxu0 %v5703
      %v6200 = vpop.f32.mrf.mxu0
      %v6201 = vadd.f32 %v6016, %v6200
      %v6202 = vpop.f32.mrf.mxu0
      %v6203 = vadd.f32 %v6018, %v6202
      %6204 = vmatmul.bf16.gmra.mxu0 %v5704
      %v6205 = vpop.f32.mrf.mxu0
      %v6206 = vpop.f32.mrf.mxu0
      %v6207 = vadd.f32 %v6022, %v6206
      %6208 = vmatmul.bf16.gmra.mxu0 %v5705
      %v6209 = vpop.f32.mrf.mxu0
      %v6210 = vadd.f32 %v6025, %v6209
      %v6211 = vpop.f32.mrf.mxu0
      %6212 = vmatmul.bf16.gmra.mxu0 %v5706
      %v6213 = vpop.f32.mrf.mxu0
      %v6214 = vadd.f32 %v6029, %v6213
      %v6215 = vpop.f32.mrf.mxu0
      %v6216 = vadd.f32 %v6031, %v6215
      %6217 = vmatmul.bf16.gmra.mxu0 %v5707
      %v6218 = vpop.f32.mrf.mxu0
      %v6219 = vpop.f32.mrf.mxu0
      %v6220 = vadd.f32 %v6035, %v6219
      %6221 = vmatmul.bf16.gmra.mxu0 %v5708
      %v6222 = vpop.f32.mrf.mxu0
      %v6223 = vadd.f32 %v6038, %v6222
      %v6224 = vpop.f32.mrf.mxu0
      %6225 = vmatmul.bf16.gmra.mxu0 %v5709
      %v6226 = vpop.f32.mrf.mxu0
      %v6227 = vadd.f32 %v6042, %v6226
      %v6228 = vpop.f32.mrf.mxu0
      %v6229 = vadd.f32 %v6044, %v6228
      %6230 = vmatmul.bf16.gmra.mxu0 %v5710
      %v6231 = vpop.f32.mrf.mxu0
      %v6232 = vpop.f32.mrf.mxu0
      %v6233 = vadd.f32 %v6048, %v6232
      %6234 = vmatmul.bf16.gmra.mxu0 %v5711
      %v6235 = vpop.f32.mrf.mxu0
      %v6236 = vadd.f32 %v6051, %v6235
      %v6237 = vpop.f32.mrf.mxu0
      %6238 = vmatmul.bf16.gmra.mxu0 %v5712
      %v6239 = vpop.f32.mrf.mxu0
      %v6240 = vadd.f32 %v6055, %v6239
      %v6241 = vpop.f32.mrf.mxu0
      %v6242 = vadd.f32 %v6057, %v6241
      %6243 = vmatmul.bf16.gmra.mxu0 %v5713
      %v6244 = vpop.f32.mrf.mxu0
      %v6245 = vpop.f32.mrf.mxu0
      %v6246 = vadd.f32 %v6061, %v6245
      %6247 = vmatmul.bf16.gmra.mxu0 %v5714
      %v6248 = vpop.f32.mrf.mxu0
      %v6249 = vadd.f32 %v6064, %v6248
      %v6250 = vpop.f32.mrf.mxu0
      %6251 = vmatmul.bf16.gmra.mxu0 %v5715
      %v6252 = vpop.f32.mrf.mxu0
      %v6253 = vadd.f32 %v6068, %v6252
      %v6254 = vpop.f32.mrf.mxu0
      %v6255 = vadd.f32 %v6070, %v6254
      %6256 = vmatmul.bf16.gmra.mxu0 %v5716
      %v6257 = vpop.f32.mrf.mxu0
      %v6258 = vpop.f32.mrf.mxu0
      %v6259 = vadd.f32 %v6074, %v6258
      %6260 = vmatmul.bf16.gmra.mxu0 %v5717
      %v6261 = vpop.f32.mrf.mxu0
      %v6262 = vadd.f32 %v6077, %v6261
      %v6263 = vpop.f32.mrf.mxu0
      %6264 = vmatmul.bf16.gmra.mxu0 %v5718
      %v6265 = vpop.f32.mrf.mxu0
      %v6266 = vadd.f32 %v6081, %v6265
      %v6267 = vpop.f32.mrf.mxu0
      %v6268 = vadd.f32 %v6083, %v6267
      %6269 = vmatmul.bf16.gmra.mxu0 %v5719
      %v6270 = vpop.f32.mrf.mxu0
      %v6271 = vpop.f32.mrf.mxu0
      %v6272 = vadd.f32 %v6087, %v6271
      %6273 = vmatmul.bf16.gmra.mxu0 %v5720
      %v6274 = vpop.f32.mrf.mxu0
      %v6275 = vadd.f32 %v6090, %v6274
      %v6276 = vpop.f32.mrf.mxu0
      %6277 = vmatmul.bf16.gmra.mxu0 %v5721
      %v6278 = vpop.f32.mrf.mxu0
      %v6279 = vadd.f32 %v6094, %v6278
      %v6280 = vpop.f32.mrf.mxu0
      %v6281 = vadd.f32 %v6096, %v6280
      %6282 = vmatmul.bf16.gmra.mxu0 %v5722
      %v6283 = vpop.f32.mrf.mxu0
      %v6284 = vpop.f32.mrf.mxu0
      %v6285 = vadd.f32 %v6100, %v6284
      %6286 = vmatmul.bf16.gmra.mxu0 %v5723
      %v6287 = vpop.f32.mrf.mxu0
      %v6288 = vadd.f32 %v6103, %v6287
      %v6289 = vpop.f32.mrf.mxu0
      %6290 = vdwg.mxu0
      %v6291 = vld [vmem:[#allocation3] sm:$0xe]
      %s6292 = scalar_lea.vmem %s6, 128
      %v6293 = vld [vmem:[%s6292] sm:$0xf]
      %v6294 = vld [vmem:[%s6292 + $0x4] sm:$0xf]
      %v6295 = vld [vmem:[%s6292 + $0x8] sm:$0xf]
      %v6296 = vld [vmem:[%s6292 + $0xc] sm:$0xf]
      %v6297 = vld [vmem:[%s6292 + $0x10] sm:$0xf]
      %v6298 = vld [vmem:[%s6292 + $0x14] sm:$0xf]
      %v6299 = vld [vmem:[%s6292 + $0x18] sm:$0xf]
      %v6300 = vld [vmem:[%s6292 + $0x1c] sm:$0xf]
      %v6301 = vld [vmem:[%s6292 + $0x20] sm:$0xf]
      %v6302 = vld [vmem:[%s6292 + $0x24] sm:$0xf]
      %v6303 = vld [vmem:[%s6292 + $0x28] sm:$0xf]
      %v6304 = vld [vmem:[%s6292 + $0x2c] sm:$0xf]
      %v6305 = vld [vmem:[%s6292 + $0x30] sm:$0xf]
      %v6306 = vld [vmem:[%s6292 + $0x34] sm:$0xf]
      %v6307 = vld [vmem:[%s6292 + $0x38] sm:$0xf]
      %v6308 = vld [vmem:[%s6292 + $0x3c] sm:$0xf]
      %v6310 = vunpack.c.l.b16 %v6291
      %v6311 = vpack.c.b16 %v5652, %v6310
      %v6312 = vrot.slane %v6311, 1
      %v6313 = vrot.slane %v5701, 1
      %v6314 = vsel %vm1646, %v6312, %v6313
      %v6315 = vrot.slane %v5702, 1
      %v6316 = vsel %vm1646, %v6313, %v6315
      %v6317 = vrot.slane %v5703, 1
      %v6318 = vsel %vm1646, %v6315, %v6317
      %v6319 = vrot.slane %v5704, 1
      %v6320 = vsel %vm1646, %v6317, %v6319
      %v6321 = vrot.slane %v5705, 1
      %v6322 = vsel %vm1646, %v6319, %v6321
      %v6323 = vrot.slane %v5706, 1
      %v6324 = vsel %vm1646, %v6321, %v6323
      %v6325 = vrot.slane %v5707, 1
      %v6326 = vsel %vm1646, %v6323, %v6325
      %v6327 = vrot.slane %v5708, 1
      %v6328 = vsel %vm1646, %v6325, %v6327
      %v6329 = vrot.slane %v5709, 1
      %v6330 = vsel %vm1646, %v6327, %v6329
      %v6331 = vrot.slane %v5710, 1
      %v6332 = vsel %vm1646, %v6329, %v6331
      %v6333 = vrot.slane %v5711, 1
      %v6334 = vsel %vm1646, %v6331, %v6333
      %v6335 = vrot.slane %v5712, 1
      %v6336 = vsel %vm1646, %v6333, %v6335
      %v6337 = vrot.slane %v5713, 1
      %v6338 = vsel %vm1646, %v6335, %v6337
      %v6339 = vrot.slane %v5714, 1
      %v6340 = vsel %vm1646, %v6337, %v6339
      %v6341 = vrot.slane %v5715, 1
      %v6342 = vsel %vm1646, %v6339, %v6341
      %v6343 = vrot.slane %v5716, 1
      %v6344 = vsel %vm1646, %v6341, %v6343
      %v6345 = vrot.slane %v5717, 1
      %v6346 = vsel %vm1646, %v6343, %v6345
      %v6347 = vrot.slane %v5718, 1
      %v6348 = vsel %vm1646, %v6345, %v6347
      %v6349 = vrot.slane %v5719, 1
      %v6350 = vsel %vm1646, %v6347, %v6349
      %v6351 = vrot.slane %v5720, 1
      %v6352 = vsel %vm1646, %v6349, %v6351
      %v6353 = vrot.slane %v5721, 1
      %v6354 = vsel %vm1646, %v6351, %v6353
      %v6355 = vrot.slane %v5722, 1
      %v6356 = vsel %vm1646, %v6353, %v6355
      %v6357 = vrot.slane %v5723, 1
      %v6358 = vsel %vm1646, %v6355, %v6357
      %v6359 = vrot.slane %v5724, 1
      %v6360 = vsel %vm1646, %v6357, %v6359
      %v6401 = vunpack.c.l.b16 %v6293
      %v6402 = vunpack.c.l.b16 %v6294
      %v6403 = vunpack.c.l.b16 %v6295
      %v6404 = vunpack.c.l.b16 %v6296
      %v6405 = vunpack.c.l.b16 %v6297
      %v6406 = vunpack.c.l.b16 %v6298
      %v6407 = vunpack.c.l.b16 %v6299
      %v6408 = vunpack.c.l.b16 %v6300
      %v6409 = vunpack.c.l.b16 %v6301
      %v6410 = vunpack.c.l.b16 %v6302
      %v6411 = vunpack.c.l.b16 %v6303
      %v6412 = vunpack.c.l.b16 %v6304
      %v6413 = vunpack.c.l.b16 %v6305
      %v6414 = vunpack.c.l.b16 %v6306
      %v6415 = vunpack.c.l.b16 %v6307
      %v6416 = vunpack.c.l.b16 %v6308
      %v6417 = vpack.c.b16 %v6402, %v6401
      %v6418 = vpack.c.b16 %v6404, %v6403
      %v6419 = vpack.c.b16 %v6406, %v6405
      %v6420 = vpack.c.b16 %v6408, %v6407
      %v6421 = vpack.c.b16 %v6410, %v6409
      %v6422 = vpack.c.b16 %v6412, %v6411
      %v6423 = vpack.c.b16 %v6414, %v6413
      %v6424 = vpack.c.b16 %v6416, %v6415
      %6433 = vmatpush.bf16.msra.mxu0 %v6424
      %6434 = vmatpush.bf16.msra.mxu0 %v6423
      %6435 = vmatpush.bf16.msra.mxu0 %v6422
      %6436 = vmatpush.bf16.msra.mxu0 %v6421
      %6437 = vmatpush.bf16.msra.mxu0 %v6420
      %6438 = vmatpush.bf16.msra.mxu0 %v6419
      %6439 = vmatpush.bf16.msra.mxu0 %v6418
      %6440 = vmatpush.bf16.msra.mxu0 %v6417
      %6441 = vmatmul.bf16.gmra.mxu0 %v6314
      %v6442 = vpop.f32.mrf.mxu0
      %v6443 = vadd.f32 0.0, %v6442
      %v6444 = vpop.f32.mrf.mxu0
      %v6445 = vadd.f32 0.0, %v6444
      %6446 = vmatmul.bf16.gmra.mxu0 %v6316
      %v6447 = vpop.f32.mrf.mxu0
      %v6448 = vpop.f32.mrf.mxu0
      %v6449 = vadd.f32 0.0, %v6448
      %6450 = vmatmul.bf16.gmra.mxu0 %v6318
      %v6451 = vpop.f32.mrf.mxu0
      %v6452 = vadd.f32 0.0, %v6451
      %v6453 = vpop.f32.mrf.mxu0
      %6454 = vmatmul.bf16.gmra.mxu0 %v6320
      %v6455 = vpop.f32.mrf.mxu0
      %v6456 = vadd.f32 0.0, %v6455
      %v6457 = vpop.f32.mrf.mxu0
      %v6458 = vadd.f32 0.0, %v6457
      %6459 = vmatmul.bf16.gmra.mxu0 %v6322
      %v6460 = vpop.f32.mrf.mxu0
      %v6461 = vpop.f32.mrf.mxu0
      %v6462 = vadd.f32 0.0, %v6461
      %6463 = vmatmul.bf16.gmra.mxu0 %v6324
      %v6464 = vpop.f32.mrf.mxu0
      %v6465 = vadd.f32 0.0, %v6464
      %v6466 = vpop.f32.mrf.mxu0
      %6467 = vmatmul.bf16.gmra.mxu0 %v6326
      %v6468 = vpop.f32.mrf.mxu0
      %v6469 = vadd.f32 0.0, %v6468
      %v6470 = vpop.f32.mrf.mxu0
      %v6471 = vadd.f32 0.0, %v6470
      %6472 = vmatmul.bf16.gmra.mxu0 %v6328
      %v6473 = vpop.f32.mrf.mxu0
      %v6474 = vpop.f32.mrf.mxu0
      %v6475 = vadd.f32 0.0, %v6474
      %6476 = vmatmul.bf16.gmra.mxu0 %v6330
      %v6477 = vpop.f32.mrf.mxu0
      %v6478 = vadd.f32 0.0, %v6477
      %v6479 = vpop.f32.mrf.mxu0
      %6480 = vmatmul.bf16.gmra.mxu0 %v6332
      %v6481 = vpop.f32.mrf.mxu0
      %v6482 = vadd.f32 0.0, %v6481
      %v6483 = vpop.f32.mrf.mxu0
      %v6484 = vadd.f32 0.0, %v6483
      %6485 = vmatmul.bf16.gmra.mxu0 %v6334
      %v6486 = vpop.f32.mrf.mxu0
      %v6487 = vpop.f32.mrf.mxu0
      %v6488 = vadd.f32 0.0, %v6487
      %6489 = vmatmul.bf16.gmra.mxu0 %v6336
      %v6490 = vpop.f32.mrf.mxu0
      %v6491 = vadd.f32 0.0, %v6490
      %v6492 = vpop.f32.mrf.mxu0
      %6493 = vmatmul.bf16.gmra.mxu0 %v6338
      %v6494 = vpop.f32.mrf.mxu0
      %v6495 = vadd.f32 0.0, %v6494
      %v6496 = vpop.f32.mrf.mxu0
      %v6497 = vadd.f32 0.0, %v6496
      %6498 = vmatmul.bf16.gmra.mxu0 %v6340
      %v6499 = vpop.f32.mrf.mxu0
      %v6500 = vpop.f32.mrf.mxu0
      %v6501 = vadd.f32 0.0, %v6500
      %6502 = vmatmul.bf16.gmra.mxu0 %v6342
      %v6503 = vpop.f32.mrf.mxu0
      %v6504 = vadd.f32 0.0, %v6503
      %v6505 = vpop.f32.mrf.mxu0
      %6506 = vmatmul.bf16.gmra.mxu0 %v6344
      %v6507 = vpop.f32.mrf.mxu0
      %v6508 = vadd.f32 0.0, %v6507
      %v6509 = vpop.f32.mrf.mxu0
      %v6510 = vadd.f32 0.0, %v6509
      %6511 = vmatmul.bf16.gmra.mxu0 %v6346
      %v6512 = vpop.f32.mrf.mxu0
      %v6513 = vpop.f32.mrf.mxu0
      %v6514 = vadd.f32 0.0, %v6513
      %6515 = vmatmul.bf16.gmra.mxu0 %v6348
      %v6516 = vpop.f32.mrf.mxu0
      %v6517 = vadd.f32 0.0, %v6516
      %v6518 = vpop.f32.mrf.mxu0
      %6519 = vmatmul.bf16.gmra.mxu0 %v6350
      %v6520 = vpop.f32.mrf.mxu0
      %v6521 = vadd.f32 0.0, %v6520
      %v6522 = vpop.f32.mrf.mxu0
      %v6523 = vadd.f32 0.0, %v6522
      %6524 = vmatmul.bf16.gmra.mxu0 %v6352
      %v6525 = vpop.f32.mrf.mxu0
      %v6526 = vpop.f32.mrf.mxu0
      %v6527 = vadd.f32 0.0, %v6526
      %6528 = vmatmul.bf16.gmra.mxu0 %v6354
      %v6529 = vpop.f32.mrf.mxu0
      %v6530 = vadd.f32 0.0, %v6529
      %v6531 = vpop.f32.mrf.mxu0
      %6532 = vmatmul.bf16.gmra.mxu0 %v6356
      %v6533 = vpop.f32.mrf.mxu0
      %v6534 = vadd.f32 0.0, %v6533
      %v6535 = vpop.f32.mrf.mxu0
      %v6536 = vadd.f32 0.0, %v6535
      %6537 = vmatmul.bf16.gmra.mxu0 %v6358
      %v6538 = vpop.f32.mrf.mxu0
      %v6539 = vpop.f32.mrf.mxu0
      %v6540 = vadd.f32 0.0, %v6539
      %6541 = vmatmul.bf16.gmra.mxu0 %v6360
      %v6542 = vpop.f32.mrf.mxu0
      %v6543 = vadd.f32 0.0, %v6542
      %v6544 = vpop.f32.mrf.mxu0
      %6545 = vdwg.mxu0
      %v6546 = vadd.f32 %v6188, %v6443
      %v6547 = vadd.f32 %v6190, %v6445
      %v6548 = vadd.f32 %v6194, %v6449
      %v6549 = vadd.f32 %v6197, %v6452
      %v6550 = vadd.f32 %v6201, %v6456
      %v6551 = vadd.f32 %v6203, %v6458
      %v6552 = vadd.f32 %v6207, %v6462
      %v6553 = vadd.f32 %v6210, %v6465
      %v6554 = vadd.f32 %v6214, %v6469
      %v6555 = vadd.f32 %v6216, %v6471
      %v6556 = vadd.f32 %v6220, %v6475
      %v6557 = vadd.f32 %v6223, %v6478
      %v6558 = vadd.f32 %v6227, %v6482
      %v6559 = vadd.f32 %v6229, %v6484
      %v6560 = vadd.f32 %v6233, %v6488
      %v6561 = vadd.f32 %v6236, %v6491
      %v6562 = vadd.f32 %v6240, %v6495
      %v6563 = vadd.f32 %v6242, %v6497
      %v6564 = vadd.f32 %v6246, %v6501
      %v6565 = vadd.f32 %v6249, %v6504
      %v6566 = vadd.f32 %v6253, %v6508
      %v6567 = vadd.f32 %v6255, %v6510
      %v6568 = vadd.f32 %v6259, %v6514
      %v6569 = vadd.f32 %v6262, %v6517
      %v6570 = vadd.f32 %v6266, %v6521
      %v6571 = vadd.f32 %v6268, %v6523
      %v6572 = vadd.f32 %v6272, %v6527
      %v6573 = vadd.f32 %v6275, %v6530
      %v6574 = vadd.f32 %v6279, %v6534
      %v6575 = vadd.f32 %v6281, %v6536
      %v6576 = vadd.f32 %v6285, %v6540
      %v6577 = vadd.f32 %v6288, %v6543
      %v6578 = vld [vmem:[#allocation3 + $0xc] sm:$0xf]
      %v6579 = vld [vmem:[#allocation3 + $0x10] sm:$0xf]
      %v6580 = vld [vmem:[#allocation3 + $0x14] sm:$0xf]
      %v6581 = vld [vmem:[#allocation3 + $0x18] sm:$0xf]
      %v6582 = vld [vmem:[#allocation3 + $0x1c] sm:$0xf]
      %v6583 = vld [vmem:[#allocation3 + $0x20] sm:$0xf]
      %v6584 = vld [vmem:[#allocation3 + $0x24] sm:$0xf]
      %v6585 = vld [vmem:[#allocation3 + $0x28] sm:$0xf]
      %v6586 = vld [vmem:[#allocation3 + $0x2c] sm:$0xf]
      %v6587 = vld [vmem:[#allocation3 + $0x30] sm:$0xf]
      %v6588 = vld [vmem:[#allocation3 + $0x34] sm:$0xf]
      %v6589 = vld [vmem:[#allocation3 + $0x38] sm:$0xf]
      %v6590 = vld [vmem:[#allocation3 + $0x3c] sm:$0xf]
      %v6591 = vld [vmem:[#allocation3 + $0x40] sm:$0xf]
      %v6592 = vld [vmem:[#allocation3 + $0x44] sm:$0xf]
      %v6593 = vld [vmem:[#allocation3 + $0x48] sm:$0xf]
      %v6594 = vld [vmem:[#allocation3 + $0x4c] sm:$0xf]
      %v6595 = vld [vmem:[#allocation3 + $0x50] sm:$0xf]
      %v6596 = vld [vmem:[#allocation3 + $0x54] sm:$0xf]
      %v6597 = vld [vmem:[#allocation3 + $0x58] sm:$0xf]
      %v6598 = vld [vmem:[#allocation3 + $0x5c] sm:$0xf]
      %v6599 = vld [vmem:[#allocation3 + $0x60] sm:$0xf]
      %v6600 = vld [vmem:[#allocation3 + $0x64] sm:$0xf]
      %v6601 = vld [vmem:[#allocation3 + $0x68] sm:$0xf]
      %v6602 = vld [vmem:[#allocation3 + $0x6c] sm:$0xf]
      %v6603 = vld [vmem:[#allocation3 + $0x70] sm:$0xf]
      %v6604 = vld [vmem:[#allocation3 + $0x74] sm:$0xf]
      %v6605 = vld [vmem:[#allocation3 + $0x78] sm:$0xf]
      %v6606 = vld [vmem:[#allocation3 + $0x7c] sm:$0xf]
      %v6607 = vld [vmem:[#allocation3 + $0x80] sm:$0xf]
      %v6608 = vld [vmem:[#allocation3 + $0x84] sm:$0xf]
      %v6609 = vld [vmem:[#allocation3 + $0x88] sm:$0xf]
      %v6610 = vld [vmem:[#allocation3 + $0x8c] sm:$0xf]
      %v6611 = vld [vmem:[#allocation3 + $0x90] sm:$0xf]
      %v6612 = vld [vmem:[#allocation3 + $0x94] sm:$0xf]
      %v6613 = vld [vmem:[#allocation3 + $0x98] sm:$0xf]
      %v6614 = vld [vmem:[#allocation3 + $0x9c] sm:$0xf]
      %v6615 = vld [vmem:[#allocation3 + $0xa0] sm:$0xf]
      %v6616 = vld [vmem:[#allocation3 + $0xa4] sm:$0xf]
      %v6617 = vld [vmem:[#allocation3 + $0xa8] sm:$0xf]
      %v6618 = vld [vmem:[#allocation3 + $0xac] sm:$0xf]
      %v6619 = vld [vmem:[#allocation3 + $0xb0] sm:$0xf]
      %v6620 = vld [vmem:[#allocation3 + $0xb4] sm:$0xf]
      %v6621 = vld [vmem:[#allocation3 + $0xb8] sm:$0xf]
      %v6622 = vld [vmem:[#allocation3 + $0xbc] sm:$0xf]
      %v6623 = vld [vmem:[#allocation3 + $0xc0] sm:$0xf]
      %v6624 = vld [vmem:[#allocation3 + $0xc4] sm:$0xf]
      %v6625 = vld [vmem:[#allocation3 + $0xc8] sm:$0xf]
      %s6626 = scalar_lea.vmem %s6, 192
      %v6627 = vld [vmem:[%s6626] sm:$0xf]
      %v6628 = vld [vmem:[%s6626 + $0x4] sm:$0xf]
      %v6629 = vld [vmem:[%s6626 + $0x8] sm:$0xf]
      %v6630 = vld [vmem:[%s6626 + $0xc] sm:$0xf]
      %v6631 = vld [vmem:[%s6626 + $0x10] sm:$0xf]
      %v6632 = vld [vmem:[%s6626 + $0x14] sm:$0xf]
      %v6633 = vld [vmem:[%s6626 + $0x18] sm:$0xf]
      %v6634 = vld [vmem:[%s6626 + $0x1c] sm:$0xf]
      %v6635 = vld [vmem:[%s6626 + $0x20] sm:$0xf]
      %v6636 = vld [vmem:[%s6626 + $0x24] sm:$0xf]
      %v6637 = vld [vmem:[%s6626 + $0x28] sm:$0xf]
      %v6638 = vld [vmem:[%s6626 + $0x2c] sm:$0xf]
      %v6639 = vld [vmem:[%s6626 + $0x30] sm:$0xf]
      %v6640 = vld [vmem:[%s6626 + $0x34] sm:$0xf]
      %v6641 = vld [vmem:[%s6626 + $0x38] sm:$0xf]
      %v6642 = vld [vmem:[%s6626 + $0x3c] sm:$0xf]
      %v6691 = vunpack.c.l.b16 %v6578
      %v6692 = vunpack.c.l.b16 %v6579
      %v6693 = vunpack.c.l.b16 %v6580
      %v6694 = vunpack.c.l.b16 %v6581
      %v6695 = vunpack.c.l.b16 %v6582
      %v6696 = vunpack.c.l.b16 %v6583
      %v6697 = vunpack.c.l.b16 %v6584
      %v6698 = vunpack.c.l.b16 %v6585
      %v6699 = vunpack.c.l.b16 %v6586
      %v6700 = vunpack.c.l.b16 %v6587
      %v6701 = vunpack.c.l.b16 %v6588
      %v6702 = vunpack.c.l.b16 %v6589
      %v6703 = vunpack.c.l.b16 %v6590
      %v6704 = vunpack.c.l.b16 %v6591
      %v6705 = vunpack.c.l.b16 %v6592
      %v6706 = vunpack.c.l.b16 %v6593
      %v6707 = vunpack.c.l.b16 %v6594
      %v6708 = vunpack.c.l.b16 %v6595
      %v6709 = vunpack.c.l.b16 %v6596
      %v6710 = vunpack.c.l.b16 %v6597
      %v6711 = vunpack.c.l.b16 %v6598
      %v6712 = vunpack.c.l.b16 %v6599
      %v6713 = vunpack.c.l.b16 %v6600
      %v6714 = vunpack.c.l.b16 %v6601
      %v6715 = vunpack.c.l.b16 %v6602
      %v6716 = vunpack.c.l.b16 %v6603
      %v6717 = vunpack.c.l.b16 %v6604
      %v6718 = vunpack.c.l.b16 %v6605
      %v6719 = vunpack.c.l.b16 %v6606
      %v6720 = vunpack.c.l.b16 %v6607
      %v6721 = vunpack.c.l.b16 %v6608
      %v6722 = vunpack.c.l.b16 %v6609
      %v6723 = vunpack.c.l.b16 %v6610
      %v6724 = vunpack.c.l.b16 %v6611
      %v6725 = vunpack.c.l.b16 %v6612
      %v6726 = vunpack.c.l.b16 %v6613
      %v6727 = vunpack.c.l.b16 %v6614
      %v6728 = vunpack.c.l.b16 %v6615
      %v6729 = vunpack.c.l.b16 %v6616
      %v6730 = vunpack.c.l.b16 %v6617
      %v6731 = vunpack.c.l.b16 %v6618
      %v6732 = vunpack.c.l.b16 %v6619
      %v6733 = vunpack.c.l.b16 %v6620
      %v6734 = vunpack.c.l.b16 %v6621
      %v6735 = vunpack.c.l.b16 %v6622
      %v6736 = vunpack.c.l.b16 %v6623
      %v6737 = vunpack.c.l.b16 %v6624
      %v6738 = vunpack.c.l.b16 %v6625
      %v6739 = vpack.c.b16 %v6692, %v6691
      %v6740 = vpack.c.b16 %v6694, %v6693
      %v6741 = vpack.c.b16 %v6696, %v6695
      %v6742 = vpack.c.b16 %v6698, %v6697
      %v6743 = vpack.c.b16 %v6700, %v6699
      %v6744 = vpack.c.b16 %v6702, %v6701
      %v6745 = vpack.c.b16 %v6704, %v6703
      %v6746 = vpack.c.b16 %v6706, %v6705
      %v6747 = vpack.c.b16 %v6708, %v6707
      %v6748 = vpack.c.b16 %v6710, %v6709
      %v6749 = vpack.c.b16 %v6712, %v6711
      %v6750 = vpack.c.b16 %v6714, %v6713
      %v6751 = vpack.c.b16 %v6716, %v6715
      %v6752 = vpack.c.b16 %v6718, %v6717
      %v6753 = vpack.c.b16 %v6720, %v6719
      %v6754 = vpack.c.b16 %v6722, %v6721
      %v6755 = vpack.c.b16 %v6724, %v6723
      %v6756 = vpack.c.b16 %v6726, %v6725
      %v6757 = vpack.c.b16 %v6728, %v6727
      %v6758 = vpack.c.b16 %v6730, %v6729
      %v6759 = vpack.c.b16 %v6732, %v6731
      %v6760 = vpack.c.b16 %v6734, %v6733
      %v6761 = vpack.c.b16 %v6736, %v6735
      %v6762 = vpack.c.b16 %v6738, %v6737
      %v6803 = vunpack.c.l.b16 %v6627
      %v6804 = vunpack.c.l.b16 %v6628
      %v6805 = vunpack.c.l.b16 %v6629
      %v6806 = vunpack.c.l.b16 %v6630
      %v6807 = vunpack.c.l.b16 %v6631
      %v6808 = vunpack.c.l.b16 %v6632
      %v6809 = vunpack.c.l.b16 %v6633
      %v6810 = vunpack.c.l.b16 %v6634
      %v6811 = vunpack.c.l.b16 %v6635
      %v6812 = vunpack.c.l.b16 %v6636
      %v6813 = vunpack.c.l.b16 %v6637
      %v6814 = vunpack.c.l.b16 %v6638
      %v6815 = vunpack.c.l.b16 %v6639
      %v6816 = vunpack.c.l.b16 %v6640
      %v6817 = vunpack.c.l.b16 %v6641
      %v6818 = vunpack.c.l.b16 %v6642
      %v6819 = vpack.c.b16 %v6804, %v6803
      %v6820 = vpack.c.b16 %v6806, %v6805
      %v6821 = vpack.c.b16 %v6808, %v6807
      %v6822 = vpack.c.b16 %v6810, %v6809
      %v6823 = vpack.c.b16 %v6812, %v6811
      %v6824 = vpack.c.b16 %v6814, %v6813
      %v6825 = vpack.c.b16 %v6816, %v6815
      %v6826 = vpack.c.b16 %v6818, %v6817
      %6835 = vmatpush.bf16.msra.mxu0 %v6826
      %6836 = vmatpush.bf16.msra.mxu0 %v6825
      %6837 = vmatpush.bf16.msra.mxu0 %v6824
      %6838 = vmatpush.bf16.msra.mxu0 %v6823
      %6839 = vmatpush.bf16.msra.mxu0 %v6822
      %6840 = vmatpush.bf16.msra.mxu0 %v6821
      %6841 = vmatpush.bf16.msra.mxu0 %v6820
      %6842 = vmatpush.bf16.msra.mxu0 %v6819
      %6843 = vmatmul.bf16.gmra.mxu0 %v6739
      %v6844 = vpop.f32.mrf.mxu0
      %v6845 = vadd.f32 0.0, %v6844
      %v6846 = vpop.f32.mrf.mxu0
      %v6847 = vadd.f32 0.0, %v6846
      %6848 = vmatmul.bf16.gmra.mxu0 %v6740
      %v6849 = vpop.f32.mrf.mxu0
      %v6850 = vpop.f32.mrf.mxu0
      %v6851 = vadd.f32 0.0, %v6850
      %6852 = vmatmul.bf16.gmra.mxu0 %v6741
      %v6853 = vpop.f32.mrf.mxu0
      %v6854 = vadd.f32 0.0, %v6853
      %v6855 = vpop.f32.mrf.mxu0
      %6856 = vmatmul.bf16.gmra.mxu0 %v6742
      %v6857 = vpop.f32.mrf.mxu0
      %v6858 = vadd.f32 0.0, %v6857
      %v6859 = vpop.f32.mrf.mxu0
      %v6860 = vadd.f32 0.0, %v6859
      %6861 = vmatmul.bf16.gmra.mxu0 %v6743
      %v6862 = vpop.f32.mrf.mxu0
      %v6863 = vpop.f32.mrf.mxu0
      %v6864 = vadd.f32 0.0, %v6863
      %6865 = vmatmul.bf16.gmra.mxu0 %v6744
      %v6866 = vpop.f32.mrf.mxu0
      %v6867 = vadd.f32 0.0, %v6866
      %v6868 = vpop.f32.mrf.mxu0
      %6869 = vmatmul.bf16.gmra.mxu0 %v6745
      %v6870 = vpop.f32.mrf.mxu0
      %v6871 = vadd.f32 0.0, %v6870
      %v6872 = vpop.f32.mrf.mxu0
      %v6873 = vadd.f32 0.0, %v6872
      %6874 = vmatmul.bf16.gmra.mxu0 %v6746
      %v6875 = vpop.f32.mrf.mxu0
      %v6876 = vpop.f32.mrf.mxu0
      %v6877 = vadd.f32 0.0, %v6876
      %6878 = vmatmul.bf16.gmra.mxu0 %v6747
      %v6879 = vpop.f32.mrf.mxu0
      %v6880 = vadd.f32 0.0, %v6879
      %v6881 = vpop.f32.mrf.mxu0
      %6882 = vmatmul.bf16.gmra.mxu0 %v6748
      %v6883 = vpop.f32.mrf.mxu0
      %v6884 = vadd.f32 0.0, %v6883
      %v6885 = vpop.f32.mrf.mxu0
      %v6886 = vadd.f32 0.0, %v6885
      %6887 = vmatmul.bf16.gmra.mxu0 %v6749
      %v6888 = vpop.f32.mrf.mxu0
      %v6889 = vpop.f32.mrf.mxu0
      %v6890 = vadd.f32 0.0, %v6889
      %6891 = vmatmul.bf16.gmra.mxu0 %v6750
      %v6892 = vpop.f32.mrf.mxu0
      %v6893 = vadd.f32 0.0, %v6892
      %v6894 = vpop.f32.mrf.mxu0
      %6895 = vmatmul.bf16.gmra.mxu0 %v6751
      %v6896 = vpop.f32.mrf.mxu0
      %v6897 = vadd.f32 0.0, %v6896
      %v6898 = vpop.f32.mrf.mxu0
      %v6899 = vadd.f32 0.0, %v6898
      %6900 = vmatmul.bf16.gmra.mxu0 %v6752
      %v6901 = vpop.f32.mrf.mxu0
      %v6902 = vpop.f32.mrf.mxu0
      %v6903 = vadd.f32 0.0, %v6902
      %6904 = vmatmul.bf16.gmra.mxu0 %v6753
      %v6905 = vpop.f32.mrf.mxu0
      %v6906 = vadd.f32 0.0, %v6905
      %v6907 = vpop.f32.mrf.mxu0
      %6908 = vmatmul.bf16.gmra.mxu0 %v6754
      %v6909 = vpop.f32.mrf.mxu0
      %v6910 = vadd.f32 0.0, %v6909
      %v6911 = vpop.f32.mrf.mxu0
      %v6912 = vadd.f32 0.0, %v6911
      %6913 = vmatmul.bf16.gmra.mxu0 %v6755
      %v6914 = vpop.f32.mrf.mxu0
      %v6915 = vpop.f32.mrf.mxu0
      %v6916 = vadd.f32 0.0, %v6915
      %6917 = vmatmul.bf16.gmra.mxu0 %v6756
      %v6918 = vpop.f32.mrf.mxu0
      %v6919 = vadd.f32 0.0, %v6918
      %v6920 = vpop.f32.mrf.mxu0
      %6921 = vmatmul.bf16.gmra.mxu0 %v6757
      %v6922 = vpop.f32.mrf.mxu0
      %v6923 = vadd.f32 0.0, %v6922
      %v6924 = vpop.f32.mrf.mxu0
      %v6925 = vadd.f32 0.0, %v6924
      %6926 = vmatmul.bf16.gmra.mxu0 %v6758
      %v6927 = vpop.f32.mrf.mxu0
      %v6928 = vpop.f32.mrf.mxu0
      %v6929 = vadd.f32 0.0, %v6928
      %6930 = vmatmul.bf16.gmra.mxu0 %v6759
      %v6931 = vpop.f32.mrf.mxu0
      %v6932 = vadd.f32 0.0, %v6931
      %v6933 = vpop.f32.mrf.mxu0
      %6934 = vmatmul.bf16.gmra.mxu0 %v6760
      %v6935 = vpop.f32.mrf.mxu0
      %v6936 = vadd.f32 0.0, %v6935
      %v6937 = vpop.f32.mrf.mxu0
      %v6938 = vadd.f32 0.0, %v6937
      %6939 = vmatmul.bf16.gmra.mxu0 %v6761
      %v6940 = vpop.f32.mrf.mxu0
      %v6941 = vpop.f32.mrf.mxu0
      %v6942 = vadd.f32 0.0, %v6941
      %6943 = vmatmul.bf16.gmra.mxu0 %v6762
      %v6944 = vpop.f32.mrf.mxu0
      %v6945 = vadd.f32 0.0, %v6944
      %v6946 = vpop.f32.mrf.mxu0
      %6947 = vdwg.mxu0
      %v6948 = vadd.f32 %v6546, %v6845
      %v6949 = vadd.f32 %v6547, %v6847
      %v6950 = vadd.f32 %v6548, %v6851
      %v6951 = vadd.f32 %v6549, %v6854
      %v6952 = vadd.f32 %v6550, %v6858
      %v6953 = vadd.f32 %v6551, %v6860
      %v6954 = vadd.f32 %v6552, %v6864
      %v6955 = vadd.f32 %v6553, %v6867
      %v6956 = vadd.f32 %v6554, %v6871
      %v6957 = vadd.f32 %v6555, %v6873
      %v6958 = vadd.f32 %v6556, %v6877
      %v6959 = vadd.f32 %v6557, %v6880
      %v6960 = vadd.f32 %v6558, %v6884
      %v6961 = vadd.f32 %v6559, %v6886
      %v6962 = vadd.f32 %v6560, %v6890
      %v6963 = vadd.f32 %v6561, %v6893
      %v6964 = vadd.f32 %v6562, %v6897
      %v6965 = vadd.f32 %v6563, %v6899
      %v6966 = vadd.f32 %v6564, %v6903
      %v6967 = vadd.f32 %v6565, %v6906
      %v6968 = vadd.f32 %v6566, %v6910
      %v6969 = vadd.f32 %v6567, %v6912
      %v6970 = vadd.f32 %v6568, %v6916
      %v6971 = vadd.f32 %v6569, %v6919
      %v6972 = vadd.f32 %v6570, %v6923
      %v6973 = vadd.f32 %v6571, %v6925
      %v6974 = vadd.f32 %v6572, %v6929
      %v6975 = vadd.f32 %v6573, %v6932
      %v6976 = vadd.f32 %v6574, %v6936
      %v6977 = vadd.f32 %v6575, %v6938
      %v6978 = vadd.f32 %v6576, %v6942
      %v6979 = vadd.f32 %v6577, %v6945
      %v6980 = vld [vmem:[#allocation3 + $0xc] sm:$0xf]
      %v6981 = vld [vmem:[#allocation3 + $0x10] sm:$0xf]
      %v6982 = vld [vmem:[#allocation3 + $0x14] sm:$0xf]
      %v6983 = vld [vmem:[#allocation3 + $0x18] sm:$0xf]
      %v6984 = vld [vmem:[#allocation3 + $0x1c] sm:$0xf]
      %v6985 = vld [vmem:[#allocation3 + $0x20] sm:$0xf]
      %v6986 = vld [vmem:[#allocation3 + $0x24] sm:$0xf]
      %v6987 = vld [vmem:[#allocation3 + $0x28] sm:$0xf]
      %v6988 = vld [vmem:[#allocation3 + $0x2c] sm:$0xf]
      %v6989 = vld [vmem:[#allocation3 + $0x30] sm:$0xf]
      %v6990 = vld [vmem:[#allocation3 + $0x34] sm:$0xf]
      %v6991 = vld [vmem:[#allocation3 + $0x38] sm:$0xf]
      %v6992 = vld [vmem:[#allocation3 + $0x3c] sm:$0xf]
      %v6993 = vld [vmem:[#allocation3 + $0x40] sm:$0xf]
      %v6994 = vld [vmem:[#allocation3 + $0x44] sm:$0xf]
      %v6995 = vld [vmem:[#allocation3 + $0x48] sm:$0xf]
      %v6996 = vld [vmem:[#allocation3 + $0x4c] sm:$0xf]
      %v6997 = vld [vmem:[#allocation3 + $0x50] sm:$0xf]
      %v6998 = vld [vmem:[#allocation3 + $0x54] sm:$0xf]
      %v6999 = vld [vmem:[#allocation3 + $0x58] sm:$0xf]
      %v7000 = vld [vmem:[#allocation3 + $0x5c] sm:$0xf]
      %v7001 = vld [vmem:[#allocation3 + $0x60] sm:$0xf]
      %v7002 = vld [vmem:[#allocation3 + $0x64] sm:$0xf]
      %v7003 = vld [vmem:[#allocation3 + $0x68] sm:$0xf]
      %v7004 = vld [vmem:[#allocation3 + $0x6c] sm:$0xf]
      %v7005 = vld [vmem:[#allocation3 + $0x70] sm:$0xf]
      %v7006 = vld [vmem:[#allocation3 + $0x74] sm:$0xf]
      %v7007 = vld [vmem:[#allocation3 + $0x78] sm:$0xf]
      %v7008 = vld [vmem:[#allocation3 + $0x7c] sm:$0xf]
      %v7009 = vld [vmem:[#allocation3 + $0x80] sm:$0xf]
      %v7010 = vld [vmem:[#allocation3 + $0x84] sm:$0xf]
      %v7011 = vld [vmem:[#allocation3 + $0x88] sm:$0xf]
      %v7012 = vld [vmem:[#allocation3 + $0x8c] sm:$0xf]
      %v7013 = vld [vmem:[#allocation3 + $0x90] sm:$0xf]
      %v7014 = vld [vmem:[#allocation3 + $0x94] sm:$0xf]
      %v7015 = vld [vmem:[#allocation3 + $0x98] sm:$0xf]
      %v7016 = vld [vmem:[#allocation3 + $0x9c] sm:$0xf]
      %v7017 = vld [vmem:[#allocation3 + $0xa0] sm:$0xf]
      %v7018 = vld [vmem:[#allocation3 + $0xa4] sm:$0xf]
      %v7019 = vld [vmem:[#allocation3 + $0xa8] sm:$0xf]
      %v7020 = vld [vmem:[#allocation3 + $0xac] sm:$0xf]
      %v7021 = vld [vmem:[#allocation3 + $0xb0] sm:$0xf]
      %v7022 = vld [vmem:[#allocation3 + $0xb4] sm:$0xf]
      %v7023 = vld [vmem:[#allocation3 + $0xb8] sm:$0xf]
      %v7024 = vld [vmem:[#allocation3 + $0xbc] sm:$0xf]
      %v7025 = vld [vmem:[#allocation3 + $0xc0] sm:$0xf]
      %v7026 = vld [vmem:[#allocation3 + $0xc4] sm:$0xf]
      %v7027 = vld [vmem:[#allocation3 + $0xc8] sm:$0xf]
      %v7028 = vld [vmem:[#allocation3 + $0xcc] sm:$0x1]
      %s7029 = scalar_lea.vmem %s6, 256
      %v7030 = vld [vmem:[%s7029] sm:$0xf]
      %v7031 = vld [vmem:[%s7029 + $0x4] sm:$0xf]
      %v7032 = vld [vmem:[%s7029 + $0x8] sm:$0xf]
      %v7033 = vld [vmem:[%s7029 + $0xc] sm:$0xf]
      %v7034 = vld [vmem:[%s7029 + $0x10] sm:$0xf]
      %v7035 = vld [vmem:[%s7029 + $0x14] sm:$0xf]
      %v7036 = vld [vmem:[%s7029 + $0x18] sm:$0xf]
      %v7037 = vld [vmem:[%s7029 + $0x1c] sm:$0xf]
      %v7038 = vld [vmem:[%s7029 + $0x20] sm:$0xf]
      %v7039 = vld [vmem:[%s7029 + $0x24] sm:$0xf]
      %v7040 = vld [vmem:[%s7029 + $0x28] sm:$0xf]
      %v7041 = vld [vmem:[%s7029 + $0x2c] sm:$0xf]
      %v7042 = vld [vmem:[%s7029 + $0x30] sm:$0xf]
      %v7043 = vld [vmem:[%s7029 + $0x34] sm:$0xf]
      %v7044 = vld [vmem:[%s7029 + $0x38] sm:$0xf]
      %v7045 = vld [vmem:[%s7029 + $0x3c] sm:$0xf]
      %v7095 = vunpack.c.l.b16 %v6980
      %v7096 = vunpack.c.l.b16 %v6981
      %v7097 = vunpack.c.l.b16 %v6982
      %v7098 = vunpack.c.l.b16 %v6983
      %v7099 = vunpack.c.l.b16 %v6984
      %v7100 = vunpack.c.l.b16 %v6985
      %v7101 = vunpack.c.l.b16 %v6986
      %v7102 = vunpack.c.l.b16 %v6987
      %v7103 = vunpack.c.l.b16 %v6988
      %v7104 = vunpack.c.l.b16 %v6989
      %v7105 = vunpack.c.l.b16 %v6990
      %v7106 = vunpack.c.l.b16 %v6991
      %v7107 = vunpack.c.l.b16 %v6992
      %v7108 = vunpack.c.l.b16 %v6993
      %v7109 = vunpack.c.l.b16 %v6994
      %v7110 = vunpack.c.l.b16 %v6995
      %v7111 = vunpack.c.l.b16 %v6996
      %v7112 = vunpack.c.l.b16 %v6997
      %v7113 = vunpack.c.l.b16 %v6998
      %v7114 = vunpack.c.l.b16 %v6999
      %v7115 = vunpack.c.l.b16 %v7000
      %v7116 = vunpack.c.l.b16 %v7001
      %v7117 = vunpack.c.l.b16 %v7002
      %v7118 = vunpack.c.l.b16 %v7003
      %v7119 = vunpack.c.l.b16 %v7004
      %v7120 = vunpack.c.l.b16 %v7005
      %v7121 = vunpack.c.l.b16 %v7006
      %v7122 = vunpack.c.l.b16 %v7007
      %v7123 = vunpack.c.l.b16 %v7008
      %v7124 = vunpack.c.l.b16 %v7009
      %v7125 = vunpack.c.l.b16 %v7010
      %v7126 = vunpack.c.l.b16 %v7011
      %v7127 = vunpack.c.l.b16 %v7012
      %v7128 = vunpack.c.l.b16 %v7013
      %v7129 = vunpack.c.l.b16 %v7014
      %v7130 = vunpack.c.l.b16 %v7015
      %v7131 = vunpack.c.l.b16 %v7016
      %v7132 = vunpack.c.l.b16 %v7017
      %v7133 = vunpack.c.l.b16 %v7018
      %v7134 = vunpack.c.l.b16 %v7019
      %v7135 = vunpack.c.l.b16 %v7020
      %v7136 = vunpack.c.l.b16 %v7021
      %v7137 = vunpack.c.l.b16 %v7022
      %v7138 = vunpack.c.l.b16 %v7023
      %v7139 = vunpack.c.l.b16 %v7024
      %v7140 = vunpack.c.l.b16 %v7025
      %v7141 = vunpack.c.l.b16 %v7026
      %v7142 = vunpack.c.l.b16 %v7027
      %v7143 = vunpack.c.l.b16 %v7028
      %v7144 = vpack.c.b16 %v7096, %v7095
      %v7145 = vpack.c.b16 %v7098, %v7097
      %v7146 = vpack.c.b16 %v7100, %v7099
      %v7147 = vpack.c.b16 %v7102, %v7101
      %v7148 = vpack.c.b16 %v7104, %v7103
      %v7149 = vpack.c.b16 %v7106, %v7105
      %v7150 = vpack.c.b16 %v7108, %v7107
      %v7151 = vpack.c.b16 %v7110, %v7109
      %v7152 = vpack.c.b16 %v7112, %v7111
      %v7153 = vpack.c.b16 %v7114, %v7113
      %v7154 = vpack.c.b16 %v7116, %v7115
      %v7155 = vpack.c.b16 %v7118, %v7117
      %v7156 = vpack.c.b16 %v7120, %v7119
      %v7157 = vpack.c.b16 %v7122, %v7121
      %v7158 = vpack.c.b16 %v7124, %v7123
      %v7159 = vpack.c.b16 %v7126, %v7125
      %v7160 = vpack.c.b16 %v7128, %v7127
      %v7161 = vpack.c.b16 %v7130, %v7129
      %v7162 = vpack.c.b16 %v7132, %v7131
      %v7163 = vpack.c.b16 %v7134, %v7133
      %v7164 = vpack.c.b16 %v7136, %v7135
      %v7165 = vpack.c.b16 %v7138, %v7137
      %v7166 = vpack.c.b16 %v7140, %v7139
      %v7167 = vpack.c.b16 %v7142, %v7141
      %v7168 = vpack.c.b16 %v7143, %v7143
      %v7170 = vshrl.u32 %v7144, 16
      %v7172 = vshll.u32 %v7144, 16
      %v7174 = vrot.slane %v7172, 1
      %v7175 = vor.u32 %v7170, %v7174
      %v7177 = vshll.u32 %v7145, 16
      %v7179 = vrot.slane %v7177, 1
      %v7180 = vsel %vm988, %v7175, %v7179
      %v7181 = vshrl.u32 %v7145, 16
      %v7183 = vor.u32 %v7181, %v7179
      %v7185 = vshll.u32 %v7146, 16
      %v7187 = vrot.slane %v7185, 1
      %v7188 = vsel %vm988, %v7183, %v7187
      %v7189 = vshrl.u32 %v7146, 16
      %v7191 = vor.u32 %v7189, %v7187
      %v7193 = vshll.u32 %v7147, 16
      %v7195 = vrot.slane %v7193, 1
      %v7196 = vsel %vm988, %v7191, %v7195
      %v7197 = vshrl.u32 %v7147, 16
      %v7199 = vor.u32 %v7197, %v7195
      %v7201 = vshll.u32 %v7148, 16
      %v7203 = vrot.slane %v7201, 1
      %v7204 = vsel %vm988, %v7199, %v7203
      %v7205 = vshrl.u32 %v7148, 16
      %v7207 = vor.u32 %v7205, %v7203
      %v7209 = vshll.u32 %v7149, 16
      %v7211 = vrot.slane %v7209, 1
      %v7212 = vsel %vm988, %v7207, %v7211
      %v7213 = vshrl.u32 %v7149, 16
      %v7215 = vor.u32 %v7213, %v7211
      %v7217 = vshll.u32 %v7150, 16
      %v7219 = vrot.slane %v7217, 1
      %v7220 = vsel %vm988, %v7215, %v7219
      %v7221 = vshrl.u32 %v7150, 16
      %v7223 = vor.u32 %v7221, %v7219
      %v7225 = vshll.u32 %v7151, 16
      %v7227 = vrot.slane %v7225, 1
      %v7228 = vsel %vm988, %v7223, %v7227
      %v7229 = vshrl.u32 %v7151, 16
      %v7231 = vor.u32 %v7229, %v7227
      %v7233 = vshll.u32 %v7152, 16
      %v7235 = vrot.slane %v7233, 1
      %v7236 = vsel %vm988, %v7231, %v7235
      %v7237 = vshrl.u32 %v7152, 16
      %v7239 = vor.u32 %v7237, %v7235
      %v7241 = vshll.u32 %v7153, 16
      %v7243 = vrot.slane %v7241, 1
      %v7244 = vsel %vm988, %v7239, %v7243
      %v7245 = vshrl.u32 %v7153, 16
      %v7247 = vor.u32 %v7245, %v7243
      %v7249 = vshll.u32 %v7154, 16
      %v7251 = vrot.slane %v7249, 1
      %v7252 = vsel %vm988, %v7247, %v7251
      %v7253 = vshrl.u32 %v7154, 16
      %v7255 = vor.u32 %v7253, %v7251
      %v7257 = vshll.u32 %v7155, 16
      %v7259 = vrot.slane %v7257, 1
      %v7260 = vsel %vm988, %v7255, %v7259
      %v7261 = vshrl.u32 %v7155, 16
      %v7263 = vor.u32 %v7261, %v7259
      %v7265 = vshll.u32 %v7156, 16
      %v7267 = vrot.slane %v7265, 1
      %v7268 = vsel %vm988, %v7263, %v7267
      %v7269 = vshrl.u32 %v7156, 16
      %v7271 = vor.u32 %v7269, %v7267
      %v7273 = vshll.u32 %v7157, 16
      %v7275 = vrot.slane %v7273, 1
      %v7276 = vsel %vm988, %v7271, %v7275
      %v7277 = vshrl.u32 %v7157, 16
      %v7279 = vor.u32 %v7277, %v7275
      %v7281 = vshll.u32 %v7158, 16
      %v7283 = vrot.slane %v7281, 1
      %v7284 = vsel %vm988, %v7279, %v7283
      %v7285 = vshrl.u32 %v7158, 16
      %v7287 = vor.u32 %v7285, %v7283
      %v7289 = vshll.u32 %v7159, 16
      %v7291 = vrot.slane %v7289, 1
      %v7292 = vsel %vm988, %v7287, %v7291
      %v7293 = vshrl.u32 %v7159, 16
      %v7295 = vor.u32 %v7293, %v7291
      %v7297 = vshll.u32 %v7160, 16
      %v7299 = vrot.slane %v7297, 1
      %v7300 = vsel %vm988, %v7295, %v7299
      %v7301 = vshrl.u32 %v7160, 16
      %v7303 = vor.u32 %v7301, %v7299
      %v7305 = vshll.u32 %v7161, 16
      %v7307 = vrot.slane %v7305, 1
      %v7308 = vsel %vm988, %v7303, %v7307
      %v7309 = vshrl.u32 %v7161, 16
      %v7311 = vor.u32 %v7309, %v7307
      %v7313 = vshll.u32 %v7162, 16
      %v7315 = vrot.slane %v7313, 1
      %v7316 = vsel %vm988, %v7311, %v7315
      %v7317 = vshrl.u32 %v7162, 16
      %v7319 = vor.u32 %v7317, %v7315
      %v7321 = vshll.u32 %v7163, 16
      %v7323 = vrot.slane %v7321, 1
      %v7324 = vsel %vm988, %v7319, %v7323
      %v7325 = vshrl.u32 %v7163, 16
      %v7327 = vor.u32 %v7325, %v7323
      %v7329 = vshll.u32 %v7164, 16
      %v7331 = vrot.slane %v7329, 1
      %v7332 = vsel %vm988, %v7327, %v7331
      %v7333 = vshrl.u32 %v7164, 16
      %v7335 = vor.u32 %v7333, %v7331
      %v7337 = vshll.u32 %v7165, 16
      %v7339 = vrot.slane %v7337, 1
      %v7340 = vsel %vm988, %v7335, %v7339
      %v7341 = vshrl.u32 %v7165, 16
      %v7343 = vor.u32 %v7341, %v7339
      %v7345 = vshll.u32 %v7166, 16
      %v7347 = vrot.slane %v7345, 1
      %v7348 = vsel %vm988, %v7343, %v7347
      %v7349 = vshrl.u32 %v7166, 16
      %v7351 = vor.u32 %v7349, %v7347
      %v7353 = vshll.u32 %v7167, 16
      %v7355 = vrot.slane %v7353, 1
      %v7356 = vsel %vm988, %v7351, %v7355
      %v7357 = vshrl.u32 %v7167, 16
      %v7359 = vor.u32 %v7357, %v7355
      %v7361 = vshll.u32 %v7168, 16
      %v7363 = vrot.slane %v7361, 1
      %v7364 = vsel %vm988, %v7359, %v7363
      %v7405 = vunpack.c.l.b16 %v7030
      %v7406 = vunpack.c.l.b16 %v7031
      %v7407 = vunpack.c.l.b16 %v7032
      %v7408 = vunpack.c.l.b16 %v7033
      %v7409 = vunpack.c.l.b16 %v7034
      %v7410 = vunpack.c.l.b16 %v7035
      %v7411 = vunpack.c.l.b16 %v7036
      %v7412 = vunpack.c.l.b16 %v7037
      %v7413 = vunpack.c.l.b16 %v7038
      %v7414 = vunpack.c.l.b16 %v7039
      %v7415 = vunpack.c.l.b16 %v7040
      %v7416 = vunpack.c.l.b16 %v7041
      %v7417 = vunpack.c.l.b16 %v7042
      %v7418 = vunpack.c.l.b16 %v7043
      %v7419 = vunpack.c.l.b16 %v7044
      %v7420 = vunpack.c.l.b16 %v7045
      %v7421 = vpack.c.b16 %v7406, %v7405
      %v7422 = vpack.c.b16 %v7408, %v7407
      %v7423 = vpack.c.b16 %v7410, %v7409
      %v7424 = vpack.c.b16 %v7412, %v7411
      %v7425 = vpack.c.b16 %v7414, %v7413
      %v7426 = vpack.c.b16 %v7416, %v7415
      %v7427 = vpack.c.b16 %v7418, %v7417
      %v7428 = vpack.c.b16 %v7420, %v7419
      %7437 = vmatpush.bf16.msra.mxu0 %v7428
      %7438 = vmatpush.bf16.msra.mxu0 %v7427
      %7439 = vmatpush.bf16.msra.mxu0 %v7426
      %7440 = vmatpush.bf16.msra.mxu0 %v7425
      %7441 = vmatpush.bf16.msra.mxu0 %v7424
      %7442 = vmatpush.bf16.msra.mxu0 %v7423
      %7443 = vmatpush.bf16.msra.mxu0 %v7422
      %7444 = vmatpush.bf16.msra.mxu0 %v7421
      %7445 = vmatmul.bf16.gmra.mxu0 %v7180
      %v7446 = vpop.f32.mrf.mxu0
      %v7447 = vadd.f32 0.0, %v7446
      %v7448 = vpop.f32.mrf.mxu0
      %v7449 = vadd.f32 0.0, %v7448
      %7450 = vmatmul.bf16.gmra.mxu0 %v7188
      %v7451 = vpop.f32.mrf.mxu0
      %v7452 = vpop.f32.mrf.mxu0
      %v7453 = vadd.f32 0.0, %v7452
      %7454 = vmatmul.bf16.gmra.mxu0 %v7196
      %v7455 = vpop.f32.mrf.mxu0
      %v7456 = vadd.f32 0.0, %v7455
      %v7457 = vpop.f32.mrf.mxu0
      %7458 = vmatmul.bf16.gmra.mxu0 %v7204
      %v7459 = vpop.f32.mrf.mxu0
      %v7460 = vadd.f32 0.0, %v7459
      %v7461 = vpop.f32.mrf.mxu0
      %v7462 = vadd.f32 0.0, %v7461
      %7463 = vmatmul.bf16.gmra.mxu0 %v7212
      %v7464 = vpop.f32.mrf.mxu0
      %v7465 = vpop.f32.mrf.mxu0
      %v7466 = vadd.f32 0.0, %v7465
      %7467 = vmatmul.bf16.gmra.mxu0 %v7220
      %v7468 = vpop.f32.mrf.mxu0
      %v7469 = vadd.f32 0.0, %v7468
      %v7470 = vpop.f32.mrf.mxu0
      %7471 = vmatmul.bf16.gmra.mxu0 %v7228
      %v7472 = vpop.f32.mrf.mxu0
      %v7473 = vadd.f32 0.0, %v7472
      %v7474 = vpop.f32.mrf.mxu0
      %v7475 = vadd.f32 0.0, %v7474
      %7476 = vmatmul.bf16.gmra.mxu0 %v7236
      %v7477 = vpop.f32.mrf.mxu0
      %v7478 = vpop.f32.mrf.mxu0
      %v7479 = vadd.f32 0.0, %v7478
      %7480 = vmatmul.bf16.gmra.mxu0 %v7244
      %v7481 = vpop.f32.mrf.mxu0
      %v7482 = vadd.f32 0.0, %v7481
      %v7483 = vpop.f32.mrf.mxu0
      %7484 = vmatmul.bf16.gmra.mxu0 %v7252
      %v7485 = vpop.f32.mrf.mxu0
      %v7486 = vadd.f32 0.0, %v7485
      %v7487 = vpop.f32.mrf.mxu0
      %v7488 = vadd.f32 0.0, %v7487
      %7489 = vmatmul.bf16.gmra.mxu0 %v7260
      %v7490 = vpop.f32.mrf.mxu0
      %v7491 = vpop.f32.mrf.mxu0
      %v7492 = vadd.f32 0.0, %v7491
      %7493 = vmatmul.bf16.gmra.mxu0 %v7268
      %v7494 = vpop.f32.mrf.mxu0
      %v7495 = vadd.f32 0.0, %v7494
      %v7496 = vpop.f32.mrf.mxu0
      %7497 = vmatmul.bf16.gmra.mxu0 %v7276
      %v7498 = vpop.f32.mrf.mxu0
      %v7499 = vadd.f32 0.0, %v7498
      %v7500 = vpop.f32.mrf.mxu0
      %v7501 = vadd.f32 0.0, %v7500
      %7502 = vmatmul.bf16.gmra.mxu0 %v7284
      %v7503 = vpop.f32.mrf.mxu0
      %v7504 = vpop.f32.mrf.mxu0
      %v7505 = vadd.f32 0.0, %v7504
      %7506 = vmatmul.bf16.gmra.mxu0 %v7292
      %v7507 = vpop.f32.mrf.mxu0
      %v7508 = vadd.f32 0.0, %v7507
      %v7509 = vpop.f32.mrf.mxu0
      %7510 = vmatmul.bf16.gmra.mxu0 %v7300
      %v7511 = vpop.f32.mrf.mxu0
      %v7512 = vadd.f32 0.0, %v7511
      %v7513 = vpop.f32.mrf.mxu0
      %v7514 = vadd.f32 0.0, %v7513
      %7515 = vmatmul.bf16.gmra.mxu0 %v7308
      %v7516 = vpop.f32.mrf.mxu0
      %v7517 = vpop.f32.mrf.mxu0
      %v7518 = vadd.f32 0.0, %v7517
      %7519 = vmatmul.bf16.gmra.mxu0 %v7316
      %v7520 = vpop.f32.mrf.mxu0
      %v7521 = vadd.f32 0.0, %v7520
      %v7522 = vpop.f32.mrf.mxu0
      %7523 = vmatmul.bf16.gmra.mxu0 %v7324
      %v7524 = vpop.f32.mrf.mxu0
      %v7525 = vadd.f32 0.0, %v7524
      %v7526 = vpop.f32.mrf.mxu0
      %v7527 = vadd.f32 0.0, %v7526
      %7528 = vmatmul.bf16.gmra.mxu0 %v7332
      %v7529 = vpop.f32.mrf.mxu0
      %v7530 = vpop.f32.mrf.mxu0
      %v7531 = vadd.f32 0.0, %v7530
      %7532 = vmatmul.bf16.gmra.mxu0 %v7340
      %v7533 = vpop.f32.mrf.mxu0
      %v7534 = vadd.f32 0.0, %v7533
      %v7535 = vpop.f32.mrf.mxu0
      %7536 = vmatmul.bf16.gmra.mxu0 %v7348
      %v7537 = vpop.f32.mrf.mxu0
      %v7538 = vadd.f32 0.0, %v7537
      %v7539 = vpop.f32.mrf.mxu0
      %v7540 = vadd.f32 0.0, %v7539
      %7541 = vmatmul.bf16.gmra.mxu0 %v7356
      %v7542 = vpop.f32.mrf.mxu0
      %v7543 = vpop.f32.mrf.mxu0
      %v7544 = vadd.f32 0.0, %v7543
      %7545 = vmatmul.bf16.gmra.mxu0 %v7364
      %v7546 = vpop.f32.mrf.mxu0
      %v7547 = vadd.f32 0.0, %v7546
      %v7548 = vpop.f32.mrf.mxu0
      %7549 = vdwg.mxu0
      %v7550 = vadd.f32 %v6948, %v7447
      %v7551 = vadd.f32 %v6949, %v7449
      %v7552 = vadd.f32 %v6950, %v7453
      %v7553 = vadd.f32 %v6951, %v7456
      %v7554 = vadd.f32 %v6952, %v7460
      %v7555 = vadd.f32 %v6953, %v7462
      %v7556 = vadd.f32 %v6954, %v7466
      %v7557 = vadd.f32 %v6955, %v7469
      %v7558 = vadd.f32 %v6956, %v7473
      %v7559 = vadd.f32 %v6957, %v7475
      %v7560 = vadd.f32 %v6958, %v7479
      %v7561 = vadd.f32 %v6959, %v7482
      %v7562 = vadd.f32 %v6960, %v7486
      %v7563 = vadd.f32 %v6961, %v7488
      %v7564 = vadd.f32 %v6962, %v7492
      %v7565 = vadd.f32 %v6963, %v7495
      %v7566 = vadd.f32 %v6964, %v7499
      %v7567 = vadd.f32 %v6965, %v7501
      %v7568 = vadd.f32 %v6966, %v7505
      %v7569 = vadd.f32 %v6967, %v7508
      %v7570 = vadd.f32 %v6968, %v7512
      %v7571 = vadd.f32 %v6969, %v7514
      %v7572 = vadd.f32 %v6970, %v7518
      %v7573 = vadd.f32 %v6971, %v7521
      %v7574 = vadd.f32 %v6972, %v7525
      %v7575 = vadd.f32 %v6973, %v7527
      %v7576 = vadd.f32 %v6974, %v7531
      %v7577 = vadd.f32 %v6975, %v7534
      %v7578 = vadd.f32 %v6976, %v7538
      %v7579 = vadd.f32 %v6977, %v7540
      %v7580 = vadd.f32 %v6978, %v7544
      %v7581 = vadd.f32 %v6979, %v7547
      %v7582 = vld [vmem:[#allocation3 + $0xc] sm:$0xe]
      %s7583 = scalar_lea.vmem %s6, 320
      %v7584 = vld [vmem:[%s7583] sm:$0xf]
      %v7585 = vld [vmem:[%s7583 + $0x4] sm:$0xf]
      %v7586 = vld [vmem:[%s7583 + $0x8] sm:$0xf]
      %v7587 = vld [vmem:[%s7583 + $0xc] sm:$0xf]
      %v7588 = vld [vmem:[%s7583 + $0x10] sm:$0xf]
      %v7589 = vld [vmem:[%s7583 + $0x14] sm:$0xf]
      %v7590 = vld [vmem:[%s7583 + $0x18] sm:$0xf]
      %v7591 = vld [vmem:[%s7583 + $0x1c] sm:$0xf]
      %v7592 = vld [vmem:[%s7583 + $0x20] sm:$0xf]
      %v7593 = vld [vmem:[%s7583 + $0x24] sm:$0xf]
      %v7594 = vld [vmem:[%s7583 + $0x28] sm:$0xf]
      %v7595 = vld [vmem:[%s7583 + $0x2c] sm:$0xf]
      %v7596 = vld [vmem:[%s7583 + $0x30] sm:$0xf]
      %v7597 = vld [vmem:[%s7583 + $0x34] sm:$0xf]
      %v7598 = vld [vmem:[%s7583 + $0x38] sm:$0xf]
      %v7599 = vld [vmem:[%s7583 + $0x3c] sm:$0xf]
      %v7601 = vunpack.c.l.b16 %v7582
      %v7602 = vpack.c.b16 %v7096, %v7601
      %v7603 = vrot.slane %v7602, 1
      %v7604 = vrot.slane %v7145, 1
      %v7605 = vsel %vm1646, %v7603, %v7604
      %v7606 = vrot.slane %v7146, 1
      %v7607 = vsel %vm1646, %v7604, %v7606
      %v7608 = vrot.slane %v7147, 1
      %v7609 = vsel %vm1646, %v7606, %v7608
      %v7610 = vrot.slane %v7148, 1
      %v7611 = vsel %vm1646, %v7608, %v7610
      %v7612 = vrot.slane %v7149, 1
      %v7613 = vsel %vm1646, %v7610, %v7612
      %v7614 = vrot.slane %v7150, 1
      %v7615 = vsel %vm1646, %v7612, %v7614
      %v7616 = vrot.slane %v7151, 1
      %v7617 = vsel %vm1646, %v7614, %v7616
      %v7618 = vrot.slane %v7152, 1
      %v7619 = vsel %vm1646, %v7616, %v7618
      %v7620 = vrot.slane %v7153, 1
      %v7621 = vsel %vm1646, %v7618, %v7620
      %v7622 = vrot.slane %v7154, 1
      %v7623 = vsel %vm1646, %v7620, %v7622
      %v7624 = vrot.slane %v7155, 1
      %v7625 = vsel %vm1646, %v7622, %v7624
      %v7626 = vrot.slane %v7156, 1
      %v7627 = vsel %vm1646, %v7624, %v7626
      %v7628 = vrot.slane %v7157, 1
      %v7629 = vsel %vm1646, %v7626, %v7628
      %v7630 = vrot.slane %v7158, 1
      %v7631 = vsel %vm1646, %v7628, %v7630
      %v7632 = vrot.slane %v7159, 1
      %v7633 = vsel %vm1646, %v7630, %v7632
      %v7634 = vrot.slane %v7160, 1
      %v7635 = vsel %vm1646, %v7632, %v7634
      %v7636 = vrot.slane %v7161, 1
      %v7637 = vsel %vm1646, %v7634, %v7636
      %v7638 = vrot.slane %v7162, 1
      %v7639 = vsel %vm1646, %v7636, %v7638
      %v7640 = vrot.slane %v7163, 1
      %v7641 = vsel %vm1646, %v7638, %v7640
      %v7642 = vrot.slane %v7164, 1
      %v7643 = vsel %vm1646, %v7640, %v7642
      %v7644 = vrot.slane %v7165, 1
      %v7645 = vsel %vm1646, %v7642, %v7644
      %v7646 = vrot.slane %v7166, 1
      %v7647 = vsel %vm1646, %v7644, %v7646
      %v7648 = vrot.slane %v7167, 1
      %v7649 = vsel %vm1646, %v7646, %v7648
      %v7650 = vrot.slane %v7168, 1
      %v7651 = vsel %vm1646, %v7648, %v7650
      %v7692 = vunpack.c.l.b16 %v7584
      %v7693 = vunpack.c.l.b16 %v7585
      %v7694 = vunpack.c.l.b16 %v7586
      %v7695 = vunpack.c.l.b16 %v7587
      %v7696 = vunpack.c.l.b16 %v7588
      %v7697 = vunpack.c.l.b16 %v7589
      %v7698 = vunpack.c.l.b16 %v7590
      %v7699 = vunpack.c.l.b16 %v7591
      %v7700 = vunpack.c.l.b16 %v7592
      %v7701 = vunpack.c.l.b16 %v7593
      %v7702 = vunpack.c.l.b16 %v7594
      %v7703 = vunpack.c.l.b16 %v7595
      %v7704 = vunpack.c.l.b16 %v7596
      %v7705 = vunpack.c.l.b16 %v7597
      %v7706 = vunpack.c.l.b16 %v7598
      %v7707 = vunpack.c.l.b16 %v7599
      %v7708 = vpack.c.b16 %v7693, %v7692
      %v7709 = vpack.c.b16 %v7695, %v7694
      %v7710 = vpack.c.b16 %v7697, %v7696
      %v7711 = vpack.c.b16 %v7699, %v7698
      %v7712 = vpack.c.b16 %v7701, %v7700
      %v7713 = vpack.c.b16 %v7703, %v7702
      %v7714 = vpack.c.b16 %v7705, %v7704
      %v7715 = vpack.c.b16 %v7707, %v7706
      %7724 = vmatpush.bf16.msra.mxu0 %v7715
      %7725 = vmatpush.bf16.msra.mxu0 %v7714
      %7726 = vmatpush.bf16.msra.mxu0 %v7713
      %7727 = vmatpush.bf16.msra.mxu0 %v7712
      %7728 = vmatpush.bf16.msra.mxu0 %v7711
      %7729 = vmatpush.bf16.msra.mxu0 %v7710
      %7730 = vmatpush.bf16.msra.mxu0 %v7709
      %7731 = vmatpush.bf16.msra.mxu0 %v7708
      %7732 = vmatmul.bf16.gmra.mxu0 %v7605
      %v7733 = vpop.f32.mrf.mxu0
      %v7734 = vadd.f32 0.0, %v7733
      %v7735 = vpop.f32.mrf.mxu0
      %v7736 = vadd.f32 0.0, %v7735
      %7737 = vmatmul.bf16.gmra.mxu0 %v7607
      %v7738 = vpop.f32.mrf.mxu0
      %v7739 = vpop.f32.mrf.mxu0
      %v7740 = vadd.f32 0.0, %v7739
      %7741 = vmatmul.bf16.gmra.mxu0 %v7609
      %v7742 = vpop.f32.mrf.mxu0
      %v7743 = vadd.f32 0.0, %v7742
      %v7744 = vpop.f32.mrf.mxu0
      %7745 = vmatmul.bf16.gmra.mxu0 %v7611
      %v7746 = vpop.f32.mrf.mxu0
      %v7747 = vadd.f32 0.0, %v7746
      %v7748 = vpop.f32.mrf.mxu0
      %v7749 = vadd.f32 0.0, %v7748
      %7750 = vmatmul.bf16.gmra.mxu0 %v7613
      %v7751 = vpop.f32.mrf.mxu0
      %v7752 = vpop.f32.mrf.mxu0
      %v7753 = vadd.f32 0.0, %v7752
      %7754 = vmatmul.bf16.gmra.mxu0 %v7615
      %v7755 = vpop.f32.mrf.mxu0
      %v7756 = vadd.f32 0.0, %v7755
      %v7757 = vpop.f32.mrf.mxu0
      %7758 = vmatmul.bf16.gmra.mxu0 %v7617
      %v7759 = vpop.f32.mrf.mxu0
      %v7760 = vadd.f32 0.0, %v7759
      %v7761 = vpop.f32.mrf.mxu0
      %v7762 = vadd.f32 0.0, %v7761
      %7763 = vmatmul.bf16.gmra.mxu0 %v7619
      %v7764 = vpop.f32.mrf.mxu0
      %v7765 = vpop.f32.mrf.mxu0
      %v7766 = vadd.f32 0.0, %v7765
      %7767 = vmatmul.bf16.gmra.mxu0 %v7621
      %v7768 = vpop.f32.mrf.mxu0
      %v7769 = vadd.f32 0.0, %v7768
      %v7770 = vpop.f32.mrf.mxu0
      %7771 = vmatmul.bf16.gmra.mxu0 %v7623
      %v7772 = vpop.f32.mrf.mxu0
      %v7773 = vadd.f32 0.0, %v7772
      %v7774 = vpop.f32.mrf.mxu0
      %v7775 = vadd.f32 0.0, %v7774
      %7776 = vmatmul.bf16.gmra.mxu0 %v7625
      %v7777 = vpop.f32.mrf.mxu0
      %v7778 = vpop.f32.mrf.mxu0
      %v7779 = vadd.f32 0.0, %v7778
      %7780 = vmatmul.bf16.gmra.mxu0 %v7627
      %v7781 = vpop.f32.mrf.mxu0
      %v7782 = vadd.f32 0.0, %v7781
      %v7783 = vpop.f32.mrf.mxu0
      %7784 = vmatmul.bf16.gmra.mxu0 %v7629
      %v7785 = vpop.f32.mrf.mxu0
      %v7786 = vadd.f32 0.0, %v7785
      %v7787 = vpop.f32.mrf.mxu0
      %v7788 = vadd.f32 0.0, %v7787
      %7789 = vmatmul.bf16.gmra.mxu0 %v7631
      %v7790 = vpop.f32.mrf.mxu0
      %v7791 = vpop.f32.mrf.mxu0
      %v7792 = vadd.f32 0.0, %v7791
      %7793 = vmatmul.bf16.gmra.mxu0 %v7633
      %v7794 = vpop.f32.mrf.mxu0
      %v7795 = vadd.f32 0.0, %v7794
      %v7796 = vpop.f32.mrf.mxu0
      %7797 = vmatmul.bf16.gmra.mxu0 %v7635
      %v7798 = vpop.f32.mrf.mxu0
      %v7799 = vadd.f32 0.0, %v7798
      %v7800 = vpop.f32.mrf.mxu0
      %v7801 = vadd.f32 0.0, %v7800
      %7802 = vmatmul.bf16.gmra.mxu0 %v7637
      %v7803 = vpop.f32.mrf.mxu0
      %v7804 = vpop.f32.mrf.mxu0
      %v7805 = vadd.f32 0.0, %v7804
      %7806 = vmatmul.bf16.gmra.mxu0 %v7639
      %v7807 = vpop.f32.mrf.mxu0
      %v7808 = vadd.f32 0.0, %v7807
      %v7809 = vpop.f32.mrf.mxu0
      %7810 = vmatmul.bf16.gmra.mxu0 %v7641
      %v7811 = vpop.f32.mrf.mxu0
      %v7812 = vadd.f32 0.0, %v7811
      %v7813 = vpop.f32.mrf.mxu0
      %v7814 = vadd.f32 0.0, %v7813
      %7815 = vmatmul.bf16.gmra.mxu0 %v7643
      %v7816 = vpop.f32.mrf.mxu0
      %v7817 = vpop.f32.mrf.mxu0
      %v7818 = vadd.f32 0.0, %v7817
      %7819 = vmatmul.bf16.gmra.mxu0 %v7645
      %v7820 = vpop.f32.mrf.mxu0
      %v7821 = vadd.f32 0.0, %v7820
      %v7822 = vpop.f32.mrf.mxu0
      %7823 = vmatmul.bf16.gmra.mxu0 %v7647
      %v7824 = vpop.f32.mrf.mxu0
      %v7825 = vadd.f32 0.0, %v7824
      %v7826 = vpop.f32.mrf.mxu0
      %v7827 = vadd.f32 0.0, %v7826
      %7828 = vmatmul.bf16.gmra.mxu0 %v7649
      %v7829 = vpop.f32.mrf.mxu0
      %v7830 = vpop.f32.mrf.mxu0
      %v7831 = vadd.f32 0.0, %v7830
      %7832 = vmatmul.bf16.gmra.mxu0 %v7651
      %v7833 = vpop.f32.mrf.mxu0
      %v7834 = vadd.f32 0.0, %v7833
      %v7835 = vpop.f32.mrf.mxu0
      %7836 = vdwg.mxu0
      %v7837 = vadd.f32 %v7550, %v7734
      %v7838 = vadd.f32 %v7551, %v7736
      %v7839 = vadd.f32 %v7552, %v7740
      %v7840 = vadd.f32 %v7553, %v7743
      %v7841 = vadd.f32 %v7554, %v7747
      %v7842 = vadd.f32 %v7555, %v7749
      %v7843 = vadd.f32 %v7556, %v7753
      %v7844 = vadd.f32 %v7557, %v7756
      %v7845 = vadd.f32 %v7558, %v7760
      %v7846 = vadd.f32 %v7559, %v7762
      %v7847 = vadd.f32 %v7560, %v7766
      %v7848 = vadd.f32 %v7561, %v7769
      %v7849 = vadd.f32 %v7562, %v7773
      %v7850 = vadd.f32 %v7563, %v7775
      %v7851 = vadd.f32 %v7564, %v7779
      %v7852 = vadd.f32 %v7565, %v7782
      %v7853 = vadd.f32 %v7566, %v7786
      %v7854 = vadd.f32 %v7567, %v7788
      %v7855 = vadd.f32 %v7568, %v7792
      %v7856 = vadd.f32 %v7569, %v7795
      %v7857 = vadd.f32 %v7570, %v7799
      %v7858 = vadd.f32 %v7571, %v7801
      %v7859 = vadd.f32 %v7572, %v7805
      %v7860 = vadd.f32 %v7573, %v7808
      %v7861 = vadd.f32 %v7574, %v7812
      %v7862 = vadd.f32 %v7575, %v7814
      %v7863 = vadd.f32 %v7576, %v7818
      %v7864 = vadd.f32 %v7577, %v7821
      %v7865 = vadd.f32 %v7578, %v7825
      %v7866 = vadd.f32 %v7579, %v7827
      %v7867 = vadd.f32 %v7580, %v7831
      %v7868 = vadd.f32 %v7581, %v7834
      %v7869 = vld [vmem:[#allocation3 + $0x18] sm:$0xf]
      %v7870 = vld [vmem:[#allocation3 + $0x1c] sm:$0xf]
      %v7871 = vld [vmem:[#allocation3 + $0x20] sm:$0xf]
      %v7872 = vld [vmem:[#allocation3 + $0x24] sm:$0xf]
      %v7873 = vld [vmem:[#allocation3 + $0x28] sm:$0xf]
      %v7874 = vld [vmem:[#allocation3 + $0x2c] sm:$0xf]
      %v7875 = vld [vmem:[#allocation3 + $0x30] sm:$0xf]
      %v7876 = vld [vmem:[#allocation3 + $0x34] sm:$0xf]
      %v7877 = vld [vmem:[#allocation3 + $0x38] sm:$0xf]
      %v7878 = vld [vmem:[#allocation3 + $0x3c] sm:$0xf]
      %v7879 = vld [vmem:[#allocation3 + $0x40] sm:$0xf]
      %v7880 = vld [vmem:[#allocation3 + $0x44] sm:$0xf]
      %v7881 = vld [vmem:[#allocation3 + $0x48] sm:$0xf]
      %v7882 = vld [vmem:[#allocation3 + $0x4c] sm:$0xf]
      %v7883 = vld [vmem:[#allocation3 + $0x50] sm:$0xf]
      %v7884 = vld [vmem:[#allocation3 + $0x54] sm:$0xf]
      %v7885 = vld [vmem:[#allocation3 + $0x58] sm:$0xf]
      %v7886 = vld [vmem:[#allocation3 + $0x5c] sm:$0xf]
      %v7887 = vld [vmem:[#allocation3 + $0x60] sm:$0xf]
      %v7888 = vld [vmem:[#allocation3 + $0x64] sm:$0xf]
      %v7889 = vld [vmem:[#allocation3 + $0x68] sm:$0xf]
      %v7890 = vld [vmem:[#allocation3 + $0x6c] sm:$0xf]
      %v7891 = vld [vmem:[#allocation3 + $0x70] sm:$0xf]
      %v7892 = vld [vmem:[#allocation3 + $0x74] sm:$0xf]
      %v7893 = vld [vmem:[#allocation3 + $0x78] sm:$0xf]
      %v7894 = vld [vmem:[#allocation3 + $0x7c] sm:$0xf]
      %v7895 = vld [vmem:[#allocation3 + $0x80] sm:$0xf]
      %v7896 = vld [vmem:[#allocation3 + $0x84] sm:$0xf]
      %v7897 = vld [vmem:[#allocation3 + $0x88] sm:$0xf]
      %v7898 = vld [vmem:[#allocation3 + $0x8c] sm:$0xf]
      %v7899 = vld [vmem:[#allocation3 + $0x90] sm:$0xf]
      %v7900 = vld [vmem:[#allocation3 + $0x94] sm:$0xf]
      %v7901 = vld [vmem:[#allocation3 + $0x98] sm:$0xf]
      %v7902 = vld [vmem:[#allocation3 + $0x9c] sm:$0xf]
      %v7903 = vld [vmem:[#allocation3 + $0xa0] sm:$0xf]
      %v7904 = vld [vmem:[#allocation3 + $0xa4] sm:$0xf]
      %v7905 = vld [vmem:[#allocation3 + $0xa8] sm:$0xf]
      %v7906 = vld [vmem:[#allocation3 + $0xac] sm:$0xf]
      %v7907 = vld [vmem:[#allocation3 + $0xb0] sm:$0xf]
      %v7908 = vld [vmem:[#allocation3 + $0xb4] sm:$0xf]
      %v7909 = vld [vmem:[#allocation3 + $0xb8] sm:$0xf]
      %v7910 = vld [vmem:[#allocation3 + $0xbc] sm:$0xf]
      %v7911 = vld [vmem:[#allocation3 + $0xc0] sm:$0xf]
      %v7912 = vld [vmem:[#allocation3 + $0xc4] sm:$0xf]
      %v7913 = vld [vmem:[#allocation3 + $0xc8] sm:$0xf]
      %v7914 = vld [vmem:[#allocation3 + $0xcc] sm:$0xf]
      %v7915 = vld [vmem:[#allocation3 + $0xd0] sm:$0xf]
      %v7916 = vld [vmem:[#allocation3 + $0xd4] sm:$0xf]
      %s7917 = scalar_lea.vmem %s6, 384
      %v7918 = vld [vmem:[%s7917] sm:$0xf]
      %v7919 = vld [vmem:[%s7917 + $0x4] sm:$0xf]
      %v7920 = vld [vmem:[%s7917 + $0x8] sm:$0xf]
      %v7921 = vld [vmem:[%s7917 + $0xc] sm:$0xf]
      %v7922 = vld [vmem:[%s7917 + $0x10] sm:$0xf]
      %v7923 = vld [vmem:[%s7917 + $0x14] sm:$0xf]
      %v7924 = vld [vmem:[%s7917 + $0x18] sm:$0xf]
      %v7925 = vld [vmem:[%s7917 + $0x1c] sm:$0xf]
      %v7926 = vld [vmem:[%s7917 + $0x20] sm:$0xf]
      %v7927 = vld [vmem:[%s7917 + $0x24] sm:$0xf]
      %v7928 = vld [vmem:[%s7917 + $0x28] sm:$0xf]
      %v7929 = vld [vmem:[%s7917 + $0x2c] sm:$0xf]
      %v7930 = vld [vmem:[%s7917 + $0x30] sm:$0xf]
      %v7931 = vld [vmem:[%s7917 + $0x34] sm:$0xf]
      %v7932 = vld [vmem:[%s7917 + $0x38] sm:$0xf]
      %v7933 = vld [vmem:[%s7917 + $0x3c] sm:$0xf]
      %v7982 = vunpack.c.l.b16 %v7869
      %v7983 = vunpack.c.l.b16 %v7870
      %v7984 = vunpack.c.l.b16 %v7871
      %v7985 = vunpack.c.l.b16 %v7872
      %v7986 = vunpack.c.l.b16 %v7873
      %v7987 = vunpack.c.l.b16 %v7874
      %v7988 = vunpack.c.l.b16 %v7875
      %v7989 = vunpack.c.l.b16 %v7876
      %v7990 = vunpack.c.l.b16 %v7877
      %v7991 = vunpack.c.l.b16 %v7878
      %v7992 = vunpack.c.l.b16 %v7879
      %v7993 = vunpack.c.l.b16 %v7880
      %v7994 = vunpack.c.l.b16 %v7881
      %v7995 = vunpack.c.l.b16 %v7882
      %v7996 = vunpack.c.l.b16 %v7883
      %v7997 = vunpack.c.l.b16 %v7884
      %v7998 = vunpack.c.l.b16 %v7885
      %v7999 = vunpack.c.l.b16 %v7886
      %v8000 = vunpack.c.l.b16 %v7887
      %v8001 = vunpack.c.l.b16 %v7888
      %v8002 = vunpack.c.l.b16 %v7889
      %v8003 = vunpack.c.l.b16 %v7890
      %v8004 = vunpack.c.l.b16 %v7891
      %v8005 = vunpack.c.l.b16 %v7892
      %v8006 = vunpack.c.l.b16 %v7893
      %v8007 = vunpack.c.l.b16 %v7894
      %v8008 = vunpack.c.l.b16 %v7895
      %v8009 = vunpack.c.l.b16 %v7896
      %v8010 = vunpack.c.l.b16 %v7897
      %v8011 = vunpack.c.l.b16 %v7898
      %v8012 = vunpack.c.l.b16 %v7899
      %v8013 = vunpack.c.l.b16 %v7900
      %v8014 = vunpack.c.l.b16 %v7901
      %v8015 = vunpack.c.l.b16 %v7902
      %v8016 = vunpack.c.l.b16 %v7903
      %v8017 = vunpack.c.l.b16 %v7904
      %v8018 = vunpack.c.l.b16 %v7905
      %v8019 = vunpack.c.l.b16 %v7906
      %v8020 = vunpack.c.l.b16 %v7907
      %v8021 = vunpack.c.l.b16 %v7908
      %v8022 = vunpack.c.l.b16 %v7909
      %v8023 = vunpack.c.l.b16 %v7910
      %v8024 = vunpack.c.l.b16 %v7911
      %v8025 = vunpack.c.l.b16 %v7912
      %v8026 = vunpack.c.l.b16 %v7913
      %v8027 = vunpack.c.l.b16 %v7914
      %v8028 = vunpack.c.l.b16 %v7915
      %v8029 = vunpack.c.l.b16 %v7916
      %v8030 = vpack.c.b16 %v7983, %v7982
      %v8031 = vpack.c.b16 %v7985, %v7984
      %v8032 = vpack.c.b16 %v7987, %v7986
      %v8033 = vpack.c.b16 %v7989, %v7988
      %v8034 = vpack.c.b16 %v7991, %v7990
      %v8035 = vpack.c.b16 %v7993, %v7992
      %v8036 = vpack.c.b16 %v7995, %v7994
      %v8037 = vpack.c.b16 %v7997, %v7996
      %v8038 = vpack.c.b16 %v7999, %v7998
      %v8039 = vpack.c.b16 %v8001, %v8000
      %v8040 = vpack.c.b16 %v8003, %v8002
      %v8041 = vpack.c.b16 %v8005, %v8004
      %v8042 = vpack.c.b16 %v8007, %v8006
      %v8043 = vpack.c.b16 %v8009, %v8008
      %v8044 = vpack.c.b16 %v8011, %v8010
      %v8045 = vpack.c.b16 %v8013, %v8012
      %v8046 = vpack.c.b16 %v8015, %v8014
      %v8047 = vpack.c.b16 %v8017, %v8016
      %v8048 = vpack.c.b16 %v8019, %v8018
      %v8049 = vpack.c.b16 %v8021, %v8020
      %v8050 = vpack.c.b16 %v8023, %v8022
      %v8051 = vpack.c.b16 %v8025, %v8024
      %v8052 = vpack.c.b16 %v8027, %v8026
      %v8053 = vpack.c.b16 %v8029, %v8028
      %v8094 = vunpack.c.l.b16 %v7918
      %v8095 = vunpack.c.l.b16 %v7919
      %v8096 = vunpack.c.l.b16 %v7920
      %v8097 = vunpack.c.l.b16 %v7921
      %v8098 = vunpack.c.l.b16 %v7922
      %v8099 = vunpack.c.l.b16 %v7923
      %v8100 = vunpack.c.l.b16 %v7924
      %v8101 = vunpack.c.l.b16 %v7925
      %v8102 = vunpack.c.l.b16 %v7926
      %v8103 = vunpack.c.l.b16 %v7927
      %v8104 = vunpack.c.l.b16 %v7928
      %v8105 = vunpack.c.l.b16 %v7929
      %v8106 = vunpack.c.l.b16 %v7930
      %v8107 = vunpack.c.l.b16 %v7931
      %v8108 = vunpack.c.l.b16 %v7932
      %v8109 = vunpack.c.l.b16 %v7933
      %v8110 = vpack.c.b16 %v8095, %v8094
      %v8111 = vpack.c.b16 %v8097, %v8096
      %v8112 = vpack.c.b16 %v8099, %v8098
      %v8113 = vpack.c.b16 %v8101, %v8100
      %v8114 = vpack.c.b16 %v8103, %v8102
      %v8115 = vpack.c.b16 %v8105, %v8104
      %v8116 = vpack.c.b16 %v8107, %v8106
      %v8117 = vpack.c.b16 %v8109, %v8108
      %8126 = vmatpush.bf16.msra.mxu0 %v8117
      %8127 = vmatpush.bf16.msra.mxu0 %v8116
      %8128 = vmatpush.bf16.msra.mxu0 %v8115
      %8129 = vmatpush.bf16.msra.mxu0 %v8114
      %8130 = vmatpush.bf16.msra.mxu0 %v8113
      %8131 = vmatpush.bf16.msra.mxu0 %v8112
      %8132 = vmatpush.bf16.msra.mxu0 %v8111
      %8133 = vmatpush.bf16.msra.mxu0 %v8110
      %8134 = vmatmul.bf16.gmra.mxu0 %v8030
      %v8135 = vpop.f32.mrf.mxu0
      %v8136 = vadd.f32 0.0, %v8135
      %v8137 = vpop.f32.mrf.mxu0
      %v8138 = vadd.f32 0.0, %v8137
      %8139 = vmatmul.bf16.gmra.mxu0 %v8031
      %v8140 = vpop.f32.mrf.mxu0
      %v8141 = vpop.f32.mrf.mxu0
      %v8142 = vadd.f32 0.0, %v8141
      %8143 = vmatmul.bf16.gmra.mxu0 %v8032
      %v8144 = vpop.f32.mrf.mxu0
      %v8145 = vadd.f32 0.0, %v8144
      %v8146 = vpop.f32.mrf.mxu0
      %8147 = vmatmul.bf16.gmra.mxu0 %v8033
      %v8148 = vpop.f32.mrf.mxu0
      %v8149 = vadd.f32 0.0, %v8148
      %v8150 = vpop.f32.mrf.mxu0
      %v8151 = vadd.f32 0.0, %v8150
      %8152 = vmatmul.bf16.gmra.mxu0 %v8034
      %v8153 = vpop.f32.mrf.mxu0
      %v8154 = vpop.f32.mrf.mxu0
      %v8155 = vadd.f32 0.0, %v8154
      %8156 = vmatmul.bf16.gmra.mxu0 %v8035
      %v8157 = vpop.f32.mrf.mxu0
      %v8158 = vadd.f32 0.0, %v8157
      %v8159 = vpop.f32.mrf.mxu0
      %8160 = vmatmul.bf16.gmra.mxu0 %v8036
      %v8161 = vpop.f32.mrf.mxu0
      %v8162 = vadd.f32 0.0, %v8161
      %v8163 = vpop.f32.mrf.mxu0
      %v8164 = vadd.f32 0.0, %v8163
      %8165 = vmatmul.bf16.gmra.mxu0 %v8037
      %v8166 = vpop.f32.mrf.mxu0
      %v8167 = vpop.f32.mrf.mxu0
      %v8168 = vadd.f32 0.0, %v8167
      %8169 = vmatmul.bf16.gmra.mxu0 %v8038
      %v8170 = vpop.f32.mrf.mxu0
      %v8171 = vadd.f32 0.0, %v8170
      %v8172 = vpop.f32.mrf.mxu0
      %8173 = vmatmul.bf16.gmra.mxu0 %v8039
      %v8174 = vpop.f32.mrf.mxu0
      %v8175 = vadd.f32 0.0, %v8174
      %v8176 = vpop.f32.mrf.mxu0
      %v8177 = vadd.f32 0.0, %v8176
      %8178 = vmatmul.bf16.gmra.mxu0 %v8040
      %v8179 = vpop.f32.mrf.mxu0
      %v8180 = vpop.f32.mrf.mxu0
      %v8181 = vadd.f32 0.0, %v8180
      %8182 = vmatmul.bf16.gmra.mxu0 %v8041
      %v8183 = vpop.f32.mrf.mxu0
      %v8184 = vadd.f32 0.0, %v8183
      %v8185 = vpop.f32.mrf.mxu0
      %8186 = vmatmul.bf16.gmra.mxu0 %v8042
      %v8187 = vpop.f32.mrf.mxu0
      %v8188 = vadd.f32 0.0, %v8187
      %v8189 = vpop.f32.mrf.mxu0
      %v8190 = vadd.f32 0.0, %v8189
      %8191 = vmatmul.bf16.gmra.mxu0 %v8043
      %v8192 = vpop.f32.mrf.mxu0
      %v8193 = vpop.f32.mrf.mxu0
      %v8194 = vadd.f32 0.0, %v8193
      %8195 = vmatmul.bf16.gmra.mxu0 %v8044
      %v8196 = vpop.f32.mrf.mxu0
      %v8197 = vadd.f32 0.0, %v8196
      %v8198 = vpop.f32.mrf.mxu0
      %8199 = vmatmul.bf16.gmra.mxu0 %v8045
      %v8200 = vpop.f32.mrf.mxu0
      %v8201 = vadd.f32 0.0, %v8200
      %v8202 = vpop.f32.mrf.mxu0
      %v8203 = vadd.f32 0.0, %v8202
      %8204 = vmatmul.bf16.gmra.mxu0 %v8046
      %v8205 = vpop.f32.mrf.mxu0
      %v8206 = vpop.f32.mrf.mxu0
      %v8207 = vadd.f32 0.0, %v8206
      %8208 = vmatmul.bf16.gmra.mxu0 %v8047
      %v8209 = vpop.f32.mrf.mxu0
      %v8210 = vadd.f32 0.0, %v8209
      %v8211 = vpop.f32.mrf.mxu0
      %8212 = vmatmul.bf16.gmra.mxu0 %v8048
      %v8213 = vpop.f32.mrf.mxu0
      %v8214 = vadd.f32 0.0, %v8213
      %v8215 = vpop.f32.mrf.mxu0
      %v8216 = vadd.f32 0.0, %v8215
      %8217 = vmatmul.bf16.gmra.mxu0 %v8049
      %v8218 = vpop.f32.mrf.mxu0
      %v8219 = vpop.f32.mrf.mxu0
      %v8220 = vadd.f32 0.0, %v8219
      %8221 = vmatmul.bf16.gmra.mxu0 %v8050
      %v8222 = vpop.f32.mrf.mxu0
      %v8223 = vadd.f32 0.0, %v8222
      %v8224 = vpop.f32.mrf.mxu0
      %8225 = vmatmul.bf16.gmra.mxu0 %v8051
      %v8226 = vpop.f32.mrf.mxu0
      %v8227 = vadd.f32 0.0, %v8226
      %v8228 = vpop.f32.mrf.mxu0
      %v8229 = vadd.f32 0.0, %v8228
      %8230 = vmatmul.bf16.gmra.mxu0 %v8052
      %v8231 = vpop.f32.mrf.mxu0
      %v8232 = vpop.f32.mrf.mxu0
      %v8233 = vadd.f32 0.0, %v8232
      %8234 = vmatmul.bf16.gmra.mxu0 %v8053
      %v8235 = vpop.f32.mrf.mxu0
      %v8236 = vadd.f32 0.0, %v8235
      %v8237 = vpop.f32.mrf.mxu0
      %8238 = vdwg.mxu0
      %v8239 = vadd.f32 %v7837, %v8136
      %v8240 = vadd.f32 %v7838, %v8138
      %v8241 = vadd.f32 %v7839, %v8142
      %v8242 = vadd.f32 %v7840, %v8145
      %v8243 = vadd.f32 %v7841, %v8149
      %v8244 = vadd.f32 %v7842, %v8151
      %v8245 = vadd.f32 %v7843, %v8155
      %v8246 = vadd.f32 %v7844, %v8158
      %v8247 = vadd.f32 %v7845, %v8162
      %v8248 = vadd.f32 %v7846, %v8164
      %v8249 = vadd.f32 %v7847, %v8168
      %v8250 = vadd.f32 %v7848, %v8171
      %v8251 = vadd.f32 %v7849, %v8175
      %v8252 = vadd.f32 %v7850, %v8177
      %v8253 = vadd.f32 %v7851, %v8181
      %v8254 = vadd.f32 %v7852, %v8184
      %v8255 = vadd.f32 %v7853, %v8188
      %v8256 = vadd.f32 %v7854, %v8190
      %v8257 = vadd.f32 %v7855, %v8194
      %v8258 = vadd.f32 %v7856, %v8197
      %v8259 = vadd.f32 %v7857, %v8201
      %v8260 = vadd.f32 %v7858, %v8203
      %v8261 = vadd.f32 %v7859, %v8207
      %v8262 = vadd.f32 %v7860, %v8210
      %v8263 = vadd.f32 %v7861, %v8214
      %v8264 = vadd.f32 %v7862, %v8216
      %v8265 = vadd.f32 %v7863, %v8220
      %v8266 = vadd.f32 %v7864, %v8223
      %v8267 = vadd.f32 %v7865, %v8227
      %v8268 = vadd.f32 %v7866, %v8229
      %v8269 = vadd.f32 %v7867, %v8233
      %v8270 = vadd.f32 %v7868, %v8236
      %v8271 = vld [vmem:[#allocation3 + $0x18] sm:$0xf]
      %v8272 = vld [vmem:[#allocation3 + $0x1c] sm:$0xf]
      %v8273 = vld [vmem:[#allocation3 + $0x20] sm:$0xf]
      %v8274 = vld [vmem:[#allocation3 + $0x24] sm:$0xf]
      %v8275 = vld [vmem:[#allocation3 + $0x28] sm:$0xf]
      %v8276 = vld [vmem:[#allocation3 + $0x2c] sm:$0xf]
      %v8277 = vld [vmem:[#allocation3 + $0x30] sm:$0xf]
      %v8278 = vld [vmem:[#allocation3 + $0x34] sm:$0xf]
      %v8279 = vld [vmem:[#allocation3 + $0x38] sm:$0xf]
      %v8280 = vld [vmem:[#allocation3 + $0x3c] sm:$0xf]
      %v8281 = vld [vmem:[#allocation3 + $0x40] sm:$0xf]
      %v8282 = vld [vmem:[#allocation3 + $0x44] sm:$0xf]
      %v8283 = vld [vmem:[#allocation3 + $0x48] sm:$0xf]
      %v8284 = vld [vmem:[#allocation3 + $0x4c] sm:$0xf]
      %v8285 = vld [vmem:[#allocation3 + $0x50] sm:$0xf]
      %v8286 = vld [vmem:[#allocation3 + $0x54] sm:$0xf]
      %v8287 = vld [vmem:[#allocation3 + $0x58] sm:$0xf]
      %v8288 = vld [vmem:[#allocation3 + $0x5c] sm:$0xf]
      %v8289 = vld [vmem:[#allocation3 + $0x60] sm:$0xf]
      %v8290 = vld [vmem:[#allocation3 + $0x64] sm:$0xf]
      %v8291 = vld [vmem:[#allocation3 + $0x68] sm:$0xf]
      %v8292 = vld [vmem:[#allocation3 + $0x6c] sm:$0xf]
      %v8293 = vld [vmem:[#allocation3 + $0x70] sm:$0xf]
      %v8294 = vld [vmem:[#allocation3 + $0x74] sm:$0xf]
      %v8295 = vld [vmem:[#allocation3 + $0x78] sm:$0xf]
      %v8296 = vld [vmem:[#allocation3 + $0x7c] sm:$0xf]
      %v8297 = vld [vmem:[#allocation3 + $0x80] sm:$0xf]
      %v8298 = vld [vmem:[#allocation3 + $0x84] sm:$0xf]
      %v8299 = vld [vmem:[#allocation3 + $0x88] sm:$0xf]
      %v8300 = vld [vmem:[#allocation3 + $0x8c] sm:$0xf]
      %v8301 = vld [vmem:[#allocation3 + $0x90] sm:$0xf]
      %v8302 = vld [vmem:[#allocation3 + $0x94] sm:$0xf]
      %v8303 = vld [vmem:[#allocation3 + $0x98] sm:$0xf]
      %v8304 = vld [vmem:[#allocation3 + $0x9c] sm:$0xf]
      %v8305 = vld [vmem:[#allocation3 + $0xa0] sm:$0xf]
      %v8306 = vld [vmem:[#allocation3 + $0xa4] sm:$0xf]
      %v8307 = vld [vmem:[#allocation3 + $0xa8] sm:$0xf]
      %v8308 = vld [vmem:[#allocation3 + $0xac] sm:$0xf]
      %v8309 = vld [vmem:[#allocation3 + $0xb0] sm:$0xf]
      %v8310 = vld [vmem:[#allocation3 + $0xb4] sm:$0xf]
      %v8311 = vld [vmem:[#allocation3 + $0xb8] sm:$0xf]
      %v8312 = vld [vmem:[#allocation3 + $0xbc] sm:$0xf]
      %v8313 = vld [vmem:[#allocation3 + $0xc0] sm:$0xf]
      %v8314 = vld [vmem:[#allocation3 + $0xc4] sm:$0xf]
      %v8315 = vld [vmem:[#allocation3 + $0xc8] sm:$0xf]
      %v8316 = vld [vmem:[#allocation3 + $0xcc] sm:$0xf]
      %v8317 = vld [vmem:[#allocation3 + $0xd0] sm:$0xf]
      %v8318 = vld [vmem:[#allocation3 + $0xd4] sm:$0xf]
      %v8319 = vld [vmem:[#allocation3 + $0xd8] sm:$0x1]
      %s8320 = scalar_lea.vmem %s6, 448
      %v8321 = vld [vmem:[%s8320] sm:$0xf]
      %v8322 = vld [vmem:[%s8320 + $0x4] sm:$0xf]
      %v8323 = vld [vmem:[%s8320 + $0x8] sm:$0xf]
      %v8324 = vld [vmem:[%s8320 + $0xc] sm:$0xf]
      %v8325 = vld [vmem:[%s8320 + $0x10] sm:$0xf]
      %v8326 = vld [vmem:[%s8320 + $0x14] sm:$0xf]
      %v8327 = vld [vmem:[%s8320 + $0x18] sm:$0xf]
      %v8328 = vld [vmem:[%s8320 + $0x1c] sm:$0xf]
      %v8329 = vld [vmem:[%s8320 + $0x20] sm:$0xf]
      %v8330 = vld [vmem:[%s8320 + $0x24] sm:$0xf]
      %v8331 = vld [vmem:[%s8320 + $0x28] sm:$0xf]
      %v8332 = vld [vmem:[%s8320 + $0x2c] sm:$0xf]
      %v8333 = vld [vmem:[%s8320 + $0x30] sm:$0xf]
      %v8334 = vld [vmem:[%s8320 + $0x34] sm:$0xf]
      %v8335 = vld [vmem:[%s8320 + $0x38] sm:$0xf]
      %v8336 = vld [vmem:[%s8320 + $0x3c] sm:$0xf]
      %v8386 = vunpack.c.l.b16 %v8271
      %v8387 = vunpack.c.l.b16 %v8272
      %v8388 = vunpack.c.l.b16 %v8273
      %v8389 = vunpack.c.l.b16 %v8274
      %v8390 = vunpack.c.l.b16 %v8275
      %v8391 = vunpack.c.l.b16 %v8276
      %v8392 = vunpack.c.l.b16 %v8277
      %v8393 = vunpack.c.l.b16 %v8278
      %v8394 = vunpack.c.l.b16 %v8279
      %v8395 = vunpack.c.l.b16 %v8280
      %v8396 = vunpack.c.l.b16 %v8281
      %v8397 = vunpack.c.l.b16 %v8282
      %v8398 = vunpack.c.l.b16 %v8283
      %v8399 = vunpack.c.l.b16 %v8284
      %v8400 = vunpack.c.l.b16 %v8285
      %v8401 = vunpack.c.l.b16 %v8286
      %v8402 = vunpack.c.l.b16 %v8287
      %v8403 = vunpack.c.l.b16 %v8288
      %v8404 = vunpack.c.l.b16 %v8289
      %v8405 = vunpack.c.l.b16 %v8290
      %v8406 = vunpack.c.l.b16 %v8291
      %v8407 = vunpack.c.l.b16 %v8292
      %v8408 = vunpack.c.l.b16 %v8293
      %v8409 = vunpack.c.l.b16 %v8294
      %v8410 = vunpack.c.l.b16 %v8295
      %v8411 = vunpack.c.l.b16 %v8296
      %v8412 = vunpack.c.l.b16 %v8297
      %v8413 = vunpack.c.l.b16 %v8298
      %v8414 = vunpack.c.l.b16 %v8299
      %v8415 = vunpack.c.l.b16 %v8300
      %v8416 = vunpack.c.l.b16 %v8301
      %v8417 = vunpack.c.l.b16 %v8302
      %v8418 = vunpack.c.l.b16 %v8303
      %v8419 = vunpack.c.l.b16 %v8304
      %v8420 = vunpack.c.l.b16 %v8305
      %v8421 = vunpack.c.l.b16 %v8306
      %v8422 = vunpack.c.l.b16 %v8307
      %v8423 = vunpack.c.l.b16 %v8308
      %v8424 = vunpack.c.l.b16 %v8309
      %v8425 = vunpack.c.l.b16 %v8310
      %v8426 = vunpack.c.l.b16 %v8311
      %v8427 = vunpack.c.l.b16 %v8312
      %v8428 = vunpack.c.l.b16 %v8313
      %v8429 = vunpack.c.l.b16 %v8314
      %v8430 = vunpack.c.l.b16 %v8315
      %v8431 = vunpack.c.l.b16 %v8316
      %v8432 = vunpack.c.l.b16 %v8317
      %v8433 = vunpack.c.l.b16 %v8318
      %v8434 = vunpack.c.l.b16 %v8319
      %v8435 = vpack.c.b16 %v8387, %v8386
      %v8436 = vpack.c.b16 %v8389, %v8388
      %v8437 = vpack.c.b16 %v8391, %v8390
      %v8438 = vpack.c.b16 %v8393, %v8392
      %v8439 = vpack.c.b16 %v8395, %v8394
      %v8440 = vpack.c.b16 %v8397, %v8396
      %v8441 = vpack.c.b16 %v8399, %v8398
      %v8442 = vpack.c.b16 %v8401, %v8400
      %v8443 = vpack.c.b16 %v8403, %v8402
      %v8444 = vpack.c.b16 %v8405, %v8404
      %v8445 = vpack.c.b16 %v8407, %v8406
      %v8446 = vpack.c.b16 %v8409, %v8408
      %v8447 = vpack.c.b16 %v8411, %v8410
      %v8448 = vpack.c.b16 %v8413, %v8412
      %v8449 = vpack.c.b16 %v8415, %v8414
      %v8450 = vpack.c.b16 %v8417, %v8416
      %v8451 = vpack.c.b16 %v8419, %v8418
      %v8452 = vpack.c.b16 %v8421, %v8420
      %v8453 = vpack.c.b16 %v8423, %v8422
      %v8454 = vpack.c.b16 %v8425, %v8424
      %v8455 = vpack.c.b16 %v8427, %v8426
      %v8456 = vpack.c.b16 %v8429, %v8428
      %v8457 = vpack.c.b16 %v8431, %v8430
      %v8458 = vpack.c.b16 %v8433, %v8432
      %v8459 = vpack.c.b16 %v8434, %v8434
      %v8461 = vshrl.u32 %v8435, 16
      %v8463 = vshll.u32 %v8435, 16
      %v8465 = vrot.slane %v8463, 1
      %v8466 = vor.u32 %v8461, %v8465
      %v8468 = vshll.u32 %v8436, 16
      %v8470 = vrot.slane %v8468, 1
      %v8471 = vsel %vm988, %v8466, %v8470
      %v8472 = vshrl.u32 %v8436, 16
      %v8474 = vor.u32 %v8472, %v8470
      %v8476 = vshll.u32 %v8437, 16
      %v8478 = vrot.slane %v8476, 1
      %v8479 = vsel %vm988, %v8474, %v8478
      %v8480 = vshrl.u32 %v8437, 16
      %v8482 = vor.u32 %v8480, %v8478
      %v8484 = vshll.u32 %v8438, 16
      %v8486 = vrot.slane %v8484, 1
      %v8487 = vsel %vm988, %v8482, %v8486
      %v8488 = vshrl.u32 %v8438, 16
      %v8490 = vor.u32 %v8488, %v8486
      %v8492 = vshll.u32 %v8439, 16
      %v8494 = vrot.slane %v8492, 1
      %v8495 = vsel %vm988, %v8490, %v8494
      %v8496 = vshrl.u32 %v8439, 16
      %v8498 = vor.u32 %v8496, %v8494
      %v8500 = vshll.u32 %v8440, 16
      %v8502 = vrot.slane %v8500, 1
      %v8503 = vsel %vm988, %v8498, %v8502
      %v8504 = vshrl.u32 %v8440, 16
      %v8506 = vor.u32 %v8504, %v8502
      %v8508 = vshll.u32 %v8441, 16
      %v8510 = vrot.slane %v8508, 1
      %v8511 = vsel %vm988, %v8506, %v8510
      %v8512 = vshrl.u32 %v8441, 16
      %v8514 = vor.u32 %v8512, %v8510
      %v8516 = vshll.u32 %v8442, 16
      %v8518 = vrot.slane %v8516, 1
      %v8519 = vsel %vm988, %v8514, %v8518
      %v8520 = vshrl.u32 %v8442, 16
      %v8522 = vor.u32 %v8520, %v8518
      %v8524 = vshll.u32 %v8443, 16
      %v8526 = vrot.slane %v8524, 1
      %v8527 = vsel %vm988, %v8522, %v8526
      %v8528 = vshrl.u32 %v8443, 16
      %v8530 = vor.u32 %v8528, %v8526
      %v8532 = vshll.u32 %v8444, 16
      %v8534 = vrot.slane %v8532, 1
      %v8535 = vsel %vm988, %v8530, %v8534
      %v8536 = vshrl.u32 %v8444, 16
      %v8538 = vor.u32 %v8536, %v8534
      %v8540 = vshll.u32 %v8445, 16
      %v8542 = vrot.slane %v8540, 1
      %v8543 = vsel %vm988, %v8538, %v8542
      %v8544 = vshrl.u32 %v8445, 16
      %v8546 = vor.u32 %v8544, %v8542
      %v8548 = vshll.u32 %v8446, 16
      %v8550 = vrot.slane %v8548, 1
      %v8551 = vsel %vm988, %v8546, %v8550
      %v8552 = vshrl.u32 %v8446, 16
      %v8554 = vor.u32 %v8552, %v8550
      %v8556 = vshll.u32 %v8447, 16
      %v8558 = vrot.slane %v8556, 1
      %v8559 = vsel %vm988, %v8554, %v8558
      %v8560 = vshrl.u32 %v8447, 16
      %v8562 = vor.u32 %v8560, %v8558
      %v8564 = vshll.u32 %v8448, 16
      %v8566 = vrot.slane %v8564, 1
      %v8567 = vsel %vm988, %v8562, %v8566
      %v8568 = vshrl.u32 %v8448, 16
      %v8570 = vor.u32 %v8568, %v8566
      %v8572 = vshll.u32 %v8449, 16
      %v8574 = vrot.slane %v8572, 1
      %v8575 = vsel %vm988, %v8570, %v8574
      %v8576 = vshrl.u32 %v8449, 16
      %v8578 = vor.u32 %v8576, %v8574
      %v8580 = vshll.u32 %v8450, 16
      %v8582 = vrot.slane %v8580, 1
      %v8583 = vsel %vm988, %v8578, %v8582
      %v8584 = vshrl.u32 %v8450, 16
      %v8586 = vor.u32 %v8584, %v8582
      %v8588 = vshll.u32 %v8451, 16
      %v8590 = vrot.slane %v8588, 1
      %v8591 = vsel %vm988, %v8586, %v8590
      %v8592 = vshrl.u32 %v8451, 16
      %v8594 = vor.u32 %v8592, %v8590
      %v8596 = vshll.u32 %v8452, 16
      %v8598 = vrot.slane %v8596, 1
      %v8599 = vsel %vm988, %v8594, %v8598
      %v8600 = vshrl.u32 %v8452, 16
      %v8602 = vor.u32 %v8600, %v8598
      %v8604 = vshll.u32 %v8453, 16
      %v8606 = vrot.slane %v8604, 1
      %v8607 = vsel %vm988, %v8602, %v8606
      %v8608 = vshrl.u32 %v8453, 16
      %v8610 = vor.u32 %v8608, %v8606
      %v8612 = vshll.u32 %v8454, 16
      %v8614 = vrot.slane %v8612, 1
      %v8615 = vsel %vm988, %v8610, %v8614
      %v8616 = vshrl.u32 %v8454, 16
      %v8618 = vor.u32 %v8616, %v8614
      %v8620 = vshll.u32 %v8455, 16
      %v8622 = vrot.slane %v8620, 1
      %v8623 = vsel %vm988, %v8618, %v8622
      %v8624 = vshrl.u32 %v8455, 16
      %v8626 = vor.u32 %v8624, %v8622
      %v8628 = vshll.u32 %v8456, 16
      %v8630 = vrot.slane %v8628, 1
      %v8631 = vsel %vm988, %v8626, %v8630
      %v8632 = vshrl.u32 %v8456, 16
      %v8634 = vor.u32 %v8632, %v8630
      %v8636 = vshll.u32 %v8457, 16
      %v8638 = vrot.slane %v8636, 1
      %v8639 = vsel %vm988, %v8634, %v8638
      %v8640 = vshrl.u32 %v8457, 16
      %v8642 = vor.u32 %v8640, %v8638
      %v8644 = vshll.u32 %v8458, 16
      %v8646 = vrot.slane %v8644, 1
      %v8647 = vsel %vm988, %v8642, %v8646
      %v8648 = vshrl.u32 %v8458, 16
      %v8650 = vor.u32 %v8648, %v8646
      %v8652 = vshll.u32 %v8459, 16
      %v8654 = vrot.slane %v8652, 1
      %v8655 = vsel %vm988, %v8650, %v8654
      %v8696 = vunpack.c.l.b16 %v8321
      %v8697 = vunpack.c.l.b16 %v8322
      %v8698 = vunpack.c.l.b16 %v8323
      %v8699 = vunpack.c.l.b16 %v8324
      %v8700 = vunpack.c.l.b16 %v8325
      %v8701 = vunpack.c.l.b16 %v8326
      %v8702 = vunpack.c.l.b16 %v8327
      %v8703 = vunpack.c.l.b16 %v8328
      %v8704 = vunpack.c.l.b16 %v8329
      %v8705 = vunpack.c.l.b16 %v8330
      %v8706 = vunpack.c.l.b16 %v8331
      %v8707 = vunpack.c.l.b16 %v8332
      %v8708 = vunpack.c.l.b16 %v8333
      %v8709 = vunpack.c.l.b16 %v8334
      %v8710 = vunpack.c.l.b16 %v8335
      %v8711 = vunpack.c.l.b16 %v8336
      %v8712 = vpack.c.b16 %v8697, %v8696
      %v8713 = vpack.c.b16 %v8699, %v8698
      %v8714 = vpack.c.b16 %v8701, %v8700
      %v8715 = vpack.c.b16 %v8703, %v8702
      %v8716 = vpack.c.b16 %v8705, %v8704
      %v8717 = vpack.c.b16 %v8707, %v8706
      %v8718 = vpack.c.b16 %v8709, %v8708
      %v8719 = vpack.c.b16 %v8711, %v8710
      %8728 = vmatpush.bf16.msra.mxu0 %v8719
      %8729 = vmatpush.bf16.msra.mxu0 %v8718
      %8730 = vmatpush.bf16.msra.mxu0 %v8717
      %8731 = vmatpush.bf16.msra.mxu0 %v8716
      %8732 = vmatpush.bf16.msra.mxu0 %v8715
      %8733 = vmatpush.bf16.msra.mxu0 %v8714
      %8734 = vmatpush.bf16.msra.mxu0 %v8713
      %8735 = vmatpush.bf16.msra.mxu0 %v8712
      %8736 = vmatmul.bf16.gmra.mxu0 %v8471
      %v8737 = vpop.f32.mrf.mxu0
      %v8738 = vadd.f32 0.0, %v8737
      %v8739 = vpop.f32.mrf.mxu0
      %v8740 = vadd.f32 0.0, %v8739
      %8741 = vmatmul.bf16.gmra.mxu0 %v8479
      %v8742 = vpop.f32.mrf.mxu0
      %v8743 = vpop.f32.mrf.mxu0
      %v8744 = vadd.f32 0.0, %v8743
      %8745 = vmatmul.bf16.gmra.mxu0 %v8487
      %v8746 = vpop.f32.mrf.mxu0
      %v8747 = vadd.f32 0.0, %v8746
      %v8748 = vpop.f32.mrf.mxu0
      %8749 = vmatmul.bf16.gmra.mxu0 %v8495
      %v8750 = vpop.f32.mrf.mxu0
      %v8751 = vadd.f32 0.0, %v8750
      %v8752 = vpop.f32.mrf.mxu0
      %v8753 = vadd.f32 0.0, %v8752
      %8754 = vmatmul.bf16.gmra.mxu0 %v8503
      %v8755 = vpop.f32.mrf.mxu0
      %v8756 = vpop.f32.mrf.mxu0
      %v8757 = vadd.f32 0.0, %v8756
      %8758 = vmatmul.bf16.gmra.mxu0 %v8511
      %v8759 = vpop.f32.mrf.mxu0
      %v8760 = vadd.f32 0.0, %v8759
      %v8761 = vpop.f32.mrf.mxu0
      %8762 = vmatmul.bf16.gmra.mxu0 %v8519
      %v8763 = vpop.f32.mrf.mxu0
      %v8764 = vadd.f32 0.0, %v8763
      %v8765 = vpop.f32.mrf.mxu0
      %v8766 = vadd.f32 0.0, %v8765
      %8767 = vmatmul.bf16.gmra.mxu0 %v8527
      %v8768 = vpop.f32.mrf.mxu0
      %v8769 = vpop.f32.mrf.mxu0
      %v8770 = vadd.f32 0.0, %v8769
      %8771 = vmatmul.bf16.gmra.mxu0 %v8535
      %v8772 = vpop.f32.mrf.mxu0
      %v8773 = vadd.f32 0.0, %v8772
      %v8774 = vpop.f32.mrf.mxu0
      %8775 = vmatmul.bf16.gmra.mxu0 %v8543
      %v8776 = vpop.f32.mrf.mxu0
      %v8777 = vadd.f32 0.0, %v8776
      %v8778 = vpop.f32.mrf.mxu0
      %v8779 = vadd.f32 0.0, %v8778
      %8780 = vmatmul.bf16.gmra.mxu0 %v8551
      %v8781 = vpop.f32.mrf.mxu0
      %v8782 = vpop.f32.mrf.mxu0
      %v8783 = vadd.f32 0.0, %v8782
      %8784 = vmatmul.bf16.gmra.mxu0 %v8559
      %v8785 = vpop.f32.mrf.mxu0
      %v8786 = vadd.f32 0.0, %v8785
      %v8787 = vpop.f32.mrf.mxu0
      %8788 = vmatmul.bf16.gmra.mxu0 %v8567
      %v8789 = vpop.f32.mrf.mxu0
      %v8790 = vadd.f32 0.0, %v8789
      %v8791 = vpop.f32.mrf.mxu0
      %v8792 = vadd.f32 0.0, %v8791
      %8793 = vmatmul.bf16.gmra.mxu0 %v8575
      %v8794 = vpop.f32.mrf.mxu0
      %v8795 = vpop.f32.mrf.mxu0
      %v8796 = vadd.f32 0.0, %v8795
      %8797 = vmatmul.bf16.gmra.mxu0 %v8583
      %v8798 = vpop.f32.mrf.mxu0
      %v8799 = vadd.f32 0.0, %v8798
      %v8800 = vpop.f32.mrf.mxu0
      %8801 = vmatmul.bf16.gmra.mxu0 %v8591
      %v8802 = vpop.f32.mrf.mxu0
      %v8803 = vadd.f32 0.0, %v8802
      %v8804 = vpop.f32.mrf.mxu0
      %v8805 = vadd.f32 0.0, %v8804
      %8806 = vmatmul.bf16.gmra.mxu0 %v8599
      %v8807 = vpop.f32.mrf.mxu0
      %v8808 = vpop.f32.mrf.mxu0
      %v8809 = vadd.f32 0.0, %v8808
      %8810 = vmatmul.bf16.gmra.mxu0 %v8607
      %v8811 = vpop.f32.mrf.mxu0
      %v8812 = vadd.f32 0.0, %v8811
      %v8813 = vpop.f32.mrf.mxu0
      %8814 = vmatmul.bf16.gmra.mxu0 %v8615
      %v8815 = vpop.f32.mrf.mxu0
      %v8816 = vadd.f32 0.0, %v8815
      %v8817 = vpop.f32.mrf.mxu0
      %v8818 = vadd.f32 0.0, %v8817
      %8819 = vmatmul.bf16.gmra.mxu0 %v8623
      %v8820 = vpop.f32.mrf.mxu0
      %v8821 = vpop.f32.mrf.mxu0
      %v8822 = vadd.f32 0.0, %v8821
      %8823 = vmatmul.bf16.gmra.mxu0 %v8631
      %v8824 = vpop.f32.mrf.mxu0
      %v8825 = vadd.f32 0.0, %v8824
      %v8826 = vpop.f32.mrf.mxu0
      %8827 = vmatmul.bf16.gmra.mxu0 %v8639
      %v8828 = vpop.f32.mrf.mxu0
      %v8829 = vadd.f32 0.0, %v8828
      %v8830 = vpop.f32.mrf.mxu0
      %v8831 = vadd.f32 0.0, %v8830
      %8832 = vmatmul.bf16.gmra.mxu0 %v8647
      %v8833 = vpop.f32.mrf.mxu0
      %v8834 = vpop.f32.mrf.mxu0
      %v8835 = vadd.f32 0.0, %v8834
      %8836 = vmatmul.bf16.gmra.mxu0 %v8655
      %v8837 = vpop.f32.mrf.mxu0
      %v8838 = vadd.f32 0.0, %v8837
      %v8839 = vpop.f32.mrf.mxu0
      %8840 = vdwg.mxu0
      %v8841 = vadd.f32 %v8239, %v8738
      %v8842 = vadd.f32 %v8240, %v8740
      %v8843 = vadd.f32 %v8241, %v8744
      %v8844 = vadd.f32 %v8242, %v8747
      %v8845 = vadd.f32 %v8243, %v8751
      %v8846 = vadd.f32 %v8244, %v8753
      %v8847 = vadd.f32 %v8245, %v8757
      %v8848 = vadd.f32 %v8246, %v8760
      %v8849 = vadd.f32 %v8247, %v8764
      %v8850 = vadd.f32 %v8248, %v8766
      %v8851 = vadd.f32 %v8249, %v8770
      %v8852 = vadd.f32 %v8250, %v8773
      %v8853 = vadd.f32 %v8251, %v8777
      %v8854 = vadd.f32 %v8252, %v8779
      %v8855 = vadd.f32 %v8253, %v8783
      %v8856 = vadd.f32 %v8254, %v8786
      %v8857 = vadd.f32 %v8255, %v8790
      %v8858 = vadd.f32 %v8256, %v8792
      %v8859 = vadd.f32 %v8257, %v8796
      %v8860 = vadd.f32 %v8258, %v8799
      %v8861 = vadd.f32 %v8259, %v8803
      %v8862 = vadd.f32 %v8260, %v8805
      %v8863 = vadd.f32 %v8261, %v8809
      %v8864 = vadd.f32 %v8262, %v8812
      %v8865 = vadd.f32 %v8263, %v8816
      %v8866 = vadd.f32 %v8264, %v8818
      %v8867 = vadd.f32 %v8265, %v8822
      %v8868 = vadd.f32 %v8266, %v8825
      %v8869 = vadd.f32 %v8267, %v8829
      %v8870 = vadd.f32 %v8268, %v8831
      %v8871 = vadd.f32 %v8269, %v8835
      %v8872 = vadd.f32 %v8270, %v8838
      %v8873 = vld [vmem:[#allocation3 + $0x18] sm:$0xe]
      %s8874 = scalar_lea.vmem %s6, 512
      %v8875 = vld [vmem:[%s8874] sm:$0xf]
      %v8876 = vld [vmem:[%s8874 + $0x4] sm:$0xf]
      %v8877 = vld [vmem:[%s8874 + $0x8] sm:$0xf]
      %v8878 = vld [vmem:[%s8874 + $0xc] sm:$0xf]
      %v8879 = vld [vmem:[%s8874 + $0x10] sm:$0xf]
      %v8880 = vld [vmem:[%s8874 + $0x14] sm:$0xf]
      %v8881 = vld [vmem:[%s8874 + $0x18] sm:$0xf]
      %v8882 = vld [vmem:[%s8874 + $0x1c] sm:$0xf]
      %v8883 = vld [vmem:[%s8874 + $0x20] sm:$0xf]
      %v8884 = vld [vmem:[%s8874 + $0x24] sm:$0xf]
      %v8885 = vld [vmem:[%s8874 + $0x28] sm:$0xf]
      %v8886 = vld [vmem:[%s8874 + $0x2c] sm:$0xf]
      %v8887 = vld [vmem:[%s8874 + $0x30] sm:$0xf]
      %v8888 = vld [vmem:[%s8874 + $0x34] sm:$0xf]
      %v8889 = vld [vmem:[%s8874 + $0x38] sm:$0xf]
      %v8890 = vld [vmem:[%s8874 + $0x3c] sm:$0xf]
      %v8892 = vunpack.c.l.b16 %v8873
      %v8893 = vpack.c.b16 %v8387, %v8892
      %v8894 = vrot.slane %v8893, 1
      %v8895 = vrot.slane %v8436, 1
      %v8896 = vsel %vm1646, %v8894, %v8895
      %v8897 = vrot.slane %v8437, 1
      %v8898 = vsel %vm1646, %v8895, %v8897
      %v8899 = vrot.slane %v8438, 1
      %v8900 = vsel %vm1646, %v8897, %v8899
      %v8901 = vrot.slane %v8439, 1
      %v8902 = vsel %vm1646, %v8899, %v8901
      %v8903 = vrot.slane %v8440, 1
      %v8904 = vsel %vm1646, %v8901, %v8903
      %v8905 = vrot.slane %v8441, 1
      %v8906 = vsel %vm1646, %v8903, %v8905
      %v8907 = vrot.slane %v8442, 1
      %v8908 = vsel %vm1646, %v8905, %v8907
      %v8909 = vrot.slane %v8443, 1
      %v8910 = vsel %vm1646, %v8907, %v8909
      %v8911 = vrot.slane %v8444, 1
      %v8912 = vsel %vm1646, %v8909, %v8911
      %v8913 = vrot.slane %v8445, 1
      %v8914 = vsel %vm1646, %v8911, %v8913
      %v8915 = vrot.slane %v8446, 1
      %v8916 = vsel %vm1646, %v8913, %v8915
      %v8917 = vrot.slane %v8447, 1
      %v8918 = vsel %vm1646, %v8915, %v8917
      %v8919 = vrot.slane %v8448, 1
      %v8920 = vsel %vm1646, %v8917, %v8919
      %v8921 = vrot.slane %v8449, 1
      %v8922 = vsel %vm1646, %v8919, %v8921
      %v8923 = vrot.slane %v8450, 1
      %v8924 = vsel %vm1646, %v8921, %v8923
      %v8925 = vrot.slane %v8451, 1
      %v8926 = vsel %vm1646, %v8923, %v8925
      %v8927 = vrot.slane %v8452, 1
      %v8928 = vsel %vm1646, %v8925, %v8927
      %v8929 = vrot.slane %v8453, 1
      %v8930 = vsel %vm1646, %v8927, %v8929
      %v8931 = vrot.slane %v8454, 1
      %v8932 = vsel %vm1646, %v8929, %v8931
      %v8933 = vrot.slane %v8455, 1
      %v8934 = vsel %vm1646, %v8931, %v8933
      %v8935 = vrot.slane %v8456, 1
      %v8936 = vsel %vm1646, %v8933, %v8935
      %v8937 = vrot.slane %v8457, 1
      %v8938 = vsel %vm1646, %v8935, %v8937
      %v8939 = vrot.slane %v8458, 1
      %v8940 = vsel %vm1646, %v8937, %v8939
      %v8941 = vrot.slane %v8459, 1
      %v8942 = vsel %vm1646, %v8939, %v8941
      %v8983 = vunpack.c.l.b16 %v8875
      %v8984 = vunpack.c.l.b16 %v8876
      %v8985 = vunpack.c.l.b16 %v8877
      %v8986 = vunpack.c.l.b16 %v8878
      %v8987 = vunpack.c.l.b16 %v8879
      %v8988 = vunpack.c.l.b16 %v8880
      %v8989 = vunpack.c.l.b16 %v8881
      %v8990 = vunpack.c.l.b16 %v8882
      %v8991 = vunpack.c.l.b16 %v8883
      %v8992 = vunpack.c.l.b16 %v8884
      %v8993 = vunpack.c.l.b16 %v8885
      %v8994 = vunpack.c.l.b16 %v8886
      %v8995 = vunpack.c.l.b16 %v8887
      %v8996 = vunpack.c.l.b16 %v8888
      %v8997 = vunpack.c.l.b16 %v8889
      %v8998 = vunpack.c.l.b16 %v8890
      %v8999 = vpack.c.b16 %v8984, %v8983
      %v9000 = vpack.c.b16 %v8986, %v8985
      %v9001 = vpack.c.b16 %v8988, %v8987
      %v9002 = vpack.c.b16 %v8990, %v8989
      %v9003 = vpack.c.b16 %v8992, %v8991
      %v9004 = vpack.c.b16 %v8994, %v8993
      %v9005 = vpack.c.b16 %v8996, %v8995
      %v9006 = vpack.c.b16 %v8998, %v8997
      %9015 = vmatpush.bf16.msra.mxu0 %v9006
      %9016 = vmatpush.bf16.msra.mxu0 %v9005
      %9017 = vmatpush.bf16.msra.mxu0 %v9004
      %9018 = vmatpush.bf16.msra.mxu0 %v9003
      %9019 = vmatpush.bf16.msra.mxu0 %v9002
      %9020 = vmatpush.bf16.msra.mxu0 %v9001
      %9021 = vmatpush.bf16.msra.mxu0 %v9000
      %9022 = vmatpush.bf16.msra.mxu0 %v8999
      %9023 = vmatmul.bf16.gmra.mxu0 %v8896
      %v9024 = vpop.f32.mrf.mxu0
      %v9025 = vadd.f32 0.0, %v9024
      %v9026 = vpop.f32.mrf.mxu0
      %v9027 = vadd.f32 0.0, %v9026
      %9028 = vmatmul.bf16.gmra.mxu0 %v8898
      %v9029 = vpop.f32.mrf.mxu0
      %v9030 = vpop.f32.mrf.mxu0
      %v9031 = vadd.f32 0.0, %v9030
      %9032 = vmatmul.bf16.gmra.mxu0 %v8900
      %v9033 = vpop.f32.mrf.mxu0
      %v9034 = vadd.f32 0.0, %v9033
      %v9035 = vpop.f32.mrf.mxu0
      %9036 = vmatmul.bf16.gmra.mxu0 %v8902
      %v9037 = vpop.f32.mrf.mxu0
      %v9038 = vadd.f32 0.0, %v9037
      %v9039 = vpop.f32.mrf.mxu0
      %v9040 = vadd.f32 0.0, %v9039
      %9041 = vmatmul.bf16.gmra.mxu0 %v8904
      %v9042 = vpop.f32.mrf.mxu0
      %v9043 = vpop.f32.mrf.mxu0
      %v9044 = vadd.f32 0.0, %v9043
      %9045 = vmatmul.bf16.gmra.mxu0 %v8906
      %v9046 = vpop.f32.mrf.mxu0
      %v9047 = vadd.f32 0.0, %v9046
      %v9048 = vpop.f32.mrf.mxu0
      %9049 = vmatmul.bf16.gmra.mxu0 %v8908
      %v9050 = vpop.f32.mrf.mxu0
      %v9051 = vadd.f32 0.0, %v9050
      %v9052 = vpop.f32.mrf.mxu0
      %v9053 = vadd.f32 0.0, %v9052
      %9054 = vmatmul.bf16.gmra.mxu0 %v8910
      %v9055 = vpop.f32.mrf.mxu0
      %v9056 = vpop.f32.mrf.mxu0
      %v9057 = vadd.f32 0.0, %v9056
      %9058 = vmatmul.bf16.gmra.mxu0 %v8912
      %v9059 = vpop.f32.mrf.mxu0
      %v9060 = vadd.f32 0.0, %v9059
      %v9061 = vpop.f32.mrf.mxu0
      %9062 = vmatmul.bf16.gmra.mxu0 %v8914
      %v9063 = vpop.f32.mrf.mxu0
      %v9064 = vadd.f32 0.0, %v9063
      %v9065 = vpop.f32.mrf.mxu0
      %v9066 = vadd.f32 0.0, %v9065
      %9067 = vmatmul.bf16.gmra.mxu0 %v8916
      %v9068 = vpop.f32.mrf.mxu0
      %v9069 = vpop.f32.mrf.mxu0
      %v9070 = vadd.f32 0.0, %v9069
      %9071 = vmatmul.bf16.gmra.mxu0 %v8918
      %v9072 = vpop.f32.mrf.mxu0
      %v9073 = vadd.f32 0.0, %v9072
      %v9074 = vpop.f32.mrf.mxu0
      %9075 = vmatmul.bf16.gmra.mxu0 %v8920
      %v9076 = vpop.f32.mrf.mxu0
      %v9077 = vadd.f32 0.0, %v9076
      %v9078 = vpop.f32.mrf.mxu0
      %v9079 = vadd.f32 0.0, %v9078
      %9080 = vmatmul.bf16.gmra.mxu0 %v8922
      %v9081 = vpop.f32.mrf.mxu0
      %v9082 = vpop.f32.mrf.mxu0
      %v9083 = vadd.f32 0.0, %v9082
      %9084 = vmatmul.bf16.gmra.mxu0 %v8924
      %v9085 = vpop.f32.mrf.mxu0
      %v9086 = vadd.f32 0.0, %v9085
      %v9087 = vpop.f32.mrf.mxu0
      %9088 = vmatmul.bf16.gmra.mxu0 %v8926
      %v9089 = vpop.f32.mrf.mxu0
      %v9090 = vadd.f32 0.0, %v9089
      %v9091 = vpop.f32.mrf.mxu0
      %v9092 = vadd.f32 0.0, %v9091
      %9093 = vmatmul.bf16.gmra.mxu0 %v8928
      %v9094 = vpop.f32.mrf.mxu0
      %v9095 = vpop.f32.mrf.mxu0
      %v9096 = vadd.f32 0.0, %v9095
      %9097 = vmatmul.bf16.gmra.mxu0 %v8930
      %v9098 = vpop.f32.mrf.mxu0
      %v9099 = vadd.f32 0.0, %v9098
      %v9100 = vpop.f32.mrf.mxu0
      %9101 = vmatmul.bf16.gmra.mxu0 %v8932
      %v9102 = vpop.f32.mrf.mxu0
      %v9103 = vadd.f32 0.0, %v9102
      %v9104 = vpop.f32.mrf.mxu0
      %v9105 = vadd.f32 0.0, %v9104
      %9106 = vmatmul.bf16.gmra.mxu0 %v8934
      %v9107 = vpop.f32.mrf.mxu0
      %v9108 = vpop.f32.mrf.mxu0
      %v9109 = vadd.f32 0.0, %v9108
      %9110 = vmatmul.bf16.gmra.mxu0 %v8936
      %v9111 = vpop.f32.mrf.mxu0
      %v9112 = vadd.f32 0.0, %v9111
      %v9113 = vpop.f32.mrf.mxu0
      %9114 = vmatmul.bf16.gmra.mxu0 %v8938
      %v9115 = vpop.f32.mrf.mxu0
      %v9116 = vadd.f32 0.0, %v9115
      %v9117 = vpop.f32.mrf.mxu0
      %v9118 = vadd.f32 0.0, %v9117
      %9119 = vmatmul.bf16.gmra.mxu0 %v8940
      %v9120 = vpop.f32.mrf.mxu0
      %v9121 = vpop.f32.mrf.mxu0
      %v9122 = vadd.f32 0.0, %v9121
      %9123 = vmatmul.bf16.gmra.mxu0 %v8942
      %v9124 = vpop.f32.mrf.mxu0
      %v9125 = vadd.f32 0.0, %v9124
      %v9126 = vpop.f32.mrf.mxu0
      %9127 = vdwg.mxu0
      %v9128 = vadd.f32 %v8841, %v9025
      %v9129 = vadd.f32 %v8842, %v9027
      %v9130 = vadd.f32 %v8843, %v9031
      %v9131 = vadd.f32 %v8844, %v9034
      %v9132 = vadd.f32 %v8845, %v9038
      %v9133 = vadd.f32 %v8846, %v9040
      %v9134 = vadd.f32 %v8847, %v9044
      %v9135 = vadd.f32 %v8848, %v9047
      %v9136 = vadd.f32 %v8849, %v9051
      %v9137 = vadd.f32 %v8850, %v9053
      %v9138 = vadd.f32 %v8851, %v9057
      %v9139 = vadd.f32 %v8852, %v9060
      %v9140 = vadd.f32 %v8853, %v9064
      %v9141 = vadd.f32 %v8854, %v9066
      %v9142 = vadd.f32 %v8855, %v9070
      %v9143 = vadd.f32 %v8856, %v9073
      %v9144 = vadd.f32 %v8857, %v9077
      %v9145 = vadd.f32 %v8858, %v9079
      %v9146 = vadd.f32 %v8859, %v9083
      %v9147 = vadd.f32 %v8860, %v9086
      %v9148 = vadd.f32 %v8861, %v9090
      %v9149 = vadd.f32 %v8862, %v9092
      %v9150 = vadd.f32 %v8863, %v9096
      %v9151 = vadd.f32 %v8864, %v9099
      %v9152 = vadd.f32 %v8865, %v9103
      %v9153 = vadd.f32 %v8866, %v9105
      %v9154 = vadd.f32 %v8867, %v9109
      %v9155 = vadd.f32 %v8868, %v9112
      %v9156 = vadd.f32 %v8869, %v9116
      %v9157 = vadd.f32 %v8870, %v9118
      %v9158 = vadd.f32 %v8871, %v9122
      %v9159 = vadd.f32 %v8872, %v9125
      %v9160 = vld [vmem:[%s9] sm:$0x1]
      %v9162 = vperm.slane %v9160, 0
      %v9164 = vmul.f32 %v9128, %v9162
      %v9165 = vmul.f32 %v9129, %v9162
      %v9166 = vmul.f32 %v9130, %v9162
      %v9167 = vmul.f32 %v9131, %v9162
      %v9168 = vmul.f32 %v9132, %v9162
      %v9169 = vmul.f32 %v9133, %v9162
      %v9170 = vmul.f32 %v9134, %v9162
      %v9171 = vmul.f32 %v9135, %v9162
      %v9172 = vmul.f32 %v9136, %v9162
      %v9173 = vmul.f32 %v9137, %v9162
      %v9174 = vmul.f32 %v9138, %v9162
      %v9175 = vmul.f32 %v9139, %v9162
      %v9176 = vmul.f32 %v9140, %v9162
      %v9177 = vmul.f32 %v9141, %v9162
      %v9178 = vmul.f32 %v9142, %v9162
      %v9179 = vmul.f32 %v9143, %v9162
      %v9180 = vmul.f32 %v9144, %v9162
      %v9181 = vmul.f32 %v9145, %v9162
      %v9182 = vmul.f32 %v9146, %v9162
      %v9183 = vmul.f32 %v9147, %v9162
      %v9184 = vmul.f32 %v9148, %v9162
      %v9185 = vmul.f32 %v9149, %v9162
      %v9186 = vmul.f32 %v9150, %v9162
      %v9187 = vmul.f32 %v9151, %v9162
      %v9188 = vmul.f32 %v9152, %v9162
      %v9189 = vmul.f32 %v9153, %v9162
      %v9190 = vmul.f32 %v9154, %v9162
      %v9191 = vmul.f32 %v9155, %v9162
      %v9192 = vmul.f32 %v9156, %v9162
      %v9193 = vmul.f32 %v9157, %v9162
      %v9194 = vmul.f32 %v9158, %v9162
      %v9195 = vmul.f32 %v9159, %v9162
      %v9196 = vld [vmem:[%s10] sm:$0x1]
      %v9198 = vperm.slane %v9196, 0
      %v9200 = vadd.f32 %v9164, %v9198
      %v9201 = vadd.f32 %v9165, %v9198
      %v9202 = vadd.f32 %v9166, %v9198
      %v9203 = vadd.f32 %v9167, %v9198
      %v9204 = vadd.f32 %v9168, %v9198
      %v9205 = vadd.f32 %v9169, %v9198
      %v9206 = vadd.f32 %v9170, %v9198
      %v9207 = vadd.f32 %v9171, %v9198
      %v9208 = vadd.f32 %v9172, %v9198
      %v9209 = vadd.f32 %v9173, %v9198
      %v9210 = vadd.f32 %v9174, %v9198
      %v9211 = vadd.f32 %v9175, %v9198
      %v9212 = vadd.f32 %v9176, %v9198
      %v9213 = vadd.f32 %v9177, %v9198
      %v9214 = vadd.f32 %v9178, %v9198
      %v9215 = vadd.f32 %v9179, %v9198
      %v9216 = vadd.f32 %v9180, %v9198
      %v9217 = vadd.f32 %v9181, %v9198
      %v9218 = vadd.f32 %v9182, %v9198
      %v9219 = vadd.f32 %v9183, %v9198
      %v9220 = vadd.f32 %v9184, %v9198
      %v9221 = vadd.f32 %v9185, %v9198
      %v9222 = vadd.f32 %v9186, %v9198
      %v9223 = vadd.f32 %v9187, %v9198
      %v9224 = vadd.f32 %v9188, %v9198
      %v9225 = vadd.f32 %v9189, %v9198
      %v9226 = vadd.f32 %v9190, %v9198
      %v9227 = vadd.f32 %v9191, %v9198
      %v9228 = vadd.f32 %v9192, %v9198
      %v9229 = vadd.f32 %v9193, %v9198
      %v9230 = vadd.f32 %v9194, %v9198
      %v9231 = vadd.f32 %v9195, %v9198
      %vm9232 = vcmp.ge.f32.partialorder %v9200, 0.0
      %vm9233 = vcmp.ge.f32.partialorder %v9201, 0.0
      %vm9234 = vcmp.ge.f32.partialorder %v9202, 0.0
      %vm9235 = vcmp.ge.f32.partialorder %v9203, 0.0
      %vm9236 = vcmp.ge.f32.partialorder %v9204, 0.0
      %vm9237 = vcmp.ge.f32.partialorder %v9205, 0.0
      %vm9238 = vcmp.ge.f32.partialorder %v9206, 0.0
      %vm9239 = vcmp.ge.f32.partialorder %v9207, 0.0
      %vm9240 = vcmp.ge.f32.partialorder %v9208, 0.0
      %vm9241 = vcmp.ge.f32.partialorder %v9209, 0.0
      %vm9242 = vcmp.ge.f32.partialorder %v9210, 0.0
      %vm9243 = vcmp.ge.f32.partialorder %v9211, 0.0
      %vm9244 = vcmp.ge.f32.partialorder %v9212, 0.0
      %vm9245 = vcmp.ge.f32.partialorder %v9213, 0.0
      %vm9246 = vcmp.ge.f32.partialorder %v9214, 0.0
      %vm9247 = vcmp.ge.f32.partialorder %v9215, 0.0
      %vm9248 = vcmp.ge.f32.partialorder %v9216, 0.0
      %vm9249 = vcmp.ge.f32.partialorder %v9217, 0.0
      %vm9250 = vcmp.ge.f32.partialorder %v9218, 0.0
      %vm9251 = vcmp.ge.f32.partialorder %v9219, 0.0
      %vm9252 = vcmp.ge.f32.partialorder %v9220, 0.0
      %vm9253 = vcmp.ge.f32.partialorder %v9221, 0.0
      %vm9254 = vcmp.ge.f32.partialorder %v9222, 0.0
      %vm9255 = vcmp.ge.f32.partialorder %v9223, 0.0
      %vm9256 = vcmp.ge.f32.partialorder %v9224, 0.0
      %vm9257 = vcmp.ge.f32.partialorder %v9225, 0.0
      %vm9258 = vcmp.ge.f32.partialorder %v9226, 0.0
      %vm9259 = vcmp.ge.f32.partialorder %v9227, 0.0
      %vm9260 = vcmp.ge.f32.partialorder %v9228, 0.0
      %vm9261 = vcmp.ge.f32.partialorder %v9229, 0.0
      %vm9262 = vcmp.ge.f32.partialorder %v9230, 0.0
      %vm9263 = vcmp.ge.f32.partialorder %v9231, 0.0
      %v9264 = vmul.f32 %v9200, 0.2
      %v9265 = vmul.f32 %v9201, 0.2
      %v9266 = vmul.f32 %v9202, 0.2
      %v9267 = vmul.f32 %v9203, 0.2
      %v9268 = vmul.f32 %v9204, 0.2
      %v9269 = vmul.f32 %v9205, 0.2
      %v9270 = vmul.f32 %v9206, 0.2
      %v9271 = vmul.f32 %v9207, 0.2
      %v9272 = vmul.f32 %v9208, 0.2
      %v9273 = vmul.f32 %v9209, 0.2
      %v9274 = vmul.f32 %v9210, 0.2
      %v9275 = vmul.f32 %v9211, 0.2
      %v9276 = vmul.f32 %v9212, 0.2
      %v9277 = vmul.f32 %v9213, 0.2
      %v9278 = vmul.f32 %v9214, 0.2
      %v9279 = vmul.f32 %v9215, 0.2
      %v9280 = vmul.f32 %v9216, 0.2
      %v9281 = vmul.f32 %v9217, 0.2
      %v9282 = vmul.f32 %v9218, 0.2
      %v9283 = vmul.f32 %v9219, 0.2
      %v9284 = vmul.f32 %v9220, 0.2
      %v9285 = vmul.f32 %v9221, 0.2
      %v9286 = vmul.f32 %v9222, 0.2
      %v9287 = vmul.f32 %v9223, 0.2
      %v9288 = vmul.f32 %v9224, 0.2
      %v9289 = vmul.f32 %v9225, 0.2
      %v9290 = vmul.f32 %v9226, 0.2
      %v9291 = vmul.f32 %v9227, 0.2
      %v9292 = vmul.f32 %v9228, 0.2
      %v9293 = vmul.f32 %v9229, 0.2
      %v9294 = vmul.f32 %v9230, 0.2
      %v9295 = vmul.f32 %v9231, 0.2
      %v9296 = vsel %vm9232, %v9200, %v9264
      %v9297 = vsel %vm9233, %v9201, %v9265
      %v9298 = vsel %vm9234, %v9202, %v9266
      %v9299 = vsel %vm9235, %v9203, %v9267
      %v9300 = vsel %vm9236, %v9204, %v9268
      %v9301 = vsel %vm9237, %v9205, %v9269
      %v9302 = vsel %vm9238, %v9206, %v9270
      %v9303 = vsel %vm9239, %v9207, %v9271
      %v9304 = vsel %vm9240, %v9208, %v9272
      %v9305 = vsel %vm9241, %v9209, %v9273
      %v9306 = vsel %vm9242, %v9210, %v9274
      %v9307 = vsel %vm9243, %v9211, %v9275
      %v9308 = vsel %vm9244, %v9212, %v9276
      %v9309 = vsel %vm9245, %v9213, %v9277
      %v9310 = vsel %vm9246, %v9214, %v9278
      %v9311 = vsel %vm9247, %v9215, %v9279
      %v9312 = vsel %vm9248, %v9216, %v9280
      %v9313 = vsel %vm9249, %v9217, %v9281
      %v9314 = vsel %vm9250, %v9218, %v9282
      %v9315 = vsel %vm9251, %v9219, %v9283
      %v9316 = vsel %vm9252, %v9220, %v9284
      %v9317 = vsel %vm9253, %v9221, %v9285
      %v9318 = vsel %vm9254, %v9222, %v9286
      %v9319 = vsel %vm9255, %v9223, %v9287
      %v9320 = vsel %vm9256, %v9224, %v9288
      %v9321 = vsel %vm9257, %v9225, %v9289
      %v9322 = vsel %vm9258, %v9226, %v9290
      %v9323 = vsel %vm9259, %v9227, %v9291
      %v9324 = vsel %vm9260, %v9228, %v9292
      %v9325 = vsel %vm9261, %v9229, %v9293
      %v9326 = vsel %vm9262, %v9230, %v9294
      %v9327 = vsel %vm9263, %v9231, %v9295
      %v9328 = vpack.c.bf16 %v9296, %v9296
      %v9329 = vpack.c.bf16 %v9297, %v9297
      %v9330 = vpack.c.bf16 %v9298, %v9298
      %v9331 = vpack.c.bf16 %v9299, %v9299
      %v9332 = vpack.c.bf16 %v9300, %v9300
      %v9333 = vpack.c.bf16 %v9301, %v9301
      %v9334 = vpack.c.bf16 %v9302, %v9302
      %v9335 = vpack.c.bf16 %v9303, %v9303
      %v9336 = vpack.c.bf16 %v9304, %v9304
      %v9337 = vpack.c.bf16 %v9305, %v9305
      %v9338 = vpack.c.bf16 %v9306, %v9306
      %v9339 = vpack.c.bf16 %v9307, %v9307
      %v9340 = vpack.c.bf16 %v9308, %v9308
      %v9341 = vpack.c.bf16 %v9309, %v9309
      %v9342 = vpack.c.bf16 %v9310, %v9310
      %v9343 = vpack.c.bf16 %v9311, %v9311
      %v9344 = vpack.c.bf16 %v9312, %v9312
      %v9345 = vpack.c.bf16 %v9313, %v9313
      %v9346 = vpack.c.bf16 %v9314, %v9314
      %v9347 = vpack.c.bf16 %v9315, %v9315
      %v9348 = vpack.c.bf16 %v9316, %v9316
      %v9349 = vpack.c.bf16 %v9317, %v9317
      %v9350 = vpack.c.bf16 %v9318, %v9318
      %v9351 = vpack.c.bf16 %v9319, %v9319
      %v9352 = vpack.c.bf16 %v9320, %v9320
      %v9353 = vpack.c.bf16 %v9321, %v9321
      %v9354 = vpack.c.bf16 %v9322, %v9322
      %v9355 = vpack.c.bf16 %v9323, %v9323
      %v9356 = vpack.c.bf16 %v9324, %v9324
      %v9357 = vpack.c.bf16 %v9325, %v9325
      %v9358 = vpack.c.bf16 %v9326, %v9326
      %v9359 = vpack.c.bf16 %v9327, %v9327
      %9360 = vst.msk [vmem:[%s667] sm:$0xf] %vm718, %v9328
      %9361 = vst.msk [vmem:[%s667 + $0x4] sm:$0xf] %vm718, %v9329
      %9362 = vst.msk [vmem:[%s667 + $0x8] sm:$0xf] %vm718, %v9330
      %9363 = vst.msk [vmem:[%s667 + $0xc] sm:$0xf] %vm718, %v9331
      %9364 = vst.msk [vmem:[%s667 + $0x10] sm:$0xf] %vm718, %v9332
      %9365 = vst.msk [vmem:[%s667 + $0x14] sm:$0xf] %vm718, %v9333
      %9366 = vst.msk [vmem:[%s667 + $0x18] sm:$0xf] %vm718, %v9334
      %9367 = vst.msk [vmem:[%s667 + $0x1c] sm:$0xf] %vm718, %v9335
      %9368 = vst.msk [vmem:[%s667 + $0x20] sm:$0xf] %vm718, %v9336
      %9369 = vst.msk [vmem:[%s667 + $0x24] sm:$0xf] %vm718, %v9337
      %9370 = vst.msk [vmem:[%s667 + $0x28] sm:$0xf] %vm718, %v9338
      %9371 = vst.msk [vmem:[%s667 + $0x2c] sm:$0xf] %vm718, %v9339
      %9372 = vst.msk [vmem:[%s667 + $0x30] sm:$0xf] %vm718, %v9340
      %9373 = vst.msk [vmem:[%s667 + $0x34] sm:$0xf] %vm718, %v9341
      %9374 = vst.msk [vmem:[%s667 + $0x38] sm:$0xf] %vm718, %v9342
      %9375 = vst.msk [vmem:[%s667 + $0x3c] sm:$0xf] %vm718, %v9343
      %9376 = vst.msk [vmem:[%s667 + $0x40] sm:$0xf] %vm718, %v9344
      %9377 = vst.msk [vmem:[%s667 + $0x44] sm:$0xf] %vm718, %v9345
      %9378 = vst.msk [vmem:[%s667 + $0x48] sm:$0xf] %vm718, %v9346
      %9379 = vst.msk [vmem:[%s667 + $0x4c] sm:$0xf] %vm718, %v9347
      %9380 = vst.msk [vmem:[%s667 + $0x50] sm:$0xf] %vm718, %v9348
      %9381 = vst.msk [vmem:[%s667 + $0x54] sm:$0xf] %vm718, %v9349
      %9382 = vst.msk [vmem:[%s667 + $0x58] sm:$0xf] %vm718, %v9350
      %9383 = vst.msk [vmem:[%s667 + $0x5c] sm:$0xf] %vm718, %v9351
      %9384 = vst.msk [vmem:[%s667 + $0x60] sm:$0xf] %vm718, %v9352
      %9385 = vst.msk [vmem:[%s667 + $0x64] sm:$0xf] %vm718, %v9353
      %9386 = vst.msk [vmem:[%s667 + $0x68] sm:$0xf] %vm718, %v9354
      %9387 = vst.msk [vmem:[%s667 + $0x6c] sm:$0xf] %vm718, %v9355
      %9388 = vst.msk [vmem:[%s667 + $0x70] sm:$0xf] %vm718, %v9356
      %9389 = vst.msk [vmem:[%s667 + $0x74] sm:$0xf] %vm718, %v9357
      %9390 = vst.msk [vmem:[%s667 + $0x78] sm:$0xf] %vm718, %v9358
      %9391 = vst.msk [vmem:[%s667 + $0x7c] sm:$0xf] %vm718, %v9359
      %s9392 = smul.u32 16, %s27
      %p9393 = scmp.lt.s32.totalorder %s26, 1
      %s9394 = scalar_select %p9393, %s26, 1
      %p9395 = scmp.lt.s32.totalorder %s9392, 15
      %s9396 = scalar_select %p9395, %s9392, 15
      %s9397 = smul.addr %s9396, 2
      %s9398 = smul.addr %s9394, 32
      %s9399 = sadd.s32 %s9397, %s9398
      %s9400 = smul.addr %s9399, 4
      %s9401 = scalar_lea.vmem %s11, %s9400
      // Predicated region
      $region69: #{tpu_custom_call.1} parent=63 // pred_check
        %p9402 = pneg %p342
      $region70: #{tpu_custom_call.1} parent=63 // pred_check_branch
        %9404 = sbr.rel (%p9402) target = $region72
      $region71: #{tpu_custom_call.1} parent=63 // pred_region
        %s9405 = smul.u32 16, %s27
      $region72: #{tpu_custom_call.1} parent=63 // pred_fallthru
        _
    $region64: #{tpu_custom_call.1} parent=5 // pred_fallthru
      _
    %p9406 = scmp.le.s32.totalorder 2, %s17
    // Predicated region
    $region73: #{tpu_custom_call.1} parent=5 // pred_check
      %p9407 = pneg %p9406
    $region74: #{tpu_custom_call.1} parent=5 // pred_check_branch
      %9409 = sbr.rel (%p9407) target = $region76
    $region75: #{tpu_custom_call.1} parent=5 // pred_region
      %s9410 = ssub.s32 %s17, 2
      // Predicated region
      $region77: #{tpu_custom_call.1} parent=75 // pred_check
        %p9411 = pneg %p348
      $region78: #{tpu_custom_call.1} parent=75 // pred_check_branch
        %9413 = sbr.rel (%p9411) target = $region80
      $region79: #{tpu_custom_call.1} parent=75 // pred_region
        %s9414 = smul.u32 16, %s29
        %p9415 = scmp.lt.s32.totalorder %s28, 1
        %s9416 = scalar_select %p9415, %s28, 1
        %p9417 = scmp.lt.s32.totalorder %s9414, 15
        %s9418 = scalar_select %p9417, %s9414, 15
        %s9419 = smul.addr %s9418, 2
        %s9420 = smul.addr %s9416, 32
        %s9421 = sadd.s32 %s9419, %s9420
        %s9422 = smul.addr %s9421, 4
        %s9423 = scalar_lea.vmem %s11, %s9422
      $region80: #{tpu_custom_call.1} parent=75 // pred_fallthru
        _
    $region76: #{tpu_custom_call.1} parent=5 // pred_fallthru
      _
  $region6: #{tpu_custom_call.1} parent=0 // loop_footer
    %s21 = sadd.s32 1, %s17
  $region7: #{tpu_custom_call.1} parent=0 // loop_footer_branch
    %16 = sbr.rel target = $region3
  $region8: #{tpu_custom_call.1} parent=0 // loop_exit
    _

</llo_original>
